<compile_context>
chip_gen: v6e
topology: v6e:2x2x1
jax: 0.10.0
libtpu: 0.0.40
codegen_flags: <defaults>
</compile_context>

<pallas_src>
import functools

import jax
import jax.numpy as jnp
from jax import lax
from jax.experimental import pallas as pl
from jax.experimental.pallas import tpu as pltpu

# ---------------- small-but-faithful config (module hard-codes 6 layers, 8 heads) ----------
LAYERS = 6
HEADS = 8
DIM = 32                       # transformer hidden dim ("dimhead" arg)
DIM_HEAD = 8
INNER = HEADS * DIM_HEAD       # 64
MLP_DIM = 64
IMG = 16
PATCH = 4
CHANS = 3
NUM_CLASSES = 10
N_TOKENS = (IMG // PATCH) ** 2 + 1   # 16 patches + CLS = 17
BATCH = 2
EPS = 0.1
LN_EPS = 1e-5
SQUARINGS = 3                  # M -> M^8 (in place)
POWER_STEPS = 3                # normalized power steps on M^8


def _layernorm(x, gamma, beta):
    mu = jnp.mean(x, axis=-1, keepdims=True)
    var = jnp.mean((x - mu) ** 2, axis=-1, keepdims=True)
    return (x - mu) * lax.rsqrt(var + LN_EPS) * gamma + beta


# --------------------- fused per-image ViT + certified-bound kernel (grid = batch) ---------
def vit_kernel(tok_ref, ag_ref, ab_ref, wqkv_ref, wo_ref, bo_ref,
               fg_ref, fb_ref, w1_ref, b1_ref, w2_ref, b2_ref,
               hg_ref, hb_ref, wh_ref, bh_ref,
               yhat_ref, delta_ref):
    f32 = jnp.float32
    bf16 = jnp.bfloat16
    n = N_TOKENS

    # power-iteration start vector (hoisted out of the layer loop; strong overlap with the
    # top eigenvector of a row-stochastic P P^T)
    v0 = jnp.full((HEADS, 1, n), n ** -0.5, f32)

    def layer_step(l, carry):
        x, delta = carry                                   # x: [N, D] f32, delta: [1, 1] f32

        # -------- PreNorm + multi-head attention (hooked x_l / Px_l stay on-chip) ----------
        xn = _layernorm(x, ag_ref[l], ab_ref[l])           # hooked x_l, f32
        qkv = jnp.dot(xn.astype(bf16), wqkv_ref[l],
                      preferred_element_type=f32)          # [N, 3*H*dh]; q pre-scaled host-side
        qkvh = qkv.reshape(n, 3 * HEADS, DIM_HEAD).transpose(1, 0, 2)   # [3H, N, dh]
        q = qkvh[0:HEADS].astype(bf16)
        k = qkvh[HEADS:2 * HEADS].astype(bf16)
        v = qkvh[2 * HEADS:3 * HEADS].astype(bf16)

        s = jnp.einsum('hnd,hmd->hnm', q, k, preferred_element_type=f32)     # [H, N, N] f32
        s = s - jnp.max(s, axis=-1, keepdims=True)
        e = jnp.exp(s)
        p = e * pl.reciprocal(jnp.sum(e, axis=-1, keepdims=True), approx=True)  # hooked Px_l

        o = jnp.einsum('hnm,hmd->hnd', p.astype(bf16), v,
                       preferred_element_type=f32)                            # [H, N, dh]
        o2 = o.transpose(1, 0, 2).reshape(n, INNER).astype(bf16)              # [N, H*dh]
        x = x + jnp.dot(o2, wo_ref[l], preferred_element_type=f32) + bo_ref[l]

        # -------- certified-bound layer step (compute_bound_layer), all f32 ----------------
        rowsq = jnp.sum(xn * xn, axis=-1, keepdims=True)                      # [N, 1]
        x_norm = jnp.sqrt(jnp.sum(rowsq, axis=0, keepdims=True))              # [1, 1] fro norm

        m = jnp.einsum('hij,hkj->hik', p, p, preferred_element_type=f32)      # P P^T  [H,N,N]
        for _ in range(SQUARINGS):                                            # M -> M^8 in place
            m = jnp.einsum('hij,hjk->hik', m, m, preferred_element_type=f32)
        vec = v0
        for _ in range(POWER_STEPS):
            w = jnp.einsum('hbj,hjk->hbk', vec, m, preferred_element_type=f32)
            wn2 = jnp.sum(w * w, axis=-1, keepdims=True)                      # ||v M^8||^2
            vec = w * lax.rsqrt(wn2 + 1e-30)
        # ||P||_2 = lambda_max(P P^T)^(1/2) ~= (||v M^8||^2)^(1/32): five cheap sqrts
        sigma = wn2
        for _ in range(5):
            sigma = jnp.sqrt(sigma)                                           # [H, 1, 1]
        sig_sum = jnp.sum(sigma, axis=0)                                      # [1, 1]

        beta = delta * jnp.sqrt((2.0 / DIM) * (4.0 * x_norm * x_norm + delta * delta)) \
            * (x_norm + delta)
        delta = delta + delta * sig_sum + HEADS * beta

        # -------- PreNorm + feed-forward ----------------------------------------------------
        xf = _layernorm(x, fg_ref[l], fb_ref[l])
        h1 = jnp.dot(xf.astype(bf16), w1_ref[l], preferred_element_type=f32) + b1_ref[l]
        # TODO(synk): nn.GELU() default is the exact erf GELU; tanh approximation used for a
        #             guaranteed Mosaic lowering.
        h1 = jax.nn.gelu(h1, approximate=True)
        x = x + jnp.dot(h1.astype(bf16), w2_ref[l], preferred_element_type=f32) + b2_ref[l]

        return x, delta

    x0 = tok_ref[...]                                   # [N, D] f32 (one image)
    delta0 = jnp.full((1, 1), EPS, jnp.float32)
    x_fin, delta_fin = lax.fori_loop(0, LAYERS, layer_step, (x0, delta0))

    # -------- classification head on the CLS token (static row slice, no one-hot matmul) ----
    cls_tok = x_fin[0:1, :]
    cn = _layernorm(cls_tok, hg_ref[...], hb_ref[...])
    yhat_ref[...] = jnp.dot(cn.astype(bf16), wh_ref[...],
                            preferred_element_type=f32) + bh_ref[...]
    delta_ref[...] = delta_fin


# ----------------------------------------------------------------- params + forward --------
def init_params(key):
    def nrm(k, shape, scale=0.02):
        return scale * jax.random.normal(k, shape, jnp.float32)

    ks = jax.random.split(key, 8)
    return {
        "w_patch": nrm(ks[0], (PATCH * PATCH * CHANS, DIM)),
        "b_patch": jnp.zeros((1, DIM), jnp.float32),
        "pos_emb": nrm(ks[1], (1, N_TOKENS, DIM)),
        "cls": nrm(ks[2], (1, 1, DIM)),
        "head_g": jnp.ones((1, DIM), jnp.float32),
        "head_b": jnp.zeros((1, DIM), jnp.float32),
        "w_head": nrm(ks[3], (DIM, NUM_CLASSES)),
        "b_head": jnp.zeros((1, NUM_CLASSES), jnp.float32),
        # stacked per-layer weights, leading axis = layer
        "a_g": jnp.ones((LAYERS, 1, DIM), jnp.float32),
        "a_b": jnp.zeros((LAYERS, 1, DIM), jnp.float32),
        "wqkv": nrm(ks[4], (LAYERS, DIM, 3 * INNER)),      # to_qkv (bias=False)
        "wo": nrm(ks[5], (LAYERS, INNER, DIM)),            # native [inner, dim] layout
        "bo": jnp.zeros((LAYERS, 1, DIM), jnp.float32),
        "f_g": jnp.ones((LAYERS, 1, DIM), jnp.float32),
        "f_b": jnp.zeros((LAYERS, 1, DIM), jnp.float32),
        "w1": nrm(ks[6], (LAYERS, DIM, MLP_DIM)),
        "b1": jnp.zeros((LAYERS, 1, MLP_DIM), jnp.float32),
        "w2": nrm(ks[7], (LAYERS, MLP_DIM, DIM)),
        "b2": jnp.zeros((LAYERS, 1, DIM), jnp.float32),
    }


def _full_spec(shape):
    """Whole-array VMEM block, same block for every grid step (DMA'd once)."""
    return pl.BlockSpec(shape, lambda b: (0,) * len(shape))


def vit_analyzer_forward(params, x, y):
    """Equivalent of ViTAnalyzer.forward: returns (y_hat, delta)."""
    del y  # y is unused by the reference forward (only passed through)
    B, C, H, W = x.shape
    p = PATCH

    # ---- patch embedding (glue): 'b c (h p1) (w p2) -> b (h w) (p1 p2 c)' + Linear --------
    xp = x.reshape(B, C, H // p, p, W // p, p)
    xp = xp.transpose(0, 2, 4, 3, 5, 1).reshape(B, (H // p) * (W // p), p * p * C)
    tok = xp @ params["w_patch"] + params["b_patch"]
    cls = jnp.broadcast_to(params["cls"], (B, 1, DIM))
    tok = jnp.concatenate([cls, tok], axis=1) + params["pos_emb"]          # [B, N, D] f32

    # ---- host-side weight prep (constant-folded under jit): fold 1/sqrt(dh) into the q
    #      columns of the fused qkv weight; cast ViT-path matmul weights to bf16.
    scale = DIM_HEAD ** -0.5
    wqkv = jnp.concatenate([params["wqkv"][..., :INNER] * scale,
                            params["wqkv"][..., INNER:]], axis=-1).astype(jnp.bfloat16)
    wo = params["wo"].astype(jnp.bfloat16)
    w1 = params["w1"].astype(jnp.bfloat16)
    w2 = params["w2"].astype(jnp.bfloat16)
    wh = params["w_head"].astype(jnp.bfloat16)

    # ---- one image per grid step; all weights VMEM-resident; hooks never leave the chip ----
    y_hat, delta = pl.pallas_call(
        vit_kernel,
        grid=(B,),
        in_specs=[
            pl.BlockSpec((None, N_TOKENS, DIM), lambda b: (b, 0, 0)),        # tokens
            _full_spec((LAYERS, 1, DIM)), _full_spec((LAYERS, 1, DIM)),      # attn LN g/b
            _full_spec((LAYERS, DIM, 3 * INNER)),                            # fused qkv (bf16)
            _full_spec((LAYERS, INNER, DIM)), _full_spec((LAYERS, 1, DIM)),  # out proj w/b
            _full_spec((LAYERS, 1, DIM)), _full_spec((LAYERS, 1, DIM)),      # ffn LN g/b
            _full_spec((LAYERS, DIM, MLP_DIM)), _full_spec((LAYERS, 1, MLP_DIM)),
            _full_spec((LAYERS, MLP_DIM, DIM)), _full_spec((LAYERS, 1, DIM)),
            _full_spec((1, DIM)), _full_spec((1, DIM)),                      # head LN g/b
            _full_spec((DIM, NUM_CLASSES)), _full_spec((1, NUM_CLASSES)),    # head linear
        ],
        out_specs=(pl.BlockSpec((None, 1, NUM_CLASSES), lambda b: (b, 0, 0)),
                   pl.BlockSpec((None, 1, 1), lambda b: (b, 0, 0))),
        out_shape=(jax.ShapeDtypeStruct((B, 1, NUM_CLASSES), jnp.float32),
                   jax.ShapeDtypeStruct((B, 1, 1), jnp.float32)),
        compiler_params=pltpu.CompilerParams(dimension_semantics=("parallel",)),
    )(tok, params["a_g"], params["a_b"], wqkv, wo, params["bo"],
      params["f_g"], params["f_b"], w1, params["b1"], w2, params["b2"],
      params["head_g"], params["head_b"], wh, params["b_head"])

    return y_hat.reshape(B, NUM_CLASSES), delta.reshape(B, 1)


if __name__ == "__main__":
    key = jax.random.PRNGKey(0)
    pkey, xkey, ykey = jax.random.split(key, 3)

    params = init_params(pkey)
    x = jax.random.normal(xkey, (BATCH, CHANS, IMG, IMG), jnp.float32)      # NCHW like PyTorch
    y = jax.random.randint(ykey, (BATCH,), 0, NUM_CLASSES)

    fwd = jax.jit(functools.partial(vit_analyzer_forward, params))
    y_hat, delta = fwd(x, y)
    jax.block_until_ready((y_hat, delta))

    assert y_hat.shape == (BATCH, NUM_CLASSES)
    assert delta.shape == (BATCH, 1)
    assert bool(jnp.all(jnp.isfinite(y_hat)))
    # With the module's eps=0.1, 8 heads and 6 layers, the certified-bound recursion
    # (delta ~ 9*delta + 2*delta^3 per layer) exceeds the float32 range by construction; the
    # PyTorch reference in fp32 also yields +inf.  Require a valid, NaN-free, positive bound.
    assert bool(jnp.all(~jnp.isnan(delta)))
    assert bool(jnp.all(delta > 0.0))
    print("KERNEL_OK")
</pallas_src>

<mosaic_0001>
module attributes {stable_mosaic.version = 11 : i64} {
  func.func @vit_kernel(%arg0: i32, %arg1: memref<1x17x32xf32, #tpu.memory_space<vmem>>, %arg2: memref<6x1x32xf32, #tpu.memory_space<vmem>>, %arg3: memref<6x1x32xf32, #tpu.memory_space<vmem>>, %arg4: memref<6x32x192xbf16, #tpu.memory_space<vmem>>, %arg5: memref<6x64x32xbf16, #tpu.memory_space<vmem>>, %arg6: memref<6x1x32xf32, #tpu.memory_space<vmem>>, %arg7: memref<6x1x32xf32, #tpu.memory_space<vmem>>, %arg8: memref<6x1x32xf32, #tpu.memory_space<vmem>>, %arg9: memref<6x32x64xbf16, #tpu.memory_space<vmem>>, %arg10: memref<6x1x64xf32, #tpu.memory_space<vmem>>, %arg11: memref<6x64x32xbf16, #tpu.memory_space<vmem>>, %arg12: memref<6x1x32xf32, #tpu.memory_space<vmem>>, %arg13: memref<1x32xf32, #tpu.memory_space<vmem>>, %arg14: memref<1x32xf32, #tpu.memory_space<vmem>>, %arg15: memref<32x10xbf16, #tpu.memory_space<vmem>>, %arg16: memref<1x10xf32, #tpu.memory_space<vmem>>, %arg17: memref<1x1x10xf32, #tpu.memory_space<vmem>>, %arg18: memref<1x1x1xf32, #tpu.memory_space<vmem>>) attributes {dimension_semantics = [#tpu.dimension_semantics<parallel>], iteration_bounds = array<i64: 2>, scalar_prefetch = 0 : i64, scratch_operands = 0 : i64, tpu.core_type = #tpu.core_type<tc>, window_params = [{transform_indices = @transform_0, window_bounds = array<i64: 1, 17, 32>}, {pipeline_mode = #tpu.pipeline_mode<synchronous>, transform_indices = @transform_1, window_bounds = array<i64: 6, 1, 32>}, {pipeline_mode = #tpu.pipeline_mode<synchronous>, transform_indices = @transform_2, window_bounds = array<i64: 6, 1, 32>}, {pipeline_mode = #tpu.pipeline_mode<synchronous>, transform_indices = @transform_3, window_bounds = array<i64: 6, 32, 192>}, {pipeline_mode = #tpu.pipeline_mode<synchronous>, transform_indices = @transform_4, window_bounds = array<i64: 6, 64, 32>}, {pipeline_mode = #tpu.pipeline_mode<synchronous>, transform_indices = @transform_5, window_bounds = array<i64: 6, 1, 32>}, {pipeline_mode = #tpu.pipeline_mode<synchronous>, transform_indices = @transform_6, window_bounds = array<i64: 6, 1, 32>}, {pipeline_mode = #tpu.pipeline_mode<synchronous>, transform_indices = @transform_7, window_bounds = array<i64: 6, 1, 32>}, {pipeline_mode = #tpu.pipeline_mode<synchronous>, transform_indices = @transform_8, window_bounds = array<i64: 6, 32, 64>}, {pipeline_mode = #tpu.pipeline_mode<synchronous>, transform_indices = @transform_9, window_bounds = array<i64: 6, 1, 64>}, {pipeline_mode = #tpu.pipeline_mode<synchronous>, transform_indices = @transform_10, window_bounds = array<i64: 6, 64, 32>}, {pipeline_mode = #tpu.pipeline_mode<synchronous>, transform_indices = @transform_11, window_bounds = array<i64: 6, 1, 32>}, {pipeline_mode = #tpu.pipeline_mode<synchronous>, transform_indices = @transform_12, window_bounds = array<i64: 1, 32>}, {pipeline_mode = #tpu.pipeline_mode<synchronous>, transform_indices = @transform_13, window_bounds = array<i64: 1, 32>}, {pipeline_mode = #tpu.pipeline_mode<synchronous>, transform_indices = @transform_14, window_bounds = array<i64: 32, 10>}, {pipeline_mode = #tpu.pipeline_mode<synchronous>, transform_indices = @transform_15, window_bounds = array<i64: 1, 10>}, {transform_indices = @transform_16, window_bounds = array<i64: 1, 1, 10>}, {transform_indices = @transform_17, window_bounds = array<i64: 1, 1, 1>}]} {
    %cst = arith.constant 0.242535621 : f32
    %0 = vector.broadcast %cst : f32 to vector<8x1x17xf32>
    %c0 = arith.constant 0 : index
    %c0_0 = arith.constant 0 : index
    %c0_1 = arith.constant 0 : index
    %1 = vector.load %arg1[%c0, %c0_0, %c0_1] : memref<1x17x32xf32, #tpu.memory_space<vmem>>, vector<1x17x32xf32>
    %2 = vector.shape_cast %1 : vector<1x17x32xf32> to vector<17x32xf32>
    %cst_2 = arith.constant 1.000000e-01 : f32
    %3 = vector.broadcast %cst_2 : f32 to vector<1x1xf32>
    %c0_i32 = arith.constant 0 : i32
    %c6_i32 = arith.constant 6 : i32
    %4 = arith.addi %c0_i32, %c6_i32 : i32
    %c1_i32 = arith.constant 1 : i32
    %5:2 = scf.for %arg19 = %c0_i32 to %4 step %c1_i32 iter_args(%arg20 = %2, %arg21 = %3) -> (vector<17x32xf32>, vector<1x1xf32>)  : i32 {
      %40 = arith.index_cast %arg19 : i32 to index
      %c0_24 = arith.constant 0 : index
      %c0_25 = arith.constant 0 : index
      %41 = vector.load %arg2[%40, %c0_24, %c0_25] : memref<6x1x32xf32, #tpu.memory_space<vmem>>, vector<1x1x32xf32>
      %42 = vector.shape_cast %41 : vector<1x1x32xf32> to vector<1x32xf32>
      %43 = arith.index_cast %arg19 : i32 to index
      %c0_26 = arith.constant 0 : index
      %c0_27 = arith.constant 0 : index
      %44 = vector.load %arg3[%43, %c0_26, %c0_27] : memref<6x1x32xf32, #tpu.memory_space<vmem>>, vector<1x1x32xf32>
      %45 = vector.shape_cast %44 : vector<1x1x32xf32> to vector<1x32xf32>
      %cst_28 = arith.constant dense<0.000000e+00> : vector<17xf32>
      %46 = vector.multi_reduction <add>, %arg20, %cst_28 [1] : vector<17x32xf32> to vector<17xf32>
      %47 = vector.shape_cast %46 : vector<17xf32> to vector<17x1xf32>
      %cst_29 = arith.constant 3.200000e+01 : f32
      %48 = vector.broadcast %cst_29 : f32 to vector<17x1xf32>
      %49 = arith.divf %47, %48 : vector<17x1xf32>
      %50 = vector.broadcast %49 : vector<17x1xf32> to vector<17x32xf32>
      %51 = arith.subf %arg20, %50 : vector<17x32xf32>
      %52 = arith.mulf %51, %51 : vector<17x32xf32>
      %cst_30 = arith.constant dense<0.000000e+00> : vector<17xf32>
      %53 = vector.multi_reduction <add>, %52, %cst_30 [1] : vector<17x32xf32> to vector<17xf32>
      %54 = vector.shape_cast %53 : vector<17xf32> to vector<17x1xf32>
      %cst_31 = arith.constant 3.200000e+01 : f32
      %55 = vector.broadcast %cst_31 : f32 to vector<17x1xf32>
      %56 = arith.divf %54, %55 : vector<17x1xf32>
      %57 = vector.broadcast %49 : vector<17x1xf32> to vector<17x32xf32>
      %58 = arith.subf %arg20, %57 : vector<17x32xf32>
      %cst_32 = arith.constant 9.99999974E-6 : f32
      %59 = vector.broadcast %cst_32 : f32 to vector<17x1xf32>
      %60 = arith.addf %56, %59 : vector<17x1xf32>
      %61 = math.rsqrt %60 : vector<17x1xf32>
      %62 = vector.broadcast %61 : vector<17x1xf32> to vector<17x32xf32>
      %63 = arith.mulf %58, %62 : vector<17x32xf32>
      %64 = vector.broadcast %42 : vector<1x32xf32> to vector<17x32xf32>
      %65 = arith.mulf %63, %64 : vector<17x32xf32>
      %66 = vector.broadcast %45 : vector<1x32xf32> to vector<17x32xf32>
      %67 = arith.addf %65, %66 : vector<17x32xf32>
      %68 = arith.truncf %67 : vector<17x32xf32> to vector<17x32xbf16>
      %69 = arith.index_cast %arg19 : i32 to index
      %c0_33 = arith.constant 0 : index
      %c0_34 = arith.constant 0 : index
      %70 = vector.load %arg4[%69, %c0_33, %c0_34] : memref<6x32x192xbf16, #tpu.memory_space<vmem>>, vector<1x32x192xbf16>
      %71 = vector.shape_cast %70 : vector<1x32x192xbf16> to vector<32x192xbf16>
      %cst_35 = arith.constant dense<0.000000e+00> : vector<17x192xf32>
      %72 = tpu.matmul %68, %71, %cst_35 {dimension_numbers = #tpu.dot_dimension_numbers<[1], [0], [0], [1], [0, 0, 1, 1], [], []>} : vector<17x32xbf16>, vector<32x192xbf16>, vector<17x192xf32> -> vector<17x192xf32>
      %73 = vector.shape_cast %72 : vector<17x192xf32> to vector<17x24x8xf32>
      %74 = tpu.transpose %73, [1, 0, 2] : vector<17x24x8xf32> -> vector<24x17x8xf32>
      %75 = vector.extract_strided_slice %74 {offsets = [0, 0, 0], sizes = [8, 17, 8], strides = [1, 1, 1]} : vector<24x17x8xf32> to vector<8x17x8xf32>
      %76 = arith.truncf %75 : vector<8x17x8xf32> to vector<8x17x8xbf16>
      %77 = vector.extract_strided_slice %74 {offsets = [8, 0, 0], sizes = [8, 17, 8], strides = [1, 1, 1]} : vector<24x17x8xf32> to vector<8x17x8xf32>
      %78 = arith.truncf %77 : vector<8x17x8xf32> to vector<8x17x8xbf16>
      %79 = vector.extract_strided_slice %74 {offsets = [16, 0, 0], sizes = [8, 17, 8], strides = [1, 1, 1]} : vector<24x17x8xf32> to vector<8x17x8xf32>
      %80 = arith.truncf %79 : vector<8x17x8xf32> to vector<8x17x8xbf16>
      "tpu.trace_start"() <{level = 10 : i32, message = "hnd,hmd->hnm"}> : () -> ()
      %cst_36 = arith.constant dense<0.000000e+00> : vector<8x17x17xf32>
      %81 = tpu.matmul %76, %78, %cst_36 {dimension_numbers = #tpu.dot_dimension_numbers<[2], [2], [1], [1], [0, 0, 0, 1, 1, 1], [0], [0]>} : vector<8x17x8xbf16>, vector<8x17x8xbf16>, vector<8x17x17xf32> -> vector<8x17x17xf32>
      "tpu.trace_stop"() : () -> ()
      %cst_37 = arith.constant dense<0xFF800000> : vector<8x17xf32>
      %82 = vector.multi_reduction <maximumf>, %81, %cst_37 [2] : vector<8x17x17xf32> to vector<8x17xf32>
      %83 = vector.shape_cast %82 : vector<8x17xf32> to vector<8x17x1xf32>
      %84 = vector.broadcast %83 : vector<8x17x1xf32> to vector<8x17x17xf32>
      %85 = arith.subf %81, %84 : vector<8x17x17xf32>
      %86 = math.exp %85 : vector<8x17x17xf32>
      %cst_38 = arith.constant dense<0.000000e+00> : vector<8x17xf32>
      %87 = vector.multi_reduction <add>, %86, %cst_38 [2] : vector<8x17x17xf32> to vector<8x17xf32>
      %88 = vector.shape_cast %87 : vector<8x17xf32> to vector<8x17x1xf32>
      %89 = tpu.reciprocal %88 {approx = true} : vector<8x17x1xf32> -> vector<8x17x1xf32>
      %90 = vector.broadcast %89 : vector<8x17x1xf32> to vector<8x17x17xf32>
      %91 = arith.mulf %86, %90 : vector<8x17x17xf32>
      %92 = arith.truncf %91 : vector<8x17x17xf32> to vector<8x17x17xbf16>
      "tpu.trace_start"() <{level = 10 : i32, message = "hnm,hmd->hnd"}> : () -> ()
      %cst_39 = arith.constant dense<0.000000e+00> : vector<8x17x8xf32>
      %93 = tpu.matmul %92, %80, %cst_39 {dimension_numbers = #tpu.dot_dimension_numbers<[2], [1], [1], [2], [0, 0, 0, 1, 1, 2], [0], [0]>} : vector<8x17x17xbf16>, vector<8x17x8xbf16>, vector<8x17x8xf32> -> vector<8x17x8xf32>
      "tpu.trace_stop"() : () -> ()
      %94 = tpu.transpose %93, [1, 0, 2] : vector<8x17x8xf32> -> vector<17x8x8xf32>
      %95 = vector.shape_cast %94 : vector<17x8x8xf32> to vector<17x64xf32>
      %96 = arith.truncf %95 : vector<17x64xf32> to vector<17x64xbf16>
      %97 = arith.index_cast %arg19 : i32 to index
      %c0_40 = arith.constant 0 : index
      %c0_41 = arith.constant 0 : index
      %98 = vector.load %arg5[%97, %c0_40, %c0_41] : memref<6x64x32xbf16, #tpu.memory_space<vmem>>, vector<1x64x32xbf16>
      %99 = vector.shape_cast %98 : vector<1x64x32xbf16> to vector<64x32xbf16>
      %cst_42 = arith.constant dense<0.000000e+00> : vector<17x32xf32>
      %100 = tpu.matmul %96, %99, %cst_42 {dimension_numbers = #tpu.dot_dimension_numbers<[1], [0], [0], [1], [0, 0, 1, 1], [], []>} : vector<17x64xbf16>, vector<64x32xbf16>, vector<17x32xf32> -> vector<17x32xf32>
      %101 = arith.addf %arg20, %100 : vector<17x32xf32>
      %102 = arith.index_cast %arg19 : i32 to index
      %c0_43 = arith.constant 0 : index
      %c0_44 = arith.constant 0 : index
      %103 = vector.load %arg6[%102, %c0_43, %c0_44] : memref<6x1x32xf32, #tpu.memory_space<vmem>>, vector<1x1x32xf32>
      %104 = vector.shape_cast %103 : vector<1x1x32xf32> to vector<1x32xf32>
      %105 = vector.broadcast %104 : vector<1x32xf32> to vector<17x32xf32>
      %106 = arith.addf %101, %105 : vector<17x32xf32>
      %107 = arith.mulf %67, %67 : vector<17x32xf32>
      %cst_45 = arith.constant dense<0.000000e+00> : vector<17xf32>
      %108 = vector.multi_reduction <add>, %107, %cst_45 [1] : vector<17x32xf32> to vector<17xf32>
      %109 = vector.shape_cast %108 : vector<17xf32> to vector<17x1xf32>
      %cst_46 = arith.constant dense<0.000000e+00> : vector<1xf32>
      %110 = vector.multi_reduction <add>, %109, %cst_46 [0] : vector<17x1xf32> to vector<1xf32>
      %111 = vector.shape_cast %110 : vector<1xf32> to vector<1x1xf32>
      %112 = math.sqrt %111 : vector<1x1xf32>
      "tpu.trace_start"() <{level = 10 : i32, message = "hij,hkj->hik"}> : () -> ()
      %cst_47 = arith.constant dense<0.000000e+00> : vector<8x17x17xf32>
      %113 = tpu.matmul %91, %91, %cst_47 {dimension_numbers = #tpu.dot_dimension_numbers<[2], [2], [1], [1], [0, 0, 0, 1, 1, 1], [0], [0]>} : vector<8x17x17xf32>, vector<8x17x17xf32>, vector<8x17x17xf32> -> vector<8x17x17xf32>
      "tpu.trace_stop"() : () -> ()
      "tpu.trace_start"() <{level = 10 : i32, message = "hij,hjk->hik"}> : () -> ()
      %cst_48 = arith.constant dense<0.000000e+00> : vector<8x17x17xf32>
      %114 = tpu.matmul %113, %113, %cst_48 {dimension_numbers = #tpu.dot_dimension_numbers<[2], [1], [1], [2], [0, 0, 0, 1, 1, 2], [0], [0]>} : vector<8x17x17xf32>, vector<8x17x17xf32>, vector<8x17x17xf32> -> vector<8x17x17xf32>
      %cst_49 = arith.constant dense<0.000000e+00> : vector<8x17x17xf32>
      %115 = tpu.matmul %114, %114, %cst_49 {dimension_numbers = #tpu.dot_dimension_numbers<[2], [1], [1], [2], [0, 0, 0, 1, 1, 2], [0], [0]>} : vector<8x17x17xf32>, vector<8x17x17xf32>, vector<8x17x17xf32> -> vector<8x17x17xf32>
      %cst_50 = arith.constant dense<0.000000e+00> : vector<8x17x17xf32>
      %116 = tpu.matmul %115, %115, %cst_50 {dimension_numbers = #tpu.dot_dimension_numbers<[2], [1], [1], [2], [0, 0, 0, 1, 1, 2], [0], [0]>} : vector<8x17x17xf32>, vector<8x17x17xf32>, vector<8x17x17xf32> -> vector<8x17x17xf32>
      "tpu.trace_stop"() : () -> ()
      "tpu.trace_start"() <{level = 10 : i32, message = "hbj,hjk->hbk"}> : () -> ()
      %cst_51 = arith.constant dense<0.000000e+00> : vector<8x1x17xf32>
      %117 = tpu.matmul %0, %116, %cst_51 {dimension_numbers = #tpu.dot_dimension_numbers<[2], [1], [1], [2], [0, 0, 0, 1, 1, 2], [0], [0]>} : vector<8x1x17xf32>, vector<8x17x17xf32>, vector<8x1x17xf32> -> vector<8x1x17xf32>
      "tpu.trace_stop"() : () -> ()
      %118 = arith.mulf %117, %117 : vector<8x1x17xf32>
      %cst_52 = arith.constant dense<0.000000e+00> : vector<8x1xf32>
      %119 = vector.multi_reduction <add>, %118, %cst_52 [2] : vector<8x1x17xf32> to vector<8x1xf32>
      %120 = vector.shape_cast %119 : vector<8x1xf32> to vector<8x1x1xf32>
      %cst_53 = arith.constant 1.000000e-30 : f32
      %121 = vector.broadcast %cst_53 : f32 to vector<8x1x1xf32>
      %122 = arith.addf %120, %121 : vector<8x1x1xf32>
      %123 = math.rsqrt %122 : vector<8x1x1xf32>
      %124 = vector.broadcast %123 : vector<8x1x1xf32> to vector<8x1x17xf32>
      %125 = arith.mulf %117, %124 : vector<8x1x17xf32>
      "tpu.trace_start"() <{level = 10 : i32, message = "hbj,hjk->hbk"}> : () -> ()
      %cst_54 = arith.constant dense<0.000000e+00> : vector<8x1x17xf32>
      %126 = tpu.matmul %125, %116, %cst_54 {dimension_numbers = #tpu.dot_dimension_numbers<[2], [1], [1], [2], [0, 0, 0, 1, 1, 2], [0], [0]>} : vector<8x1x17xf32>, vector<8x17x17xf32>, vector<8x1x17xf32> -> vector<8x1x17xf32>
      "tpu.trace_stop"() : () -> ()
      %127 = arith.mulf %126, %126 : vector<8x1x17xf32>
      %cst_55 = arith.constant dense<0.000000e+00> : vector<8x1xf32>
      %128 = vector.multi_reduction <add>, %127, %cst_55 [2] : vector<8x1x17xf32> to vector<8x1xf32>
      %129 = vector.shape_cast %128 : vector<8x1xf32> to vector<8x1x1xf32>
      %cst_56 = arith.constant 1.000000e-30 : f32
      %130 = vector.broadcast %cst_56 : f32 to vector<8x1x1xf32>
      %131 = arith.addf %129, %130 : vector<8x1x1xf32>
      %132 = math.rsqrt %131 : vector<8x1x1xf32>
      %133 = vector.broadcast %132 : vector<8x1x1xf32> to vector<8x1x17xf32>
      %134 = arith.mulf %126, %133 : vector<8x1x17xf32>
      "tpu.trace_start"() <{level = 10 : i32, message = "hbj,hjk->hbk"}> : () -> ()
      %cst_57 = arith.constant dense<0.000000e+00> : vector<8x1x17xf32>
      %135 = tpu.matmul %134, %116, %cst_57 {dimension_numbers = #tpu.dot_dimension_numbers<[2], [1], [1], [2], [0, 0, 0, 1, 1, 2], [0], [0]>} : vector<8x1x17xf32>, vector<8x17x17xf32>, vector<8x1x17xf32> -> vector<8x1x17xf32>
      "tpu.trace_stop"() : () -> ()
      %136 = arith.mulf %135, %135 : vector<8x1x17xf32>
      %cst_58 = arith.constant dense<0.000000e+00> : vector<8x1xf32>
      %137 = vector.multi_reduction <add>, %136, %cst_58 [2] : vector<8x1x17xf32> to vector<8x1xf32>
      %138 = vector.shape_cast %137 : vector<8x1xf32> to vector<8x1x1xf32>
      %139 = math.sqrt %138 : vector<8x1x1xf32>
      %140 = math.sqrt %139 : vector<8x1x1xf32>
      %141 = math.sqrt %140 : vector<8x1x1xf32>
      %142 = math.sqrt %141 : vector<8x1x1xf32>
      %143 = math.sqrt %142 : vector<8x1x1xf32>
      %cst_59 = arith.constant dense<0.000000e+00> : vector<1x1xf32>
      %144 = vector.multi_reduction <add>, %143, %cst_59 [0] : vector<8x1x1xf32> to vector<1x1xf32>
      %cst_60 = arith.constant 4.000000e+00 : f32
      %145 = vector.broadcast %cst_60 : f32 to vector<1x1xf32>
      %146 = arith.mulf %145, %112 : vector<1x1xf32>
      %147 = arith.mulf %146, %112 : vector<1x1xf32>
      %148 = arith.mulf %arg21, %arg21 : vector<1x1xf32>
      %149 = arith.addf %147, %148 : vector<1x1xf32>
      %cst_61 = arith.constant 6.250000e-02 : f32
      %150 = vector.broadcast %cst_61 : f32 to vector<1x1xf32>
      %151 = arith.mulf %150, %149 : vector<1x1xf32>
      %152 = math.sqrt %151 : vector<1x1xf32>
      %153 = arith.mulf %arg21, %152 : vector<1x1xf32>
      %154 = arith.addf %112, %arg21 : vector<1x1xf32>
      %155 = arith.mulf %153, %154 : vector<1x1xf32>
      %156 = arith.mulf %arg21, %144 : vector<1x1xf32>
      %157 = arith.addf %arg21, %156 : vector<1x1xf32>
      %cst_62 = arith.constant 8.000000e+00 : f32
      %158 = vector.broadcast %cst_62 : f32 to vector<1x1xf32>
      %159 = arith.mulf %158, %155 : vector<1x1xf32>
      %160 = arith.addf %157, %159 : vector<1x1xf32>
      %161 = arith.index_cast %arg19 : i32 to index
      %c0_63 = arith.constant 0 : index
      %c0_64 = arith.constant 0 : index
      %162 = vector.load %arg7[%161, %c0_63, %c0_64] : memref<6x1x32xf32, #tpu.memory_space<vmem>>, vector<1x1x32xf32>
      %163 = vector.shape_cast %162 : vector<1x1x32xf32> to vector<1x32xf32>
      %164 = arith.index_cast %arg19 : i32 to index
      %c0_65 = arith.constant 0 : index
      %c0_66 = arith.constant 0 : index
      %165 = vector.load %arg8[%164, %c0_65, %c0_66] : memref<6x1x32xf32, #tpu.memory_space<vmem>>, vector<1x1x32xf32>
      %166 = vector.shape_cast %165 : vector<1x1x32xf32> to vector<1x32xf32>
      %cst_67 = arith.constant dense<0.000000e+00> : vector<17xf32>
      %167 = vector.multi_reduction <add>, %106, %cst_67 [1] : vector<17x32xf32> to vector<17xf32>
      %168 = vector.shape_cast %167 : vector<17xf32> to vector<17x1xf32>
      %cst_68 = arith.constant 3.200000e+01 : f32
      %169 = vector.broadcast %cst_68 : f32 to vector<17x1xf32>
      %170 = arith.divf %168, %169 : vector<17x1xf32>
      %171 = vector.broadcast %170 : vector<17x1xf32> to vector<17x32xf32>
      %172 = arith.subf %106, %171 : vector<17x32xf32>
      %173 = arith.mulf %172, %172 : vector<17x32xf32>
      %cst_69 = arith.constant dense<0.000000e+00> : vector<17xf32>
      %174 = vector.multi_reduction <add>, %173, %cst_69 [1] : vector<17x32xf32> to vector<17xf32>
      %175 = vector.shape_cast %174 : vector<17xf32> to vector<17x1xf32>
      %cst_70 = arith.constant 3.200000e+01 : f32
      %176 = vector.broadcast %cst_70 : f32 to vector<17x1xf32>
      %177 = arith.divf %175, %176 : vector<17x1xf32>
      %178 = vector.broadcast %170 : vector<17x1xf32> to vector<17x32xf32>
      %179 = arith.subf %106, %178 : vector<17x32xf32>
      %cst_71 = arith.constant 9.99999974E-6 : f32
      %180 = vector.broadcast %cst_71 : f32 to vector<17x1xf32>
      %181 = arith.addf %177, %180 : vector<17x1xf32>
      %182 = math.rsqrt %181 : vector<17x1xf32>
      %183 = vector.broadcast %182 : vector<17x1xf32> to vector<17x32xf32>
      %184 = arith.mulf %179, %183 : vector<17x32xf32>
      %185 = vector.broadcast %163 : vector<1x32xf32> to vector<17x32xf32>
      %186 = arith.mulf %184, %185 : vector<17x32xf32>
      %187 = vector.broadcast %166 : vector<1x32xf32> to vector<17x32xf32>
      %188 = arith.addf %186, %187 : vector<17x32xf32>
      %189 = arith.truncf %188 : vector<17x32xf32> to vector<17x32xbf16>
      %190 = arith.index_cast %arg19 : i32 to index
      %c0_72 = arith.constant 0 : index
      %c0_73 = arith.constant 0 : index
      %191 = vector.load %arg9[%190, %c0_72, %c0_73] : memref<6x32x64xbf16, #tpu.memory_space<vmem>>, vector<1x32x64xbf16>
      %192 = vector.shape_cast %191 : vector<1x32x64xbf16> to vector<32x64xbf16>
      %cst_74 = arith.constant dense<0.000000e+00> : vector<17x64xf32>
      %193 = tpu.matmul %189, %192, %cst_74 {dimension_numbers = #tpu.dot_dimension_numbers<[1], [0], [0], [1], [0, 0, 1, 1], [], []>} : vector<17x32xbf16>, vector<32x64xbf16>, vector<17x64xf32> -> vector<17x64xf32>
      %194 = arith.index_cast %arg19 : i32 to index
      %c0_75 = arith.constant 0 : index
      %c0_76 = arith.constant 0 : index
      %195 = vector.load %arg10[%194, %c0_75, %c0_76] : memref<6x1x64xf32, #tpu.memory_space<vmem>>, vector<1x1x64xf32>
      %196 = vector.shape_cast %195 : vector<1x1x64xf32> to vector<1x64xf32>
      %197 = vector.broadcast %196 : vector<1x64xf32> to vector<17x64xf32>
      %198 = arith.addf %193, %197 : vector<17x64xf32>
      %199 = arith.mulf %198, %198 : vector<17x64xf32>
      %200 = arith.mulf %198, %199 : vector<17x64xf32>
      %cst_77 = arith.constant 4.471500e-02 : f32
      %201 = vector.broadcast %cst_77 : f32 to vector<17x64xf32>
      %202 = arith.mulf %201, %200 : vector<17x64xf32>
      %203 = arith.addf %198, %202 : vector<17x64xf32>
      %cst_78 = arith.constant 0.797884583 : f32
      %204 = vector.broadcast %cst_78 : f32 to vector<17x64xf32>
      %205 = arith.mulf %204, %203 : vector<17x64xf32>
      %206 = math.tanh %205 : vector<17x64xf32>
      %cst_79 = arith.constant 1.000000e+00 : f32
      %207 = vector.broadcast %cst_79 : f32 to vector<17x64xf32>
      %208 = arith.addf %207, %206 : vector<17x64xf32>
      %cst_80 = arith.constant 5.000000e-01 : f32
      %209 = vector.broadcast %cst_80 : f32 to vector<17x64xf32>
      %210 = arith.mulf %209, %208 : vector<17x64xf32>
      %211 = arith.mulf %198, %210 : vector<17x64xf32>
      %212 = arith.truncf %211 : vector<17x64xf32> to vector<17x64xbf16>
      %213 = arith.index_cast %arg19 : i32 to index
      %c0_81 = arith.constant 0 : index
      %c0_82 = arith.constant 0 : index
      %214 = vector.load %arg11[%213, %c0_81, %c0_82] : memref<6x64x32xbf16, #tpu.memory_space<vmem>>, vector<1x64x32xbf16>
      %215 = vector.shape_cast %214 : vector<1x64x32xbf16> to vector<64x32xbf16>
      %cst_83 = arith.constant dense<0.000000e+00> : vector<17x32xf32>
      %216 = tpu.matmul %212, %215, %cst_83 {dimension_numbers = #tpu.dot_dimension_numbers<[1], [0], [0], [1], [0, 0, 1, 1], [], []>} : vector<17x64xbf16>, vector<64x32xbf16>, vector<17x32xf32> -> vector<17x32xf32>
      %217 = arith.addf %106, %216 : vector<17x32xf32>
      %218 = arith.index_cast %arg19 : i32 to index
      %c0_84 = arith.constant 0 : index
      %c0_85 = arith.constant 0 : index
      %219 = vector.load %arg12[%218, %c0_84, %c0_85] : memref<6x1x32xf32, #tpu.memory_space<vmem>>, vector<1x1x32xf32>
      %220 = vector.shape_cast %219 : vector<1x1x32xf32> to vector<1x32xf32>
      %221 = vector.broadcast %220 : vector<1x32xf32> to vector<17x32xf32>
      %222 = arith.addf %217, %221 : vector<17x32xf32>
      scf.yield %222, %160 : vector<17x32xf32>, vector<1x1xf32>
    }
    %c6_i32_3 = arith.constant 6 : i32
    %6 = vector.extract_strided_slice %5#0 {offsets = [0, 0], sizes = [1, 32], strides = [1, 1]} : vector<17x32xf32> to vector<1x32xf32>
    %c0_4 = arith.constant 0 : index
    %c0_5 = arith.constant 0 : index
    %7 = vector.load %arg13[%c0_4, %c0_5] : memref<1x32xf32, #tpu.memory_space<vmem>>, vector<1x32xf32>
    %c0_6 = arith.constant 0 : index
    %c0_7 = arith.constant 0 : index
    %8 = vector.load %arg14[%c0_6, %c0_7] : memref<1x32xf32, #tpu.memory_space<vmem>>, vector<1x32xf32>
    %cst_8 = arith.constant dense<0.000000e+00> : vector<1xf32>
    %9 = vector.multi_reduction <add>, %6, %cst_8 [1] : vector<1x32xf32> to vector<1xf32>
    %10 = vector.shape_cast %9 : vector<1xf32> to vector<1x1xf32>
    %cst_9 = arith.constant 3.200000e+01 : f32
    %11 = vector.broadcast %cst_9 : f32 to vector<1x1xf32>
    %12 = arith.divf %10, %11 : vector<1x1xf32>
    %13 = vector.broadcast %12 : vector<1x1xf32> to vector<1x32xf32>
    %14 = arith.subf %6, %13 : vector<1x32xf32>
    %15 = arith.mulf %14, %14 : vector<1x32xf32>
    %cst_10 = arith.constant dense<0.000000e+00> : vector<1xf32>
    %16 = vector.multi_reduction <add>, %15, %cst_10 [1] : vector<1x32xf32> to vector<1xf32>
    %17 = vector.shape_cast %16 : vector<1xf32> to vector<1x1xf32>
    %cst_11 = arith.constant 3.200000e+01 : f32
    %18 = vector.broadcast %cst_11 : f32 to vector<1x1xf32>
    %19 = arith.divf %17, %18 : vector<1x1xf32>
    %20 = vector.broadcast %12 : vector<1x1xf32> to vector<1x32xf32>
    %21 = arith.subf %6, %20 : vector<1x32xf32>
    %cst_12 = arith.constant 9.99999974E-6 : f32
    %22 = vector.broadcast %cst_12 : f32 to vector<1x1xf32>
    %23 = arith.addf %19, %22 : vector<1x1xf32>
    %24 = math.rsqrt %23 : vector<1x1xf32>
    %25 = vector.broadcast %24 : vector<1x1xf32> to vector<1x32xf32>
    %26 = arith.mulf %21, %25 : vector<1x32xf32>
    %27 = arith.mulf %26, %7 : vector<1x32xf32>
    %28 = arith.addf %27, %8 : vector<1x32xf32>
    %29 = arith.truncf %28 : vector<1x32xf32> to vector<1x32xbf16>
    %c0_13 = arith.constant 0 : index
    %c0_14 = arith.constant 0 : index
    %30 = vector.load %arg15[%c0_13, %c0_14] : memref<32x10xbf16, #tpu.memory_space<vmem>>, vector<32x10xbf16>
    %cst_15 = arith.constant dense<0.000000e+00> : vector<1x10xf32>
    %31 = tpu.matmul %29, %30, %cst_15 {dimension_numbers = #tpu.dot_dimension_numbers<[1], [0], [0], [1], [0, 0, 1, 1], [], []>} : vector<1x32xbf16>, vector<32x10xbf16>, vector<1x10xf32> -> vector<1x10xf32>
    %c0_16 = arith.constant 0 : index
    %c0_17 = arith.constant 0 : index
    %32 = vector.load %arg16[%c0_16, %c0_17] : memref<1x10xf32, #tpu.memory_space<vmem>>, vector<1x10xf32>
    %33 = arith.addf %31, %32 : vector<1x10xf32>
    %c0_18 = arith.constant 0 : index
    %c0_19 = arith.constant 0 : index
    %c0_20 = arith.constant 0 : index
    %34 = vector.load %arg17[%c0_18, %c0_19, %c0_20] : memref<1x1x10xf32, #tpu.memory_space<vmem>>, vector<1x1x10xf32>
    %35 = vector.shape_cast %34 : vector<1x1x10xf32> to vector<1x10xf32>
    %36 = vector.shape_cast %33 : vector<1x10xf32> to vector<1x1x10xf32>
    tpu.vector_store %arg17[%c0_18, %c0_19, %c0_20], %36 {strides = array<i32>} : memref<1x1x10xf32, #tpu.memory_space<vmem>>, vector<1x1x10xf32>,
    %c0_21 = arith.constant 0 : index
    %c0_22 = arith.constant 0 : index
    %c0_23 = arith.constant 0 : index
    %37 = vector.load %arg18[%c0_21, %c0_22, %c0_23] : memref<1x1x1xf32, #tpu.memory_space<vmem>>, vector<1x1x1xf32>
    %38 = vector.shape_cast %37 : vector<1x1x1xf32> to vector<1x1xf32>
    %39 = vector.shape_cast %5#1 : vector<1x1xf32> to vector<1x1x1xf32>
    tpu.vector_store %arg18[%c0_21, %c0_22, %c0_23], %39 {strides = array<i32>} : memref<1x1x1xf32, #tpu.memory_space<vmem>>, vector<1x1x1xf32>,
    return
  }
  func.func @transform_0(%arg0: i32) -> (i32, i32, i32) {
    %c0_i32 = arith.constant 0 : i32
    %c0_i32_0 = arith.constant 0 : i32
    %c0_i32_1 = arith.constant 0 : i32
    return %arg0, %c0_i32, %c0_i32_0 : i32, i32, i32
  }
  func.func @transform_1(%arg0: i32) -> (i32, i32, i32) {
    %c0_i32 = arith.constant 0 : i32
    %c0_i32_0 = arith.constant 0 : i32
    %c0_i32_1 = arith.constant 0 : i32
    %c0_i32_2 = arith.constant 0 : i32
    return %c0_i32, %c0_i32_0, %c0_i32_1 : i32, i32, i32
  }
  func.func @transform_2(%arg0: i32) -> (i32, i32, i32) {
    %c0_i32 = arith.constant 0 : i32
    %c0_i32_0 = arith.constant 0 : i32
    %c0_i32_1 = arith.constant 0 : i32
    %c0_i32_2 = arith.constant 0 : i32
    return %c0_i32, %c0_i32_0, %c0_i32_1 : i32, i32, i32
  }
  func.func @transform_3(%arg0: i32) -> (i32, i32, i32) {
    %c0_i32 = arith.constant 0 : i32
    %c0_i32_0 = arith.constant 0 : i32
    %c0_i32_1 = arith.constant 0 : i32
    %c0_i32_2 = arith.constant 0 : i32
    return %c0_i32, %c0_i32_0, %c0_i32_1 : i32, i32, i32
  }
  func.func @transform_4(%arg0: i32) -> (i32, i32, i32) {
    %c0_i32 = arith.constant 0 : i32
    %c0_i32_0 = arith.constant 0 : i32
    %c0_i32_1 = arith.constant 0 : i32
    %c0_i32_2 = arith.constant 0 : i32
    return %c0_i32, %c0_i32_0, %c0_i32_1 : i32, i32, i32
  }
  func.func @transform_5(%arg0: i32) -> (i32, i32, i32) {
    %c0_i32 = arith.constant 0 : i32
    %c0_i32_0 = arith.constant 0 : i32
    %c0_i32_1 = arith.constant 0 : i32
    %c0_i32_2 = arith.constant 0 : i32
    return %c0_i32, %c0_i32_0, %c0_i32_1 : i32, i32, i32
  }
  func.func @transform_6(%arg0: i32) -> (i32, i32, i32) {
    %c0_i32 = arith.constant 0 : i32
    %c0_i32_0 = arith.constant 0 : i32
    %c0_i32_1 = arith.constant 0 : i32
    %c0_i32_2 = arith.constant 0 : i32
    return %c0_i32, %c0_i32_0, %c0_i32_1 : i32, i32, i32
  }
  func.func @transform_7(%arg0: i32) -> (i32, i32, i32) {
    %c0_i32 = arith.constant 0 : i32
    %c0_i32_0 = arith.constant 0 : i32
    %c0_i32_1 = arith.constant 0 : i32
    %c0_i32_2 = arith.constant 0 : i32
    return %c0_i32, %c0_i32_0, %c0_i32_1 : i32, i32, i32
  }
  func.func @transform_8(%arg0: i32) -> (i32, i32, i32) {
    %c0_i32 = arith.constant 0 : i32
    %c0_i32_0 = arith.constant 0 : i32
    %c0_i32_1 = arith.constant 0 : i32
    %c0_i32_2 = arith.constant 0 : i32
    return %c0_i32, %c0_i32_0, %c0_i32_1 : i32, i32, i32
  }
  func.func @transform_9(%arg0: i32) -> (i32, i32, i32) {
    %c0_i32 = arith.constant 0 : i32
    %c0_i32_0 = arith.constant 0 : i32
    %c0_i32_1 = arith.constant 0 : i32
    %c0_i32_2 = arith.constant 0 : i32
    return %c0_i32, %c0_i32_0, %c0_i32_1 : i32, i32, i32
  }
  func.func @transform_10(%arg0: i32) -> (i32, i32, i32) {
    %c0_i32 = arith.constant 0 : i32
    %c0_i32_0 = arith.constant 0 : i32
    %c0_i32_1 = arith.constant 0 : i32
    %c0_i32_2 = arith.constant 0 : i32
    return %c0_i32, %c0_i32_0, %c0_i32_1 : i32, i32, i32
  }
  func.func @transform_11(%arg0: i32) -> (i32, i32, i32) {
    %c0_i32 = arith.constant 0 : i32
    %c0_i32_0 = arith.constant 0 : i32
    %c0_i32_1 = arith.constant 0 : i32
    %c0_i32_2 = arith.constant 0 : i32
    return %c0_i32, %c0_i32_0, %c0_i32_1 : i32, i32, i32
  }
  func.func @transform_12(%arg0: i32) -> (i32, i32) {
    %c0_i32 = arith.constant 0 : i32
    %c0_i32_0 = arith.constant 0 : i32
    %c0_i32_1 = arith.constant 0 : i32
    return %c0_i32, %c0_i32_0 : i32, i32
  }
  func.func @transform_13(%arg0: i32) -> (i32, i32) {
    %c0_i32 = arith.constant 0 : i32
    %c0_i32_0 = arith.constant 0 : i32
    %c0_i32_1 = arith.constant 0 : i32
    return %c0_i32, %c0_i32_0 : i32, i32
  }
  func.func @transform_14(%arg0: i32) -> (i32, i32) {
    %c0_i32 = arith.constant 0 : i32
    %c0_i32_0 = arith.constant 0 : i32
    %c0_i32_1 = arith.constant 0 : i32
    return %c0_i32, %c0_i32_0 : i32, i32
  }
  func.func @transform_15(%arg0: i32) -> (i32, i32) {
    %c0_i32 = arith.constant 0 : i32
    %c0_i32_0 = arith.constant 0 : i32
    %c0_i32_1 = arith.constant 0 : i32
    return %c0_i32, %c0_i32_0 : i32, i32
  }
  func.func @transform_16(%arg0: i32) -> (i32, i32, i32) {
    %c0_i32 = arith.constant 0 : i32
    %c0_i32_0 = arith.constant 0 : i32
    %c0_i32_1 = arith.constant 0 : i32
    return %arg0, %c0_i32, %c0_i32_0 : i32, i32, i32
  }
  func.func @transform_17(%arg0: i32) -> (i32, i32, i32) {
    %c0_i32 = arith.constant 0 : i32
    %c0_i32_0 = arith.constant 0 : i32
    %c0_i32_1 = arith.constant 0 : i32
    return %arg0, %c0_i32, %c0_i32_0 : i32, i32, i32
  }
}

</mosaic_0001>

<llo_original>
// kernel: vit_analyzer_forward.1
$region0: #{vit_analyzer_forward.1}
  #allocation0 [shape = 'u32[]', space=smem, size = 0x4, offset = 0x4, fixed_abs, tag = 'smem constant byte address 0x4 - core index']
  #allocation1 [shape = 'u32[144,128]{1,0:T(1,128)}', space=vmem, size = 0x12000, scoped, tag = 'internal scratch']
  %s0 = inlined_call_operand.vmem [shape: f32[2,17,32], index: 0, kind: input, shape index: {}]
  %s1 = inlined_call_operand.vmem [shape: f32[6,1,32], index: 1, kind: input, shape index: {}, may-alias: {1,6}]
  %s2 = inlined_call_operand.vmem [shape: f32[6,1,32], index: 2, kind: input, shape index: {}, may-alias: {2,5,7,11}]
  %s3 = inlined_call_operand.vmem [shape: bf16[6,32,192], index: 3, kind: input, shape index: {}]
  %s4 = inlined_call_operand.vmem [shape: bf16[6,64,32], index: 4, kind: input, shape index: {}]
  %s5 = inlined_call_operand.vmem [shape: f32[6,1,32], index: 5, kind: input, shape index: {}, may-alias: {2,5,7,11}]
  %s6 = inlined_call_operand.vmem [shape: f32[6,1,32], index: 6, kind: input, shape index: {}, may-alias: {1,6}]
  %s7 = inlined_call_operand.vmem [shape: f32[6,1,32], index: 7, kind: input, shape index: {}, may-alias: {2,5,7,11}]
  %s8 = inlined_call_operand.vmem [shape: bf16[6,32,64], index: 8, kind: input, shape index: {}]
  %s9 = inlined_call_operand.vmem [shape: f32[6,1,64], index: 9, kind: input, shape index: {}]
  %s10 = inlined_call_operand.vmem [shape: bf16[6,64,32], index: 10, kind: input, shape index: {}]
  %s11 = inlined_call_operand.vmem [shape: f32[6,1,32], index: 11, kind: input, shape index: {}, may-alias: {2,5,7,11}]
  %s12 = inlined_call_operand.vmem [shape: f32[1,32], index: 12, kind: input, shape index: {}]
  %s13 = inlined_call_operand.vmem [shape: f32[1,32], index: 13, kind: input, shape index: {}]
  %s14 = inlined_call_operand.vmem [shape: bf16[32,10], index: 14, kind: input, shape index: {}]
  %s15 = inlined_call_operand.vmem [shape: f32[1,10], index: 15, kind: input, shape index: {}]
  %s16 = inlined_call_operand.hbm [shape: f32[2,1,10], index: 16, kind: output, shape index: {0}]
  %s17 = inlined_call_operand.vmem [shape: f32[2,1,1], index: 17, kind: output, shape index: {1}]
  %18 = xla_tuple %s16, %s17
  %s19 = sld [smem:[#allocation0]]
  $region112: #{vit_analyzer_forward.1} parent=0
    _
  %s21 = ssub.s32 1, %s19
  %s22 = scalar_select 0, %s21, %s19
  $region1: #{vit_analyzer_forward.1} parent=0
    #allocation2 [shape = 'u8[1024]{0}', space=vmem, size = 0x400, scoped, tag = 'output window, operand 0']
    #allocation3 [shape = 's32[2]{0}', space=sflag, size = 0x8, scoped, tag = 'scoped memory for vit_analyzer_forward.1']
    %23 = vsyncpa [#allocation3], 0
    %s24 = scalar_lea.sflag [#allocation3], 1
    %25 = vsyncpa %s24, 0
    loop: start=0, step=1, limit=4
    $region2: #{vit_analyzer_forward.1} parent=1 // loop_pre_header
      _
    $region3: #{vit_analyzer_forward.1} parent=1 // loop_header
      %s27 = sphi 0, %s31
      %p28 = scmp.ge.s32.totalorder %s27, 4
      %s37 = sphi 0, %s39
      %s40 = sphi 0, %s37
      %s41 = sphi 0, %s40
      %s57 = sphi 0, %s41
      %s61 = sphi 0, %s61
      %s63 = sphi 0, %s61
      %s64 = sphi 0, %s63
      %s78 = sphi 0, %s64
      %s82 = sphi 0, %s82
      %s84 = sphi 0, %s82
      %s85 = sphi 0, %s84
      %s99 = sphi 0, %s85
      %s103 = sphi 0, %s103
      %s105 = sphi 0, %s103
      %s106 = sphi 0, %s105
      %s120 = sphi 0, %s106
      %s124 = sphi 0, %s124
      %s126 = sphi 0, %s124
      %s127 = sphi 0, %s126
      %s141 = sphi 0, %s127
      %s145 = sphi 0, %s145
      %s147 = sphi 0, %s145
      %s148 = sphi 0, %s147
      %s162 = sphi 0, %s148
      %s166 = sphi 0, %s166
      %s168 = sphi 0, %s166
      %s169 = sphi 0, %s168
      %s183 = sphi 0, %s169
      %s187 = sphi 0, %s187
      %s189 = sphi 0, %s187
      %s190 = sphi 0, %s189
      %s204 = sphi 0, %s190
      %s208 = sphi 0, %s208
      %s210 = sphi 0, %s208
      %s211 = sphi 0, %s210
      %s225 = sphi 0, %s211
      %s229 = sphi 0, %s229
      %s231 = sphi 0, %s229
      %s232 = sphi 0, %s231
      %s246 = sphi 0, %s232
      %s250 = sphi 0, %s250
      %s252 = sphi 0, %s250
      %s253 = sphi 0, %s252
      %s267 = sphi 0, %s253
      %s271 = sphi 0, %s271
      %s273 = sphi 0, %s271
      %s274 = sphi 0, %s273
      %s288 = sphi 0, %s274
      %s292 = sphi 0, %s292
      %s294 = sphi 0, %s292
      %s295 = sphi 0, %s294
      %s309 = sphi 0, %s295
      %s313 = sphi 0, %s313
      %s315 = sphi 0, %s313
      %s316 = sphi 0, %s315
      %s330 = sphi 0, %s316
      %s334 = sphi 0, %s334
      %s336 = sphi 0, %s334
      %s337 = sphi 0, %s336
      %s351 = sphi 0, %s337
      %s355 = sphi 0, %s355
      %s357 = sphi 0, %s355
      %s358 = sphi 0, %s357
      %s372 = sphi 0, %s358
      %s378 = sphi 0, %s380
      %s381 = sphi 0, %s378
      %s382 = sphi 0, %s381
      %s398 = sphi 0, %s382
      %s404 = sphi 0, %s406
      %s407 = sphi 0, %s404
      %s408 = sphi 0, %s407
      %s424 = sphi 0, %s408
    $region4: #{vit_analyzer_forward.1} parent=1 // loop_header_branch
      %30 = sbr.rel (%p28) target = $region8
    $region5: #{vit_analyzer_forward.1} parent=1 // loop_body
      %s32 = ssub.s32 %s27, 1
      %s33 = ssub.s32 %s27, 2
      %s34 = sadd.s32 %s27, 1
      %s35 = ssub.s32 %s27, %s34
      %p36 = scmp.eq.s32.totalorder %s35, 0
      %s38 = sadd.s32 %s37, 1
      %s39 = scalar_select %p36, %s37, %s38
      %p42 = pneg %p36
      %p43 = scmp.eq.s32.totalorder %s27, 1
      %p44 = por %p42, %p43
      %p45 = scmp.ne.s32.totalorder %s37, %s40
      %p46 = scmp.eq.s32.totalorder %s27, 0
      %p47 = por %p45, %p46
      %p48 = scmp.ne.s32.totalorder %s37, %s40
      %p49 = scmp.eq.s32.totalorder %s32, 1
      %p50 = por %p48, %p49
      %p51 = scmp.ne.s32.totalorder %s40, %s41
      %p52 = scmp.eq.s32.totalorder %s32, 0
      %p53 = por %p51, %p52
      %p54 = scmp.ne.s32.totalorder %s40, %s41
      %p55 = scmp.eq.s32.totalorder %s33, 1
      %p56 = por %p54, %p55
      %p58 = scmp.ne.s32.totalorder %s41, %s57
      %p59 = scmp.eq.s32.totalorder %s33, 0
      %p60 = por %p58, %p59
      %s62 = sadd.s32 %s61, 1
      %p65 = scmp.eq.s32.totalorder %s27, 1
      %p66 = scmp.ne.s32.totalorder %s61, %s63
      %p67 = scmp.eq.s32.totalorder %s27, 0
      %p68 = por %p66, %p67
      %p69 = scmp.ne.s32.totalorder %s61, %s63
      %p70 = scmp.eq.s32.totalorder %s32, 1
      %p71 = por %p69, %p70
      %p72 = scmp.ne.s32.totalorder %s63, %s64
      %p73 = scmp.eq.s32.totalorder %s32, 0
      %p74 = por %p72, %p73
      %p75 = scmp.ne.s32.totalorder %s63, %s64
      %p76 = scmp.eq.s32.totalorder %s33, 1
      %p77 = por %p75, %p76
      %p79 = scmp.ne.s32.totalorder %s64, %s78
      %p80 = scmp.eq.s32.totalorder %s33, 0
      %p81 = por %p79, %p80
      %s83 = sadd.s32 %s82, 1
      %p86 = scmp.eq.s32.totalorder %s27, 1
      %p87 = scmp.ne.s32.totalorder %s82, %s84
      %p88 = scmp.eq.s32.totalorder %s27, 0
      %p89 = por %p87, %p88
      %p90 = scmp.ne.s32.totalorder %s82, %s84
      %p91 = scmp.eq.s32.totalorder %s32, 1
      %p92 = por %p90, %p91
      %p93 = scmp.ne.s32.totalorder %s84, %s85
      %p94 = scmp.eq.s32.totalorder %s32, 0
      %p95 = por %p93, %p94
      %p96 = scmp.ne.s32.totalorder %s84, %s85
      %p97 = scmp.eq.s32.totalorder %s33, 1
      %p98 = por %p96, %p97
      %p100 = scmp.ne.s32.totalorder %s85, %s99
      %p101 = scmp.eq.s32.totalorder %s33, 0
      %p102 = por %p100, %p101
      %s104 = sadd.s32 %s103, 1
      %p107 = scmp.eq.s32.totalorder %s27, 1
      %p108 = scmp.ne.s32.totalorder %s103, %s105
      %p109 = scmp.eq.s32.totalorder %s27, 0
      %p110 = por %p108, %p109
      %p111 = scmp.ne.s32.totalorder %s103, %s105
      %p112 = scmp.eq.s32.totalorder %s32, 1
      %p113 = por %p111, %p112
      %p114 = scmp.ne.s32.totalorder %s105, %s106
      %p115 = scmp.eq.s32.totalorder %s32, 0
      %p116 = por %p114, %p115
      %p117 = scmp.ne.s32.totalorder %s105, %s106
      %p118 = scmp.eq.s32.totalorder %s33, 1
      %p119 = por %p117, %p118
      %p121 = scmp.ne.s32.totalorder %s106, %s120
      %p122 = scmp.eq.s32.totalorder %s33, 0
      %p123 = por %p121, %p122
      %s125 = sadd.s32 %s124, 1
      %p128 = scmp.eq.s32.totalorder %s27, 1
      %p129 = scmp.ne.s32.totalorder %s124, %s126
      %p130 = scmp.eq.s32.totalorder %s27, 0
      %p131 = por %p129, %p130
      %p132 = scmp.ne.s32.totalorder %s124, %s126
      %p133 = scmp.eq.s32.totalorder %s32, 1
      %p134 = por %p132, %p133
      %p135 = scmp.ne.s32.totalorder %s126, %s127
      %p136 = scmp.eq.s32.totalorder %s32, 0
      %p137 = por %p135, %p136
      %p138 = scmp.ne.s32.totalorder %s126, %s127
      %p139 = scmp.eq.s32.totalorder %s33, 1
      %p140 = por %p138, %p139
      %p142 = scmp.ne.s32.totalorder %s127, %s141
      %p143 = scmp.eq.s32.totalorder %s33, 0
      %p144 = por %p142, %p143
      %s146 = sadd.s32 %s145, 1
      %p149 = scmp.eq.s32.totalorder %s27, 1
      %p150 = scmp.ne.s32.totalorder %s145, %s147
      %p151 = scmp.eq.s32.totalorder %s27, 0
      %p152 = por %p150, %p151
      %p153 = scmp.ne.s32.totalorder %s145, %s147
      %p154 = scmp.eq.s32.totalorder %s32, 1
      %p155 = por %p153, %p154
      %p156 = scmp.ne.s32.totalorder %s147, %s148
      %p157 = scmp.eq.s32.totalorder %s32, 0
      %p158 = por %p156, %p157
      %p159 = scmp.ne.s32.totalorder %s147, %s148
      %p160 = scmp.eq.s32.totalorder %s33, 1
      %p161 = por %p159, %p160
      %p163 = scmp.ne.s32.totalorder %s148, %s162
      %p164 = scmp.eq.s32.totalorder %s33, 0
      %p165 = por %p163, %p164
      %s167 = sadd.s32 %s166, 1
      %p170 = scmp.eq.s32.totalorder %s27, 1
      %p171 = scmp.ne.s32.totalorder %s166, %s168
      %p172 = scmp.eq.s32.totalorder %s27, 0
      %p173 = por %p171, %p172
      %p174 = scmp.ne.s32.totalorder %s166, %s168
      %p175 = scmp.eq.s32.totalorder %s32, 1
      %p176 = por %p174, %p175
      %p177 = scmp.ne.s32.totalorder %s168, %s169
      %p178 = scmp.eq.s32.totalorder %s32, 0
      %p179 = por %p177, %p178
      %p180 = scmp.ne.s32.totalorder %s168, %s169
      %p181 = scmp.eq.s32.totalorder %s33, 1
      %p182 = por %p180, %p181
      %p184 = scmp.ne.s32.totalorder %s169, %s183
      %p185 = scmp.eq.s32.totalorder %s33, 0
      %p186 = por %p184, %p185
      %s188 = sadd.s32 %s187, 1
      %p191 = scmp.eq.s32.totalorder %s27, 1
      %p192 = scmp.ne.s32.totalorder %s187, %s189
      %p193 = scmp.eq.s32.totalorder %s27, 0
      %p194 = por %p192, %p193
      %p195 = scmp.ne.s32.totalorder %s187, %s189
      %p196 = scmp.eq.s32.totalorder %s32, 1
      %p197 = por %p195, %p196
      %p198 = scmp.ne.s32.totalorder %s189, %s190
      %p199 = scmp.eq.s32.totalorder %s32, 0
      %p200 = por %p198, %p199
      %p201 = scmp.ne.s32.totalorder %s189, %s190
      %p202 = scmp.eq.s32.totalorder %s33, 1
      %p203 = por %p201, %p202
      %p205 = scmp.ne.s32.totalorder %s190, %s204
      %p206 = scmp.eq.s32.totalorder %s33, 0
      %p207 = por %p205, %p206
      %s209 = sadd.s32 %s208, 1
      %p212 = scmp.eq.s32.totalorder %s27, 1
      %p213 = scmp.ne.s32.totalorder %s208, %s210
      %p214 = scmp.eq.s32.totalorder %s27, 0
      %p215 = por %p213, %p214
      %p216 = scmp.ne.s32.totalorder %s208, %s210
      %p217 = scmp.eq.s32.totalorder %s32, 1
      %p218 = por %p216, %p217
      %p219 = scmp.ne.s32.totalorder %s210, %s211
      %p220 = scmp.eq.s32.totalorder %s32, 0
      %p221 = por %p219, %p220
      %p222 = scmp.ne.s32.totalorder %s210, %s211
      %p223 = scmp.eq.s32.totalorder %s33, 1
      %p224 = por %p222, %p223
      %p226 = scmp.ne.s32.totalorder %s211, %s225
      %p227 = scmp.eq.s32.totalorder %s33, 0
      %p228 = por %p226, %p227
      %s230 = sadd.s32 %s229, 1
      %p233 = scmp.eq.s32.totalorder %s27, 1
      %p234 = scmp.ne.s32.totalorder %s229, %s231
      %p235 = scmp.eq.s32.totalorder %s27, 0
      %p236 = por %p234, %p235
      %p237 = scmp.ne.s32.totalorder %s229, %s231
      %p238 = scmp.eq.s32.totalorder %s32, 1
      %p239 = por %p237, %p238
      %p240 = scmp.ne.s32.totalorder %s231, %s232
      %p241 = scmp.eq.s32.totalorder %s32, 0
      %p242 = por %p240, %p241
      %p243 = scmp.ne.s32.totalorder %s231, %s232
      %p244 = scmp.eq.s32.totalorder %s33, 1
      %p245 = por %p243, %p244
      %p247 = scmp.ne.s32.totalorder %s232, %s246
      %p248 = scmp.eq.s32.totalorder %s33, 0
      %p249 = por %p247, %p248
      %s251 = sadd.s32 %s250, 1
      %p254 = scmp.eq.s32.totalorder %s27, 1
      %p255 = scmp.ne.s32.totalorder %s250, %s252
      %p256 = scmp.eq.s32.totalorder %s27, 0
      %p257 = por %p255, %p256
      %p258 = scmp.ne.s32.totalorder %s250, %s252
      %p259 = scmp.eq.s32.totalorder %s32, 1
      %p260 = por %p258, %p259
      %p261 = scmp.ne.s32.totalorder %s252, %s253
      %p262 = scmp.eq.s32.totalorder %s32, 0
      %p263 = por %p261, %p262
      %p264 = scmp.ne.s32.totalorder %s252, %s253
      %p265 = scmp.eq.s32.totalorder %s33, 1
      %p266 = por %p264, %p265
      %p268 = scmp.ne.s32.totalorder %s253, %s267
      %p269 = scmp.eq.s32.totalorder %s33, 0
      %p270 = por %p268, %p269
      %s272 = sadd.s32 %s271, 1
      %p275 = scmp.eq.s32.totalorder %s27, 1
      %p276 = scmp.ne.s32.totalorder %s271, %s273
      %p277 = scmp.eq.s32.totalorder %s27, 0
      %p278 = por %p276, %p277
      %p279 = scmp.ne.s32.totalorder %s271, %s273
      %p280 = scmp.eq.s32.totalorder %s32, 1
      %p281 = por %p279, %p280
      %p282 = scmp.ne.s32.totalorder %s273, %s274
      %p283 = scmp.eq.s32.totalorder %s32, 0
      %p284 = por %p282, %p283
      %p285 = scmp.ne.s32.totalorder %s273, %s274
      %p286 = scmp.eq.s32.totalorder %s33, 1
      %p287 = por %p285, %p286
      %p289 = scmp.ne.s32.totalorder %s274, %s288
      %p290 = scmp.eq.s32.totalorder %s33, 0
      %p291 = por %p289, %p290
      %s293 = sadd.s32 %s292, 1
      %p296 = scmp.eq.s32.totalorder %s27, 1
      %p297 = scmp.ne.s32.totalorder %s292, %s294
      %p298 = scmp.eq.s32.totalorder %s27, 0
      %p299 = por %p297, %p298
      %p300 = scmp.ne.s32.totalorder %s292, %s294
      %p301 = scmp.eq.s32.totalorder %s32, 1
      %p302 = por %p300, %p301
      %p303 = scmp.ne.s32.totalorder %s294, %s295
      %p304 = scmp.eq.s32.totalorder %s32, 0
      %p305 = por %p303, %p304
      %p306 = scmp.ne.s32.totalorder %s294, %s295
      %p307 = scmp.eq.s32.totalorder %s33, 1
      %p308 = por %p306, %p307
      %p310 = scmp.ne.s32.totalorder %s295, %s309
      %p311 = scmp.eq.s32.totalorder %s33, 0
      %p312 = por %p310, %p311
      %s314 = sadd.s32 %s313, 1
      %p317 = scmp.eq.s32.totalorder %s27, 1
      %p318 = scmp.ne.s32.totalorder %s313, %s315
      %p319 = scmp.eq.s32.totalorder %s27, 0
      %p320 = por %p318, %p319
      %p321 = scmp.ne.s32.totalorder %s313, %s315
      %p322 = scmp.eq.s32.totalorder %s32, 1
      %p323 = por %p321, %p322
      %p324 = scmp.ne.s32.totalorder %s315, %s316
      %p325 = scmp.eq.s32.totalorder %s32, 0
      %p326 = por %p324, %p325
      %p327 = scmp.ne.s32.totalorder %s315, %s316
      %p328 = scmp.eq.s32.totalorder %s33, 1
      %p329 = por %p327, %p328
      %p331 = scmp.ne.s32.totalorder %s316, %s330
      %p332 = scmp.eq.s32.totalorder %s33, 0
      %p333 = por %p331, %p332
      %s335 = sadd.s32 %s334, 1
      %p338 = scmp.eq.s32.totalorder %s27, 1
      %p339 = scmp.ne.s32.totalorder %s334, %s336
      %p340 = scmp.eq.s32.totalorder %s27, 0
      %p341 = por %p339, %p340
      %p342 = scmp.ne.s32.totalorder %s334, %s336
      %p343 = scmp.eq.s32.totalorder %s32, 1
      %p344 = por %p342, %p343
      %p345 = scmp.ne.s32.totalorder %s336, %s337
      %p346 = scmp.eq.s32.totalorder %s32, 0
      %p347 = por %p345, %p346
      %p348 = scmp.ne.s32.totalorder %s336, %s337
      %p349 = scmp.eq.s32.totalorder %s33, 1
      %p350 = por %p348, %p349
      %p352 = scmp.ne.s32.totalorder %s337, %s351
      %p353 = scmp.eq.s32.totalorder %s33, 0
      %p354 = por %p352, %p353
      %s356 = sadd.s32 %s355, 1
      %p359 = scmp.eq.s32.totalorder %s27, 1
      %p360 = scmp.ne.s32.totalorder %s355, %s357
      %p361 = scmp.eq.s32.totalorder %s27, 0
      %p362 = por %p360, %p361
      %p363 = scmp.ne.s32.totalorder %s355, %s357
      %p364 = scmp.eq.s32.totalorder %s32, 1
      %p365 = por %p363, %p364
      %p366 = scmp.ne.s32.totalorder %s357, %s358
      %p367 = scmp.eq.s32.totalorder %s32, 0
      %p368 = por %p366, %p367
      %p369 = scmp.ne.s32.totalorder %s357, %s358
      %p370 = scmp.eq.s32.totalorder %s33, 1
      %p371 = por %p369, %p370
      %p373 = scmp.ne.s32.totalorder %s358, %s372
      %p374 = scmp.eq.s32.totalorder %s33, 0
      %p375 = por %p373, %p374
      %s376 = ssub.s32 %s27, %s34
      %p377 = scmp.eq.s32.totalorder %s376, 0
      %s379 = sadd.s32 %s378, 1
      %s380 = scalar_select %p377, %s378, %s379
      %p383 = pneg %p377
      %p384 = scmp.eq.s32.totalorder %s27, 1
      %p385 = por %p383, %p384
      %p386 = scmp.ne.s32.totalorder %s378, %s381
      %p387 = scmp.eq.s32.totalorder %s27, 0
      %p388 = por %p386, %p387
      %p389 = scmp.ne.s32.totalorder %s378, %s381
      %p390 = scmp.eq.s32.totalorder %s32, 1
      %p391 = por %p389, %p390
      %p392 = scmp.ne.s32.totalorder %s381, %s382
      %p393 = scmp.eq.s32.totalorder %s32, 0
      %p394 = por %p392, %p393
      %p395 = scmp.ne.s32.totalorder %s381, %s382
      %p396 = scmp.eq.s32.totalorder %s33, 1
      %p397 = por %p395, %p396
      %p399 = scmp.ne.s32.totalorder %s382, %s398
      %p400 = scmp.eq.s32.totalorder %s33, 0
      %p401 = por %p399, %p400
      %s402 = ssub.s32 %s27, %s34
      %p403 = scmp.eq.s32.totalorder %s402, 0
      %s405 = sadd.s32 %s404, 1
      %s406 = scalar_select %p403, %s404, %s405
      %p409 = pneg %p403
      %p410 = scmp.eq.s32.totalorder %s27, 1
      %p411 = por %p409, %p410
      %p412 = scmp.ne.s32.totalorder %s404, %s407
      %p413 = scmp.eq.s32.totalorder %s27, 0
      %p414 = por %p412, %p413
      %p415 = scmp.ne.s32.totalorder %s404, %s407
      %p416 = scmp.eq.s32.totalorder %s32, 1
      %p417 = por %p415, %p416
      %p418 = scmp.ne.s32.totalorder %s407, %s408
      %p419 = scmp.eq.s32.totalorder %s32, 0
      %p420 = por %p418, %p419
      %p421 = scmp.ne.s32.totalorder %s407, %s408
      %p422 = scmp.eq.s32.totalorder %s33, 1
      %p423 = por %p421, %p422
      %p425 = scmp.ne.s32.totalorder %s408, %s424
      %p426 = scmp.eq.s32.totalorder %s33, 0
      %p427 = por %p425, %p426
      %p428 = scmp.le.s32.totalorder 1, %s27
      %p429 = scmp.lt.s32.totalorder %s27, 3
      %p430 = pnand %p428, %p429
      %p431 = pneg %p430
      // Predicated region
      $region9: #{vit_analyzer_forward.1} parent=5 // pred_check
        _
      $region10: #{vit_analyzer_forward.1} parent=5 // pred_check_branch
        %433 = sbr.rel (%p430) target = $region12
      $region11: #{vit_analyzer_forward.1} parent=5 // pred_region
        %s434 = ssub.s32 %s27, 1
        // Predicated region
        $region13: #{vit_analyzer_forward.1} parent=11 // pred_check
          %p435 = pneg %p74
        $region14: #{vit_analyzer_forward.1} parent=11 // pred_check_branch
          %437 = sbr.rel (%p435) target = $region16
        $region15: #{vit_analyzer_forward.1} parent=11 // pred_region
          _
        $region16: #{vit_analyzer_forward.1} parent=11 // pred_fallthru
          _
        // Predicated region
        $region17: #{vit_analyzer_forward.1} parent=11 // pred_check
          %p438 = pneg %p95
        $region18: #{vit_analyzer_forward.1} parent=11 // pred_check_branch
          %440 = sbr.rel (%p438) target = $region20
        $region19: #{vit_analyzer_forward.1} parent=11 // pred_region
          _
        $region20: #{vit_analyzer_forward.1} parent=11 // pred_fallthru
          _
        // Predicated region
        $region21: #{vit_analyzer_forward.1} parent=11 // pred_check
          %p441 = pneg %p116
        $region22: #{vit_analyzer_forward.1} parent=11 // pred_check_branch
          %443 = sbr.rel (%p441) target = $region24
        $region23: #{vit_analyzer_forward.1} parent=11 // pred_region
          _
        $region24: #{vit_analyzer_forward.1} parent=11 // pred_fallthru
          _
        // Predicated region
        $region25: #{vit_analyzer_forward.1} parent=11 // pred_check
          %p444 = pneg %p137
        $region26: #{vit_analyzer_forward.1} parent=11 // pred_check_branch
          %446 = sbr.rel (%p444) target = $region28
        $region27: #{vit_analyzer_forward.1} parent=11 // pred_region
          _
        $region28: #{vit_analyzer_forward.1} parent=11 // pred_fallthru
          _
        // Predicated region
        $region29: #{vit_analyzer_forward.1} parent=11 // pred_check
          %p447 = pneg %p158
        $region30: #{vit_analyzer_forward.1} parent=11 // pred_check_branch
          %449 = sbr.rel (%p447) target = $region32
        $region31: #{vit_analyzer_forward.1} parent=11 // pred_region
          _
        $region32: #{vit_analyzer_forward.1} parent=11 // pred_fallthru
          _
        // Predicated region
        $region33: #{vit_analyzer_forward.1} parent=11 // pred_check
          %p450 = pneg %p179
        $region34: #{vit_analyzer_forward.1} parent=11 // pred_check_branch
          %452 = sbr.rel (%p450) target = $region36
        $region35: #{vit_analyzer_forward.1} parent=11 // pred_region
          _
        $region36: #{vit_analyzer_forward.1} parent=11 // pred_fallthru
          _
        // Predicated region
        $region37: #{vit_analyzer_forward.1} parent=11 // pred_check
          %p453 = pneg %p200
        $region38: #{vit_analyzer_forward.1} parent=11 // pred_check_branch
          %455 = sbr.rel (%p453) target = $region40
        $region39: #{vit_analyzer_forward.1} parent=11 // pred_region
          _
        $region40: #{vit_analyzer_forward.1} parent=11 // pred_fallthru
          _
        // Predicated region
        $region41: #{vit_analyzer_forward.1} parent=11 // pred_check
          %p456 = pneg %p221
        $region42: #{vit_analyzer_forward.1} parent=11 // pred_check_branch
          %458 = sbr.rel (%p456) target = $region44
        $region43: #{vit_analyzer_forward.1} parent=11 // pred_region
          _
        $region44: #{vit_analyzer_forward.1} parent=11 // pred_fallthru
          _
        // Predicated region
        $region45: #{vit_analyzer_forward.1} parent=11 // pred_check
          %p459 = pneg %p242
        $region46: #{vit_analyzer_forward.1} parent=11 // pred_check_branch
          %461 = sbr.rel (%p459) target = $region48
        $region47: #{vit_analyzer_forward.1} parent=11 // pred_region
          _
        $region48: #{vit_analyzer_forward.1} parent=11 // pred_fallthru
          _
        // Predicated region
        $region49: #{vit_analyzer_forward.1} parent=11 // pred_check
          %p462 = pneg %p263
        $region50: #{vit_analyzer_forward.1} parent=11 // pred_check_branch
          %464 = sbr.rel (%p462) target = $region52
        $region51: #{vit_analyzer_forward.1} parent=11 // pred_region
          _
        $region52: #{vit_analyzer_forward.1} parent=11 // pred_fallthru
          _
        // Predicated region
        $region53: #{vit_analyzer_forward.1} parent=11 // pred_check
          %p465 = pneg %p284
        $region54: #{vit_analyzer_forward.1} parent=11 // pred_check_branch
          %467 = sbr.rel (%p465) target = $region56
        $region55: #{vit_analyzer_forward.1} parent=11 // pred_region
          _
        $region56: #{vit_analyzer_forward.1} parent=11 // pred_fallthru
          _
        // Predicated region
        $region57: #{vit_analyzer_forward.1} parent=11 // pred_check
          %p468 = pneg %p305
        $region58: #{vit_analyzer_forward.1} parent=11 // pred_check_branch
          %470 = sbr.rel (%p468) target = $region60
        $region59: #{vit_analyzer_forward.1} parent=11 // pred_region
          _
        $region60: #{vit_analyzer_forward.1} parent=11 // pred_fallthru
          _
        // Predicated region
        $region61: #{vit_analyzer_forward.1} parent=11 // pred_check
          %p471 = pneg %p326
        $region62: #{vit_analyzer_forward.1} parent=11 // pred_check_branch
          %473 = sbr.rel (%p471) target = $region64
        $region63: #{vit_analyzer_forward.1} parent=11 // pred_region
          _
        $region64: #{vit_analyzer_forward.1} parent=11 // pred_fallthru
          _
        // Predicated region
        $region65: #{vit_analyzer_forward.1} parent=11 // pred_check
          %p474 = pneg %p347
        $region66: #{vit_analyzer_forward.1} parent=11 // pred_check_branch
          %476 = sbr.rel (%p474) target = $region68
        $region67: #{vit_analyzer_forward.1} parent=11 // pred_region
          _
        $region68: #{vit_analyzer_forward.1} parent=11 // pred_fallthru
          _
        // Predicated region
        $region69: #{vit_analyzer_forward.1} parent=11 // pred_check
          %p477 = pneg %p368
        $region70: #{vit_analyzer_forward.1} parent=11 // pred_check_branch
          %479 = sbr.rel (%p477) target = $region72
        $region71: #{vit_analyzer_forward.1} parent=11 // pred_region
          _
        $region72: #{vit_analyzer_forward.1} parent=11 // pred_fallthru
          _
      $region12: #{vit_analyzer_forward.1} parent=5 // pred_fallthru
        _
      %p480 = scmp.lt.s32.totalorder %s27, 2
      // Predicated region
      $region73: #{vit_analyzer_forward.1} parent=5 // pred_check
        %p481 = pneg %p480
      $region74: #{vit_analyzer_forward.1} parent=5 // pred_check_branch
        %483 = sbr.rel (%p481) target = $region76
      $region75: #{vit_analyzer_forward.1} parent=5 // pred_region
        // Predicated region
        $region77: #{vit_analyzer_forward.1} parent=75 // pred_check
          %p484 = pneg %p47
        $region78: #{vit_analyzer_forward.1} parent=75 // pred_check_branch
          %486 = sbr.rel (%p484) target = $region80
        $region79: #{vit_analyzer_forward.1} parent=75 // pred_region
          %p487 = scmp.lt.s32.totalorder %s27, 1
          %s488 = scalar_select %p487, %s27, 1
          %s489 = smul.addr %s488, 3
          %s490 = smul.addr %s489, 8
          %s491 = scalar_lea.vmem %s0, %s490
        $region80: #{vit_analyzer_forward.1} parent=75 // pred_fallthru
          _
      $region76: #{vit_analyzer_forward.1} parent=5 // pred_fallthru
        _
      %p492 = scmp.le.s32.totalorder 1, %s27
      %p493 = scmp.lt.s32.totalorder %s27, 3
      %p494 = pnand %p492, %p493
      %p495 = pneg %p494
      // Predicated region
      $region81: #{vit_analyzer_forward.1} parent=5 // pred_check
        _
      $region82: #{vit_analyzer_forward.1} parent=5 // pred_check_branch
        %497 = sbr.rel (%p494) target = $region84
      $region83: #{vit_analyzer_forward.1} parent=5 // pred_region
        %s498 = ssub.s32 %s27, 1
        %p499 = scmp.lt.s32.totalorder %s32, 1
        %s500 = scalar_select %p499, %s32, 1
        %s501 = smul.addr %s500, 3
        %s502 = smul.addr %s501, 8
        %s503 = scalar_lea.vmem %s0, %s502
        %p504 = pneg %p53
        %p505 = pneg %p50
        %p506 = pneg %p74
        %p507 = pneg %p71
        %p508 = pneg %p95
        %p509 = pneg %p92
        %p510 = pneg %p116
        %p511 = pneg %p113
        %p512 = pneg %p137
        %p513 = pneg %p134
        %p514 = pneg %p158
        %p515 = pneg %p155
        %p516 = pneg %p179
        %p517 = pneg %p176
        %p518 = pneg %p200
        %p519 = pneg %p197
        %p520 = pneg %p221
        %p521 = pneg %p218
        %p522 = pneg %p242
        %p523 = pneg %p239
        %p524 = pneg %p263
        %p525 = pneg %p260
        %p526 = pneg %p284
        %p527 = pneg %p281
        %p528 = pneg %p305
        %p529 = pneg %p302
        %p530 = pneg %p326
        %p531 = pneg %p323
        %p532 = pneg %p347
        %p533 = pneg %p344
        %p534 = pneg %p368
        %p535 = pneg %p365
        %p536 = pneg %p394
        %p537 = pneg %p391
        %s538 = sand.u32 %s381, 1
        %s539 = scalar_lea.sflag [#allocation3], %s538
        %s540 = sand.u32 %s381, 1
        %s541 = scalar_lea.vmem [#allocation2], %s540
        %p542 = pneg %p420
        %p543 = pneg %p417
        %p544 = scmp.lt.s32.totalorder %s32, 1
        %s545 = scalar_select %p544, %s32, 1
        %s546 = scalar_lea.vmem %s17, %s545
        %p547 = scmp.lt.s32.totalorder %s32, 1
        %s548 = scalar_select %p547, %s32, 1
        %s549 = smul.addr %s548, 3
        %s550 = smul.addr %s549, 8
        %s551 = scalar_lea.vmem %s0, %s550
        %p552 = scmp.lt.s32.totalorder %s32, 1
        %s553 = scalar_select %p552, %s32, 1
        %s554 = scalar_lea.vmem %s17, %s553
        %v556 = vld [vmem:[%s551] sm:$0xff]
        %v557 = vld [vmem:[%s551 + $0x8] sm:$0xff]
        %v558 = vld [vmem:[%s551 + $0x10] sm:$0x1]
        loop: start=0, step=1, limit=6
        $region85: #{vit_analyzer_forward.1} parent=83 // loop_pre_header
          _
        $region86: #{vit_analyzer_forward.1} parent=83 // loop_header
          %s560 = sphi 0, %s564
          %p561 = scmp.ge.s32.totalorder %s560, 6
          %v565 = vphi %v556, %v10385
          %v566 = vphi %v557, %v10386
          %v567 = vphi %v558, %v10387
          %v568 = vphi 0.1, %v10112
        $region87: #{vit_analyzer_forward.1} parent=83 // loop_header_branch
          %563 = sbr.rel (%p561) target = $region91
        $region88: #{vit_analyzer_forward.1} parent=83 // loop_body
          %s569 = scalar_lea.vmem %s1, %s560
          %v570 = vld [vmem:[%s569] sm:$0x1]
          %s571 = scalar_lea.vmem %s2, %s560
          %v572 = vld [vmem:[%s571] sm:$0x1]
          %vm573 = vcmask 261120
          %v574 = vsel %vm573, %v565, 0.0
          %575 = vadd.xlane.f32.xlu0 %v574
          %v576 = vpop.xlane.xlu0 %575
          %v577 = vsel %vm573, %v566, 0.0
          %578 = vadd.xlane.f32.xlu0 %v577
          %v579 = vpop.xlane.xlu0 %578
          %vm580 = vcmask 253952
          %v581 = vsel %vm580, %v567, 0.0
          %582 = vadd.xlane.f32.xlu0 %v581
          %v583 = vpop.xlane.xlu0 %582
          %v584 = vrcp.pop 32.0
          %v585 = vmul.f32 %v576, %v584
          %v586 = vmul.f32 %v579, %v584
          %v587 = vmul.f32 %v583, %v584
          %v588 = vsub.f32 %v565, %v585
          %v589 = vsub.f32 %v566, %v586
          %v590 = vsub.f32 %v567, %v587
          %v591 = vmul.f32 %v588, %v588
          %v592 = vmul.f32 %v589, %v589
          %v593 = vmul.f32 %v590, %v590
          %v594 = vsel %vm573, %v591, 0.0
          %595 = vadd.xlane.f32.xlu0 %v594
          %v596 = vpop.xlane.xlu0 %595
          %v597 = vsel %vm573, %v592, 0.0
          %598 = vadd.xlane.f32.xlu0 %v597
          %v599 = vpop.xlane.xlu0 %598
          %v600 = vsel %vm580, %v593, 0.0
          %601 = vadd.xlane.f32.xlu0 %v600
          %v602 = vpop.xlane.xlu0 %601
          %v603 = vmul.f32 %v596, %v584
          %v604 = vmul.f32 %v599, %v584
          %v605 = vmul.f32 %v602, %v584
          %v606 = vadd.f32 %v603, 1e-05
          %v607 = vadd.f32 %v604, 1e-05
          %v608 = vadd.f32 %v605, 1e-05
          %v609 = vrsqrt.pop %v606
          %v610 = vrsqrt.pop %v607
          %v611 = vrsqrt.pop %v608
          %v612 = vmul.f32 %v588, %v609
          %v613 = vmul.f32 %v589, %v610
          %v614 = vmul.f32 %v590, %v611
          %v616 = vlaneseq
          %v617 = vshrl.u32 %v616, 7
          %v618 = vsub.s32 0, %v617
          %v619 = vrot.slane %v570, %v618
          %v621 = vmul.f32 %v612, %v619
          %v622 = vmul.f32 %v613, %v619
          %v623 = vmul.f32 %v614, %v619
          %v625 = vlaneseq
          %v626 = vshrl.u32 %v625, 7
          %v627 = vsub.s32 0, %v626
          %v628 = vrot.slane %v572, %v627
          %v630 = vadd.f32 %v621, %v628
          %v631 = vadd.f32 %v622, %v628
          %v632 = vadd.f32 %v623, %v628
          %v633 = vpack.c.bf16 %v631, %v630
          %v634 = vpack.c.bf16 %v632, %v632
          %s635 = smul.u32 %s560, 8
          %s636 = smul.addr %s635, 4
          %s637 = scalar_lea.vmem %s3, %s636
          %v638 = vld [vmem:[%s637] sm:$0xff]
          %v639 = vld [vmem:[%s637 + $0x8] sm:$0xff]
          %v640 = vld [vmem:[%s637 + $0x10] sm:$0xff]
          %v641 = vld [vmem:[%s637 + $0x18] sm:$0xff]
          %v646 = vunpack.c.l.b16 %v638
          %v647 = vunpack.c.h.b16 %v638
          %v648 = vunpack.c.l.b16 %v639
          %v649 = vunpack.c.h.b16 %v639
          %v650 = vunpack.c.l.b16 %v640
          %v651 = vunpack.c.h.b16 %v640
          %v652 = vunpack.c.l.b16 %v641
          %v653 = vunpack.c.h.b16 %v641
          %v654 = vpack.c.b16 %v648, %v646
          %v655 = vpack.c.b16 %v649, %v647
          %v656 = vpack.c.b16 %v652, %v650
          %v657 = vpack.c.b16 %v653, %v651
          %v663 = vsel %vm573, %v633, 0
          %v666 = vsel %vm573, %v634, 0
          %668 = vmatprep.subr.bf16.mxu0 0
          %669 = vmatpush1.bf16.msra.mxu0 0
          %670 = vmatprep.subr.bf16.mxu0 0
          %671 = vmatpush1.bf16.msra.mxu0 0
          %672 = vmatprep.subr.bf16.mxu0 0
          %673 = vmatpush1.bf16.msra.mxu0 0
          %674 = vmatprep.subr.bf16.mxu0 0
          %675 = vmatpush1.bf16.msra.mxu0 0
          %676 = vmatprep.subr.bf16.mxu0 0
          %677 = vmatpush1.bf16.msra.mxu0 0
          %678 = vmatprep.subr.bf16.mxu0 0
          %679 = vmatpush1.bf16.msra.mxu0 0
          %680 = vmatprep.subr.bf16.mxu0 %v657
          %681 = vmatpush1.bf16.msra.mxu0 %v656
          %682 = vmatprep.subr.bf16.mxu0 %v655
          %683 = vmatpush1.bf16.msra.mxu0 %v654
          %684 = vmatprep.subr.bf16.mxu0 0
          %685 = vmatpush2.bf16.msra.mxu0 0
          %686 = vmatprep.subr.bf16.mxu0 0
          %687 = vmatpush2.bf16.msra.mxu0 0
          %688 = vmatprep.subr.bf16.mxu0 0
          %689 = vmatpush2.bf16.msra.mxu0 0
          %690 = vmatprep.subr.bf16.mxu0 0
          %691 = vmatpush2.bf16.msra.mxu0 0
          %692 = vmatprep.subr.bf16.mxu0 0
          %693 = vmatpush2.bf16.msra.mxu0 0
          %694 = vmatprep.subr.bf16.mxu0 0
          %695 = vmatpush2.bf16.msra.mxu0 0
          %696 = vmatprep.subr.bf16.mxu0 0
          %697 = vmatpush2.bf16.msra.mxu0 0
          %698 = vmatprep.subr.bf16.mxu0 0
          %699 = vmatpush2.bf16.msra.mxu0 0
          %700 = vmatprep.mubr.bf16.mxu0 0
          %701 = vmatmul.mubr.bf16.gmra.mxu0 %v663
          %v702 = vpop.f32.mrf.mxu0
          %v703 = vadd.f32 0.0, %v702
          %v704 = vpop.f32.mrf.mxu0
          %v705 = vadd.f32 0.0, %v704
          %v706 = vpop.f32.mrf.mxu0
          %v707 = vadd.f32 0.0, %v706
          %v708 = vpop.f32.mrf.mxu0
          %v709 = vadd.f32 0.0, %v708
          %710 = vmatprep.mubr.bf16.mxu0 0
          %711 = vmatmul.mubr.bf16.gmra.mxu0 %v666
          %v712 = vpop.f32.mrf.mxu0
          %v713 = vadd.f32 0.0, %v712
          %v714 = vpop.f32.mrf.mxu0
          %v715 = vadd.f32 0.0, %v714
          %v716 = vpop.f32.mrf.mxu0
          %v717 = vpop.f32.mrf.mxu0
          %718 = vdwg.mxu0
          %722 = vrot.lane.b32.xlu0 %v703, 120
          %v723 = vpop.permute.xlu0 %722
          %724 = vrot.lane.b32.xlu0 %v707, 120
          %v725 = vpop.permute.xlu0 %724
          %726 = vrot.lane.b32.xlu0 %v713, 120
          %v727 = vpop.permute.xlu0 %726
          %731 = vrot.lane.b32.xlu0 %v703, 112
          %v732 = vpop.permute.xlu0 %731
          %733 = vrot.lane.b32.xlu0 %v707, 112
          %v734 = vpop.permute.xlu0 %733
          %735 = vrot.lane.b32.xlu0 %v713, 112
          %v736 = vpop.permute.xlu0 %735
          %740 = vrot.lane.b32.xlu0 %v703, 104
          %v741 = vpop.permute.xlu0 %740
          %742 = vrot.lane.b32.xlu0 %v707, 104
          %v743 = vpop.permute.xlu0 %742
          %744 = vrot.lane.b32.xlu0 %v713, 104
          %v745 = vpop.permute.xlu0 %744
          %749 = vrot.lane.b32.xlu0 %v703, 96
          %v750 = vpop.permute.xlu0 %749
          %751 = vrot.lane.b32.xlu0 %v707, 96
          %v752 = vpop.permute.xlu0 %751
          %753 = vrot.lane.b32.xlu0 %v713, 96
          %v754 = vpop.permute.xlu0 %753
          %758 = vrot.lane.b32.xlu0 %v703, 88
          %v759 = vpop.permute.xlu0 %758
          %760 = vrot.lane.b32.xlu0 %v707, 88
          %v761 = vpop.permute.xlu0 %760
          %762 = vrot.lane.b32.xlu0 %v713, 88
          %v763 = vpop.permute.xlu0 %762
          %767 = vrot.lane.b32.xlu0 %v703, 80
          %v768 = vpop.permute.xlu0 %767
          %769 = vrot.lane.b32.xlu0 %v707, 80
          %v770 = vpop.permute.xlu0 %769
          %771 = vrot.lane.b32.xlu0 %v713, 80
          %v772 = vpop.permute.xlu0 %771
          %776 = vrot.lane.b32.xlu0 %v703, 72
          %v777 = vpop.permute.xlu0 %776
          %778 = vrot.lane.b32.xlu0 %v707, 72
          %v779 = vpop.permute.xlu0 %778
          %780 = vrot.lane.b32.xlu0 %v713, 72
          %v781 = vpop.permute.xlu0 %780
          %785 = vrot.lane.b32.xlu0 %v703, 64
          %v786 = vpop.permute.xlu0 %785
          %787 = vrot.lane.b32.xlu0 %v707, 64
          %v788 = vpop.permute.xlu0 %787
          %789 = vrot.lane.b32.xlu0 %v713, 64
          %v790 = vpop.permute.xlu0 %789
          %794 = vrot.lane.b32.xlu0 %v703, 56
          %v795 = vpop.permute.xlu0 %794
          %796 = vrot.lane.b32.xlu0 %v707, 56
          %v797 = vpop.permute.xlu0 %796
          %798 = vrot.lane.b32.xlu0 %v713, 56
          %v799 = vpop.permute.xlu0 %798
          %803 = vrot.lane.b32.xlu0 %v703, 48
          %v804 = vpop.permute.xlu0 %803
          %805 = vrot.lane.b32.xlu0 %v707, 48
          %v806 = vpop.permute.xlu0 %805
          %807 = vrot.lane.b32.xlu0 %v713, 48
          %v808 = vpop.permute.xlu0 %807
          %812 = vrot.lane.b32.xlu0 %v703, 40
          %v813 = vpop.permute.xlu0 %812
          %814 = vrot.lane.b32.xlu0 %v707, 40
          %v815 = vpop.permute.xlu0 %814
          %816 = vrot.lane.b32.xlu0 %v713, 40
          %v817 = vpop.permute.xlu0 %816
          %821 = vrot.lane.b32.xlu0 %v703, 32
          %v822 = vpop.permute.xlu0 %821
          %823 = vrot.lane.b32.xlu0 %v707, 32
          %v824 = vpop.permute.xlu0 %823
          %825 = vrot.lane.b32.xlu0 %v713, 32
          %v826 = vpop.permute.xlu0 %825
          %830 = vrot.lane.b32.xlu0 %v703, 24
          %v831 = vpop.permute.xlu0 %830
          %832 = vrot.lane.b32.xlu0 %v707, 24
          %v833 = vpop.permute.xlu0 %832
          %834 = vrot.lane.b32.xlu0 %v713, 24
          %v835 = vpop.permute.xlu0 %834
          %839 = vrot.lane.b32.xlu0 %v703, 16
          %v840 = vpop.permute.xlu0 %839
          %841 = vrot.lane.b32.xlu0 %v707, 16
          %v842 = vpop.permute.xlu0 %841
          %843 = vrot.lane.b32.xlu0 %v713, 16
          %v844 = vpop.permute.xlu0 %843
          %848 = vrot.lane.b32.xlu0 %v703, 8
          %v849 = vpop.permute.xlu0 %848
          %850 = vrot.lane.b32.xlu0 %v707, 8
          %v851 = vpop.permute.xlu0 %850
          %852 = vrot.lane.b32.xlu0 %v713, 8
          %v853 = vpop.permute.xlu0 %852
          %860 = vrot.lane.b32.xlu0 %v705, 120
          %v861 = vpop.permute.xlu0 %860
          %862 = vrot.lane.b32.xlu0 %v709, 120
          %v863 = vpop.permute.xlu0 %862
          %864 = vrot.lane.b32.xlu0 %v715, 120
          %v865 = vpop.permute.xlu0 %864
          %869 = vrot.lane.b32.xlu0 %v705, 112
          %v870 = vpop.permute.xlu0 %869
          %871 = vrot.lane.b32.xlu0 %v709, 112
          %v872 = vpop.permute.xlu0 %871
          %873 = vrot.lane.b32.xlu0 %v715, 112
          %v874 = vpop.permute.xlu0 %873
          %878 = vrot.lane.b32.xlu0 %v705, 104
          %v879 = vpop.permute.xlu0 %878
          %880 = vrot.lane.b32.xlu0 %v709, 104
          %v881 = vpop.permute.xlu0 %880
          %882 = vrot.lane.b32.xlu0 %v715, 104
          %v883 = vpop.permute.xlu0 %882
          %887 = vrot.lane.b32.xlu0 %v705, 96
          %v888 = vpop.permute.xlu0 %887
          %889 = vrot.lane.b32.xlu0 %v709, 96
          %v890 = vpop.permute.xlu0 %889
          %891 = vrot.lane.b32.xlu0 %v715, 96
          %v892 = vpop.permute.xlu0 %891
          %896 = vrot.lane.b32.xlu0 %v705, 88
          %v897 = vpop.permute.xlu0 %896
          %898 = vrot.lane.b32.xlu0 %v709, 88
          %v899 = vpop.permute.xlu0 %898
          %900 = vrot.lane.b32.xlu0 %v715, 88
          %v901 = vpop.permute.xlu0 %900
          %905 = vrot.lane.b32.xlu0 %v705, 80
          %v906 = vpop.permute.xlu0 %905
          %907 = vrot.lane.b32.xlu0 %v709, 80
          %v908 = vpop.permute.xlu0 %907
          %909 = vrot.lane.b32.xlu0 %v715, 80
          %v910 = vpop.permute.xlu0 %909
          %914 = vrot.lane.b32.xlu0 %v705, 72
          %v915 = vpop.permute.xlu0 %914
          %916 = vrot.lane.b32.xlu0 %v709, 72
          %v917 = vpop.permute.xlu0 %916
          %918 = vrot.lane.b32.xlu0 %v715, 72
          %v919 = vpop.permute.xlu0 %918
          %v923 = vcombine.low %v703, %v732
          %v924 = vcombine.high %v703, %v732
          %v926 = vunpack.c.l.s4 1983009808
          %v927 = vunpack.c.0.s8 %v926
          %v928 = vlaneseq
          %v929 = vshrl.u32 %v928, 7
          %v930 = vsub.s32 %v927, %v929
          %v931 = vrot.slane %v923, %v930
          %v933 = vunpack.c.l.s4 1983009808
          %v934 = vunpack.c.0.s8 %v933
          %v935 = vlaneseq
          %v936 = vshrl.u32 %v935, 7
          %v937 = vsub.s32 %v934, %v936
          %v938 = vrot.slane %v924, %v937
          %v939 = vcombine.low %v723, %v741
          %v940 = vcombine.high %v723, %v741
          %v942 = vunpack.c.l.s4 1983009808
          %v943 = vunpack.c.0.s8 %v942
          %v944 = vlaneseq
          %v945 = vshrl.u32 %v944, 7
          %v946 = vsub.s32 %v943, %v945
          %v947 = vrot.slane %v939, %v946
          %v949 = vunpack.c.l.s4 1983009808
          %v950 = vunpack.c.0.s8 %v949
          %v951 = vlaneseq
          %v952 = vshrl.u32 %v951, 7
          %v953 = vsub.s32 %v950, %v952
          %v954 = vrot.slane %v940, %v953
          %v955 = vcombine.low %v750, %v768
          %v956 = vcombine.high %v750, %v768
          %v958 = vunpack.c.l.s4 1983009808
          %v959 = vunpack.c.0.s8 %v958
          %v960 = vlaneseq
          %v961 = vshrl.u32 %v960, 7
          %v962 = vsub.s32 %v959, %v961
          %v963 = vrot.slane %v955, %v962
          %v965 = vunpack.c.l.s4 1983009808
          %v966 = vunpack.c.0.s8 %v965
          %v967 = vlaneseq
          %v968 = vshrl.u32 %v967, 7
          %v969 = vsub.s32 %v966, %v968
          %v970 = vrot.slane %v956, %v969
          %v971 = vcombine.low %v759, %v777
          %v972 = vcombine.high %v759, %v777
          %v974 = vunpack.c.l.s4 1983009808
          %v975 = vunpack.c.0.s8 %v974
          %v976 = vlaneseq
          %v977 = vshrl.u32 %v976, 7
          %v978 = vsub.s32 %v975, %v977
          %v979 = vrot.slane %v971, %v978
          %v981 = vunpack.c.l.s4 1983009808
          %v982 = vunpack.c.0.s8 %v981
          %v983 = vlaneseq
          %v984 = vshrl.u32 %v983, 7
          %v985 = vsub.s32 %v982, %v984
          %v986 = vrot.slane %v972, %v985
          %v987 = vcombine.low %v931, %v947
          %v988 = vcombine.high %v931, %v947
          %v990 = vunpack.c.l.s4 1934713408
          %v991 = vunpack.c.0.s8 %v990
          %v992 = vlaneseq
          %v993 = vshrl.u32 %v992, 7
          %v994 = vsub.s32 %v991, %v993
          %v995 = vrot.slane %v987, %v994
          %v997 = vunpack.c.l.s4 1934713408
          %v998 = vunpack.c.0.s8 %v997
          %v999 = vlaneseq
          %v1000 = vshrl.u32 %v999, 7
          %v1001 = vsub.s32 %v998, %v1000
          %v1002 = vrot.slane %v988, %v1001
          %v1003 = vcombine.low %v938, %v954
          %v1004 = vcombine.high %v938, %v954
          %v1006 = vunpack.c.l.s4 1934713408
          %v1007 = vunpack.c.0.s8 %v1006
          %v1008 = vlaneseq
          %v1009 = vshrl.u32 %v1008, 7
          %v1010 = vsub.s32 %v1007, %v1009
          %v1011 = vrot.slane %v1003, %v1010
          %v1013 = vunpack.c.l.s4 1934713408
          %v1014 = vunpack.c.0.s8 %v1013
          %v1015 = vlaneseq
          %v1016 = vshrl.u32 %v1015, 7
          %v1017 = vsub.s32 %v1014, %v1016
          %v1018 = vrot.slane %v1004, %v1017
          %v1019 = vcombine.low %v963, %v979
          %v1020 = vcombine.high %v963, %v979
          %v1022 = vunpack.c.l.s4 1934713408
          %v1023 = vunpack.c.0.s8 %v1022
          %v1024 = vlaneseq
          %v1025 = vshrl.u32 %v1024, 7
          %v1026 = vsub.s32 %v1023, %v1025
          %v1027 = vrot.slane %v1019, %v1026
          %v1029 = vunpack.c.l.s4 1934713408
          %v1030 = vunpack.c.0.s8 %v1029
          %v1031 = vlaneseq
          %v1032 = vshrl.u32 %v1031, 7
          %v1033 = vsub.s32 %v1030, %v1032
          %v1034 = vrot.slane %v1020, %v1033
          %v1035 = vcombine.low %v970, %v986
          %v1036 = vcombine.high %v970, %v986
          %v1038 = vunpack.c.l.s4 1934713408
          %v1039 = vunpack.c.0.s8 %v1038
          %v1040 = vlaneseq
          %v1041 = vshrl.u32 %v1040, 7
          %v1042 = vsub.s32 %v1039, %v1041
          %v1043 = vrot.slane %v1035, %v1042
          %v1045 = vunpack.c.l.s4 1934713408
          %v1046 = vunpack.c.0.s8 %v1045
          %v1047 = vlaneseq
          %v1048 = vshrl.u32 %v1047, 7
          %v1049 = vsub.s32 %v1046, %v1048
          %v1050 = vrot.slane %v1036, %v1049
          %v1051 = vcombine.low %v995, %v1027
          %v1052 = vcombine.high %v995, %v1027
          %v1053 = vcombine.low %v1002, %v1034
          %v1054 = vcombine.high %v1002, %v1034
          %v1055 = vcombine.low %v1011, %v1043
          %v1056 = vcombine.high %v1011, %v1043
          %v1057 = vcombine.low %v1018, %v1050
          %v1058 = vcombine.high %v1018, %v1050
          %v1059 = vcombine.low %v786, %v804
          %v1060 = vcombine.high %v786, %v804
          %v1062 = vunpack.c.l.s4 1983009808
          %v1063 = vunpack.c.0.s8 %v1062
          %v1064 = vlaneseq
          %v1065 = vshrl.u32 %v1064, 7
          %v1066 = vsub.s32 %v1063, %v1065
          %v1067 = vrot.slane %v1059, %v1066
          %v1069 = vunpack.c.l.s4 1983009808
          %v1070 = vunpack.c.0.s8 %v1069
          %v1071 = vlaneseq
          %v1072 = vshrl.u32 %v1071, 7
          %v1073 = vsub.s32 %v1070, %v1072
          %v1074 = vrot.slane %v1060, %v1073
          %v1075 = vcombine.low %v795, %v813
          %v1076 = vcombine.high %v795, %v813
          %v1078 = vunpack.c.l.s4 1983009808
          %v1079 = vunpack.c.0.s8 %v1078
          %v1080 = vlaneseq
          %v1081 = vshrl.u32 %v1080, 7
          %v1082 = vsub.s32 %v1079, %v1081
          %v1083 = vrot.slane %v1075, %v1082
          %v1085 = vunpack.c.l.s4 1983009808
          %v1086 = vunpack.c.0.s8 %v1085
          %v1087 = vlaneseq
          %v1088 = vshrl.u32 %v1087, 7
          %v1089 = vsub.s32 %v1086, %v1088
          %v1090 = vrot.slane %v1076, %v1089
          %v1091 = vcombine.low %v822, %v840
          %v1092 = vcombine.high %v822, %v840
          %v1094 = vunpack.c.l.s4 1983009808
          %v1095 = vunpack.c.0.s8 %v1094
          %v1096 = vlaneseq
          %v1097 = vshrl.u32 %v1096, 7
          %v1098 = vsub.s32 %v1095, %v1097
          %v1099 = vrot.slane %v1091, %v1098
          %v1101 = vunpack.c.l.s4 1983009808
          %v1102 = vunpack.c.0.s8 %v1101
          %v1103 = vlaneseq
          %v1104 = vshrl.u32 %v1103, 7
          %v1105 = vsub.s32 %v1102, %v1104
          %v1106 = vrot.slane %v1092, %v1105
          %v1107 = vcombine.low %v831, %v849
          %v1108 = vcombine.high %v831, %v849
          %v1110 = vunpack.c.l.s4 1983009808
          %v1111 = vunpack.c.0.s8 %v1110
          %v1112 = vlaneseq
          %v1113 = vshrl.u32 %v1112, 7
          %v1114 = vsub.s32 %v1111, %v1113
          %v1115 = vrot.slane %v1107, %v1114
          %v1117 = vunpack.c.l.s4 1983009808
          %v1118 = vunpack.c.0.s8 %v1117
          %v1119 = vlaneseq
          %v1120 = vshrl.u32 %v1119, 7
          %v1121 = vsub.s32 %v1118, %v1120
          %v1122 = vrot.slane %v1108, %v1121
          %v1123 = vcombine.low %v1067, %v1083
          %v1124 = vcombine.high %v1067, %v1083
          %v1126 = vunpack.c.l.s4 1934713408
          %v1127 = vunpack.c.0.s8 %v1126
          %v1128 = vlaneseq
          %v1129 = vshrl.u32 %v1128, 7
          %v1130 = vsub.s32 %v1127, %v1129
          %v1131 = vrot.slane %v1123, %v1130
          %v1133 = vunpack.c.l.s4 1934713408
          %v1134 = vunpack.c.0.s8 %v1133
          %v1135 = vlaneseq
          %v1136 = vshrl.u32 %v1135, 7
          %v1137 = vsub.s32 %v1134, %v1136
          %v1138 = vrot.slane %v1124, %v1137
          %v1139 = vcombine.low %v1074, %v1090
          %v1140 = vcombine.high %v1074, %v1090
          %v1142 = vunpack.c.l.s4 1934713408
          %v1143 = vunpack.c.0.s8 %v1142
          %v1144 = vlaneseq
          %v1145 = vshrl.u32 %v1144, 7
          %v1146 = vsub.s32 %v1143, %v1145
          %v1147 = vrot.slane %v1139, %v1146
          %v1149 = vunpack.c.l.s4 1934713408
          %v1150 = vunpack.c.0.s8 %v1149
          %v1151 = vlaneseq
          %v1152 = vshrl.u32 %v1151, 7
          %v1153 = vsub.s32 %v1150, %v1152
          %v1154 = vrot.slane %v1140, %v1153
          %v1155 = vcombine.low %v1099, %v1115
          %v1156 = vcombine.high %v1099, %v1115
          %v1158 = vunpack.c.l.s4 1934713408
          %v1159 = vunpack.c.0.s8 %v1158
          %v1160 = vlaneseq
          %v1161 = vshrl.u32 %v1160, 7
          %v1162 = vsub.s32 %v1159, %v1161
          %v1163 = vrot.slane %v1155, %v1162
          %v1165 = vunpack.c.l.s4 1934713408
          %v1166 = vunpack.c.0.s8 %v1165
          %v1167 = vlaneseq
          %v1168 = vshrl.u32 %v1167, 7
          %v1169 = vsub.s32 %v1166, %v1168
          %v1170 = vrot.slane %v1156, %v1169
          %v1171 = vcombine.low %v1106, %v1122
          %v1172 = vcombine.high %v1106, %v1122
          %v1174 = vunpack.c.l.s4 1934713408
          %v1175 = vunpack.c.0.s8 %v1174
          %v1176 = vlaneseq
          %v1177 = vshrl.u32 %v1176, 7
          %v1178 = vsub.s32 %v1175, %v1177
          %v1179 = vrot.slane %v1171, %v1178
          %v1181 = vunpack.c.l.s4 1934713408
          %v1182 = vunpack.c.0.s8 %v1181
          %v1183 = vlaneseq
          %v1184 = vshrl.u32 %v1183, 7
          %v1185 = vsub.s32 %v1182, %v1184
          %v1186 = vrot.slane %v1172, %v1185
          %v1187 = vcombine.low %v1131, %v1163
          %v1188 = vcombine.high %v1131, %v1163
          %v1189 = vcombine.low %v1138, %v1170
          %v1190 = vcombine.high %v1138, %v1170
          %v1191 = vcombine.low %v1147, %v1179
          %v1192 = vcombine.high %v1147, %v1179
          %v1193 = vcombine.low %v1154, %v1186
          %v1194 = vcombine.high %v1154, %v1186
          %v1195 = vcombine.low %v705, %v870
          %v1196 = vcombine.high %v705, %v870
          %v1198 = vunpack.c.l.s4 1983009808
          %v1199 = vunpack.c.0.s8 %v1198
          %v1200 = vlaneseq
          %v1201 = vshrl.u32 %v1200, 7
          %v1202 = vsub.s32 %v1199, %v1201
          %v1203 = vrot.slane %v1195, %v1202
          %v1205 = vunpack.c.l.s4 1983009808
          %v1206 = vunpack.c.0.s8 %v1205
          %v1207 = vlaneseq
          %v1208 = vshrl.u32 %v1207, 7
          %v1209 = vsub.s32 %v1206, %v1208
          %v1210 = vrot.slane %v1196, %v1209
          %v1211 = vcombine.low %v861, %v879
          %v1212 = vcombine.high %v861, %v879
          %v1214 = vunpack.c.l.s4 1983009808
          %v1215 = vunpack.c.0.s8 %v1214
          %v1216 = vlaneseq
          %v1217 = vshrl.u32 %v1216, 7
          %v1218 = vsub.s32 %v1215, %v1217
          %v1219 = vrot.slane %v1211, %v1218
          %v1221 = vunpack.c.l.s4 1983009808
          %v1222 = vunpack.c.0.s8 %v1221
          %v1223 = vlaneseq
          %v1224 = vshrl.u32 %v1223, 7
          %v1225 = vsub.s32 %v1222, %v1224
          %v1226 = vrot.slane %v1212, %v1225
          %v1227 = vcombine.low %v888, %v906
          %v1228 = vcombine.high %v888, %v906
          %v1230 = vunpack.c.l.s4 1983009808
          %v1231 = vunpack.c.0.s8 %v1230
          %v1232 = vlaneseq
          %v1233 = vshrl.u32 %v1232, 7
          %v1234 = vsub.s32 %v1231, %v1233
          %v1235 = vrot.slane %v1227, %v1234
          %v1237 = vunpack.c.l.s4 1983009808
          %v1238 = vunpack.c.0.s8 %v1237
          %v1239 = vlaneseq
          %v1240 = vshrl.u32 %v1239, 7
          %v1241 = vsub.s32 %v1238, %v1240
          %v1242 = vrot.slane %v1228, %v1241
          %v1243 = vcombine.low %v897, %v915
          %v1244 = vcombine.high %v897, %v915
          %v1246 = vunpack.c.l.s4 1983009808
          %v1247 = vunpack.c.0.s8 %v1246
          %v1248 = vlaneseq
          %v1249 = vshrl.u32 %v1248, 7
          %v1250 = vsub.s32 %v1247, %v1249
          %v1251 = vrot.slane %v1243, %v1250
          %v1253 = vunpack.c.l.s4 1983009808
          %v1254 = vunpack.c.0.s8 %v1253
          %v1255 = vlaneseq
          %v1256 = vshrl.u32 %v1255, 7
          %v1257 = vsub.s32 %v1254, %v1256
          %v1258 = vrot.slane %v1244, %v1257
          %v1259 = vcombine.low %v1203, %v1219
          %v1260 = vcombine.high %v1203, %v1219
          %v1262 = vunpack.c.l.s4 1934713408
          %v1263 = vunpack.c.0.s8 %v1262
          %v1264 = vlaneseq
          %v1265 = vshrl.u32 %v1264, 7
          %v1266 = vsub.s32 %v1263, %v1265
          %v1267 = vrot.slane %v1259, %v1266
          %v1269 = vunpack.c.l.s4 1934713408
          %v1270 = vunpack.c.0.s8 %v1269
          %v1271 = vlaneseq
          %v1272 = vshrl.u32 %v1271, 7
          %v1273 = vsub.s32 %v1270, %v1272
          %v1274 = vrot.slane %v1260, %v1273
          %v1275 = vcombine.low %v1210, %v1226
          %v1276 = vcombine.high %v1210, %v1226
          %v1278 = vunpack.c.l.s4 1934713408
          %v1279 = vunpack.c.0.s8 %v1278
          %v1280 = vlaneseq
          %v1281 = vshrl.u32 %v1280, 7
          %v1282 = vsub.s32 %v1279, %v1281
          %v1283 = vrot.slane %v1275, %v1282
          %v1285 = vunpack.c.l.s4 1934713408
          %v1286 = vunpack.c.0.s8 %v1285
          %v1287 = vlaneseq
          %v1288 = vshrl.u32 %v1287, 7
          %v1289 = vsub.s32 %v1286, %v1288
          %v1290 = vrot.slane %v1276, %v1289
          %v1291 = vcombine.low %v1235, %v1251
          %v1292 = vcombine.high %v1235, %v1251
          %v1294 = vunpack.c.l.s4 1934713408
          %v1295 = vunpack.c.0.s8 %v1294
          %v1296 = vlaneseq
          %v1297 = vshrl.u32 %v1296, 7
          %v1298 = vsub.s32 %v1295, %v1297
          %v1299 = vrot.slane %v1291, %v1298
          %v1301 = vunpack.c.l.s4 1934713408
          %v1302 = vunpack.c.0.s8 %v1301
          %v1303 = vlaneseq
          %v1304 = vshrl.u32 %v1303, 7
          %v1305 = vsub.s32 %v1302, %v1304
          %v1306 = vrot.slane %v1292, %v1305
          %v1307 = vcombine.low %v1242, %v1258
          %v1308 = vcombine.high %v1242, %v1258
          %v1310 = vunpack.c.l.s4 1934713408
          %v1311 = vunpack.c.0.s8 %v1310
          %v1312 = vlaneseq
          %v1313 = vshrl.u32 %v1312, 7
          %v1314 = vsub.s32 %v1311, %v1313
          %v1315 = vrot.slane %v1307, %v1314
          %v1317 = vunpack.c.l.s4 1934713408
          %v1318 = vunpack.c.0.s8 %v1317
          %v1319 = vlaneseq
          %v1320 = vshrl.u32 %v1319, 7
          %v1321 = vsub.s32 %v1318, %v1320
          %v1322 = vrot.slane %v1308, %v1321
          %v1323 = vcombine.low %v1267, %v1299
          %v1324 = vcombine.high %v1267, %v1299
          %v1325 = vcombine.low %v1274, %v1306
          %v1326 = vcombine.high %v1274, %v1306
          %v1327 = vcombine.low %v1283, %v1315
          %v1328 = vcombine.high %v1283, %v1315
          %v1329 = vcombine.low %v1290, %v1322
          %v1330 = vcombine.high %v1290, %v1322
          %v1331 = vcombine.low %v707, %v734
          %v1332 = vcombine.high %v707, %v734
          %v1334 = vunpack.c.l.s4 1983009808
          %v1335 = vunpack.c.0.s8 %v1334
          %v1336 = vlaneseq
          %v1337 = vshrl.u32 %v1336, 7
          %v1338 = vsub.s32 %v1335, %v1337
          %v1339 = vrot.slane %v1331, %v1338
          %v1341 = vunpack.c.l.s4 1983009808
          %v1342 = vunpack.c.0.s8 %v1341
          %v1343 = vlaneseq
          %v1344 = vshrl.u32 %v1343, 7
          %v1345 = vsub.s32 %v1342, %v1344
          %v1346 = vrot.slane %v1332, %v1345
          %v1347 = vcombine.low %v725, %v743
          %v1348 = vcombine.high %v725, %v743
          %v1350 = vunpack.c.l.s4 1983009808
          %v1351 = vunpack.c.0.s8 %v1350
          %v1352 = vlaneseq
          %v1353 = vshrl.u32 %v1352, 7
          %v1354 = vsub.s32 %v1351, %v1353
          %v1355 = vrot.slane %v1347, %v1354
          %v1357 = vunpack.c.l.s4 1983009808
          %v1358 = vunpack.c.0.s8 %v1357
          %v1359 = vlaneseq
          %v1360 = vshrl.u32 %v1359, 7
          %v1361 = vsub.s32 %v1358, %v1360
          %v1362 = vrot.slane %v1348, %v1361
          %v1363 = vcombine.low %v752, %v770
          %v1364 = vcombine.high %v752, %v770
          %v1366 = vunpack.c.l.s4 1983009808
          %v1367 = vunpack.c.0.s8 %v1366
          %v1368 = vlaneseq
          %v1369 = vshrl.u32 %v1368, 7
          %v1370 = vsub.s32 %v1367, %v1369
          %v1371 = vrot.slane %v1363, %v1370
          %v1373 = vunpack.c.l.s4 1983009808
          %v1374 = vunpack.c.0.s8 %v1373
          %v1375 = vlaneseq
          %v1376 = vshrl.u32 %v1375, 7
          %v1377 = vsub.s32 %v1374, %v1376
          %v1378 = vrot.slane %v1364, %v1377
          %v1379 = vcombine.low %v761, %v779
          %v1380 = vcombine.high %v761, %v779
          %v1382 = vunpack.c.l.s4 1983009808
          %v1383 = vunpack.c.0.s8 %v1382
          %v1384 = vlaneseq
          %v1385 = vshrl.u32 %v1384, 7
          %v1386 = vsub.s32 %v1383, %v1385
          %v1387 = vrot.slane %v1379, %v1386
          %v1389 = vunpack.c.l.s4 1983009808
          %v1390 = vunpack.c.0.s8 %v1389
          %v1391 = vlaneseq
          %v1392 = vshrl.u32 %v1391, 7
          %v1393 = vsub.s32 %v1390, %v1392
          %v1394 = vrot.slane %v1380, %v1393
          %v1395 = vcombine.low %v1339, %v1355
          %v1396 = vcombine.high %v1339, %v1355
          %v1398 = vunpack.c.l.s4 1934713408
          %v1399 = vunpack.c.0.s8 %v1398
          %v1400 = vlaneseq
          %v1401 = vshrl.u32 %v1400, 7
          %v1402 = vsub.s32 %v1399, %v1401
          %v1403 = vrot.slane %v1395, %v1402
          %v1405 = vunpack.c.l.s4 1934713408
          %v1406 = vunpack.c.0.s8 %v1405
          %v1407 = vlaneseq
          %v1408 = vshrl.u32 %v1407, 7
          %v1409 = vsub.s32 %v1406, %v1408
          %v1410 = vrot.slane %v1396, %v1409
          %v1411 = vcombine.low %v1346, %v1362
          %v1412 = vcombine.high %v1346, %v1362
          %v1414 = vunpack.c.l.s4 1934713408
          %v1415 = vunpack.c.0.s8 %v1414
          %v1416 = vlaneseq
          %v1417 = vshrl.u32 %v1416, 7
          %v1418 = vsub.s32 %v1415, %v1417
          %v1419 = vrot.slane %v1411, %v1418
          %v1421 = vunpack.c.l.s4 1934713408
          %v1422 = vunpack.c.0.s8 %v1421
          %v1423 = vlaneseq
          %v1424 = vshrl.u32 %v1423, 7
          %v1425 = vsub.s32 %v1422, %v1424
          %v1426 = vrot.slane %v1412, %v1425
          %v1427 = vcombine.low %v1371, %v1387
          %v1428 = vcombine.high %v1371, %v1387
          %v1430 = vunpack.c.l.s4 1934713408
          %v1431 = vunpack.c.0.s8 %v1430
          %v1432 = vlaneseq
          %v1433 = vshrl.u32 %v1432, 7
          %v1434 = vsub.s32 %v1431, %v1433
          %v1435 = vrot.slane %v1427, %v1434
          %v1437 = vunpack.c.l.s4 1934713408
          %v1438 = vunpack.c.0.s8 %v1437
          %v1439 = vlaneseq
          %v1440 = vshrl.u32 %v1439, 7
          %v1441 = vsub.s32 %v1438, %v1440
          %v1442 = vrot.slane %v1428, %v1441
          %v1443 = vcombine.low %v1378, %v1394
          %v1444 = vcombine.high %v1378, %v1394
          %v1446 = vunpack.c.l.s4 1934713408
          %v1447 = vunpack.c.0.s8 %v1446
          %v1448 = vlaneseq
          %v1449 = vshrl.u32 %v1448, 7
          %v1450 = vsub.s32 %v1447, %v1449
          %v1451 = vrot.slane %v1443, %v1450
          %v1453 = vunpack.c.l.s4 1934713408
          %v1454 = vunpack.c.0.s8 %v1453
          %v1455 = vlaneseq
          %v1456 = vshrl.u32 %v1455, 7
          %v1457 = vsub.s32 %v1454, %v1456
          %v1458 = vrot.slane %v1444, %v1457
          %v1459 = vcombine.low %v1403, %v1435
          %v1460 = vcombine.high %v1403, %v1435
          %v1461 = vcombine.low %v1410, %v1442
          %v1462 = vcombine.high %v1410, %v1442
          %v1463 = vcombine.low %v1419, %v1451
          %v1464 = vcombine.high %v1419, %v1451
          %v1465 = vcombine.low %v1426, %v1458
          %v1466 = vcombine.high %v1426, %v1458
          %v1467 = vcombine.low %v788, %v806
          %v1468 = vcombine.high %v788, %v806
          %v1470 = vunpack.c.l.s4 1983009808
          %v1471 = vunpack.c.0.s8 %v1470
          %v1472 = vlaneseq
          %v1473 = vshrl.u32 %v1472, 7
          %v1474 = vsub.s32 %v1471, %v1473
          %v1475 = vrot.slane %v1467, %v1474
          %v1477 = vunpack.c.l.s4 1983009808
          %v1478 = vunpack.c.0.s8 %v1477
          %v1479 = vlaneseq
          %v1480 = vshrl.u32 %v1479, 7
          %v1481 = vsub.s32 %v1478, %v1480
          %v1482 = vrot.slane %v1468, %v1481
          %v1483 = vcombine.low %v797, %v815
          %v1484 = vcombine.high %v797, %v815
          %v1486 = vunpack.c.l.s4 1983009808
          %v1487 = vunpack.c.0.s8 %v1486
          %v1488 = vlaneseq
          %v1489 = vshrl.u32 %v1488, 7
          %v1490 = vsub.s32 %v1487, %v1489
          %v1491 = vrot.slane %v1483, %v1490
          %v1493 = vunpack.c.l.s4 1983009808
          %v1494 = vunpack.c.0.s8 %v1493
          %v1495 = vlaneseq
          %v1496 = vshrl.u32 %v1495, 7
          %v1497 = vsub.s32 %v1494, %v1496
          %v1498 = vrot.slane %v1484, %v1497
          %v1499 = vcombine.low %v824, %v842
          %v1500 = vcombine.high %v824, %v842
          %v1502 = vunpack.c.l.s4 1983009808
          %v1503 = vunpack.c.0.s8 %v1502
          %v1504 = vlaneseq
          %v1505 = vshrl.u32 %v1504, 7
          %v1506 = vsub.s32 %v1503, %v1505
          %v1507 = vrot.slane %v1499, %v1506
          %v1509 = vunpack.c.l.s4 1983009808
          %v1510 = vunpack.c.0.s8 %v1509
          %v1511 = vlaneseq
          %v1512 = vshrl.u32 %v1511, 7
          %v1513 = vsub.s32 %v1510, %v1512
          %v1514 = vrot.slane %v1500, %v1513
          %v1515 = vcombine.low %v833, %v851
          %v1516 = vcombine.high %v833, %v851
          %v1518 = vunpack.c.l.s4 1983009808
          %v1519 = vunpack.c.0.s8 %v1518
          %v1520 = vlaneseq
          %v1521 = vshrl.u32 %v1520, 7
          %v1522 = vsub.s32 %v1519, %v1521
          %v1523 = vrot.slane %v1515, %v1522
          %v1525 = vunpack.c.l.s4 1983009808
          %v1526 = vunpack.c.0.s8 %v1525
          %v1527 = vlaneseq
          %v1528 = vshrl.u32 %v1527, 7
          %v1529 = vsub.s32 %v1526, %v1528
          %v1530 = vrot.slane %v1516, %v1529
          %v1531 = vcombine.low %v1475, %v1491
          %v1532 = vcombine.high %v1475, %v1491
          %v1534 = vunpack.c.l.s4 1934713408
          %v1535 = vunpack.c.0.s8 %v1534
          %v1536 = vlaneseq
          %v1537 = vshrl.u32 %v1536, 7
          %v1538 = vsub.s32 %v1535, %v1537
          %v1539 = vrot.slane %v1531, %v1538
          %v1541 = vunpack.c.l.s4 1934713408
          %v1542 = vunpack.c.0.s8 %v1541
          %v1543 = vlaneseq
          %v1544 = vshrl.u32 %v1543, 7
          %v1545 = vsub.s32 %v1542, %v1544
          %v1546 = vrot.slane %v1532, %v1545
          %v1547 = vcombine.low %v1482, %v1498
          %v1548 = vcombine.high %v1482, %v1498
          %v1550 = vunpack.c.l.s4 1934713408
          %v1551 = vunpack.c.0.s8 %v1550
          %v1552 = vlaneseq
          %v1553 = vshrl.u32 %v1552, 7
          %v1554 = vsub.s32 %v1551, %v1553
          %v1555 = vrot.slane %v1547, %v1554
          %v1557 = vunpack.c.l.s4 1934713408
          %v1558 = vunpack.c.0.s8 %v1557
          %v1559 = vlaneseq
          %v1560 = vshrl.u32 %v1559, 7
          %v1561 = vsub.s32 %v1558, %v1560
          %v1562 = vrot.slane %v1548, %v1561
          %v1563 = vcombine.low %v1507, %v1523
          %v1564 = vcombine.high %v1507, %v1523
          %v1566 = vunpack.c.l.s4 1934713408
          %v1567 = vunpack.c.0.s8 %v1566
          %v1568 = vlaneseq
          %v1569 = vshrl.u32 %v1568, 7
          %v1570 = vsub.s32 %v1567, %v1569
          %v1571 = vrot.slane %v1563, %v1570
          %v1573 = vunpack.c.l.s4 1934713408
          %v1574 = vunpack.c.0.s8 %v1573
          %v1575 = vlaneseq
          %v1576 = vshrl.u32 %v1575, 7
          %v1577 = vsub.s32 %v1574, %v1576
          %v1578 = vrot.slane %v1564, %v1577
          %v1579 = vcombine.low %v1514, %v1530
          %v1580 = vcombine.high %v1514, %v1530
          %v1582 = vunpack.c.l.s4 1934713408
          %v1583 = vunpack.c.0.s8 %v1582
          %v1584 = vlaneseq
          %v1585 = vshrl.u32 %v1584, 7
          %v1586 = vsub.s32 %v1583, %v1585
          %v1587 = vrot.slane %v1579, %v1586
          %v1589 = vunpack.c.l.s4 1934713408
          %v1590 = vunpack.c.0.s8 %v1589
          %v1591 = vlaneseq
          %v1592 = vshrl.u32 %v1591, 7
          %v1593 = vsub.s32 %v1590, %v1592
          %v1594 = vrot.slane %v1580, %v1593
          %v1595 = vcombine.low %v1539, %v1571
          %v1596 = vcombine.high %v1539, %v1571
          %v1597 = vcombine.low %v1546, %v1578
          %v1598 = vcombine.high %v1546, %v1578
          %v1599 = vcombine.low %v1555, %v1587
          %v1600 = vcombine.high %v1555, %v1587
          %v1601 = vcombine.low %v1562, %v1594
          %v1602 = vcombine.high %v1562, %v1594
          %v1603 = vcombine.low %v709, %v872
          %v1604 = vcombine.high %v709, %v872
          %v1606 = vunpack.c.l.s4 1983009808
          %v1607 = vunpack.c.0.s8 %v1606
          %v1608 = vlaneseq
          %v1609 = vshrl.u32 %v1608, 7
          %v1610 = vsub.s32 %v1607, %v1609
          %v1611 = vrot.slane %v1603, %v1610
          %v1613 = vunpack.c.l.s4 1983009808
          %v1614 = vunpack.c.0.s8 %v1613
          %v1615 = vlaneseq
          %v1616 = vshrl.u32 %v1615, 7
          %v1617 = vsub.s32 %v1614, %v1616
          %v1618 = vrot.slane %v1604, %v1617
          %v1619 = vcombine.low %v863, %v881
          %v1620 = vcombine.high %v863, %v881
          %v1622 = vunpack.c.l.s4 1983009808
          %v1623 = vunpack.c.0.s8 %v1622
          %v1624 = vlaneseq
          %v1625 = vshrl.u32 %v1624, 7
          %v1626 = vsub.s32 %v1623, %v1625
          %v1627 = vrot.slane %v1619, %v1626
          %v1629 = vunpack.c.l.s4 1983009808
          %v1630 = vunpack.c.0.s8 %v1629
          %v1631 = vlaneseq
          %v1632 = vshrl.u32 %v1631, 7
          %v1633 = vsub.s32 %v1630, %v1632
          %v1634 = vrot.slane %v1620, %v1633
          %v1635 = vcombine.low %v890, %v908
          %v1636 = vcombine.high %v890, %v908
          %v1638 = vunpack.c.l.s4 1983009808
          %v1639 = vunpack.c.0.s8 %v1638
          %v1640 = vlaneseq
          %v1641 = vshrl.u32 %v1640, 7
          %v1642 = vsub.s32 %v1639, %v1641
          %v1643 = vrot.slane %v1635, %v1642
          %v1645 = vunpack.c.l.s4 1983009808
          %v1646 = vunpack.c.0.s8 %v1645
          %v1647 = vlaneseq
          %v1648 = vshrl.u32 %v1647, 7
          %v1649 = vsub.s32 %v1646, %v1648
          %v1650 = vrot.slane %v1636, %v1649
          %v1651 = vcombine.low %v899, %v917
          %v1652 = vcombine.high %v899, %v917
          %v1654 = vunpack.c.l.s4 1983009808
          %v1655 = vunpack.c.0.s8 %v1654
          %v1656 = vlaneseq
          %v1657 = vshrl.u32 %v1656, 7
          %v1658 = vsub.s32 %v1655, %v1657
          %v1659 = vrot.slane %v1651, %v1658
          %v1661 = vunpack.c.l.s4 1983009808
          %v1662 = vunpack.c.0.s8 %v1661
          %v1663 = vlaneseq
          %v1664 = vshrl.u32 %v1663, 7
          %v1665 = vsub.s32 %v1662, %v1664
          %v1666 = vrot.slane %v1652, %v1665
          %v1667 = vcombine.low %v1611, %v1627
          %v1668 = vcombine.high %v1611, %v1627
          %v1670 = vunpack.c.l.s4 1934713408
          %v1671 = vunpack.c.0.s8 %v1670
          %v1672 = vlaneseq
          %v1673 = vshrl.u32 %v1672, 7
          %v1674 = vsub.s32 %v1671, %v1673
          %v1675 = vrot.slane %v1667, %v1674
          %v1677 = vunpack.c.l.s4 1934713408
          %v1678 = vunpack.c.0.s8 %v1677
          %v1679 = vlaneseq
          %v1680 = vshrl.u32 %v1679, 7
          %v1681 = vsub.s32 %v1678, %v1680
          %v1682 = vrot.slane %v1668, %v1681
          %v1683 = vcombine.low %v1618, %v1634
          %v1684 = vcombine.high %v1618, %v1634
          %v1686 = vunpack.c.l.s4 1934713408
          %v1687 = vunpack.c.0.s8 %v1686
          %v1688 = vlaneseq
          %v1689 = vshrl.u32 %v1688, 7
          %v1690 = vsub.s32 %v1687, %v1689
          %v1691 = vrot.slane %v1683, %v1690
          %v1693 = vunpack.c.l.s4 1934713408
          %v1694 = vunpack.c.0.s8 %v1693
          %v1695 = vlaneseq
          %v1696 = vshrl.u32 %v1695, 7
          %v1697 = vsub.s32 %v1694, %v1696
          %v1698 = vrot.slane %v1684, %v1697
          %v1699 = vcombine.low %v1643, %v1659
          %v1700 = vcombine.high %v1643, %v1659
          %v1702 = vunpack.c.l.s4 1934713408
          %v1703 = vunpack.c.0.s8 %v1702
          %v1704 = vlaneseq
          %v1705 = vshrl.u32 %v1704, 7
          %v1706 = vsub.s32 %v1703, %v1705
          %v1707 = vrot.slane %v1699, %v1706
          %v1709 = vunpack.c.l.s4 1934713408
          %v1710 = vunpack.c.0.s8 %v1709
          %v1711 = vlaneseq
          %v1712 = vshrl.u32 %v1711, 7
          %v1713 = vsub.s32 %v1710, %v1712
          %v1714 = vrot.slane %v1700, %v1713
          %v1715 = vcombine.low %v1650, %v1666
          %v1716 = vcombine.high %v1650, %v1666
          %v1718 = vunpack.c.l.s4 1934713408
          %v1719 = vunpack.c.0.s8 %v1718
          %v1720 = vlaneseq
          %v1721 = vshrl.u32 %v1720, 7
          %v1722 = vsub.s32 %v1719, %v1721
          %v1723 = vrot.slane %v1715, %v1722
          %v1725 = vunpack.c.l.s4 1934713408
          %v1726 = vunpack.c.0.s8 %v1725
          %v1727 = vlaneseq
          %v1728 = vshrl.u32 %v1727, 7
          %v1729 = vsub.s32 %v1726, %v1728
          %v1730 = vrot.slane %v1716, %v1729
          %v1731 = vcombine.low %v1675, %v1707
          %v1732 = vcombine.high %v1675, %v1707
          %v1733 = vcombine.low %v1682, %v1714
          %v1734 = vcombine.high %v1682, %v1714
          %v1735 = vcombine.low %v1691, %v1723
          %v1736 = vcombine.high %v1691, %v1723
          %v1737 = vcombine.low %v1698, %v1730
          %v1738 = vcombine.high %v1698, %v1730
          %v1739 = vcombine.low %v713, %v736
          %v1741 = vunpack.c.l.s4 1983009808
          %v1742 = vunpack.c.0.s8 %v1741
          %v1743 = vlaneseq
          %v1744 = vshrl.u32 %v1743, 7
          %v1745 = vsub.s32 %v1742, %v1744
          %v1746 = vrot.slane %v1739, %v1745
          %v1747 = vcombine.low %v727, %v745
          %v1749 = vunpack.c.l.s4 1983009808
          %v1750 = vunpack.c.0.s8 %v1749
          %v1751 = vlaneseq
          %v1752 = vshrl.u32 %v1751, 7
          %v1753 = vsub.s32 %v1750, %v1752
          %v1754 = vrot.slane %v1747, %v1753
          %v1755 = vcombine.low %v754, %v772
          %v1757 = vunpack.c.l.s4 1983009808
          %v1758 = vunpack.c.0.s8 %v1757
          %v1759 = vlaneseq
          %v1760 = vshrl.u32 %v1759, 7
          %v1761 = vsub.s32 %v1758, %v1760
          %v1762 = vrot.slane %v1755, %v1761
          %v1763 = vcombine.low %v763, %v781
          %v1765 = vunpack.c.l.s4 1983009808
          %v1766 = vunpack.c.0.s8 %v1765
          %v1767 = vlaneseq
          %v1768 = vshrl.u32 %v1767, 7
          %v1769 = vsub.s32 %v1766, %v1768
          %v1770 = vrot.slane %v1763, %v1769
          %v1771 = vcombine.low %v1746, %v1754
          %v1773 = vunpack.c.l.s4 1934713408
          %v1774 = vunpack.c.0.s8 %v1773
          %v1775 = vlaneseq
          %v1776 = vshrl.u32 %v1775, 7
          %v1777 = vsub.s32 %v1774, %v1776
          %v1778 = vrot.slane %v1771, %v1777
          %v1779 = vcombine.low %v1762, %v1770
          %v1781 = vunpack.c.l.s4 1934713408
          %v1782 = vunpack.c.0.s8 %v1781
          %v1783 = vlaneseq
          %v1784 = vshrl.u32 %v1783, 7
          %v1785 = vsub.s32 %v1782, %v1784
          %v1786 = vrot.slane %v1779, %v1785
          %v1787 = vcombine.low %v1778, %v1786
          %v1788 = vcombine.low %v790, %v808
          %v1790 = vunpack.c.l.s4 1983009808
          %v1791 = vunpack.c.0.s8 %v1790
          %v1792 = vlaneseq
          %v1793 = vshrl.u32 %v1792, 7
          %v1794 = vsub.s32 %v1791, %v1793
          %v1795 = vrot.slane %v1788, %v1794
          %v1796 = vcombine.low %v799, %v817
          %v1798 = vunpack.c.l.s4 1983009808
          %v1799 = vunpack.c.0.s8 %v1798
          %v1800 = vlaneseq
          %v1801 = vshrl.u32 %v1800, 7
          %v1802 = vsub.s32 %v1799, %v1801
          %v1803 = vrot.slane %v1796, %v1802
          %v1804 = vcombine.low %v826, %v844
          %v1806 = vunpack.c.l.s4 1983009808
          %v1807 = vunpack.c.0.s8 %v1806
          %v1808 = vlaneseq
          %v1809 = vshrl.u32 %v1808, 7
          %v1810 = vsub.s32 %v1807, %v1809
          %v1811 = vrot.slane %v1804, %v1810
          %v1812 = vcombine.low %v835, %v853
          %v1814 = vunpack.c.l.s4 1983009808
          %v1815 = vunpack.c.0.s8 %v1814
          %v1816 = vlaneseq
          %v1817 = vshrl.u32 %v1816, 7
          %v1818 = vsub.s32 %v1815, %v1817
          %v1819 = vrot.slane %v1812, %v1818
          %v1820 = vcombine.low %v1795, %v1803
          %v1822 = vunpack.c.l.s4 1934713408
          %v1823 = vunpack.c.0.s8 %v1822
          %v1824 = vlaneseq
          %v1825 = vshrl.u32 %v1824, 7
          %v1826 = vsub.s32 %v1823, %v1825
          %v1827 = vrot.slane %v1820, %v1826
          %v1828 = vcombine.low %v1811, %v1819
          %v1830 = vunpack.c.l.s4 1934713408
          %v1831 = vunpack.c.0.s8 %v1830
          %v1832 = vlaneseq
          %v1833 = vshrl.u32 %v1832, 7
          %v1834 = vsub.s32 %v1831, %v1833
          %v1835 = vrot.slane %v1828, %v1834
          %v1836 = vcombine.low %v1827, %v1835
          %v1837 = vcombine.low %v715, %v874
          %v1839 = vunpack.c.l.s4 1983009808
          %v1840 = vunpack.c.0.s8 %v1839
          %v1841 = vlaneseq
          %v1842 = vshrl.u32 %v1841, 7
          %v1843 = vsub.s32 %v1840, %v1842
          %v1844 = vrot.slane %v1837, %v1843
          %v1845 = vcombine.low %v865, %v883
          %v1847 = vunpack.c.l.s4 1983009808
          %v1848 = vunpack.c.0.s8 %v1847
          %v1849 = vlaneseq
          %v1850 = vshrl.u32 %v1849, 7
          %v1851 = vsub.s32 %v1848, %v1850
          %v1852 = vrot.slane %v1845, %v1851
          %v1853 = vcombine.low %v892, %v910
          %v1855 = vunpack.c.l.s4 1983009808
          %v1856 = vunpack.c.0.s8 %v1855
          %v1857 = vlaneseq
          %v1858 = vshrl.u32 %v1857, 7
          %v1859 = vsub.s32 %v1856, %v1858
          %v1860 = vrot.slane %v1853, %v1859
          %v1861 = vcombine.low %v901, %v919
          %v1863 = vunpack.c.l.s4 1983009808
          %v1864 = vunpack.c.0.s8 %v1863
          %v1865 = vlaneseq
          %v1866 = vshrl.u32 %v1865, 7
          %v1867 = vsub.s32 %v1864, %v1866
          %v1868 = vrot.slane %v1861, %v1867
          %v1869 = vcombine.low %v1844, %v1852
          %v1871 = vunpack.c.l.s4 1934713408
          %v1872 = vunpack.c.0.s8 %v1871
          %v1873 = vlaneseq
          %v1874 = vshrl.u32 %v1873, 7
          %v1875 = vsub.s32 %v1872, %v1874
          %v1876 = vrot.slane %v1869, %v1875
          %v1877 = vcombine.low %v1860, %v1868
          %v1879 = vunpack.c.l.s4 1934713408
          %v1880 = vunpack.c.0.s8 %v1879
          %v1881 = vlaneseq
          %v1882 = vshrl.u32 %v1881, 7
          %v1883 = vsub.s32 %v1880, %v1882
          %v1884 = vrot.slane %v1877, %v1883
          %v1885 = vcombine.low %v1876, %v1884
          %v1886 = vcombine.low %v1051, %v1053
          %v1887 = vcombine.high %v1051, %v1053
          %v1889 = vunpack.c.l.s4 1983009808
          %v1890 = vunpack.c.0.s8 %v1889
          %v1891 = vlaneseq
          %v1892 = vshrl.u32 %v1891, 7
          %v1893 = vsub.s32 %v1890, %v1892
          %v1894 = vrot.slane %v1886, %v1893
          %v1896 = vunpack.c.l.s4 1983009808
          %v1897 = vunpack.c.0.s8 %v1896
          %v1898 = vlaneseq
          %v1899 = vshrl.u32 %v1898, 7
          %v1900 = vsub.s32 %v1897, %v1899
          %v1901 = vrot.slane %v1887, %v1900
          %v1902 = vcombine.low %v1052, %v1054
          %v1903 = vcombine.high %v1052, %v1054
          %v1905 = vunpack.c.l.s4 1983009808
          %v1906 = vunpack.c.0.s8 %v1905
          %v1907 = vlaneseq
          %v1908 = vshrl.u32 %v1907, 7
          %v1909 = vsub.s32 %v1906, %v1908
          %v1910 = vrot.slane %v1902, %v1909
          %v1912 = vunpack.c.l.s4 1983009808
          %v1913 = vunpack.c.0.s8 %v1912
          %v1914 = vlaneseq
          %v1915 = vshrl.u32 %v1914, 7
          %v1916 = vsub.s32 %v1913, %v1915
          %v1917 = vrot.slane %v1903, %v1916
          %v1918 = vcombine.low %v1055, %v1057
          %v1919 = vcombine.high %v1055, %v1057
          %v1921 = vunpack.c.l.s4 1983009808
          %v1922 = vunpack.c.0.s8 %v1921
          %v1923 = vlaneseq
          %v1924 = vshrl.u32 %v1923, 7
          %v1925 = vsub.s32 %v1922, %v1924
          %v1926 = vrot.slane %v1918, %v1925
          %v1928 = vunpack.c.l.s4 1983009808
          %v1929 = vunpack.c.0.s8 %v1928
          %v1930 = vlaneseq
          %v1931 = vshrl.u32 %v1930, 7
          %v1932 = vsub.s32 %v1929, %v1931
          %v1933 = vrot.slane %v1919, %v1932
          %v1934 = vcombine.low %v1056, %v1058
          %v1935 = vcombine.high %v1056, %v1058
          %v1937 = vunpack.c.l.s4 1983009808
          %v1938 = vunpack.c.0.s8 %v1937
          %v1939 = vlaneseq
          %v1940 = vshrl.u32 %v1939, 7
          %v1941 = vsub.s32 %v1938, %v1940
          %v1942 = vrot.slane %v1934, %v1941
          %v1944 = vunpack.c.l.s4 1983009808
          %v1945 = vunpack.c.0.s8 %v1944
          %v1946 = vlaneseq
          %v1947 = vshrl.u32 %v1946, 7
          %v1948 = vsub.s32 %v1945, %v1947
          %v1949 = vrot.slane %v1935, %v1948
          %v1950 = vcombine.low %v1894, %v1910
          %v1951 = vcombine.high %v1894, %v1910
          %v1953 = vunpack.c.l.s4 1934713408
          %v1954 = vunpack.c.0.s8 %v1953
          %v1955 = vlaneseq
          %v1956 = vshrl.u32 %v1955, 7
          %v1957 = vsub.s32 %v1954, %v1956
          %v1958 = vrot.slane %v1950, %v1957
          %v1960 = vunpack.c.l.s4 1934713408
          %v1961 = vunpack.c.0.s8 %v1960
          %v1962 = vlaneseq
          %v1963 = vshrl.u32 %v1962, 7
          %v1964 = vsub.s32 %v1961, %v1963
          %v1965 = vrot.slane %v1951, %v1964
          %v1966 = vcombine.low %v1901, %v1917
          %v1967 = vcombine.high %v1901, %v1917
          %v1969 = vunpack.c.l.s4 1934713408
          %v1970 = vunpack.c.0.s8 %v1969
          %v1971 = vlaneseq
          %v1972 = vshrl.u32 %v1971, 7
          %v1973 = vsub.s32 %v1970, %v1972
          %v1974 = vrot.slane %v1966, %v1973
          %v1976 = vunpack.c.l.s4 1934713408
          %v1977 = vunpack.c.0.s8 %v1976
          %v1978 = vlaneseq
          %v1979 = vshrl.u32 %v1978, 7
          %v1980 = vsub.s32 %v1977, %v1979
          %v1981 = vrot.slane %v1967, %v1980
          %v1982 = vcombine.low %v1926, %v1942
          %v1983 = vcombine.high %v1926, %v1942
          %v1985 = vunpack.c.l.s4 1934713408
          %v1986 = vunpack.c.0.s8 %v1985
          %v1987 = vlaneseq
          %v1988 = vshrl.u32 %v1987, 7
          %v1989 = vsub.s32 %v1986, %v1988
          %v1990 = vrot.slane %v1982, %v1989
          %v1992 = vunpack.c.l.s4 1934713408
          %v1993 = vunpack.c.0.s8 %v1992
          %v1994 = vlaneseq
          %v1995 = vshrl.u32 %v1994, 7
          %v1996 = vsub.s32 %v1993, %v1995
          %v1997 = vrot.slane %v1983, %v1996
          %v1998 = vcombine.low %v1933, %v1949
          %v1999 = vcombine.high %v1933, %v1949
          %v2001 = vunpack.c.l.s4 1934713408
          %v2002 = vunpack.c.0.s8 %v2001
          %v2003 = vlaneseq
          %v2004 = vshrl.u32 %v2003, 7
          %v2005 = vsub.s32 %v2002, %v2004
          %v2006 = vrot.slane %v1998, %v2005
          %v2008 = vunpack.c.l.s4 1934713408
          %v2009 = vunpack.c.0.s8 %v2008
          %v2010 = vlaneseq
          %v2011 = vshrl.u32 %v2010, 7
          %v2012 = vsub.s32 %v2009, %v2011
          %v2013 = vrot.slane %v1999, %v2012
          %v2014 = vcombine.low %v1958, %v1990
          %v2015 = vcombine.high %v1958, %v1990
          %v2016 = vcombine.low %v1965, %v1997
          %v2017 = vcombine.high %v1965, %v1997
          %v2018 = vcombine.low %v1974, %v2006
          %v2019 = vcombine.high %v1974, %v2006
          %v2020 = vcombine.low %v1981, %v2013
          %v2021 = vcombine.high %v1981, %v2013
          %v2022 = vcombine.low %v1459, %v1461
          %v2023 = vcombine.high %v1459, %v1461
          %v2025 = vunpack.c.l.s4 1983009808
          %v2026 = vunpack.c.0.s8 %v2025
          %v2027 = vlaneseq
          %v2028 = vshrl.u32 %v2027, 7
          %v2029 = vsub.s32 %v2026, %v2028
          %v2030 = vrot.slane %v2022, %v2029
          %v2032 = vunpack.c.l.s4 1983009808
          %v2033 = vunpack.c.0.s8 %v2032
          %v2034 = vlaneseq
          %v2035 = vshrl.u32 %v2034, 7
          %v2036 = vsub.s32 %v2033, %v2035
          %v2037 = vrot.slane %v2023, %v2036
          %v2038 = vcombine.low %v1460, %v1462
          %v2039 = vcombine.high %v1460, %v1462
          %v2041 = vunpack.c.l.s4 1983009808
          %v2042 = vunpack.c.0.s8 %v2041
          %v2043 = vlaneseq
          %v2044 = vshrl.u32 %v2043, 7
          %v2045 = vsub.s32 %v2042, %v2044
          %v2046 = vrot.slane %v2038, %v2045
          %v2048 = vunpack.c.l.s4 1983009808
          %v2049 = vunpack.c.0.s8 %v2048
          %v2050 = vlaneseq
          %v2051 = vshrl.u32 %v2050, 7
          %v2052 = vsub.s32 %v2049, %v2051
          %v2053 = vrot.slane %v2039, %v2052
          %v2054 = vcombine.low %v1463, %v1465
          %v2055 = vcombine.high %v1463, %v1465
          %v2057 = vunpack.c.l.s4 1983009808
          %v2058 = vunpack.c.0.s8 %v2057
          %v2059 = vlaneseq
          %v2060 = vshrl.u32 %v2059, 7
          %v2061 = vsub.s32 %v2058, %v2060
          %v2062 = vrot.slane %v2054, %v2061
          %v2064 = vunpack.c.l.s4 1983009808
          %v2065 = vunpack.c.0.s8 %v2064
          %v2066 = vlaneseq
          %v2067 = vshrl.u32 %v2066, 7
          %v2068 = vsub.s32 %v2065, %v2067
          %v2069 = vrot.slane %v2055, %v2068
          %v2070 = vcombine.low %v1464, %v1466
          %v2071 = vcombine.high %v1464, %v1466
          %v2073 = vunpack.c.l.s4 1983009808
          %v2074 = vunpack.c.0.s8 %v2073
          %v2075 = vlaneseq
          %v2076 = vshrl.u32 %v2075, 7
          %v2077 = vsub.s32 %v2074, %v2076
          %v2078 = vrot.slane %v2070, %v2077
          %v2080 = vunpack.c.l.s4 1983009808
          %v2081 = vunpack.c.0.s8 %v2080
          %v2082 = vlaneseq
          %v2083 = vshrl.u32 %v2082, 7
          %v2084 = vsub.s32 %v2081, %v2083
          %v2085 = vrot.slane %v2071, %v2084
          %v2086 = vcombine.low %v2030, %v2046
          %v2087 = vcombine.high %v2030, %v2046
          %v2089 = vunpack.c.l.s4 1934713408
          %v2090 = vunpack.c.0.s8 %v2089
          %v2091 = vlaneseq
          %v2092 = vshrl.u32 %v2091, 7
          %v2093 = vsub.s32 %v2090, %v2092
          %v2094 = vrot.slane %v2086, %v2093
          %v2096 = vunpack.c.l.s4 1934713408
          %v2097 = vunpack.c.0.s8 %v2096
          %v2098 = vlaneseq
          %v2099 = vshrl.u32 %v2098, 7
          %v2100 = vsub.s32 %v2097, %v2099
          %v2101 = vrot.slane %v2087, %v2100
          %v2102 = vcombine.low %v2037, %v2053
          %v2103 = vcombine.high %v2037, %v2053
          %v2105 = vunpack.c.l.s4 1934713408
          %v2106 = vunpack.c.0.s8 %v2105
          %v2107 = vlaneseq
          %v2108 = vshrl.u32 %v2107, 7
          %v2109 = vsub.s32 %v2106, %v2108
          %v2110 = vrot.slane %v2102, %v2109
          %v2112 = vunpack.c.l.s4 1934713408
          %v2113 = vunpack.c.0.s8 %v2112
          %v2114 = vlaneseq
          %v2115 = vshrl.u32 %v2114, 7
          %v2116 = vsub.s32 %v2113, %v2115
          %v2117 = vrot.slane %v2103, %v2116
          %v2118 = vcombine.low %v2062, %v2078
          %v2119 = vcombine.high %v2062, %v2078
          %v2121 = vunpack.c.l.s4 1934713408
          %v2122 = vunpack.c.0.s8 %v2121
          %v2123 = vlaneseq
          %v2124 = vshrl.u32 %v2123, 7
          %v2125 = vsub.s32 %v2122, %v2124
          %v2126 = vrot.slane %v2118, %v2125
          %v2128 = vunpack.c.l.s4 1934713408
          %v2129 = vunpack.c.0.s8 %v2128
          %v2130 = vlaneseq
          %v2131 = vshrl.u32 %v2130, 7
          %v2132 = vsub.s32 %v2129, %v2131
          %v2133 = vrot.slane %v2119, %v2132
          %v2134 = vcombine.low %v2069, %v2085
          %v2135 = vcombine.high %v2069, %v2085
          %v2137 = vunpack.c.l.s4 1934713408
          %v2138 = vunpack.c.0.s8 %v2137
          %v2139 = vlaneseq
          %v2140 = vshrl.u32 %v2139, 7
          %v2141 = vsub.s32 %v2138, %v2140
          %v2142 = vrot.slane %v2134, %v2141
          %v2144 = vunpack.c.l.s4 1934713408
          %v2145 = vunpack.c.0.s8 %v2144
          %v2146 = vlaneseq
          %v2147 = vshrl.u32 %v2146, 7
          %v2148 = vsub.s32 %v2145, %v2147
          %v2149 = vrot.slane %v2135, %v2148
          %v2150 = vcombine.low %v2094, %v2126
          %v2151 = vcombine.high %v2094, %v2126
          %v2152 = vcombine.low %v2101, %v2133
          %v2153 = vcombine.high %v2101, %v2133
          %v2154 = vcombine.low %v2110, %v2142
          %v2155 = vcombine.high %v2110, %v2142
          %v2156 = vcombine.low %v2117, %v2149
          %v2157 = vcombine.high %v2117, %v2149
          %v2158 = vcombine.high %v1787, 0.0
          %v2160 = vunpack.c.l.s4 1983009808
          %v2161 = vunpack.c.0.s8 %v2160
          %v2162 = vlaneseq
          %v2163 = vshrl.u32 %v2162, 7
          %v2164 = vsub.s32 %v2161, %v2163
          %v2165 = vrot.slane %v1787, %v2164
          %v2167 = vunpack.c.l.s4 1983009808
          %v2168 = vunpack.c.0.s8 %v2167
          %v2169 = vlaneseq
          %v2170 = vshrl.u32 %v2169, 7
          %v2171 = vsub.s32 %v2168, %v2170
          %v2172 = vrot.slane %v2158, %v2171
          %v2173 = vcombine.high %v2165, 0.0
          %v2175 = vunpack.c.l.s4 1934713408
          %v2176 = vunpack.c.0.s8 %v2175
          %v2177 = vlaneseq
          %v2178 = vshrl.u32 %v2177, 7
          %v2179 = vsub.s32 %v2176, %v2178
          %v2180 = vrot.slane %v2165, %v2179
          %v2182 = vunpack.c.l.s4 1934713408
          %v2183 = vunpack.c.0.s8 %v2182
          %v2184 = vlaneseq
          %v2185 = vshrl.u32 %v2184, 7
          %v2186 = vsub.s32 %v2183, %v2185
          %v2187 = vrot.slane %v2173, %v2186
          %v2188 = vcombine.high %v2172, 0.0
          %v2190 = vunpack.c.l.s4 1934713408
          %v2191 = vunpack.c.0.s8 %v2190
          %v2192 = vlaneseq
          %v2193 = vshrl.u32 %v2192, 7
          %v2194 = vsub.s32 %v2191, %v2193
          %v2195 = vrot.slane %v2172, %v2194
          %v2197 = vunpack.c.l.s4 1934713408
          %v2198 = vunpack.c.0.s8 %v2197
          %v2199 = vlaneseq
          %v2200 = vshrl.u32 %v2199, 7
          %v2201 = vsub.s32 %v2198, %v2200
          %v2202 = vrot.slane %v2188, %v2201
          %v2203 = vcombine.high %v2180, 0.0
          %v2204 = vcombine.high %v2187, 0.0
          %v2205 = vcombine.high %v2195, 0.0
          %v2206 = vcombine.high %v2202, 0.0
          %v2207 = vcombine.low %v1187, %v1189
          %v2208 = vcombine.high %v1187, %v1189
          %v2210 = vunpack.c.l.s4 1983009808
          %v2211 = vunpack.c.0.s8 %v2210
          %v2212 = vlaneseq
          %v2213 = vshrl.u32 %v2212, 7
          %v2214 = vsub.s32 %v2211, %v2213
          %v2215 = vrot.slane %v2207, %v2214
          %v2217 = vunpack.c.l.s4 1983009808
          %v2218 = vunpack.c.0.s8 %v2217
          %v2219 = vlaneseq
          %v2220 = vshrl.u32 %v2219, 7
          %v2221 = vsub.s32 %v2218, %v2220
          %v2222 = vrot.slane %v2208, %v2221
          %v2223 = vcombine.low %v1188, %v1190
          %v2224 = vcombine.high %v1188, %v1190
          %v2226 = vunpack.c.l.s4 1983009808
          %v2227 = vunpack.c.0.s8 %v2226
          %v2228 = vlaneseq
          %v2229 = vshrl.u32 %v2228, 7
          %v2230 = vsub.s32 %v2227, %v2229
          %v2231 = vrot.slane %v2223, %v2230
          %v2233 = vunpack.c.l.s4 1983009808
          %v2234 = vunpack.c.0.s8 %v2233
          %v2235 = vlaneseq
          %v2236 = vshrl.u32 %v2235, 7
          %v2237 = vsub.s32 %v2234, %v2236
          %v2238 = vrot.slane %v2224, %v2237
          %v2239 = vcombine.low %v1191, %v1193
          %v2240 = vcombine.high %v1191, %v1193
          %v2242 = vunpack.c.l.s4 1983009808
          %v2243 = vunpack.c.0.s8 %v2242
          %v2244 = vlaneseq
          %v2245 = vshrl.u32 %v2244, 7
          %v2246 = vsub.s32 %v2243, %v2245
          %v2247 = vrot.slane %v2239, %v2246
          %v2249 = vunpack.c.l.s4 1983009808
          %v2250 = vunpack.c.0.s8 %v2249
          %v2251 = vlaneseq
          %v2252 = vshrl.u32 %v2251, 7
          %v2253 = vsub.s32 %v2250, %v2252
          %v2254 = vrot.slane %v2240, %v2253
          %v2255 = vcombine.low %v1192, %v1194
          %v2256 = vcombine.high %v1192, %v1194
          %v2258 = vunpack.c.l.s4 1983009808
          %v2259 = vunpack.c.0.s8 %v2258
          %v2260 = vlaneseq
          %v2261 = vshrl.u32 %v2260, 7
          %v2262 = vsub.s32 %v2259, %v2261
          %v2263 = vrot.slane %v2255, %v2262
          %v2265 = vunpack.c.l.s4 1983009808
          %v2266 = vunpack.c.0.s8 %v2265
          %v2267 = vlaneseq
          %v2268 = vshrl.u32 %v2267, 7
          %v2269 = vsub.s32 %v2266, %v2268
          %v2270 = vrot.slane %v2256, %v2269
          %v2271 = vcombine.low %v2215, %v2231
          %v2272 = vcombine.high %v2215, %v2231
          %v2274 = vunpack.c.l.s4 1934713408
          %v2275 = vunpack.c.0.s8 %v2274
          %v2276 = vlaneseq
          %v2277 = vshrl.u32 %v2276, 7
          %v2278 = vsub.s32 %v2275, %v2277
          %v2279 = vrot.slane %v2271, %v2278
          %v2281 = vunpack.c.l.s4 1934713408
          %v2282 = vunpack.c.0.s8 %v2281
          %v2283 = vlaneseq
          %v2284 = vshrl.u32 %v2283, 7
          %v2285 = vsub.s32 %v2282, %v2284
          %v2286 = vrot.slane %v2272, %v2285
          %v2287 = vcombine.low %v2222, %v2238
          %v2288 = vcombine.high %v2222, %v2238
          %v2290 = vunpack.c.l.s4 1934713408
          %v2291 = vunpack.c.0.s8 %v2290
          %v2292 = vlaneseq
          %v2293 = vshrl.u32 %v2292, 7
          %v2294 = vsub.s32 %v2291, %v2293
          %v2295 = vrot.slane %v2287, %v2294
          %v2297 = vunpack.c.l.s4 1934713408
          %v2298 = vunpack.c.0.s8 %v2297
          %v2299 = vlaneseq
          %v2300 = vshrl.u32 %v2299, 7
          %v2301 = vsub.s32 %v2298, %v2300
          %v2302 = vrot.slane %v2288, %v2301
          %v2303 = vcombine.low %v2247, %v2263
          %v2304 = vcombine.high %v2247, %v2263
          %v2306 = vunpack.c.l.s4 1934713408
          %v2307 = vunpack.c.0.s8 %v2306
          %v2308 = vlaneseq
          %v2309 = vshrl.u32 %v2308, 7
          %v2310 = vsub.s32 %v2307, %v2309
          %v2311 = vrot.slane %v2303, %v2310
          %v2313 = vunpack.c.l.s4 1934713408
          %v2314 = vunpack.c.0.s8 %v2313
          %v2315 = vlaneseq
          %v2316 = vshrl.u32 %v2315, 7
          %v2317 = vsub.s32 %v2314, %v2316
          %v2318 = vrot.slane %v2304, %v2317
          %v2319 = vcombine.low %v2254, %v2270
          %v2320 = vcombine.high %v2254, %v2270
          %v2322 = vunpack.c.l.s4 1934713408
          %v2323 = vunpack.c.0.s8 %v2322
          %v2324 = vlaneseq
          %v2325 = vshrl.u32 %v2324, 7
          %v2326 = vsub.s32 %v2323, %v2325
          %v2327 = vrot.slane %v2319, %v2326
          %v2329 = vunpack.c.l.s4 1934713408
          %v2330 = vunpack.c.0.s8 %v2329
          %v2331 = vlaneseq
          %v2332 = vshrl.u32 %v2331, 7
          %v2333 = vsub.s32 %v2330, %v2332
          %v2334 = vrot.slane %v2320, %v2333
          %v2335 = vcombine.low %v2279, %v2311
          %v2336 = vcombine.high %v2279, %v2311
          %v2337 = vcombine.low %v2286, %v2318
          %v2338 = vcombine.high %v2286, %v2318
          %v2339 = vcombine.low %v2295, %v2327
          %v2340 = vcombine.high %v2295, %v2327
          %v2341 = vcombine.low %v2302, %v2334
          %v2342 = vcombine.high %v2302, %v2334
          %v2343 = vcombine.low %v1595, %v1597
          %v2344 = vcombine.high %v1595, %v1597
          %v2346 = vunpack.c.l.s4 1983009808
          %v2347 = vunpack.c.0.s8 %v2346
          %v2348 = vlaneseq
          %v2349 = vshrl.u32 %v2348, 7
          %v2350 = vsub.s32 %v2347, %v2349
          %v2351 = vrot.slane %v2343, %v2350
          %v2353 = vunpack.c.l.s4 1983009808
          %v2354 = vunpack.c.0.s8 %v2353
          %v2355 = vlaneseq
          %v2356 = vshrl.u32 %v2355, 7
          %v2357 = vsub.s32 %v2354, %v2356
          %v2358 = vrot.slane %v2344, %v2357
          %v2359 = vcombine.low %v1596, %v1598
          %v2360 = vcombine.high %v1596, %v1598
          %v2362 = vunpack.c.l.s4 1983009808
          %v2363 = vunpack.c.0.s8 %v2362
          %v2364 = vlaneseq
          %v2365 = vshrl.u32 %v2364, 7
          %v2366 = vsub.s32 %v2363, %v2365
          %v2367 = vrot.slane %v2359, %v2366
          %v2369 = vunpack.c.l.s4 1983009808
          %v2370 = vunpack.c.0.s8 %v2369
          %v2371 = vlaneseq
          %v2372 = vshrl.u32 %v2371, 7
          %v2373 = vsub.s32 %v2370, %v2372
          %v2374 = vrot.slane %v2360, %v2373
          %v2375 = vcombine.low %v1599, %v1601
          %v2376 = vcombine.high %v1599, %v1601
          %v2378 = vunpack.c.l.s4 1983009808
          %v2379 = vunpack.c.0.s8 %v2378
          %v2380 = vlaneseq
          %v2381 = vshrl.u32 %v2380, 7
          %v2382 = vsub.s32 %v2379, %v2381
          %v2383 = vrot.slane %v2375, %v2382
          %v2385 = vunpack.c.l.s4 1983009808
          %v2386 = vunpack.c.0.s8 %v2385
          %v2387 = vlaneseq
          %v2388 = vshrl.u32 %v2387, 7
          %v2389 = vsub.s32 %v2386, %v2388
          %v2390 = vrot.slane %v2376, %v2389
          %v2391 = vcombine.low %v1600, %v1602
          %v2392 = vcombine.high %v1600, %v1602
          %v2394 = vunpack.c.l.s4 1983009808
          %v2395 = vunpack.c.0.s8 %v2394
          %v2396 = vlaneseq
          %v2397 = vshrl.u32 %v2396, 7
          %v2398 = vsub.s32 %v2395, %v2397
          %v2399 = vrot.slane %v2391, %v2398
          %v2401 = vunpack.c.l.s4 1983009808
          %v2402 = vunpack.c.0.s8 %v2401
          %v2403 = vlaneseq
          %v2404 = vshrl.u32 %v2403, 7
          %v2405 = vsub.s32 %v2402, %v2404
          %v2406 = vrot.slane %v2392, %v2405
          %v2407 = vcombine.low %v2351, %v2367
          %v2408 = vcombine.high %v2351, %v2367
          %v2410 = vunpack.c.l.s4 1934713408
          %v2411 = vunpack.c.0.s8 %v2410
          %v2412 = vlaneseq
          %v2413 = vshrl.u32 %v2412, 7
          %v2414 = vsub.s32 %v2411, %v2413
          %v2415 = vrot.slane %v2407, %v2414
          %v2417 = vunpack.c.l.s4 1934713408
          %v2418 = vunpack.c.0.s8 %v2417
          %v2419 = vlaneseq
          %v2420 = vshrl.u32 %v2419, 7
          %v2421 = vsub.s32 %v2418, %v2420
          %v2422 = vrot.slane %v2408, %v2421
          %v2423 = vcombine.low %v2358, %v2374
          %v2424 = vcombine.high %v2358, %v2374
          %v2426 = vunpack.c.l.s4 1934713408
          %v2427 = vunpack.c.0.s8 %v2426
          %v2428 = vlaneseq
          %v2429 = vshrl.u32 %v2428, 7
          %v2430 = vsub.s32 %v2427, %v2429
          %v2431 = vrot.slane %v2423, %v2430
          %v2433 = vunpack.c.l.s4 1934713408
          %v2434 = vunpack.c.0.s8 %v2433
          %v2435 = vlaneseq
          %v2436 = vshrl.u32 %v2435, 7
          %v2437 = vsub.s32 %v2434, %v2436
          %v2438 = vrot.slane %v2424, %v2437
          %v2439 = vcombine.low %v2383, %v2399
          %v2440 = vcombine.high %v2383, %v2399
          %v2442 = vunpack.c.l.s4 1934713408
          %v2443 = vunpack.c.0.s8 %v2442
          %v2444 = vlaneseq
          %v2445 = vshrl.u32 %v2444, 7
          %v2446 = vsub.s32 %v2443, %v2445
          %v2447 = vrot.slane %v2439, %v2446
          %v2449 = vunpack.c.l.s4 1934713408
          %v2450 = vunpack.c.0.s8 %v2449
          %v2451 = vlaneseq
          %v2452 = vshrl.u32 %v2451, 7
          %v2453 = vsub.s32 %v2450, %v2452
          %v2454 = vrot.slane %v2440, %v2453
          %v2455 = vcombine.low %v2390, %v2406
          %v2456 = vcombine.high %v2390, %v2406
          %v2458 = vunpack.c.l.s4 1934713408
          %v2459 = vunpack.c.0.s8 %v2458
          %v2460 = vlaneseq
          %v2461 = vshrl.u32 %v2460, 7
          %v2462 = vsub.s32 %v2459, %v2461
          %v2463 = vrot.slane %v2455, %v2462
          %v2465 = vunpack.c.l.s4 1934713408
          %v2466 = vunpack.c.0.s8 %v2465
          %v2467 = vlaneseq
          %v2468 = vshrl.u32 %v2467, 7
          %v2469 = vsub.s32 %v2466, %v2468
          %v2470 = vrot.slane %v2456, %v2469
          %v2471 = vcombine.low %v2415, %v2447
          %v2472 = vcombine.high %v2415, %v2447
          %v2473 = vcombine.low %v2422, %v2454
          %v2474 = vcombine.high %v2422, %v2454
          %v2475 = vcombine.low %v2431, %v2463
          %v2476 = vcombine.high %v2431, %v2463
          %v2477 = vcombine.low %v2438, %v2470
          %v2478 = vcombine.high %v2438, %v2470
          %v2479 = vcombine.high %v1836, 0.0
          %v2481 = vunpack.c.l.s4 1983009808
          %v2482 = vunpack.c.0.s8 %v2481
          %v2483 = vlaneseq
          %v2484 = vshrl.u32 %v2483, 7
          %v2485 = vsub.s32 %v2482, %v2484
          %v2486 = vrot.slane %v1836, %v2485
          %v2488 = vunpack.c.l.s4 1983009808
          %v2489 = vunpack.c.0.s8 %v2488
          %v2490 = vlaneseq
          %v2491 = vshrl.u32 %v2490, 7
          %v2492 = vsub.s32 %v2489, %v2491
          %v2493 = vrot.slane %v2479, %v2492
          %v2494 = vcombine.high %v2486, 0.0
          %v2496 = vunpack.c.l.s4 1934713408
          %v2497 = vunpack.c.0.s8 %v2496
          %v2498 = vlaneseq
          %v2499 = vshrl.u32 %v2498, 7
          %v2500 = vsub.s32 %v2497, %v2499
          %v2501 = vrot.slane %v2486, %v2500
          %v2503 = vunpack.c.l.s4 1934713408
          %v2504 = vunpack.c.0.s8 %v2503
          %v2505 = vlaneseq
          %v2506 = vshrl.u32 %v2505, 7
          %v2507 = vsub.s32 %v2504, %v2506
          %v2508 = vrot.slane %v2494, %v2507
          %v2509 = vcombine.high %v2493, 0.0
          %v2511 = vunpack.c.l.s4 1934713408
          %v2512 = vunpack.c.0.s8 %v2511
          %v2513 = vlaneseq
          %v2514 = vshrl.u32 %v2513, 7
          %v2515 = vsub.s32 %v2512, %v2514
          %v2516 = vrot.slane %v2493, %v2515
          %v2518 = vunpack.c.l.s4 1934713408
          %v2519 = vunpack.c.0.s8 %v2518
          %v2520 = vlaneseq
          %v2521 = vshrl.u32 %v2520, 7
          %v2522 = vsub.s32 %v2519, %v2521
          %v2523 = vrot.slane %v2509, %v2522
          %v2524 = vcombine.high %v2501, 0.0
          %v2525 = vcombine.high %v2508, 0.0
          %v2526 = vcombine.high %v2516, 0.0
          %v2527 = vcombine.high %v2523, 0.0
          %v2528 = vcombine.low %v1323, %v1325
          %v2529 = vcombine.high %v1323, %v1325
          %v2531 = vunpack.c.l.s4 1983009808
          %v2532 = vunpack.c.0.s8 %v2531
          %v2533 = vlaneseq
          %v2534 = vshrl.u32 %v2533, 7
          %v2535 = vsub.s32 %v2532, %v2534
          %v2536 = vrot.slane %v2528, %v2535
          %v2538 = vunpack.c.l.s4 1983009808
          %v2539 = vunpack.c.0.s8 %v2538
          %v2540 = vlaneseq
          %v2541 = vshrl.u32 %v2540, 7
          %v2542 = vsub.s32 %v2539, %v2541
          %v2543 = vrot.slane %v2529, %v2542
          %v2544 = vcombine.low %v1324, %v1326
          %v2545 = vcombine.high %v1324, %v1326
          %v2547 = vunpack.c.l.s4 1983009808
          %v2548 = vunpack.c.0.s8 %v2547
          %v2549 = vlaneseq
          %v2550 = vshrl.u32 %v2549, 7
          %v2551 = vsub.s32 %v2548, %v2550
          %v2552 = vrot.slane %v2544, %v2551
          %v2554 = vunpack.c.l.s4 1983009808
          %v2555 = vunpack.c.0.s8 %v2554
          %v2556 = vlaneseq
          %v2557 = vshrl.u32 %v2556, 7
          %v2558 = vsub.s32 %v2555, %v2557
          %v2559 = vrot.slane %v2545, %v2558
          %v2560 = vcombine.low %v1327, %v1329
          %v2561 = vcombine.high %v1327, %v1329
          %v2563 = vunpack.c.l.s4 1983009808
          %v2564 = vunpack.c.0.s8 %v2563
          %v2565 = vlaneseq
          %v2566 = vshrl.u32 %v2565, 7
          %v2567 = vsub.s32 %v2564, %v2566
          %v2568 = vrot.slane %v2560, %v2567
          %v2570 = vunpack.c.l.s4 1983009808
          %v2571 = vunpack.c.0.s8 %v2570
          %v2572 = vlaneseq
          %v2573 = vshrl.u32 %v2572, 7
          %v2574 = vsub.s32 %v2571, %v2573
          %v2575 = vrot.slane %v2561, %v2574
          %v2576 = vcombine.low %v1328, %v1330
          %v2577 = vcombine.high %v1328, %v1330
          %v2579 = vunpack.c.l.s4 1983009808
          %v2580 = vunpack.c.0.s8 %v2579
          %v2581 = vlaneseq
          %v2582 = vshrl.u32 %v2581, 7
          %v2583 = vsub.s32 %v2580, %v2582
          %v2584 = vrot.slane %v2576, %v2583
          %v2586 = vunpack.c.l.s4 1983009808
          %v2587 = vunpack.c.0.s8 %v2586
          %v2588 = vlaneseq
          %v2589 = vshrl.u32 %v2588, 7
          %v2590 = vsub.s32 %v2587, %v2589
          %v2591 = vrot.slane %v2577, %v2590
          %v2592 = vcombine.low %v2536, %v2552
          %v2593 = vcombine.high %v2536, %v2552
          %v2595 = vunpack.c.l.s4 1934713408
          %v2596 = vunpack.c.0.s8 %v2595
          %v2597 = vlaneseq
          %v2598 = vshrl.u32 %v2597, 7
          %v2599 = vsub.s32 %v2596, %v2598
          %v2600 = vrot.slane %v2592, %v2599
          %v2602 = vunpack.c.l.s4 1934713408
          %v2603 = vunpack.c.0.s8 %v2602
          %v2604 = vlaneseq
          %v2605 = vshrl.u32 %v2604, 7
          %v2606 = vsub.s32 %v2603, %v2605
          %v2607 = vrot.slane %v2593, %v2606
          %v2608 = vcombine.low %v2543, %v2559
          %v2609 = vcombine.high %v2543, %v2559
          %v2611 = vunpack.c.l.s4 1934713408
          %v2612 = vunpack.c.0.s8 %v2611
          %v2613 = vlaneseq
          %v2614 = vshrl.u32 %v2613, 7
          %v2615 = vsub.s32 %v2612, %v2614
          %v2616 = vrot.slane %v2608, %v2615
          %v2618 = vunpack.c.l.s4 1934713408
          %v2619 = vunpack.c.0.s8 %v2618
          %v2620 = vlaneseq
          %v2621 = vshrl.u32 %v2620, 7
          %v2622 = vsub.s32 %v2619, %v2621
          %v2623 = vrot.slane %v2609, %v2622
          %v2624 = vcombine.low %v2568, %v2584
          %v2625 = vcombine.high %v2568, %v2584
          %v2627 = vunpack.c.l.s4 1934713408
          %v2628 = vunpack.c.0.s8 %v2627
          %v2629 = vlaneseq
          %v2630 = vshrl.u32 %v2629, 7
          %v2631 = vsub.s32 %v2628, %v2630
          %v2632 = vrot.slane %v2624, %v2631
          %v2634 = vunpack.c.l.s4 1934713408
          %v2635 = vunpack.c.0.s8 %v2634
          %v2636 = vlaneseq
          %v2637 = vshrl.u32 %v2636, 7
          %v2638 = vsub.s32 %v2635, %v2637
          %v2639 = vrot.slane %v2625, %v2638
          %v2640 = vcombine.low %v2575, %v2591
          %v2641 = vcombine.high %v2575, %v2591
          %v2643 = vunpack.c.l.s4 1934713408
          %v2644 = vunpack.c.0.s8 %v2643
          %v2645 = vlaneseq
          %v2646 = vshrl.u32 %v2645, 7
          %v2647 = vsub.s32 %v2644, %v2646
          %v2648 = vrot.slane %v2640, %v2647
          %v2650 = vunpack.c.l.s4 1934713408
          %v2651 = vunpack.c.0.s8 %v2650
          %v2652 = vlaneseq
          %v2653 = vshrl.u32 %v2652, 7
          %v2654 = vsub.s32 %v2651, %v2653
          %v2655 = vrot.slane %v2641, %v2654
          %v2656 = vcombine.low %v2600, %v2632
          %v2657 = vcombine.high %v2600, %v2632
          %v2658 = vcombine.low %v2607, %v2639
          %v2659 = vcombine.high %v2607, %v2639
          %v2660 = vcombine.low %v2616, %v2648
          %v2661 = vcombine.high %v2616, %v2648
          %v2662 = vcombine.low %v2623, %v2655
          %v2663 = vcombine.high %v2623, %v2655
          %v2664 = vcombine.low %v1731, %v1733
          %v2665 = vcombine.high %v1731, %v1733
          %v2667 = vunpack.c.l.s4 1983009808
          %v2668 = vunpack.c.0.s8 %v2667
          %v2669 = vlaneseq
          %v2670 = vshrl.u32 %v2669, 7
          %v2671 = vsub.s32 %v2668, %v2670
          %v2672 = vrot.slane %v2664, %v2671
          %v2674 = vunpack.c.l.s4 1983009808
          %v2675 = vunpack.c.0.s8 %v2674
          %v2676 = vlaneseq
          %v2677 = vshrl.u32 %v2676, 7
          %v2678 = vsub.s32 %v2675, %v2677
          %v2679 = vrot.slane %v2665, %v2678
          %v2680 = vcombine.low %v1732, %v1734
          %v2681 = vcombine.high %v1732, %v1734
          %v2683 = vunpack.c.l.s4 1983009808
          %v2684 = vunpack.c.0.s8 %v2683
          %v2685 = vlaneseq
          %v2686 = vshrl.u32 %v2685, 7
          %v2687 = vsub.s32 %v2684, %v2686
          %v2688 = vrot.slane %v2680, %v2687
          %v2690 = vunpack.c.l.s4 1983009808
          %v2691 = vunpack.c.0.s8 %v2690
          %v2692 = vlaneseq
          %v2693 = vshrl.u32 %v2692, 7
          %v2694 = vsub.s32 %v2691, %v2693
          %v2695 = vrot.slane %v2681, %v2694
          %v2696 = vcombine.low %v1735, %v1737
          %v2697 = vcombine.high %v1735, %v1737
          %v2699 = vunpack.c.l.s4 1983009808
          %v2700 = vunpack.c.0.s8 %v2699
          %v2701 = vlaneseq
          %v2702 = vshrl.u32 %v2701, 7
          %v2703 = vsub.s32 %v2700, %v2702
          %v2704 = vrot.slane %v2696, %v2703
          %v2706 = vunpack.c.l.s4 1983009808
          %v2707 = vunpack.c.0.s8 %v2706
          %v2708 = vlaneseq
          %v2709 = vshrl.u32 %v2708, 7
          %v2710 = vsub.s32 %v2707, %v2709
          %v2711 = vrot.slane %v2697, %v2710
          %v2712 = vcombine.low %v1736, %v1738
          %v2713 = vcombine.high %v1736, %v1738
          %v2715 = vunpack.c.l.s4 1983009808
          %v2716 = vunpack.c.0.s8 %v2715
          %v2717 = vlaneseq
          %v2718 = vshrl.u32 %v2717, 7
          %v2719 = vsub.s32 %v2716, %v2718
          %v2720 = vrot.slane %v2712, %v2719
          %v2722 = vunpack.c.l.s4 1983009808
          %v2723 = vunpack.c.0.s8 %v2722
          %v2724 = vlaneseq
          %v2725 = vshrl.u32 %v2724, 7
          %v2726 = vsub.s32 %v2723, %v2725
          %v2727 = vrot.slane %v2713, %v2726
          %v2728 = vcombine.low %v2672, %v2688
          %v2729 = vcombine.high %v2672, %v2688
          %v2731 = vunpack.c.l.s4 1934713408
          %v2732 = vunpack.c.0.s8 %v2731
          %v2733 = vlaneseq
          %v2734 = vshrl.u32 %v2733, 7
          %v2735 = vsub.s32 %v2732, %v2734
          %v2736 = vrot.slane %v2728, %v2735
          %v2738 = vunpack.c.l.s4 1934713408
          %v2739 = vunpack.c.0.s8 %v2738
          %v2740 = vlaneseq
          %v2741 = vshrl.u32 %v2740, 7
          %v2742 = vsub.s32 %v2739, %v2741
          %v2743 = vrot.slane %v2729, %v2742
          %v2744 = vcombine.low %v2679, %v2695
          %v2745 = vcombine.high %v2679, %v2695
          %v2747 = vunpack.c.l.s4 1934713408
          %v2748 = vunpack.c.0.s8 %v2747
          %v2749 = vlaneseq
          %v2750 = vshrl.u32 %v2749, 7
          %v2751 = vsub.s32 %v2748, %v2750
          %v2752 = vrot.slane %v2744, %v2751
          %v2754 = vunpack.c.l.s4 1934713408
          %v2755 = vunpack.c.0.s8 %v2754
          %v2756 = vlaneseq
          %v2757 = vshrl.u32 %v2756, 7
          %v2758 = vsub.s32 %v2755, %v2757
          %v2759 = vrot.slane %v2745, %v2758
          %v2760 = vcombine.low %v2704, %v2720
          %v2761 = vcombine.high %v2704, %v2720
          %v2763 = vunpack.c.l.s4 1934713408
          %v2764 = vunpack.c.0.s8 %v2763
          %v2765 = vlaneseq
          %v2766 = vshrl.u32 %v2765, 7
          %v2767 = vsub.s32 %v2764, %v2766
          %v2768 = vrot.slane %v2760, %v2767
          %v2770 = vunpack.c.l.s4 1934713408
          %v2771 = vunpack.c.0.s8 %v2770
          %v2772 = vlaneseq
          %v2773 = vshrl.u32 %v2772, 7
          %v2774 = vsub.s32 %v2771, %v2773
          %v2775 = vrot.slane %v2761, %v2774
          %v2776 = vcombine.low %v2711, %v2727
          %v2777 = vcombine.high %v2711, %v2727
          %v2779 = vunpack.c.l.s4 1934713408
          %v2780 = vunpack.c.0.s8 %v2779
          %v2781 = vlaneseq
          %v2782 = vshrl.u32 %v2781, 7
          %v2783 = vsub.s32 %v2780, %v2782
          %v2784 = vrot.slane %v2776, %v2783
          %v2786 = vunpack.c.l.s4 1934713408
          %v2787 = vunpack.c.0.s8 %v2786
          %v2788 = vlaneseq
          %v2789 = vshrl.u32 %v2788, 7
          %v2790 = vsub.s32 %v2787, %v2789
          %v2791 = vrot.slane %v2777, %v2790
          %v2792 = vcombine.low %v2736, %v2768
          %v2793 = vcombine.high %v2736, %v2768
          %v2794 = vcombine.low %v2743, %v2775
          %v2795 = vcombine.high %v2743, %v2775
          %v2796 = vcombine.low %v2752, %v2784
          %v2797 = vcombine.high %v2752, %v2784
          %v2798 = vcombine.low %v2759, %v2791
          %v2799 = vcombine.high %v2759, %v2791
          %v2800 = vcombine.high %v1885, 0.0
          %v2802 = vunpack.c.l.s4 1983009808
          %v2803 = vunpack.c.0.s8 %v2802
          %v2804 = vlaneseq
          %v2805 = vshrl.u32 %v2804, 7
          %v2806 = vsub.s32 %v2803, %v2805
          %v2807 = vrot.slane %v1885, %v2806
          %v2809 = vunpack.c.l.s4 1983009808
          %v2810 = vunpack.c.0.s8 %v2809
          %v2811 = vlaneseq
          %v2812 = vshrl.u32 %v2811, 7
          %v2813 = vsub.s32 %v2810, %v2812
          %v2814 = vrot.slane %v2800, %v2813
          %v2815 = vcombine.high %v2807, 0.0
          %v2817 = vunpack.c.l.s4 1934713408
          %v2818 = vunpack.c.0.s8 %v2817
          %v2819 = vlaneseq
          %v2820 = vshrl.u32 %v2819, 7
          %v2821 = vsub.s32 %v2818, %v2820
          %v2822 = vrot.slane %v2807, %v2821
          %v2824 = vunpack.c.l.s4 1934713408
          %v2825 = vunpack.c.0.s8 %v2824
          %v2826 = vlaneseq
          %v2827 = vshrl.u32 %v2826, 7
          %v2828 = vsub.s32 %v2825, %v2827
          %v2829 = vrot.slane %v2815, %v2828
          %v2830 = vcombine.high %v2814, 0.0
          %v2832 = vunpack.c.l.s4 1934713408
          %v2833 = vunpack.c.0.s8 %v2832
          %v2834 = vlaneseq
          %v2835 = vshrl.u32 %v2834, 7
          %v2836 = vsub.s32 %v2833, %v2835
          %v2837 = vrot.slane %v2814, %v2836
          %v2839 = vunpack.c.l.s4 1934713408
          %v2840 = vunpack.c.0.s8 %v2839
          %v2841 = vlaneseq
          %v2842 = vshrl.u32 %v2841, 7
          %v2843 = vsub.s32 %v2840, %v2842
          %v2844 = vrot.slane %v2830, %v2843
          %v2845 = vcombine.high %v2822, 0.0
          %v2846 = vcombine.high %v2829, 0.0
          %v2847 = vcombine.high %v2837, 0.0
          %v2848 = vcombine.high %v2844, 0.0
          %v2849 = vpack.c.bf16 %v2150, %v2014
          %v2850 = vpack.c.bf16 %v2180, %v2180
          %v2851 = vpack.c.bf16 %v2151, %v2015
          %v2852 = vpack.c.bf16 %v2203, %v2203
          %v2853 = vpack.c.bf16 %v2152, %v2016
          %v2854 = vpack.c.bf16 %v2187, %v2187
          %v2855 = vpack.c.bf16 %v2153, %v2017
          %v2856 = vpack.c.bf16 %v2204, %v2204
          %v2857 = vpack.c.bf16 %v2154, %v2018
          %v2858 = vpack.c.bf16 %v2195, %v2195
          %v2859 = vpack.c.bf16 %v2155, %v2019
          %v2860 = vpack.c.bf16 %v2205, %v2205
          %v2861 = vpack.c.bf16 %v2156, %v2020
          %v2862 = vpack.c.bf16 %v2202, %v2202
          %v2863 = vpack.c.bf16 %v2157, %v2021
          %v2864 = vpack.c.bf16 %v2206, %v2206
          %v2865 = vpack.c.bf16 %v2471, %v2335
          %v2866 = vpack.c.bf16 %v2501, %v2501
          %v2867 = vpack.c.bf16 %v2472, %v2336
          %v2868 = vpack.c.bf16 %v2524, %v2524
          %v2869 = vpack.c.bf16 %v2473, %v2337
          %v2870 = vpack.c.bf16 %v2508, %v2508
          %v2871 = vpack.c.bf16 %v2474, %v2338
          %v2872 = vpack.c.bf16 %v2525, %v2525
          %v2873 = vpack.c.bf16 %v2475, %v2339
          %v2874 = vpack.c.bf16 %v2516, %v2516
          %v2875 = vpack.c.bf16 %v2476, %v2340
          %v2876 = vpack.c.bf16 %v2526, %v2526
          %v2877 = vpack.c.bf16 %v2477, %v2341
          %v2878 = vpack.c.bf16 %v2523, %v2523
          %v2879 = vpack.c.bf16 %v2478, %v2342
          %v2880 = vpack.c.bf16 %v2527, %v2527
          %v2881 = vpack.c.bf16 %v2792, %v2656
          %v2882 = vpack.c.bf16 %v2822, %v2822
          %v2883 = vpack.c.bf16 %v2793, %v2657
          %v2884 = vpack.c.bf16 %v2845, %v2845
          %v2885 = vpack.c.bf16 %v2794, %v2658
          %v2886 = vpack.c.bf16 %v2829, %v2829
          %v2887 = vpack.c.bf16 %v2795, %v2659
          %v2888 = vpack.c.bf16 %v2846, %v2846
          %v2889 = vpack.c.bf16 %v2796, %v2660
          %v2890 = vpack.c.bf16 %v2837, %v2837
          %v2891 = vpack.c.bf16 %v2797, %v2661
          %v2892 = vpack.c.bf16 %v2847, %v2847
          %v2893 = vpack.c.bf16 %v2798, %v2662
          %v2894 = vpack.c.bf16 %v2844, %v2844
          %v2895 = vpack.c.bf16 %v2799, %v2663
          %v2896 = vpack.c.bf16 %v2848, %v2848
          %vm2897 = vcmask 64512
          %v2899 = vsel %vm2897, %v2849, 0
          %v2902 = vsel %vm2897, %v2850, 0
          %v2905 = vsel %vm2897, %v2865, 0
          %v2908 = vsel %vm2897, %v2866, 0
          %2910 = vmatprep.subr.bf16.mxu0 0
          %2911 = vmatpush1.bf16.xpose.msra.mxu0 0
          %2912 = vmatprep.subr.bf16.mxu0 0
          %2913 = vmatpush1.bf16.xpose.msra.mxu0 0
          %2914 = vmatprep.subr.bf16.mxu0 0
          %2915 = vmatpush1.bf16.xpose.msra.mxu0 0
          %2916 = vmatprep.subr.bf16.mxu0 0
          %2917 = vmatpush1.bf16.xpose.msra.mxu0 0
          %2918 = vmatprep.subr.bf16.mxu0 0
          %2919 = vmatpush1.bf16.xpose.msra.mxu0 0
          %2920 = vmatprep.subr.bf16.mxu0 0
          %2921 = vmatpush1.bf16.xpose.msra.mxu0 0
          %2922 = vmatprep.subr.bf16.mxu0 0
          %2923 = vmatpush1.bf16.xpose.msra.mxu0 %v2908
          %2924 = vmatprep.subr.bf16.mxu0 0
          %2925 = vmatpush1.bf16.xpose.msra.mxu0 %v2905
          %2926 = vmatprep.subr.bf16.mxu0 0
          %2927 = vmatpush2.bf16.xpose.msra.mxu0 0
          %2928 = vmatprep.subr.bf16.mxu0 0
          %2929 = vmatpush2.bf16.xpose.msra.mxu0 0
          %2930 = vmatprep.subr.bf16.mxu0 0
          %2931 = vmatpush2.bf16.xpose.msra.mxu0 0
          %2932 = vmatprep.subr.bf16.mxu0 0
          %2933 = vmatpush2.bf16.xpose.msra.mxu0 0
          %2934 = vmatprep.subr.bf16.mxu0 0
          %2935 = vmatpush2.bf16.xpose.msra.mxu0 0
          %2936 = vmatprep.subr.bf16.mxu0 0
          %2937 = vmatpush2.bf16.xpose.msra.mxu0 0
          %2938 = vmatprep.subr.bf16.mxu0 0
          %2939 = vmatpush2.bf16.xpose.msra.mxu0 0
          %2940 = vmatprep.subr.bf16.mxu0 0
          %2941 = vmatpush2.bf16.xpose.msra.mxu0 0
          %2942 = vmatprep.mubr.bf16.mxu0 0
          %2943 = vmatmul.mubr.bf16.gmra.mxu0 %v2899
          %v2944 = vpop.f32.mrf.mxu0
          %v2945 = vadd.f32 0.0, %v2944
          %v2946 = vpop.f32.mrf.mxu0
          %v2947 = vpop.f32.mrf.mxu0
          %v2948 = vadd.f32 0.0, %v2947
          %v2949 = vpop.f32.mrf.mxu0
          %2950 = vmatprep.mubr.bf16.mxu0 0
          %2951 = vmatmul.mubr.bf16.gmra.mxu0 %v2902
          %v2952 = vpop.f32.mrf.mxu0
          %v2953 = vadd.f32 0.0, %v2952
          %v2954 = vpop.f32.mrf.mxu0
          %v2955 = vpop.f32.mrf.mxu0
          %v2956 = vpop.f32.mrf.mxu0
          %2957 = vdwg.mxu0
          %v2959 = vsel %vm2897, %v2851, 0
          %v2962 = vsel %vm2897, %v2852, 0
          %v2965 = vsel %vm2897, %v2867, 0
          %v2968 = vsel %vm2897, %v2868, 0
          %2970 = vmatprep.subr.bf16.mxu0 0
          %2971 = vmatpush1.bf16.xpose.msra.mxu0 0
          %2972 = vmatprep.subr.bf16.mxu0 0
          %2973 = vmatpush1.bf16.xpose.msra.mxu0 0
          %2974 = vmatprep.subr.bf16.mxu0 0
          %2975 = vmatpush1.bf16.xpose.msra.mxu0 0
          %2976 = vmatprep.subr.bf16.mxu0 0
          %2977 = vmatpush1.bf16.xpose.msra.mxu0 0
          %2978 = vmatprep.subr.bf16.mxu0 0
          %2979 = vmatpush1.bf16.xpose.msra.mxu0 0
          %2980 = vmatprep.subr.bf16.mxu0 0
          %2981 = vmatpush1.bf16.xpose.msra.mxu0 0
          %2982 = vmatprep.subr.bf16.mxu0 0
          %2983 = vmatpush1.bf16.xpose.msra.mxu0 %v2968
          %2984 = vmatprep.subr.bf16.mxu0 0
          %2985 = vmatpush1.bf16.xpose.msra.mxu0 %v2965
          %2986 = vmatprep.subr.bf16.mxu0 0
          %2987 = vmatpush2.bf16.xpose.msra.mxu0 0
          %2988 = vmatprep.subr.bf16.mxu0 0
          %2989 = vmatpush2.bf16.xpose.msra.mxu0 0
          %2990 = vmatprep.subr.bf16.mxu0 0
          %2991 = vmatpush2.bf16.xpose.msra.mxu0 0
          %2992 = vmatprep.subr.bf16.mxu0 0
          %2993 = vmatpush2.bf16.xpose.msra.mxu0 0
          %2994 = vmatprep.subr.bf16.mxu0 0
          %2995 = vmatpush2.bf16.xpose.msra.mxu0 0
          %2996 = vmatprep.subr.bf16.mxu0 0
          %2997 = vmatpush2.bf16.xpose.msra.mxu0 0
          %2998 = vmatprep.subr.bf16.mxu0 0
          %2999 = vmatpush2.bf16.xpose.msra.mxu0 0
          %3000 = vmatprep.subr.bf16.mxu0 0
          %3001 = vmatpush2.bf16.xpose.msra.mxu0 0
          %3002 = vmatprep.mubr.bf16.mxu0 0
          %3003 = vmatmul.mubr.bf16.gmra.mxu0 %v2959
          %v3004 = vpop.f32.mrf.mxu0
          %v3005 = vadd.f32 0.0, %v3004
          %v3006 = vpop.f32.mrf.mxu0
          %v3007 = vpop.f32.mrf.mxu0
          %v3008 = vadd.f32 0.0, %v3007
          %v3009 = vpop.f32.mrf.mxu0
          %3010 = vmatprep.mubr.bf16.mxu0 0
          %3011 = vmatmul.mubr.bf16.gmra.mxu0 %v2962
          %v3012 = vpop.f32.mrf.mxu0
          %v3013 = vadd.f32 0.0, %v3012
          %v3014 = vpop.f32.mrf.mxu0
          %v3015 = vpop.f32.mrf.mxu0
          %v3016 = vpop.f32.mrf.mxu0
          %3017 = vdwg.mxu0
          %v3019 = vsel %vm2897, %v2853, 0
          %v3022 = vsel %vm2897, %v2854, 0
          %v3025 = vsel %vm2897, %v2869, 0
          %v3028 = vsel %vm2897, %v2870, 0
          %3030 = vmatprep.subr.bf16.mxu0 0
          %3031 = vmatpush1.bf16.xpose.msra.mxu0 0
          %3032 = vmatprep.subr.bf16.mxu0 0
          %3033 = vmatpush1.bf16.xpose.msra.mxu0 0
          %3034 = vmatprep.subr.bf16.mxu0 0
          %3035 = vmatpush1.bf16.xpose.msra.mxu0 0
          %3036 = vmatprep.subr.bf16.mxu0 0
          %3037 = vmatpush1.bf16.xpose.msra.mxu0 0
          %3038 = vmatprep.subr.bf16.mxu0 0
          %3039 = vmatpush1.bf16.xpose.msra.mxu0 0
          %3040 = vmatprep.subr.bf16.mxu0 0
          %3041 = vmatpush1.bf16.xpose.msra.mxu0 0
          %3042 = vmatprep.subr.bf16.mxu0 0
          %3043 = vmatpush1.bf16.xpose.msra.mxu0 %v3028
          %3044 = vmatprep.subr.bf16.mxu0 0
          %3045 = vmatpush1.bf16.xpose.msra.mxu0 %v3025
          %3046 = vmatprep.subr.bf16.mxu0 0
          %3047 = vmatpush2.bf16.xpose.msra.mxu0 0
          %3048 = vmatprep.subr.bf16.mxu0 0
          %3049 = vmatpush2.bf16.xpose.msra.mxu0 0
          %3050 = vmatprep.subr.bf16.mxu0 0
          %3051 = vmatpush2.bf16.xpose.msra.mxu0 0
          %3052 = vmatprep.subr.bf16.mxu0 0
          %3053 = vmatpush2.bf16.xpose.msra.mxu0 0
          %3054 = vmatprep.subr.bf16.mxu0 0
          %3055 = vmatpush2.bf16.xpose.msra.mxu0 0
          %3056 = vmatprep.subr.bf16.mxu0 0
          %3057 = vmatpush2.bf16.xpose.msra.mxu0 0
          %3058 = vmatprep.subr.bf16.mxu0 0
          %3059 = vmatpush2.bf16.xpose.msra.mxu0 0
          %3060 = vmatprep.subr.bf16.mxu0 0
          %3061 = vmatpush2.bf16.xpose.msra.mxu0 0
          %3062 = vmatprep.mubr.bf16.mxu0 0
          %3063 = vmatmul.mubr.bf16.gmra.mxu0 %v3019
          %v3064 = vpop.f32.mrf.mxu0
          %v3065 = vadd.f32 0.0, %v3064
          %v3066 = vpop.f32.mrf.mxu0
          %v3067 = vpop.f32.mrf.mxu0
          %v3068 = vadd.f32 0.0, %v3067
          %v3069 = vpop.f32.mrf.mxu0
          %3070 = vmatprep.mubr.bf16.mxu0 0
          %3071 = vmatmul.mubr.bf16.gmra.mxu0 %v3022
          %v3072 = vpop.f32.mrf.mxu0
          %v3073 = vadd.f32 0.0, %v3072
          %v3074 = vpop.f32.mrf.mxu0
          %v3075 = vpop.f32.mrf.mxu0
          %v3076 = vpop.f32.mrf.mxu0
          %3077 = vdwg.mxu0
          %v3079 = vsel %vm2897, %v2855, 0
          %v3082 = vsel %vm2897, %v2856, 0
          %v3085 = vsel %vm2897, %v2871, 0
          %v3088 = vsel %vm2897, %v2872, 0
          %3090 = vmatprep.subr.bf16.mxu0 0
          %3091 = vmatpush1.bf16.xpose.msra.mxu0 0
          %3092 = vmatprep.subr.bf16.mxu0 0
          %3093 = vmatpush1.bf16.xpose.msra.mxu0 0
          %3094 = vmatprep.subr.bf16.mxu0 0
          %3095 = vmatpush1.bf16.xpose.msra.mxu0 0
          %3096 = vmatprep.subr.bf16.mxu0 0
          %3097 = vmatpush1.bf16.xpose.msra.mxu0 0
          %3098 = vmatprep.subr.bf16.mxu0 0
          %3099 = vmatpush1.bf16.xpose.msra.mxu0 0
          %3100 = vmatprep.subr.bf16.mxu0 0
          %3101 = vmatpush1.bf16.xpose.msra.mxu0 0
          %3102 = vmatprep.subr.bf16.mxu0 0
          %3103 = vmatpush1.bf16.xpose.msra.mxu0 %v3088
          %3104 = vmatprep.subr.bf16.mxu0 0
          %3105 = vmatpush1.bf16.xpose.msra.mxu0 %v3085
          %3106 = vmatprep.subr.bf16.mxu0 0
          %3107 = vmatpush2.bf16.xpose.msra.mxu0 0
          %3108 = vmatprep.subr.bf16.mxu0 0
          %3109 = vmatpush2.bf16.xpose.msra.mxu0 0
          %3110 = vmatprep.subr.bf16.mxu0 0
          %3111 = vmatpush2.bf16.xpose.msra.mxu0 0
          %3112 = vmatprep.subr.bf16.mxu0 0
          %3113 = vmatpush2.bf16.xpose.msra.mxu0 0
          %3114 = vmatprep.subr.bf16.mxu0 0
          %3115 = vmatpush2.bf16.xpose.msra.mxu0 0
          %3116 = vmatprep.subr.bf16.mxu0 0
          %3117 = vmatpush2.bf16.xpose.msra.mxu0 0
          %3118 = vmatprep.subr.bf16.mxu0 0
          %3119 = vmatpush2.bf16.xpose.msra.mxu0 0
          %3120 = vmatprep.subr.bf16.mxu0 0
          %3121 = vmatpush2.bf16.xpose.msra.mxu0 0
          %3122 = vmatprep.mubr.bf16.mxu0 0
          %3123 = vmatmul.mubr.bf16.gmra.mxu0 %v3079
          %v3124 = vpop.f32.mrf.mxu0
          %v3125 = vadd.f32 0.0, %v3124
          %v3126 = vpop.f32.mrf.mxu0
          %v3127 = vpop.f32.mrf.mxu0
          %v3128 = vadd.f32 0.0, %v3127
          %v3129 = vpop.f32.mrf.mxu0
          %3130 = vmatprep.mubr.bf16.mxu0 0
          %3131 = vmatmul.mubr.bf16.gmra.mxu0 %v3082
          %v3132 = vpop.f32.mrf.mxu0
          %v3133 = vadd.f32 0.0, %v3132
          %v3134 = vpop.f32.mrf.mxu0
          %v3135 = vpop.f32.mrf.mxu0
          %v3136 = vpop.f32.mrf.mxu0
          %3137 = vdwg.mxu0
          %v3139 = vsel %vm2897, %v2857, 0
          %v3142 = vsel %vm2897, %v2858, 0
          %v3145 = vsel %vm2897, %v2873, 0
          %v3148 = vsel %vm2897, %v2874, 0
          %3150 = vmatprep.subr.bf16.mxu0 0
          %3151 = vmatpush1.bf16.xpose.msra.mxu0 0
          %3152 = vmatprep.subr.bf16.mxu0 0
          %3153 = vmatpush1.bf16.xpose.msra.mxu0 0
          %3154 = vmatprep.subr.bf16.mxu0 0
          %3155 = vmatpush1.bf16.xpose.msra.mxu0 0
          %3156 = vmatprep.subr.bf16.mxu0 0
          %3157 = vmatpush1.bf16.xpose.msra.mxu0 0
          %3158 = vmatprep.subr.bf16.mxu0 0
          %3159 = vmatpush1.bf16.xpose.msra.mxu0 0
          %3160 = vmatprep.subr.bf16.mxu0 0
          %3161 = vmatpush1.bf16.xpose.msra.mxu0 0
          %3162 = vmatprep.subr.bf16.mxu0 0
          %3163 = vmatpush1.bf16.xpose.msra.mxu0 %v3148
          %3164 = vmatprep.subr.bf16.mxu0 0
          %3165 = vmatpush1.bf16.xpose.msra.mxu0 %v3145
          %3166 = vmatprep.subr.bf16.mxu0 0
          %3167 = vmatpush2.bf16.xpose.msra.mxu0 0
          %3168 = vmatprep.subr.bf16.mxu0 0
          %3169 = vmatpush2.bf16.xpose.msra.mxu0 0
          %3170 = vmatprep.subr.bf16.mxu0 0
          %3171 = vmatpush2.bf16.xpose.msra.mxu0 0
          %3172 = vmatprep.subr.bf16.mxu0 0
          %3173 = vmatpush2.bf16.xpose.msra.mxu0 0
          %3174 = vmatprep.subr.bf16.mxu0 0
          %3175 = vmatpush2.bf16.xpose.msra.mxu0 0
          %3176 = vmatprep.subr.bf16.mxu0 0
          %3177 = vmatpush2.bf16.xpose.msra.mxu0 0
          %3178 = vmatprep.subr.bf16.mxu0 0
          %3179 = vmatpush2.bf16.xpose.msra.mxu0 0
          %3180 = vmatprep.subr.bf16.mxu0 0
          %3181 = vmatpush2.bf16.xpose.msra.mxu0 0
          %3182 = vmatprep.mubr.bf16.mxu0 0
          %3183 = vmatmul.mubr.bf16.gmra.mxu0 %v3139
          %v3184 = vpop.f32.mrf.mxu0
          %v3185 = vadd.f32 0.0, %v3184
          %v3186 = vpop.f32.mrf.mxu0
          %v3187 = vpop.f32.mrf.mxu0
          %v3188 = vadd.f32 0.0, %v3187
          %v3189 = vpop.f32.mrf.mxu0
          %3190 = vmatprep.mubr.bf16.mxu0 0
          %3191 = vmatmul.mubr.bf16.gmra.mxu0 %v3142
          %v3192 = vpop.f32.mrf.mxu0
          %v3193 = vadd.f32 0.0, %v3192
          %v3194 = vpop.f32.mrf.mxu0
          %v3195 = vpop.f32.mrf.mxu0
          %v3196 = vpop.f32.mrf.mxu0
          %3197 = vdwg.mxu0
          %v3199 = vsel %vm2897, %v2859, 0
          %v3202 = vsel %vm2897, %v2860, 0
          %v3205 = vsel %vm2897, %v2875, 0
          %v3208 = vsel %vm2897, %v2876, 0
          %3210 = vmatprep.subr.bf16.mxu0 0
          %3211 = vmatpush1.bf16.xpose.msra.mxu0 0
          %3212 = vmatprep.subr.bf16.mxu0 0
          %3213 = vmatpush1.bf16.xpose.msra.mxu0 0
          %3214 = vmatprep.subr.bf16.mxu0 0
          %3215 = vmatpush1.bf16.xpose.msra.mxu0 0
          %3216 = vmatprep.subr.bf16.mxu0 0
          %3217 = vmatpush1.bf16.xpose.msra.mxu0 0
          %3218 = vmatprep.subr.bf16.mxu0 0
          %3219 = vmatpush1.bf16.xpose.msra.mxu0 0
          %3220 = vmatprep.subr.bf16.mxu0 0
          %3221 = vmatpush1.bf16.xpose.msra.mxu0 0
          %3222 = vmatprep.subr.bf16.mxu0 0
          %3223 = vmatpush1.bf16.xpose.msra.mxu0 %v3208
          %3224 = vmatprep.subr.bf16.mxu0 0
          %3225 = vmatpush1.bf16.xpose.msra.mxu0 %v3205
          %3226 = vmatprep.subr.bf16.mxu0 0
          %3227 = vmatpush2.bf16.xpose.msra.mxu0 0
          %3228 = vmatprep.subr.bf16.mxu0 0
          %3229 = vmatpush2.bf16.xpose.msra.mxu0 0
          %3230 = vmatprep.subr.bf16.mxu0 0
          %3231 = vmatpush2.bf16.xpose.msra.mxu0 0
          %3232 = vmatprep.subr.bf16.mxu0 0
          %3233 = vmatpush2.bf16.xpose.msra.mxu0 0
          %3234 = vmatprep.subr.bf16.mxu0 0
          %3235 = vmatpush2.bf16.xpose.msra.mxu0 0
          %3236 = vmatprep.subr.bf16.mxu0 0
          %3237 = vmatpush2.bf16.xpose.msra.mxu0 0
          %3238 = vmatprep.subr.bf16.mxu0 0
          %3239 = vmatpush2.bf16.xpose.msra.mxu0 0
          %3240 = vmatprep.subr.bf16.mxu0 0
          %3241 = vmatpush2.bf16.xpose.msra.mxu0 0
          %3242 = vmatprep.mubr.bf16.mxu0 0
          %3243 = vmatmul.mubr.bf16.gmra.mxu0 %v3199
          %v3244 = vpop.f32.mrf.mxu0
          %v3245 = vadd.f32 0.0, %v3244
          %v3246 = vpop.f32.mrf.mxu0
          %v3247 = vpop.f32.mrf.mxu0
          %v3248 = vadd.f32 0.0, %v3247
          %v3249 = vpop.f32.mrf.mxu0
          %3250 = vmatprep.mubr.bf16.mxu0 0
          %3251 = vmatmul.mubr.bf16.gmra.mxu0 %v3202
          %v3252 = vpop.f32.mrf.mxu0
          %v3253 = vadd.f32 0.0, %v3252
          %v3254 = vpop.f32.mrf.mxu0
          %v3255 = vpop.f32.mrf.mxu0
          %v3256 = vpop.f32.mrf.mxu0
          %3257 = vdwg.mxu0
          %v3259 = vsel %vm2897, %v2861, 0
          %v3262 = vsel %vm2897, %v2862, 0
          %v3265 = vsel %vm2897, %v2877, 0
          %v3268 = vsel %vm2897, %v2878, 0
          %3270 = vmatprep.subr.bf16.mxu0 0
          %3271 = vmatpush1.bf16.xpose.msra.mxu0 0
          %3272 = vmatprep.subr.bf16.mxu0 0
          %3273 = vmatpush1.bf16.xpose.msra.mxu0 0
          %3274 = vmatprep.subr.bf16.mxu0 0
          %3275 = vmatpush1.bf16.xpose.msra.mxu0 0
          %3276 = vmatprep.subr.bf16.mxu0 0
          %3277 = vmatpush1.bf16.xpose.msra.mxu0 0
          %3278 = vmatprep.subr.bf16.mxu0 0
          %3279 = vmatpush1.bf16.xpose.msra.mxu0 0
          %3280 = vmatprep.subr.bf16.mxu0 0
          %3281 = vmatpush1.bf16.xpose.msra.mxu0 0
          %3282 = vmatprep.subr.bf16.mxu0 0
          %3283 = vmatpush1.bf16.xpose.msra.mxu0 %v3268
          %3284 = vmatprep.subr.bf16.mxu0 0
          %3285 = vmatpush1.bf16.xpose.msra.mxu0 %v3265
          %3286 = vmatprep.subr.bf16.mxu0 0
          %3287 = vmatpush2.bf16.xpose.msra.mxu0 0
          %3288 = vmatprep.subr.bf16.mxu0 0
          %3289 = vmatpush2.bf16.xpose.msra.mxu0 0
          %3290 = vmatprep.subr.bf16.mxu0 0
          %3291 = vmatpush2.bf16.xpose.msra.mxu0 0
          %3292 = vmatprep.subr.bf16.mxu0 0
          %3293 = vmatpush2.bf16.xpose.msra.mxu0 0
          %3294 = vmatprep.subr.bf16.mxu0 0
          %3295 = vmatpush2.bf16.xpose.msra.mxu0 0
          %3296 = vmatprep.subr.bf16.mxu0 0
          %3297 = vmatpush2.bf16.xpose.msra.mxu0 0
          %3298 = vmatprep.subr.bf16.mxu0 0
          %3299 = vmatpush2.bf16.xpose.msra.mxu0 0
          %3300 = vmatprep.subr.bf16.mxu0 0
          %3301 = vmatpush2.bf16.xpose.msra.mxu0 0
          %3302 = vmatprep.mubr.bf16.mxu0 0
          %3303 = vmatmul.mubr.bf16.gmra.mxu0 %v3259
          %v3304 = vpop.f32.mrf.mxu0
          %v3305 = vadd.f32 0.0, %v3304
          %v3306 = vpop.f32.mrf.mxu0
          %v3307 = vpop.f32.mrf.mxu0
          %v3308 = vadd.f32 0.0, %v3307
          %v3309 = vpop.f32.mrf.mxu0
          %3310 = vmatprep.mubr.bf16.mxu0 0
          %3311 = vmatmul.mubr.bf16.gmra.mxu0 %v3262
          %v3312 = vpop.f32.mrf.mxu0
          %v3313 = vadd.f32 0.0, %v3312
          %v3314 = vpop.f32.mrf.mxu0
          %v3315 = vpop.f32.mrf.mxu0
          %v3316 = vpop.f32.mrf.mxu0
          %3317 = vdwg.mxu0
          %v3319 = vsel %vm2897, %v2863, 0
          %v3322 = vsel %vm2897, %v2864, 0
          %v3325 = vsel %vm2897, %v2879, 0
          %v3328 = vsel %vm2897, %v2880, 0
          %3330 = vmatprep.subr.bf16.mxu0 0
          %3331 = vmatpush1.bf16.xpose.msra.mxu0 0
          %3332 = vmatprep.subr.bf16.mxu0 0
          %3333 = vmatpush1.bf16.xpose.msra.mxu0 0
          %3334 = vmatprep.subr.bf16.mxu0 0
          %3335 = vmatpush1.bf16.xpose.msra.mxu0 0
          %3336 = vmatprep.subr.bf16.mxu0 0
          %3337 = vmatpush1.bf16.xpose.msra.mxu0 0
          %3338 = vmatprep.subr.bf16.mxu0 0
          %3339 = vmatpush1.bf16.xpose.msra.mxu0 0
          %3340 = vmatprep.subr.bf16.mxu0 0
          %3341 = vmatpush1.bf16.xpose.msra.mxu0 0
          %3342 = vmatprep.subr.bf16.mxu0 0
          %3343 = vmatpush1.bf16.xpose.msra.mxu0 %v3328
          %3344 = vmatprep.subr.bf16.mxu0 0
          %3345 = vmatpush1.bf16.xpose.msra.mxu0 %v3325
          %3346 = vmatprep.subr.bf16.mxu0 0
          %3347 = vmatpush2.bf16.xpose.msra.mxu0 0
          %3348 = vmatprep.subr.bf16.mxu0 0
          %3349 = vmatpush2.bf16.xpose.msra.mxu0 0
          %3350 = vmatprep.subr.bf16.mxu0 0
          %3351 = vmatpush2.bf16.xpose.msra.mxu0 0
          %3352 = vmatprep.subr.bf16.mxu0 0
          %3353 = vmatpush2.bf16.xpose.msra.mxu0 0
          %3354 = vmatprep.subr.bf16.mxu0 0
          %3355 = vmatpush2.bf16.xpose.msra.mxu0 0
          %3356 = vmatprep.subr.bf16.mxu0 0
          %3357 = vmatpush2.bf16.xpose.msra.mxu0 0
          %3358 = vmatprep.subr.bf16.mxu0 0
          %3359 = vmatpush2.bf16.xpose.msra.mxu0 0
          %3360 = vmatprep.subr.bf16.mxu0 0
          %3361 = vmatpush2.bf16.xpose.msra.mxu0 0
          %3362 = vmatprep.mubr.bf16.mxu0 0
          %3363 = vmatmul.mubr.bf16.gmra.mxu0 %v3319
          %v3364 = vpop.f32.mrf.mxu0
          %v3365 = vadd.f32 0.0, %v3364
          %v3366 = vpop.f32.mrf.mxu0
          %v3367 = vpop.f32.mrf.mxu0
          %v3368 = vadd.f32 0.0, %v3367
          %v3369 = vpop.f32.mrf.mxu0
          %3370 = vmatprep.mubr.bf16.mxu0 0
          %3371 = vmatmul.mubr.bf16.gmra.mxu0 %v3322
          %v3372 = vpop.f32.mrf.mxu0
          %v3373 = vadd.f32 0.0, %v3372
          %v3374 = vpop.f32.mrf.mxu0
          %v3375 = vpop.f32.mrf.mxu0
          %v3376 = vpop.f32.mrf.mxu0
          %3377 = vdwg.mxu0
          %vm3378 = vcmask 138240
          %v3379 = vsel %vm3378, %v2945, -inf
          %3380 = vmax.xlane.f32.xlu0 %v3379
          %v3381 = vpop.xlane.xlu0 %3380
          %v3382 = vsel %vm3378, %v2948, -inf
          %3383 = vmax.xlane.f32.xlu0 %v3382
          %v3384 = vpop.xlane.xlu0 %3383
          %vm3385 = vcmask 131072
          %v3386 = vsel %vm3385, %v2953, -inf
          %3387 = vmax.xlane.f32.xlu0 %v3386
          %v3388 = vpop.xlane.xlu0 %3387
          %v3389 = vsel %vm3378, %v3005, -inf
          %3390 = vmax.xlane.f32.xlu0 %v3389
          %v3391 = vpop.xlane.xlu0 %3390
          %v3392 = vsel %vm3378, %v3008, -inf
          %3393 = vmax.xlane.f32.xlu0 %v3392
          %v3394 = vpop.xlane.xlu0 %3393
          %v3395 = vsel %vm3385, %v3013, -inf
          %3396 = vmax.xlane.f32.xlu0 %v3395
          %v3397 = vpop.xlane.xlu0 %3396
          %v3398 = vsel %vm3378, %v3065, -inf
          %3399 = vmax.xlane.f32.xlu0 %v3398
          %v3400 = vpop.xlane.xlu0 %3399
          %v3401 = vsel %vm3378, %v3068, -inf
          %3402 = vmax.xlane.f32.xlu0 %v3401
          %v3403 = vpop.xlane.xlu0 %3402
          %v3404 = vsel %vm3385, %v3073, -inf
          %3405 = vmax.xlane.f32.xlu0 %v3404
          %v3406 = vpop.xlane.xlu0 %3405
          %v3407 = vsel %vm3378, %v3125, -inf
          %3408 = vmax.xlane.f32.xlu0 %v3407
          %v3409 = vpop.xlane.xlu0 %3408
          %v3410 = vsel %vm3378, %v3128, -inf
          %3411 = vmax.xlane.f32.xlu0 %v3410
          %v3412 = vpop.xlane.xlu0 %3411
          %v3413 = vsel %vm3385, %v3133, -inf
          %3414 = vmax.xlane.f32.xlu0 %v3413
          %v3415 = vpop.xlane.xlu0 %3414
          %v3416 = vsel %vm3378, %v3185, -inf
          %3417 = vmax.xlane.f32.xlu0 %v3416
          %v3418 = vpop.xlane.xlu0 %3417
          %v3419 = vsel %vm3378, %v3188, -inf
          %3420 = vmax.xlane.f32.xlu0 %v3419
          %v3421 = vpop.xlane.xlu0 %3420
          %v3422 = vsel %vm3385, %v3193, -inf
          %3423 = vmax.xlane.f32.xlu0 %v3422
          %v3424 = vpop.xlane.xlu0 %3423
          %v3425 = vsel %vm3378, %v3245, -inf
          %3426 = vmax.xlane.f32.xlu0 %v3425
          %v3427 = vpop.xlane.xlu0 %3426
          %v3428 = vsel %vm3378, %v3248, -inf
          %3429 = vmax.xlane.f32.xlu0 %v3428
          %v3430 = vpop.xlane.xlu0 %3429
          %v3431 = vsel %vm3385, %v3253, -inf
          %3432 = vmax.xlane.f32.xlu0 %v3431
          %v3433 = vpop.xlane.xlu0 %3432
          %v3434 = vsel %vm3378, %v3305, -inf
          %3435 = vmax.xlane.f32.xlu0 %v3434
          %v3436 = vpop.xlane.xlu0 %3435
          %v3437 = vsel %vm3378, %v3308, -inf
          %3438 = vmax.xlane.f32.xlu0 %v3437
          %v3439 = vpop.xlane.xlu0 %3438
          %v3440 = vsel %vm3385, %v3313, -inf
          %3441 = vmax.xlane.f32.xlu0 %v3440
          %v3442 = vpop.xlane.xlu0 %3441
          %v3443 = vsel %vm3378, %v3365, -inf
          %3444 = vmax.xlane.f32.xlu0 %v3443
          %v3445 = vpop.xlane.xlu0 %3444
          %v3446 = vsel %vm3378, %v3368, -inf
          %3447 = vmax.xlane.f32.xlu0 %v3446
          %v3448 = vpop.xlane.xlu0 %3447
          %v3449 = vsel %vm3385, %v3373, -inf
          %3450 = vmax.xlane.f32.xlu0 %v3449
          %v3451 = vpop.xlane.xlu0 %3450
          %v3452 = vsub.f32 %v2945, %v3381
          %v3453 = vsub.f32 %v2948, %v3384
          %v3454 = vsub.f32 %v2953, %v3388
          %v3455 = vsub.f32 %v3005, %v3391
          %v3456 = vsub.f32 %v3008, %v3394
          %v3457 = vsub.f32 %v3013, %v3397
          %v3458 = vsub.f32 %v3065, %v3400
          %v3459 = vsub.f32 %v3068, %v3403
          %v3460 = vsub.f32 %v3073, %v3406
          %v3461 = vsub.f32 %v3125, %v3409
          %v3462 = vsub.f32 %v3128, %v3412
          %v3463 = vsub.f32 %v3133, %v3415
          %v3464 = vsub.f32 %v3185, %v3418
          %v3465 = vsub.f32 %v3188, %v3421
          %v3466 = vsub.f32 %v3193, %v3424
          %v3467 = vsub.f32 %v3245, %v3427
          %v3468 = vsub.f32 %v3248, %v3430
          %v3469 = vsub.f32 %v3253, %v3433
          %v3470 = vsub.f32 %v3305, %v3436
          %v3471 = vsub.f32 %v3308, %v3439
          %v3472 = vsub.f32 %v3313, %v3442
          %v3473 = vsub.f32 %v3365, %v3445
          %v3474 = vsub.f32 %v3368, %v3448
          %v3475 = vsub.f32 %v3373, %v3451
          %v3476 = vmul.f32 %v3452, 1.442695
          %v3477 = vpow.pop %v3476
          %v3478 = vmul.f32 %v3453, 1.442695
          %v3479 = vpow.pop %v3478
          %v3480 = vmul.f32 %v3454, 1.442695
          %v3481 = vpow.pop %v3480
          %v3482 = vmul.f32 %v3455, 1.442695
          %v3483 = vpow.pop %v3482
          %v3484 = vmul.f32 %v3456, 1.442695
          %v3485 = vpow.pop %v3484
          %v3486 = vmul.f32 %v3457, 1.442695
          %v3487 = vpow.pop %v3486
          %v3488 = vmul.f32 %v3458, 1.442695
          %v3489 = vpow.pop %v3488
          %v3490 = vmul.f32 %v3459, 1.442695
          %v3491 = vpow.pop %v3490
          %v3492 = vmul.f32 %v3460, 1.442695
          %v3493 = vpow.pop %v3492
          %v3494 = vmul.f32 %v3461, 1.442695
          %v3495 = vpow.pop %v3494
          %v3496 = vmul.f32 %v3462, 1.442695
          %v3497 = vpow.pop %v3496
          %v3498 = vmul.f32 %v3463, 1.442695
          %v3499 = vpow.pop %v3498
          %v3500 = vmul.f32 %v3464, 1.442695
          %v3501 = vpow.pop %v3500
          %v3502 = vmul.f32 %v3465, 1.442695
          %v3503 = vpow.pop %v3502
          %v3504 = vmul.f32 %v3466, 1.442695
          %v3505 = vpow.pop %v3504
          %v3506 = vmul.f32 %v3467, 1.442695
          %v3507 = vpow.pop %v3506
          %v3508 = vmul.f32 %v3468, 1.442695
          %v3509 = vpow.pop %v3508
          %v3510 = vmul.f32 %v3469, 1.442695
          %v3511 = vpow.pop %v3510
          %v3512 = vmul.f32 %v3470, 1.442695
          %v3513 = vpow.pop %v3512
          %v3514 = vmul.f32 %v3471, 1.442695
          %v3515 = vpow.pop %v3514
          %v3516 = vmul.f32 %v3472, 1.442695
          %v3517 = vpow.pop %v3516
          %v3518 = vmul.f32 %v3473, 1.442695
          %v3519 = vpow.pop %v3518
          %v3520 = vmul.f32 %v3474, 1.442695
          %v3521 = vpow.pop %v3520
          %v3522 = vmul.f32 %v3475, 1.442695
          %v3523 = vpow.pop %v3522
          %v3524 = vsel %vm3378, %v3477, 0.0
          %3525 = vadd.xlane.f32.xlu0 %v3524
          %v3526 = vpop.xlane.xlu0 %3525
          %v3527 = vsel %vm3378, %v3479, 0.0
          %3528 = vadd.xlane.f32.xlu0 %v3527
          %v3529 = vpop.xlane.xlu0 %3528
          %v3530 = vsel %vm3385, %v3481, 0.0
          %3531 = vadd.xlane.f32.xlu0 %v3530
          %v3532 = vpop.xlane.xlu0 %3531
          %v3533 = vsel %vm3378, %v3483, 0.0
          %3534 = vadd.xlane.f32.xlu0 %v3533
          %v3535 = vpop.xlane.xlu0 %3534
          %v3536 = vsel %vm3378, %v3485, 0.0
          %3537 = vadd.xlane.f32.xlu0 %v3536
          %v3538 = vpop.xlane.xlu0 %3537
          %v3539 = vsel %vm3385, %v3487, 0.0
          %3540 = vadd.xlane.f32.xlu0 %v3539
          %v3541 = vpop.xlane.xlu0 %3540
          %v3542 = vsel %vm3378, %v3489, 0.0
          %3543 = vadd.xlane.f32.xlu0 %v3542
          %v3544 = vpop.xlane.xlu0 %3543
          %v3545 = vsel %vm3378, %v3491, 0.0
          %3546 = vadd.xlane.f32.xlu0 %v3545
          %v3547 = vpop.xlane.xlu0 %3546
          %v3548 = vsel %vm3385, %v3493, 0.0
          %3549 = vadd.xlane.f32.xlu0 %v3548
          %v3550 = vpop.xlane.xlu0 %3549
          %v3551 = vsel %vm3378, %v3495, 0.0
          %3552 = vadd.xlane.f32.xlu0 %v3551
          %v3553 = vpop.xlane.xlu0 %3552
          %v3554 = vsel %vm3378, %v3497, 0.0
          %3555 = vadd.xlane.f32.xlu0 %v3554
          %v3556 = vpop.xlane.xlu0 %3555
          %v3557 = vsel %vm3385, %v3499, 0.0
          %3558 = vadd.xlane.f32.xlu0 %v3557
          %v3559 = vpop.xlane.xlu0 %3558
          %v3560 = vsel %vm3378, %v3501, 0.0
          %3561 = vadd.xlane.f32.xlu0 %v3560
          %v3562 = vpop.xlane.xlu0 %3561
          %v3563 = vsel %vm3378, %v3503, 0.0
          %3564 = vadd.xlane.f32.xlu0 %v3563
          %v3565 = vpop.xlane.xlu0 %3564
          %v3566 = vsel %vm3385, %v3505, 0.0
          %3567 = vadd.xlane.f32.xlu0 %v3566
          %v3568 = vpop.xlane.xlu0 %3567
          %v3569 = vsel %vm3378, %v3507, 0.0
          %3570 = vadd.xlane.f32.xlu0 %v3569
          %v3571 = vpop.xlane.xlu0 %3570
          %v3572 = vsel %vm3378, %v3509, 0.0
          %3573 = vadd.xlane.f32.xlu0 %v3572
          %v3574 = vpop.xlane.xlu0 %3573
          %v3575 = vsel %vm3385, %v3511, 0.0
          %3576 = vadd.xlane.f32.xlu0 %v3575
          %v3577 = vpop.xlane.xlu0 %3576
          %v3578 = vsel %vm3378, %v3513, 0.0
          %3579 = vadd.xlane.f32.xlu0 %v3578
          %v3580 = vpop.xlane.xlu0 %3579
          %v3581 = vsel %vm3378, %v3515, 0.0
          %3582 = vadd.xlane.f32.xlu0 %v3581
          %v3583 = vpop.xlane.xlu0 %3582
          %v3584 = vsel %vm3385, %v3517, 0.0
          %3585 = vadd.xlane.f32.xlu0 %v3584
          %v3586 = vpop.xlane.xlu0 %3585
          %v3587 = vsel %vm3378, %v3519, 0.0
          %3588 = vadd.xlane.f32.xlu0 %v3587
          %v3589 = vpop.xlane.xlu0 %3588
          %v3590 = vsel %vm3378, %v3521, 0.0
          %3591 = vadd.xlane.f32.xlu0 %v3590
          %v3592 = vpop.xlane.xlu0 %3591
          %v3593 = vsel %vm3385, %v3523, 0.0
          %3594 = vadd.xlane.f32.xlu0 %v3593
          %v3595 = vpop.xlane.xlu0 %3594
          %v3596 = vrcp.pop %v3526
          %v3597 = vrcp.pop %v3529
          %v3598 = vrcp.pop %v3532
          %v3599 = vrcp.pop %v3535
          %v3600 = vrcp.pop %v3538
          %v3601 = vrcp.pop %v3541
          %v3602 = vrcp.pop %v3544
          %v3603 = vrcp.pop %v3547
          %v3604 = vrcp.pop %v3550
          %v3605 = vrcp.pop %v3553
          %v3606 = vrcp.pop %v3556
          %v3607 = vrcp.pop %v3559
          %v3608 = vrcp.pop %v3562
          %v3609 = vrcp.pop %v3565
          %v3610 = vrcp.pop %v3568
          %v3611 = vrcp.pop %v3571
          %v3612 = vrcp.pop %v3574
          %v3613 = vrcp.pop %v3577
          %v3614 = vrcp.pop %v3580
          %v3615 = vrcp.pop %v3583
          %v3616 = vrcp.pop %v3586
          %v3617 = vrcp.pop %v3589
          %v3618 = vrcp.pop %v3592
          %v3619 = vrcp.pop %v3595
          %v3620 = vmul.f32 %v3477, %v3596
          %v3621 = vmul.f32 %v3479, %v3597
          %v3622 = vmul.f32 %v3481, %v3598
          %v3623 = vmul.f32 %v3483, %v3599
          %v3624 = vmul.f32 %v3485, %v3600
          %v3625 = vmul.f32 %v3487, %v3601
          %v3626 = vmul.f32 %v3489, %v3602
          %v3627 = vmul.f32 %v3491, %v3603
          %v3628 = vmul.f32 %v3493, %v3604
          %v3629 = vmul.f32 %v3495, %v3605
          %v3630 = vmul.f32 %v3497, %v3606
          %v3631 = vmul.f32 %v3499, %v3607
          %v3632 = vmul.f32 %v3501, %v3608
          %v3633 = vmul.f32 %v3503, %v3609
          %v3634 = vmul.f32 %v3505, %v3610
          %v3635 = vmul.f32 %v3507, %v3611
          %v3636 = vmul.f32 %v3509, %v3612
          %v3637 = vmul.f32 %v3511, %v3613
          %v3638 = vmul.f32 %v3513, %v3614
          %v3639 = vmul.f32 %v3515, %v3615
          %v3640 = vmul.f32 %v3517, %v3616
          %v3641 = vmul.f32 %v3519, %v3617
          %v3642 = vmul.f32 %v3521, %v3618
          %v3643 = vmul.f32 %v3523, %v3619
          %v3644 = vpack.c.bf16 %v3621, %v3620
          %v3645 = vpack.c.bf16 %v3622, %v3622
          %v3646 = vpack.c.bf16 %v3624, %v3623
          %v3647 = vpack.c.bf16 %v3625, %v3625
          %v3648 = vpack.c.bf16 %v3627, %v3626
          %v3649 = vpack.c.bf16 %v3628, %v3628
          %v3650 = vpack.c.bf16 %v3630, %v3629
          %v3651 = vpack.c.bf16 %v3631, %v3631
          %v3652 = vpack.c.bf16 %v3633, %v3632
          %v3653 = vpack.c.bf16 %v3634, %v3634
          %v3654 = vpack.c.bf16 %v3636, %v3635
          %v3655 = vpack.c.bf16 %v3637, %v3637
          %v3656 = vpack.c.bf16 %v3639, %v3638
          %v3657 = vpack.c.bf16 %v3640, %v3640
          %v3658 = vpack.c.bf16 %v3642, %v3641
          %v3659 = vpack.c.bf16 %v3643, %v3643
          %v3661 = vsel %vm3378, %v3644, 0
          %v3664 = vsel %vm3378, %v3645, 0
          %vm3666 = vcmask 1040384
          %v3667 = vsel 0, 4294967295, 65535
          %v3668 = vsel %vm3666, %v3667, 0
          %v3670 = vand.u32 %v2882, %v3668
          %3672 = vmatprep.subr.bf16.mxu0 0
          %3673 = vmatpush1.bf16.msra.mxu0 0
          %3674 = vmatprep.subr.bf16.mxu0 0
          %3675 = vmatpush1.bf16.msra.mxu0 0
          %3676 = vmatprep.subr.bf16.mxu0 0
          %3677 = vmatpush1.bf16.msra.mxu0 0
          %3678 = vmatprep.subr.bf16.mxu0 0
          %3679 = vmatpush1.bf16.msra.mxu0 0
          %3680 = vmatprep.subr.bf16.mxu0 0
          %3681 = vmatpush1.bf16.msra.mxu0 0
          %3682 = vmatprep.subr.bf16.mxu0 0
          %3683 = vmatpush1.bf16.msra.mxu0 0
          %3684 = vmatprep.subr.bf16.mxu0 0
          %3685 = vmatpush1.bf16.msra.mxu0 %v3670
          %3686 = vmatprep.subr.bf16.mxu0 0
          %3687 = vmatpush1.bf16.msra.mxu0 %v2881
          %3688 = vmatprep.subr.bf16.mxu0 0
          %3689 = vmatpush2.bf16.msra.mxu0 0
          %3690 = vmatprep.subr.bf16.mxu0 0
          %3691 = vmatpush2.bf16.msra.mxu0 0
          %3692 = vmatprep.subr.bf16.mxu0 0
          %3693 = vmatpush2.bf16.msra.mxu0 0
          %3694 = vmatprep.subr.bf16.mxu0 0
          %3695 = vmatpush2.bf16.msra.mxu0 0
          %3696 = vmatprep.subr.bf16.mxu0 0
          %3697 = vmatpush2.bf16.msra.mxu0 0
          %3698 = vmatprep.subr.bf16.mxu0 0
          %3699 = vmatpush2.bf16.msra.mxu0 0
          %3700 = vmatprep.subr.bf16.mxu0 0
          %3701 = vmatpush2.bf16.msra.mxu0 0
          %3702 = vmatprep.subr.bf16.mxu0 0
          %3703 = vmatpush2.bf16.msra.mxu0 0
          %3704 = vmatprep.mubr.bf16.mxu0 0
          %3705 = vmatmul.mubr.bf16.gmra.mxu0 %v3661
          %v3706 = vpop.f32.mrf.mxu0
          %v3707 = vadd.f32 0.0, %v3706
          %v3708 = vpop.f32.mrf.mxu0
          %v3709 = vpop.f32.mrf.mxu0
          %v3710 = vadd.f32 0.0, %v3709
          %v3711 = vpop.f32.mrf.mxu0
          %3712 = vmatprep.mubr.bf16.mxu0 0
          %3713 = vmatmul.mubr.bf16.gmra.mxu0 %v3664
          %v3714 = vpop.f32.mrf.mxu0
          %v3715 = vadd.f32 0.0, %v3714
          %v3716 = vpop.f32.mrf.mxu0
          %v3717 = vpop.f32.mrf.mxu0
          %v3718 = vpop.f32.mrf.mxu0
          %3719 = vdwg.mxu0
          %v3721 = vsel %vm3378, %v3646, 0
          %v3724 = vsel %vm3378, %v3647, 0
          %v3727 = vand.u32 %v2884, %v3668
          %3729 = vmatprep.subr.bf16.mxu0 0
          %3730 = vmatpush1.bf16.msra.mxu0 0
          %3731 = vmatprep.subr.bf16.mxu0 0
          %3732 = vmatpush1.bf16.msra.mxu0 0
          %3733 = vmatprep.subr.bf16.mxu0 0
          %3734 = vmatpush1.bf16.msra.mxu0 0
          %3735 = vmatprep.subr.bf16.mxu0 0
          %3736 = vmatpush1.bf16.msra.mxu0 0
          %3737 = vmatprep.subr.bf16.mxu0 0
          %3738 = vmatpush1.bf16.msra.mxu0 0
          %3739 = vmatprep.subr.bf16.mxu0 0
          %3740 = vmatpush1.bf16.msra.mxu0 0
          %3741 = vmatprep.subr.bf16.mxu0 0
          %3742 = vmatpush1.bf16.msra.mxu0 %v3727
          %3743 = vmatprep.subr.bf16.mxu0 0
          %3744 = vmatpush1.bf16.msra.mxu0 %v2883
          %3745 = vmatprep.subr.bf16.mxu0 0
          %3746 = vmatpush2.bf16.msra.mxu0 0
          %3747 = vmatprep.subr.bf16.mxu0 0
          %3748 = vmatpush2.bf16.msra.mxu0 0
          %3749 = vmatprep.subr.bf16.mxu0 0
          %3750 = vmatpush2.bf16.msra.mxu0 0
          %3751 = vmatprep.subr.bf16.mxu0 0
          %3752 = vmatpush2.bf16.msra.mxu0 0
          %3753 = vmatprep.subr.bf16.mxu0 0
          %3754 = vmatpush2.bf16.msra.mxu0 0
          %3755 = vmatprep.subr.bf16.mxu0 0
          %3756 = vmatpush2.bf16.msra.mxu0 0
          %3757 = vmatprep.subr.bf16.mxu0 0
          %3758 = vmatpush2.bf16.msra.mxu0 0
          %3759 = vmatprep.subr.bf16.mxu0 0
          %3760 = vmatpush2.bf16.msra.mxu0 0
          %3761 = vmatprep.mubr.bf16.mxu0 0
          %3762 = vmatmul.mubr.bf16.gmra.mxu0 %v3721
          %v3763 = vpop.f32.mrf.mxu0
          %v3764 = vadd.f32 0.0, %v3763
          %v3765 = vpop.f32.mrf.mxu0
          %v3766 = vpop.f32.mrf.mxu0
          %v3767 = vadd.f32 0.0, %v3766
          %v3768 = vpop.f32.mrf.mxu0
          %3769 = vmatprep.mubr.bf16.mxu0 0
          %3770 = vmatmul.mubr.bf16.gmra.mxu0 %v3724
          %v3771 = vpop.f32.mrf.mxu0
          %v3772 = vadd.f32 0.0, %v3771
          %v3773 = vpop.f32.mrf.mxu0
          %v3774 = vpop.f32.mrf.mxu0
          %v3775 = vpop.f32.mrf.mxu0
          %3776 = vdwg.mxu0
          %v3778 = vsel %vm3378, %v3648, 0
          %v3781 = vsel %vm3378, %v3649, 0
          %v3784 = vand.u32 %v2886, %v3668
          %3786 = vmatprep.subr.bf16.mxu0 0
          %3787 = vmatpush1.bf16.msra.mxu0 0
          %3788 = vmatprep.subr.bf16.mxu0 0
          %3789 = vmatpush1.bf16.msra.mxu0 0
          %3790 = vmatprep.subr.bf16.mxu0 0
          %3791 = vmatpush1.bf16.msra.mxu0 0
          %3792 = vmatprep.subr.bf16.mxu0 0
          %3793 = vmatpush1.bf16.msra.mxu0 0
          %3794 = vmatprep.subr.bf16.mxu0 0
          %3795 = vmatpush1.bf16.msra.mxu0 0
          %3796 = vmatprep.subr.bf16.mxu0 0
          %3797 = vmatpush1.bf16.msra.mxu0 0
          %3798 = vmatprep.subr.bf16.mxu0 0
          %3799 = vmatpush1.bf16.msra.mxu0 %v3784
          %3800 = vmatprep.subr.bf16.mxu0 0
          %3801 = vmatpush1.bf16.msra.mxu0 %v2885
          %3802 = vmatprep.subr.bf16.mxu0 0
          %3803 = vmatpush2.bf16.msra.mxu0 0
          %3804 = vmatprep.subr.bf16.mxu0 0
          %3805 = vmatpush2.bf16.msra.mxu0 0
          %3806 = vmatprep.subr.bf16.mxu0 0
          %3807 = vmatpush2.bf16.msra.mxu0 0
          %3808 = vmatprep.subr.bf16.mxu0 0
          %3809 = vmatpush2.bf16.msra.mxu0 0
          %3810 = vmatprep.subr.bf16.mxu0 0
          %3811 = vmatpush2.bf16.msra.mxu0 0
          %3812 = vmatprep.subr.bf16.mxu0 0
          %3813 = vmatpush2.bf16.msra.mxu0 0
          %3814 = vmatprep.subr.bf16.mxu0 0
          %3815 = vmatpush2.bf16.msra.mxu0 0
          %3816 = vmatprep.subr.bf16.mxu0 0
          %3817 = vmatpush2.bf16.msra.mxu0 0
          %3818 = vmatprep.mubr.bf16.mxu0 0
          %3819 = vmatmul.mubr.bf16.gmra.mxu0 %v3778
          %v3820 = vpop.f32.mrf.mxu0
          %v3821 = vadd.f32 0.0, %v3820
          %v3822 = vpop.f32.mrf.mxu0
          %v3823 = vpop.f32.mrf.mxu0
          %v3824 = vadd.f32 0.0, %v3823
          %v3825 = vpop.f32.mrf.mxu0
          %3826 = vmatprep.mubr.bf16.mxu0 0
          %3827 = vmatmul.mubr.bf16.gmra.mxu0 %v3781
          %v3828 = vpop.f32.mrf.mxu0
          %v3829 = vadd.f32 0.0, %v3828
          %v3830 = vpop.f32.mrf.mxu0
          %v3831 = vpop.f32.mrf.mxu0
          %v3832 = vpop.f32.mrf.mxu0
          %3833 = vdwg.mxu0
          %v3835 = vsel %vm3378, %v3650, 0
          %v3838 = vsel %vm3378, %v3651, 0
          %v3841 = vand.u32 %v2888, %v3668
          %3843 = vmatprep.subr.bf16.mxu0 0
          %3844 = vmatpush1.bf16.msra.mxu0 0
          %3845 = vmatprep.subr.bf16.mxu0 0
          %3846 = vmatpush1.bf16.msra.mxu0 0
          %3847 = vmatprep.subr.bf16.mxu0 0
          %3848 = vmatpush1.bf16.msra.mxu0 0
          %3849 = vmatprep.subr.bf16.mxu0 0
          %3850 = vmatpush1.bf16.msra.mxu0 0
          %3851 = vmatprep.subr.bf16.mxu0 0
          %3852 = vmatpush1.bf16.msra.mxu0 0
          %3853 = vmatprep.subr.bf16.mxu0 0
          %3854 = vmatpush1.bf16.msra.mxu0 0
          %3855 = vmatprep.subr.bf16.mxu0 0
          %3856 = vmatpush1.bf16.msra.mxu0 %v3841
          %3857 = vmatprep.subr.bf16.mxu0 0
          %3858 = vmatpush1.bf16.msra.mxu0 %v2887
          %3859 = vmatprep.subr.bf16.mxu0 0
          %3860 = vmatpush2.bf16.msra.mxu0 0
          %3861 = vmatprep.subr.bf16.mxu0 0
          %3862 = vmatpush2.bf16.msra.mxu0 0
          %3863 = vmatprep.subr.bf16.mxu0 0
          %3864 = vmatpush2.bf16.msra.mxu0 0
          %3865 = vmatprep.subr.bf16.mxu0 0
          %3866 = vmatpush2.bf16.msra.mxu0 0
          %3867 = vmatprep.subr.bf16.mxu0 0
          %3868 = vmatpush2.bf16.msra.mxu0 0
          %3869 = vmatprep.subr.bf16.mxu0 0
          %3870 = vmatpush2.bf16.msra.mxu0 0
          %3871 = vmatprep.subr.bf16.mxu0 0
          %3872 = vmatpush2.bf16.msra.mxu0 0
          %3873 = vmatprep.subr.bf16.mxu0 0
          %3874 = vmatpush2.bf16.msra.mxu0 0
          %3875 = vmatprep.mubr.bf16.mxu0 0
          %3876 = vmatmul.mubr.bf16.gmra.mxu0 %v3835
          %v3877 = vpop.f32.mrf.mxu0
          %v3878 = vadd.f32 0.0, %v3877
          %v3879 = vpop.f32.mrf.mxu0
          %v3880 = vpop.f32.mrf.mxu0
          %v3881 = vadd.f32 0.0, %v3880
          %v3882 = vpop.f32.mrf.mxu0
          %3883 = vmatprep.mubr.bf16.mxu0 0
          %3884 = vmatmul.mubr.bf16.gmra.mxu0 %v3838
          %v3885 = vpop.f32.mrf.mxu0
          %v3886 = vadd.f32 0.0, %v3885
          %v3887 = vpop.f32.mrf.mxu0
          %v3888 = vpop.f32.mrf.mxu0
          %v3889 = vpop.f32.mrf.mxu0
          %3890 = vdwg.mxu0
          %v3892 = vsel %vm3378, %v3652, 0
          %v3895 = vsel %vm3378, %v3653, 0
          %v3898 = vand.u32 %v2890, %v3668
          %3900 = vmatprep.subr.bf16.mxu0 0
          %3901 = vmatpush1.bf16.msra.mxu0 0
          %3902 = vmatprep.subr.bf16.mxu0 0
          %3903 = vmatpush1.bf16.msra.mxu0 0
          %3904 = vmatprep.subr.bf16.mxu0 0
          %3905 = vmatpush1.bf16.msra.mxu0 0
          %3906 = vmatprep.subr.bf16.mxu0 0
          %3907 = vmatpush1.bf16.msra.mxu0 0
          %3908 = vmatprep.subr.bf16.mxu0 0
          %3909 = vmatpush1.bf16.msra.mxu0 0
          %3910 = vmatprep.subr.bf16.mxu0 0
          %3911 = vmatpush1.bf16.msra.mxu0 0
          %3912 = vmatprep.subr.bf16.mxu0 0
          %3913 = vmatpush1.bf16.msra.mxu0 %v3898
          %3914 = vmatprep.subr.bf16.mxu0 0
          %3915 = vmatpush1.bf16.msra.mxu0 %v2889
          %3916 = vmatprep.subr.bf16.mxu0 0
          %3917 = vmatpush2.bf16.msra.mxu0 0
          %3918 = vmatprep.subr.bf16.mxu0 0
          %3919 = vmatpush2.bf16.msra.mxu0 0
          %3920 = vmatprep.subr.bf16.mxu0 0
          %3921 = vmatpush2.bf16.msra.mxu0 0
          %3922 = vmatprep.subr.bf16.mxu0 0
          %3923 = vmatpush2.bf16.msra.mxu0 0
          %3924 = vmatprep.subr.bf16.mxu0 0
          %3925 = vmatpush2.bf16.msra.mxu0 0
          %3926 = vmatprep.subr.bf16.mxu0 0
          %3927 = vmatpush2.bf16.msra.mxu0 0
          %3928 = vmatprep.subr.bf16.mxu0 0
          %3929 = vmatpush2.bf16.msra.mxu0 0
          %3930 = vmatprep.subr.bf16.mxu0 0
          %3931 = vmatpush2.bf16.msra.mxu0 0
          %3932 = vmatprep.mubr.bf16.mxu0 0
          %3933 = vmatmul.mubr.bf16.gmra.mxu0 %v3892
          %v3934 = vpop.f32.mrf.mxu0
          %v3935 = vadd.f32 0.0, %v3934
          %v3936 = vpop.f32.mrf.mxu0
          %v3937 = vpop.f32.mrf.mxu0
          %v3938 = vadd.f32 0.0, %v3937
          %v3939 = vpop.f32.mrf.mxu0
          %3940 = vmatprep.mubr.bf16.mxu0 0
          %3941 = vmatmul.mubr.bf16.gmra.mxu0 %v3895
          %v3942 = vpop.f32.mrf.mxu0
          %v3943 = vadd.f32 0.0, %v3942
          %v3944 = vpop.f32.mrf.mxu0
          %v3945 = vpop.f32.mrf.mxu0
          %v3946 = vpop.f32.mrf.mxu0
          %3947 = vdwg.mxu0
          %v3949 = vsel %vm3378, %v3654, 0
          %v3952 = vsel %vm3378, %v3655, 0
          %v3955 = vand.u32 %v2892, %v3668
          %3957 = vmatprep.subr.bf16.mxu0 0
          %3958 = vmatpush1.bf16.msra.mxu0 0
          %3959 = vmatprep.subr.bf16.mxu0 0
          %3960 = vmatpush1.bf16.msra.mxu0 0
          %3961 = vmatprep.subr.bf16.mxu0 0
          %3962 = vmatpush1.bf16.msra.mxu0 0
          %3963 = vmatprep.subr.bf16.mxu0 0
          %3964 = vmatpush1.bf16.msra.mxu0 0
          %3965 = vmatprep.subr.bf16.mxu0 0
          %3966 = vmatpush1.bf16.msra.mxu0 0
          %3967 = vmatprep.subr.bf16.mxu0 0
          %3968 = vmatpush1.bf16.msra.mxu0 0
          %3969 = vmatprep.subr.bf16.mxu0 0
          %3970 = vmatpush1.bf16.msra.mxu0 %v3955
          %3971 = vmatprep.subr.bf16.mxu0 0
          %3972 = vmatpush1.bf16.msra.mxu0 %v2891
          %3973 = vmatprep.subr.bf16.mxu0 0
          %3974 = vmatpush2.bf16.msra.mxu0 0
          %3975 = vmatprep.subr.bf16.mxu0 0
          %3976 = vmatpush2.bf16.msra.mxu0 0
          %3977 = vmatprep.subr.bf16.mxu0 0
          %3978 = vmatpush2.bf16.msra.mxu0 0
          %3979 = vmatprep.subr.bf16.mxu0 0
          %3980 = vmatpush2.bf16.msra.mxu0 0
          %3981 = vmatprep.subr.bf16.mxu0 0
          %3982 = vmatpush2.bf16.msra.mxu0 0
          %3983 = vmatprep.subr.bf16.mxu0 0
          %3984 = vmatpush2.bf16.msra.mxu0 0
          %3985 = vmatprep.subr.bf16.mxu0 0
          %3986 = vmatpush2.bf16.msra.mxu0 0
          %3987 = vmatprep.subr.bf16.mxu0 0
          %3988 = vmatpush2.bf16.msra.mxu0 0
          %3989 = vmatprep.mubr.bf16.mxu0 0
          %3990 = vmatmul.mubr.bf16.gmra.mxu0 %v3949
          %v3991 = vpop.f32.mrf.mxu0
          %v3992 = vadd.f32 0.0, %v3991
          %v3993 = vpop.f32.mrf.mxu0
          %v3994 = vpop.f32.mrf.mxu0
          %v3995 = vadd.f32 0.0, %v3994
          %v3996 = vpop.f32.mrf.mxu0
          %3997 = vmatprep.mubr.bf16.mxu0 0
          %3998 = vmatmul.mubr.bf16.gmra.mxu0 %v3952
          %v3999 = vpop.f32.mrf.mxu0
          %v4000 = vadd.f32 0.0, %v3999
          %v4001 = vpop.f32.mrf.mxu0
          %v4002 = vpop.f32.mrf.mxu0
          %v4003 = vpop.f32.mrf.mxu0
          %4004 = vdwg.mxu0
          %v4006 = vsel %vm3378, %v3656, 0
          %v4009 = vsel %vm3378, %v3657, 0
          %v4012 = vand.u32 %v2894, %v3668
          %4014 = vmatprep.subr.bf16.mxu0 0
          %4015 = vmatpush1.bf16.msra.mxu0 0
          %4016 = vmatprep.subr.bf16.mxu0 0
          %4017 = vmatpush1.bf16.msra.mxu0 0
          %4018 = vmatprep.subr.bf16.mxu0 0
          %4019 = vmatpush1.bf16.msra.mxu0 0
          %4020 = vmatprep.subr.bf16.mxu0 0
          %4021 = vmatpush1.bf16.msra.mxu0 0
          %4022 = vmatprep.subr.bf16.mxu0 0
          %4023 = vmatpush1.bf16.msra.mxu0 0
          %4024 = vmatprep.subr.bf16.mxu0 0
          %4025 = vmatpush1.bf16.msra.mxu0 0
          %4026 = vmatprep.subr.bf16.mxu0 0
          %4027 = vmatpush1.bf16.msra.mxu0 %v4012
          %4028 = vmatprep.subr.bf16.mxu0 0
          %4029 = vmatpush1.bf16.msra.mxu0 %v2893
          %4030 = vmatprep.subr.bf16.mxu0 0
          %4031 = vmatpush2.bf16.msra.mxu0 0
          %4032 = vmatprep.subr.bf16.mxu0 0
          %4033 = vmatpush2.bf16.msra.mxu0 0
          %4034 = vmatprep.subr.bf16.mxu0 0
          %4035 = vmatpush2.bf16.msra.mxu0 0
          %4036 = vmatprep.subr.bf16.mxu0 0
          %4037 = vmatpush2.bf16.msra.mxu0 0
          %4038 = vmatprep.subr.bf16.mxu0 0
          %4039 = vmatpush2.bf16.msra.mxu0 0
          %4040 = vmatprep.subr.bf16.mxu0 0
          %4041 = vmatpush2.bf16.msra.mxu0 0
          %4042 = vmatprep.subr.bf16.mxu0 0
          %4043 = vmatpush2.bf16.msra.mxu0 0
          %4044 = vmatprep.subr.bf16.mxu0 0
          %4045 = vmatpush2.bf16.msra.mxu0 0
          %4046 = vmatprep.mubr.bf16.mxu0 0
          %4047 = vmatmul.mubr.bf16.gmra.mxu0 %v4006
          %v4048 = vpop.f32.mrf.mxu0
          %v4049 = vadd.f32 0.0, %v4048
          %v4050 = vpop.f32.mrf.mxu0
          %v4051 = vpop.f32.mrf.mxu0
          %v4052 = vadd.f32 0.0, %v4051
          %v4053 = vpop.f32.mrf.mxu0
          %4054 = vmatprep.mubr.bf16.mxu0 0
          %4055 = vmatmul.mubr.bf16.gmra.mxu0 %v4009
          %v4056 = vpop.f32.mrf.mxu0
          %v4057 = vadd.f32 0.0, %v4056
          %v4058 = vpop.f32.mrf.mxu0
          %v4059 = vpop.f32.mrf.mxu0
          %v4060 = vpop.f32.mrf.mxu0
          %4061 = vdwg.mxu0
          %v4063 = vsel %vm3378, %v3658, 0
          %v4066 = vsel %vm3378, %v3659, 0
          %v4069 = vand.u32 %v2896, %v3668
          %4071 = vmatprep.subr.bf16.mxu0 0
          %4072 = vmatpush1.bf16.msra.mxu0 0
          %4073 = vmatprep.subr.bf16.mxu0 0
          %4074 = vmatpush1.bf16.msra.mxu0 0
          %4075 = vmatprep.subr.bf16.mxu0 0
          %4076 = vmatpush1.bf16.msra.mxu0 0
          %4077 = vmatprep.subr.bf16.mxu0 0
          %4078 = vmatpush1.bf16.msra.mxu0 0
          %4079 = vmatprep.subr.bf16.mxu0 0
          %4080 = vmatpush1.bf16.msra.mxu0 0
          %4081 = vmatprep.subr.bf16.mxu0 0
          %4082 = vmatpush1.bf16.msra.mxu0 0
          %4083 = vmatprep.subr.bf16.mxu0 0
          %4084 = vmatpush1.bf16.msra.mxu0 %v4069
          %4085 = vmatprep.subr.bf16.mxu0 0
          %4086 = vmatpush1.bf16.msra.mxu0 %v2895
          %4087 = vmatprep.subr.bf16.mxu0 0
          %4088 = vmatpush2.bf16.msra.mxu0 0
          %4089 = vmatprep.subr.bf16.mxu0 0
          %4090 = vmatpush2.bf16.msra.mxu0 0
          %4091 = vmatprep.subr.bf16.mxu0 0
          %4092 = vmatpush2.bf16.msra.mxu0 0
          %4093 = vmatprep.subr.bf16.mxu0 0
          %4094 = vmatpush2.bf16.msra.mxu0 0
          %4095 = vmatprep.subr.bf16.mxu0 0
          %4096 = vmatpush2.bf16.msra.mxu0 0
          %4097 = vmatprep.subr.bf16.mxu0 0
          %4098 = vmatpush2.bf16.msra.mxu0 0
          %4099 = vmatprep.subr.bf16.mxu0 0
          %4100 = vmatpush2.bf16.msra.mxu0 0
          %4101 = vmatprep.subr.bf16.mxu0 0
          %4102 = vmatpush2.bf16.msra.mxu0 0
          %4103 = vmatprep.mubr.bf16.mxu0 0
          %4104 = vmatmul.mubr.bf16.gmra.mxu0 %v4063
          %v4105 = vpop.f32.mrf.mxu0
          %v4106 = vadd.f32 0.0, %v4105
          %v4107 = vpop.f32.mrf.mxu0
          %v4108 = vpop.f32.mrf.mxu0
          %v4109 = vadd.f32 0.0, %v4108
          %v4110 = vpop.f32.mrf.mxu0
          %4111 = vmatprep.mubr.bf16.mxu0 0
          %4112 = vmatmul.mubr.bf16.gmra.mxu0 %v4066
          %v4113 = vpop.f32.mrf.mxu0
          %v4114 = vadd.f32 0.0, %v4113
          %v4115 = vpop.f32.mrf.mxu0
          %v4116 = vpop.f32.mrf.mxu0
          %v4117 = vpop.f32.mrf.mxu0
          %4118 = vdwg.mxu0
          %v4119 = vcombine.low %v3707, %v3821
          %v4120 = vcombine.high %v3707, %v3821
          %v4122 = vunpack.c.l.s4 1983009808
          %v4123 = vunpack.c.0.s8 %v4122
          %v4124 = vlaneseq
          %v4125 = vshrl.u32 %v4124, 7
          %v4126 = vsub.s32 %v4123, %v4125
          %v4127 = vrot.slane %v4119, %v4126
          %v4129 = vunpack.c.l.s4 1983009808
          %v4130 = vunpack.c.0.s8 %v4129
          %v4131 = vlaneseq
          %v4132 = vshrl.u32 %v4131, 7
          %v4133 = vsub.s32 %v4130, %v4132
          %v4134 = vrot.slane %v4120, %v4133
          %v4135 = vcombine.low %v3764, %v3878
          %v4136 = vcombine.high %v3764, %v3878
          %v4138 = vunpack.c.l.s4 1983009808
          %v4139 = vunpack.c.0.s8 %v4138
          %v4140 = vlaneseq
          %v4141 = vshrl.u32 %v4140, 7
          %v4142 = vsub.s32 %v4139, %v4141
          %v4143 = vrot.slane %v4135, %v4142
          %v4145 = vunpack.c.l.s4 1983009808
          %v4146 = vunpack.c.0.s8 %v4145
          %v4147 = vlaneseq
          %v4148 = vshrl.u32 %v4147, 7
          %v4149 = vsub.s32 %v4146, %v4148
          %v4150 = vrot.slane %v4136, %v4149
          %v4151 = vcombine.low %v3935, %v4049
          %v4152 = vcombine.high %v3935, %v4049
          %v4154 = vunpack.c.l.s4 1983009808
          %v4155 = vunpack.c.0.s8 %v4154
          %v4156 = vlaneseq
          %v4157 = vshrl.u32 %v4156, 7
          %v4158 = vsub.s32 %v4155, %v4157
          %v4159 = vrot.slane %v4151, %v4158
          %v4161 = vunpack.c.l.s4 1983009808
          %v4162 = vunpack.c.0.s8 %v4161
          %v4163 = vlaneseq
          %v4164 = vshrl.u32 %v4163, 7
          %v4165 = vsub.s32 %v4162, %v4164
          %v4166 = vrot.slane %v4152, %v4165
          %v4167 = vcombine.low %v3992, %v4106
          %v4168 = vcombine.high %v3992, %v4106
          %v4170 = vunpack.c.l.s4 1983009808
          %v4171 = vunpack.c.0.s8 %v4170
          %v4172 = vlaneseq
          %v4173 = vshrl.u32 %v4172, 7
          %v4174 = vsub.s32 %v4171, %v4173
          %v4175 = vrot.slane %v4167, %v4174
          %v4177 = vunpack.c.l.s4 1983009808
          %v4178 = vunpack.c.0.s8 %v4177
          %v4179 = vlaneseq
          %v4180 = vshrl.u32 %v4179, 7
          %v4181 = vsub.s32 %v4178, %v4180
          %v4182 = vrot.slane %v4168, %v4181
          %v4183 = vcombine.low %v4127, %v4143
          %v4184 = vcombine.high %v4127, %v4143
          %v4186 = vunpack.c.l.s4 1934713408
          %v4187 = vunpack.c.0.s8 %v4186
          %v4188 = vlaneseq
          %v4189 = vshrl.u32 %v4188, 7
          %v4190 = vsub.s32 %v4187, %v4189
          %v4191 = vrot.slane %v4183, %v4190
          %v4193 = vunpack.c.l.s4 1934713408
          %v4194 = vunpack.c.0.s8 %v4193
          %v4195 = vlaneseq
          %v4196 = vshrl.u32 %v4195, 7
          %v4197 = vsub.s32 %v4194, %v4196
          %v4198 = vrot.slane %v4184, %v4197
          %v4199 = vcombine.low %v4134, %v4150
          %v4200 = vcombine.high %v4134, %v4150
          %v4202 = vunpack.c.l.s4 1934713408
          %v4203 = vunpack.c.0.s8 %v4202
          %v4204 = vlaneseq
          %v4205 = vshrl.u32 %v4204, 7
          %v4206 = vsub.s32 %v4203, %v4205
          %v4207 = vrot.slane %v4199, %v4206
          %v4209 = vunpack.c.l.s4 1934713408
          %v4210 = vunpack.c.0.s8 %v4209
          %v4211 = vlaneseq
          %v4212 = vshrl.u32 %v4211, 7
          %v4213 = vsub.s32 %v4210, %v4212
          %v4214 = vrot.slane %v4200, %v4213
          %v4215 = vcombine.low %v4159, %v4175
          %v4216 = vcombine.high %v4159, %v4175
          %v4218 = vunpack.c.l.s4 1934713408
          %v4219 = vunpack.c.0.s8 %v4218
          %v4220 = vlaneseq
          %v4221 = vshrl.u32 %v4220, 7
          %v4222 = vsub.s32 %v4219, %v4221
          %v4223 = vrot.slane %v4215, %v4222
          %v4225 = vunpack.c.l.s4 1934713408
          %v4226 = vunpack.c.0.s8 %v4225
          %v4227 = vlaneseq
          %v4228 = vshrl.u32 %v4227, 7
          %v4229 = vsub.s32 %v4226, %v4228
          %v4230 = vrot.slane %v4216, %v4229
          %v4231 = vcombine.low %v4166, %v4182
          %v4232 = vcombine.high %v4166, %v4182
          %v4234 = vunpack.c.l.s4 1934713408
          %v4235 = vunpack.c.0.s8 %v4234
          %v4236 = vlaneseq
          %v4237 = vshrl.u32 %v4236, 7
          %v4238 = vsub.s32 %v4235, %v4237
          %v4239 = vrot.slane %v4231, %v4238
          %v4241 = vunpack.c.l.s4 1934713408
          %v4242 = vunpack.c.0.s8 %v4241
          %v4243 = vlaneseq
          %v4244 = vshrl.u32 %v4243, 7
          %v4245 = vsub.s32 %v4242, %v4244
          %v4246 = vrot.slane %v4232, %v4245
          %v4247 = vcombine.low %v4191, %v4223
          %v4248 = vcombine.high %v4191, %v4223
          %v4249 = vcombine.low %v4198, %v4230
          %v4250 = vcombine.high %v4198, %v4230
          %v4251 = vcombine.low %v4207, %v4239
          %v4252 = vcombine.high %v4207, %v4239
          %v4253 = vcombine.low %v4214, %v4246
          %v4254 = vcombine.high %v4214, %v4246
          %v4255 = vcombine.low %v3710, %v3824
          %v4256 = vcombine.high %v3710, %v3824
          %v4258 = vunpack.c.l.s4 1983009808
          %v4259 = vunpack.c.0.s8 %v4258
          %v4260 = vlaneseq
          %v4261 = vshrl.u32 %v4260, 7
          %v4262 = vsub.s32 %v4259, %v4261
          %v4263 = vrot.slane %v4255, %v4262
          %v4265 = vunpack.c.l.s4 1983009808
          %v4266 = vunpack.c.0.s8 %v4265
          %v4267 = vlaneseq
          %v4268 = vshrl.u32 %v4267, 7
          %v4269 = vsub.s32 %v4266, %v4268
          %v4270 = vrot.slane %v4256, %v4269
          %v4271 = vcombine.low %v3767, %v3881
          %v4272 = vcombine.high %v3767, %v3881
          %v4274 = vunpack.c.l.s4 1983009808
          %v4275 = vunpack.c.0.s8 %v4274
          %v4276 = vlaneseq
          %v4277 = vshrl.u32 %v4276, 7
          %v4278 = vsub.s32 %v4275, %v4277
          %v4279 = vrot.slane %v4271, %v4278
          %v4281 = vunpack.c.l.s4 1983009808
          %v4282 = vunpack.c.0.s8 %v4281
          %v4283 = vlaneseq
          %v4284 = vshrl.u32 %v4283, 7
          %v4285 = vsub.s32 %v4282, %v4284
          %v4286 = vrot.slane %v4272, %v4285
          %v4287 = vcombine.low %v3938, %v4052
          %v4288 = vcombine.high %v3938, %v4052
          %v4290 = vunpack.c.l.s4 1983009808
          %v4291 = vunpack.c.0.s8 %v4290
          %v4292 = vlaneseq
          %v4293 = vshrl.u32 %v4292, 7
          %v4294 = vsub.s32 %v4291, %v4293
          %v4295 = vrot.slane %v4287, %v4294
          %v4297 = vunpack.c.l.s4 1983009808
          %v4298 = vunpack.c.0.s8 %v4297
          %v4299 = vlaneseq
          %v4300 = vshrl.u32 %v4299, 7
          %v4301 = vsub.s32 %v4298, %v4300
          %v4302 = vrot.slane %v4288, %v4301
          %v4303 = vcombine.low %v3995, %v4109
          %v4304 = vcombine.high %v3995, %v4109
          %v4306 = vunpack.c.l.s4 1983009808
          %v4307 = vunpack.c.0.s8 %v4306
          %v4308 = vlaneseq
          %v4309 = vshrl.u32 %v4308, 7
          %v4310 = vsub.s32 %v4307, %v4309
          %v4311 = vrot.slane %v4303, %v4310
          %v4313 = vunpack.c.l.s4 1983009808
          %v4314 = vunpack.c.0.s8 %v4313
          %v4315 = vlaneseq
          %v4316 = vshrl.u32 %v4315, 7
          %v4317 = vsub.s32 %v4314, %v4316
          %v4318 = vrot.slane %v4304, %v4317
          %v4319 = vcombine.low %v4263, %v4279
          %v4320 = vcombine.high %v4263, %v4279
          %v4322 = vunpack.c.l.s4 1934713408
          %v4323 = vunpack.c.0.s8 %v4322
          %v4324 = vlaneseq
          %v4325 = vshrl.u32 %v4324, 7
          %v4326 = vsub.s32 %v4323, %v4325
          %v4327 = vrot.slane %v4319, %v4326
          %v4329 = vunpack.c.l.s4 1934713408
          %v4330 = vunpack.c.0.s8 %v4329
          %v4331 = vlaneseq
          %v4332 = vshrl.u32 %v4331, 7
          %v4333 = vsub.s32 %v4330, %v4332
          %v4334 = vrot.slane %v4320, %v4333
          %v4335 = vcombine.low %v4270, %v4286
          %v4336 = vcombine.high %v4270, %v4286
          %v4338 = vunpack.c.l.s4 1934713408
          %v4339 = vunpack.c.0.s8 %v4338
          %v4340 = vlaneseq
          %v4341 = vshrl.u32 %v4340, 7
          %v4342 = vsub.s32 %v4339, %v4341
          %v4343 = vrot.slane %v4335, %v4342
          %v4345 = vunpack.c.l.s4 1934713408
          %v4346 = vunpack.c.0.s8 %v4345
          %v4347 = vlaneseq
          %v4348 = vshrl.u32 %v4347, 7
          %v4349 = vsub.s32 %v4346, %v4348
          %v4350 = vrot.slane %v4336, %v4349
          %v4351 = vcombine.low %v4295, %v4311
          %v4352 = vcombine.high %v4295, %v4311
          %v4354 = vunpack.c.l.s4 1934713408
          %v4355 = vunpack.c.0.s8 %v4354
          %v4356 = vlaneseq
          %v4357 = vshrl.u32 %v4356, 7
          %v4358 = vsub.s32 %v4355, %v4357
          %v4359 = vrot.slane %v4351, %v4358
          %v4361 = vunpack.c.l.s4 1934713408
          %v4362 = vunpack.c.0.s8 %v4361
          %v4363 = vlaneseq
          %v4364 = vshrl.u32 %v4363, 7
          %v4365 = vsub.s32 %v4362, %v4364
          %v4366 = vrot.slane %v4352, %v4365
          %v4367 = vcombine.low %v4302, %v4318
          %v4368 = vcombine.high %v4302, %v4318
          %v4370 = vunpack.c.l.s4 1934713408
          %v4371 = vunpack.c.0.s8 %v4370
          %v4372 = vlaneseq
          %v4373 = vshrl.u32 %v4372, 7
          %v4374 = vsub.s32 %v4371, %v4373
          %v4375 = vrot.slane %v4367, %v4374
          %v4377 = vunpack.c.l.s4 1934713408
          %v4378 = vunpack.c.0.s8 %v4377
          %v4379 = vlaneseq
          %v4380 = vshrl.u32 %v4379, 7
          %v4381 = vsub.s32 %v4378, %v4380
          %v4382 = vrot.slane %v4368, %v4381
          %v4383 = vcombine.low %v4327, %v4359
          %v4384 = vcombine.high %v4327, %v4359
          %v4385 = vcombine.low %v4334, %v4366
          %v4386 = vcombine.high %v4334, %v4366
          %v4387 = vcombine.low %v4343, %v4375
          %v4388 = vcombine.high %v4343, %v4375
          %v4389 = vcombine.low %v4350, %v4382
          %v4390 = vcombine.high %v4350, %v4382
          %v4391 = vcombine.low %v3715, %v3829
          %v4393 = vunpack.c.l.s4 1983009808
          %v4394 = vunpack.c.0.s8 %v4393
          %v4395 = vlaneseq
          %v4396 = vshrl.u32 %v4395, 7
          %v4397 = vsub.s32 %v4394, %v4396
          %v4398 = vrot.slane %v4391, %v4397
          %v4399 = vcombine.low %v3772, %v3886
          %v4401 = vunpack.c.l.s4 1983009808
          %v4402 = vunpack.c.0.s8 %v4401
          %v4403 = vlaneseq
          %v4404 = vshrl.u32 %v4403, 7
          %v4405 = vsub.s32 %v4402, %v4404
          %v4406 = vrot.slane %v4399, %v4405
          %v4407 = vcombine.low %v3943, %v4057
          %v4409 = vunpack.c.l.s4 1983009808
          %v4410 = vunpack.c.0.s8 %v4409
          %v4411 = vlaneseq
          %v4412 = vshrl.u32 %v4411, 7
          %v4413 = vsub.s32 %v4410, %v4412
          %v4414 = vrot.slane %v4407, %v4413
          %v4415 = vcombine.low %v4000, %v4114
          %v4417 = vunpack.c.l.s4 1983009808
          %v4418 = vunpack.c.0.s8 %v4417
          %v4419 = vlaneseq
          %v4420 = vshrl.u32 %v4419, 7
          %v4421 = vsub.s32 %v4418, %v4420
          %v4422 = vrot.slane %v4415, %v4421
          %v4423 = vcombine.low %v4398, %v4406
          %v4425 = vunpack.c.l.s4 1934713408
          %v4426 = vunpack.c.0.s8 %v4425
          %v4427 = vlaneseq
          %v4428 = vshrl.u32 %v4427, 7
          %v4429 = vsub.s32 %v4426, %v4428
          %v4430 = vrot.slane %v4423, %v4429
          %v4431 = vcombine.low %v4414, %v4422
          %v4433 = vunpack.c.l.s4 1934713408
          %v4434 = vunpack.c.0.s8 %v4433
          %v4435 = vlaneseq
          %v4436 = vshrl.u32 %v4435, 7
          %v4437 = vsub.s32 %v4434, %v4436
          %v4438 = vrot.slane %v4431, %v4437
          %v4439 = vcombine.low %v4430, %v4438
          %v4440 = vcombine.low %v4247, %v4249
          %v4441 = vcombine.high %v4247, %v4249
          %v4443 = vunpack.c.l.s4 1983009808
          %v4444 = vunpack.c.0.s8 %v4443
          %v4445 = vlaneseq
          %v4446 = vshrl.u32 %v4445, 7
          %v4447 = vsub.s32 %v4444, %v4446
          %v4448 = vrot.slane %v4440, %v4447
          %v4450 = vunpack.c.l.s4 1983009808
          %v4451 = vunpack.c.0.s8 %v4450
          %v4452 = vlaneseq
          %v4453 = vshrl.u32 %v4452, 7
          %v4454 = vsub.s32 %v4451, %v4453
          %v4455 = vrot.slane %v4441, %v4454
          %v4456 = vcombine.low %v4248, %v4250
          %v4457 = vcombine.high %v4248, %v4250
          %v4459 = vunpack.c.l.s4 1983009808
          %v4460 = vunpack.c.0.s8 %v4459
          %v4461 = vlaneseq
          %v4462 = vshrl.u32 %v4461, 7
          %v4463 = vsub.s32 %v4460, %v4462
          %v4464 = vrot.slane %v4456, %v4463
          %v4466 = vunpack.c.l.s4 1983009808
          %v4467 = vunpack.c.0.s8 %v4466
          %v4468 = vlaneseq
          %v4469 = vshrl.u32 %v4468, 7
          %v4470 = vsub.s32 %v4467, %v4469
          %v4471 = vrot.slane %v4457, %v4470
          %v4472 = vcombine.low %v4251, %v4253
          %v4473 = vcombine.high %v4251, %v4253
          %v4475 = vunpack.c.l.s4 1983009808
          %v4476 = vunpack.c.0.s8 %v4475
          %v4477 = vlaneseq
          %v4478 = vshrl.u32 %v4477, 7
          %v4479 = vsub.s32 %v4476, %v4478
          %v4480 = vrot.slane %v4472, %v4479
          %v4482 = vunpack.c.l.s4 1983009808
          %v4483 = vunpack.c.0.s8 %v4482
          %v4484 = vlaneseq
          %v4485 = vshrl.u32 %v4484, 7
          %v4486 = vsub.s32 %v4483, %v4485
          %v4487 = vrot.slane %v4473, %v4486
          %v4488 = vcombine.low %v4252, %v4254
          %v4489 = vcombine.high %v4252, %v4254
          %v4491 = vunpack.c.l.s4 1983009808
          %v4492 = vunpack.c.0.s8 %v4491
          %v4493 = vlaneseq
          %v4494 = vshrl.u32 %v4493, 7
          %v4495 = vsub.s32 %v4492, %v4494
          %v4496 = vrot.slane %v4488, %v4495
          %v4498 = vunpack.c.l.s4 1983009808
          %v4499 = vunpack.c.0.s8 %v4498
          %v4500 = vlaneseq
          %v4501 = vshrl.u32 %v4500, 7
          %v4502 = vsub.s32 %v4499, %v4501
          %v4503 = vrot.slane %v4489, %v4502
          %v4504 = vcombine.low %v4448, %v4464
          %v4505 = vcombine.high %v4448, %v4464
          %v4507 = vunpack.c.l.s4 1934713408
          %v4508 = vunpack.c.0.s8 %v4507
          %v4509 = vlaneseq
          %v4510 = vshrl.u32 %v4509, 7
          %v4511 = vsub.s32 %v4508, %v4510
          %v4512 = vrot.slane %v4504, %v4511
          %v4514 = vunpack.c.l.s4 1934713408
          %v4515 = vunpack.c.0.s8 %v4514
          %v4516 = vlaneseq
          %v4517 = vshrl.u32 %v4516, 7
          %v4518 = vsub.s32 %v4515, %v4517
          %v4519 = vrot.slane %v4505, %v4518
          %v4520 = vcombine.low %v4455, %v4471
          %v4521 = vcombine.high %v4455, %v4471
          %v4523 = vunpack.c.l.s4 1934713408
          %v4524 = vunpack.c.0.s8 %v4523
          %v4525 = vlaneseq
          %v4526 = vshrl.u32 %v4525, 7
          %v4527 = vsub.s32 %v4524, %v4526
          %v4528 = vrot.slane %v4520, %v4527
          %v4530 = vunpack.c.l.s4 1934713408
          %v4531 = vunpack.c.0.s8 %v4530
          %v4532 = vlaneseq
          %v4533 = vshrl.u32 %v4532, 7
          %v4534 = vsub.s32 %v4531, %v4533
          %v4535 = vrot.slane %v4521, %v4534
          %v4536 = vcombine.low %v4480, %v4496
          %v4537 = vcombine.high %v4480, %v4496
          %v4539 = vunpack.c.l.s4 1934713408
          %v4540 = vunpack.c.0.s8 %v4539
          %v4541 = vlaneseq
          %v4542 = vshrl.u32 %v4541, 7
          %v4543 = vsub.s32 %v4540, %v4542
          %v4544 = vrot.slane %v4536, %v4543
          %v4546 = vunpack.c.l.s4 1934713408
          %v4547 = vunpack.c.0.s8 %v4546
          %v4548 = vlaneseq
          %v4549 = vshrl.u32 %v4548, 7
          %v4550 = vsub.s32 %v4547, %v4549
          %v4551 = vrot.slane %v4537, %v4550
          %v4552 = vcombine.low %v4487, %v4503
          %v4553 = vcombine.high %v4487, %v4503
          %v4555 = vunpack.c.l.s4 1934713408
          %v4556 = vunpack.c.0.s8 %v4555
          %v4557 = vlaneseq
          %v4558 = vshrl.u32 %v4557, 7
          %v4559 = vsub.s32 %v4556, %v4558
          %v4560 = vrot.slane %v4552, %v4559
          %v4562 = vunpack.c.l.s4 1934713408
          %v4563 = vunpack.c.0.s8 %v4562
          %v4564 = vlaneseq
          %v4565 = vshrl.u32 %v4564, 7
          %v4566 = vsub.s32 %v4563, %v4565
          %v4567 = vrot.slane %v4553, %v4566
          %v4568 = vcombine.low %v4512, %v4544
          %v4569 = vcombine.high %v4512, %v4544
          %v4570 = vcombine.low %v4519, %v4551
          %v4571 = vcombine.high %v4519, %v4551
          %v4572 = vcombine.low %v4528, %v4560
          %v4573 = vcombine.high %v4528, %v4560
          %v4574 = vcombine.low %v4535, %v4567
          %v4575 = vcombine.high %v4535, %v4567
          %v4576 = vcombine.low %v4383, %v4385
          %v4577 = vcombine.high %v4383, %v4385
          %v4579 = vunpack.c.l.s4 1983009808
          %v4580 = vunpack.c.0.s8 %v4579
          %v4581 = vlaneseq
          %v4582 = vshrl.u32 %v4581, 7
          %v4583 = vsub.s32 %v4580, %v4582
          %v4584 = vrot.slane %v4576, %v4583
          %v4586 = vunpack.c.l.s4 1983009808
          %v4587 = vunpack.c.0.s8 %v4586
          %v4588 = vlaneseq
          %v4589 = vshrl.u32 %v4588, 7
          %v4590 = vsub.s32 %v4587, %v4589
          %v4591 = vrot.slane %v4577, %v4590
          %v4592 = vcombine.low %v4384, %v4386
          %v4593 = vcombine.high %v4384, %v4386
          %v4595 = vunpack.c.l.s4 1983009808
          %v4596 = vunpack.c.0.s8 %v4595
          %v4597 = vlaneseq
          %v4598 = vshrl.u32 %v4597, 7
          %v4599 = vsub.s32 %v4596, %v4598
          %v4600 = vrot.slane %v4592, %v4599
          %v4602 = vunpack.c.l.s4 1983009808
          %v4603 = vunpack.c.0.s8 %v4602
          %v4604 = vlaneseq
          %v4605 = vshrl.u32 %v4604, 7
          %v4606 = vsub.s32 %v4603, %v4605
          %v4607 = vrot.slane %v4593, %v4606
          %v4608 = vcombine.low %v4387, %v4389
          %v4609 = vcombine.high %v4387, %v4389
          %v4611 = vunpack.c.l.s4 1983009808
          %v4612 = vunpack.c.0.s8 %v4611
          %v4613 = vlaneseq
          %v4614 = vshrl.u32 %v4613, 7
          %v4615 = vsub.s32 %v4612, %v4614
          %v4616 = vrot.slane %v4608, %v4615
          %v4618 = vunpack.c.l.s4 1983009808
          %v4619 = vunpack.c.0.s8 %v4618
          %v4620 = vlaneseq
          %v4621 = vshrl.u32 %v4620, 7
          %v4622 = vsub.s32 %v4619, %v4621
          %v4623 = vrot.slane %v4609, %v4622
          %v4624 = vcombine.low %v4388, %v4390
          %v4625 = vcombine.high %v4388, %v4390
          %v4627 = vunpack.c.l.s4 1983009808
          %v4628 = vunpack.c.0.s8 %v4627
          %v4629 = vlaneseq
          %v4630 = vshrl.u32 %v4629, 7
          %v4631 = vsub.s32 %v4628, %v4630
          %v4632 = vrot.slane %v4624, %v4631
          %v4634 = vunpack.c.l.s4 1983009808
          %v4635 = vunpack.c.0.s8 %v4634
          %v4636 = vlaneseq
          %v4637 = vshrl.u32 %v4636, 7
          %v4638 = vsub.s32 %v4635, %v4637
          %v4639 = vrot.slane %v4625, %v4638
          %v4640 = vcombine.low %v4584, %v4600
          %v4641 = vcombine.high %v4584, %v4600
          %v4643 = vunpack.c.l.s4 1934713408
          %v4644 = vunpack.c.0.s8 %v4643
          %v4645 = vlaneseq
          %v4646 = vshrl.u32 %v4645, 7
          %v4647 = vsub.s32 %v4644, %v4646
          %v4648 = vrot.slane %v4640, %v4647
          %v4650 = vunpack.c.l.s4 1934713408
          %v4651 = vunpack.c.0.s8 %v4650
          %v4652 = vlaneseq
          %v4653 = vshrl.u32 %v4652, 7
          %v4654 = vsub.s32 %v4651, %v4653
          %v4655 = vrot.slane %v4641, %v4654
          %v4656 = vcombine.low %v4591, %v4607
          %v4657 = vcombine.high %v4591, %v4607
          %v4659 = vunpack.c.l.s4 1934713408
          %v4660 = vunpack.c.0.s8 %v4659
          %v4661 = vlaneseq
          %v4662 = vshrl.u32 %v4661, 7
          %v4663 = vsub.s32 %v4660, %v4662
          %v4664 = vrot.slane %v4656, %v4663
          %v4666 = vunpack.c.l.s4 1934713408
          %v4667 = vunpack.c.0.s8 %v4666
          %v4668 = vlaneseq
          %v4669 = vshrl.u32 %v4668, 7
          %v4670 = vsub.s32 %v4667, %v4669
          %v4671 = vrot.slane %v4657, %v4670
          %v4672 = vcombine.low %v4616, %v4632
          %v4673 = vcombine.high %v4616, %v4632
          %v4675 = vunpack.c.l.s4 1934713408
          %v4676 = vunpack.c.0.s8 %v4675
          %v4677 = vlaneseq
          %v4678 = vshrl.u32 %v4677, 7
          %v4679 = vsub.s32 %v4676, %v4678
          %v4680 = vrot.slane %v4672, %v4679
          %v4682 = vunpack.c.l.s4 1934713408
          %v4683 = vunpack.c.0.s8 %v4682
          %v4684 = vlaneseq
          %v4685 = vshrl.u32 %v4684, 7
          %v4686 = vsub.s32 %v4683, %v4685
          %v4687 = vrot.slane %v4673, %v4686
          %v4688 = vcombine.low %v4623, %v4639
          %v4689 = vcombine.high %v4623, %v4639
          %v4691 = vunpack.c.l.s4 1934713408
          %v4692 = vunpack.c.0.s8 %v4691
          %v4693 = vlaneseq
          %v4694 = vshrl.u32 %v4693, 7
          %v4695 = vsub.s32 %v4692, %v4694
          %v4696 = vrot.slane %v4688, %v4695
          %v4698 = vunpack.c.l.s4 1934713408
          %v4699 = vunpack.c.0.s8 %v4698
          %v4700 = vlaneseq
          %v4701 = vshrl.u32 %v4700, 7
          %v4702 = vsub.s32 %v4699, %v4701
          %v4703 = vrot.slane %v4689, %v4702
          %v4704 = vcombine.low %v4648, %v4680
          %v4705 = vcombine.high %v4648, %v4680
          %v4706 = vcombine.low %v4655, %v4687
          %v4707 = vcombine.high %v4655, %v4687
          %v4708 = vcombine.low %v4664, %v4696
          %v4709 = vcombine.high %v4664, %v4696
          %v4710 = vcombine.low %v4671, %v4703
          %v4711 = vcombine.high %v4671, %v4703
          %v4712 = vcombine.high %v4439, 0.0
          %v4714 = vunpack.c.l.s4 1983009808
          %v4715 = vunpack.c.0.s8 %v4714
          %v4716 = vlaneseq
          %v4717 = vshrl.u32 %v4716, 7
          %v4718 = vsub.s32 %v4715, %v4717
          %v4719 = vrot.slane %v4439, %v4718
          %v4721 = vunpack.c.l.s4 1983009808
          %v4722 = vunpack.c.0.s8 %v4721
          %v4723 = vlaneseq
          %v4724 = vshrl.u32 %v4723, 7
          %v4725 = vsub.s32 %v4722, %v4724
          %v4726 = vrot.slane %v4712, %v4725
          %v4727 = vcombine.high %v4719, 0.0
          %v4729 = vunpack.c.l.s4 1934713408
          %v4730 = vunpack.c.0.s8 %v4729
          %v4731 = vlaneseq
          %v4732 = vshrl.u32 %v4731, 7
          %v4733 = vsub.s32 %v4730, %v4732
          %v4734 = vrot.slane %v4719, %v4733
          %v4736 = vunpack.c.l.s4 1934713408
          %v4737 = vunpack.c.0.s8 %v4736
          %v4738 = vlaneseq
          %v4739 = vshrl.u32 %v4738, 7
          %v4740 = vsub.s32 %v4737, %v4739
          %v4741 = vrot.slane %v4727, %v4740
          %v4742 = vcombine.high %v4726, 0.0
          %v4744 = vunpack.c.l.s4 1934713408
          %v4745 = vunpack.c.0.s8 %v4744
          %v4746 = vlaneseq
          %v4747 = vshrl.u32 %v4746, 7
          %v4748 = vsub.s32 %v4745, %v4747
          %v4749 = vrot.slane %v4726, %v4748
          %v4751 = vunpack.c.l.s4 1934713408
          %v4752 = vunpack.c.0.s8 %v4751
          %v4753 = vlaneseq
          %v4754 = vshrl.u32 %v4753, 7
          %v4755 = vsub.s32 %v4752, %v4754
          %v4756 = vrot.slane %v4742, %v4755
          %v4757 = vcombine.high %v4734, 0.0
          %v4758 = vcombine.high %v4741, 0.0
          %v4759 = vcombine.high %v4749, 0.0
          %v4760 = vcombine.high %v4756, 0.0
          %4764 = vrot.lane.b32.xlu0 %v4569, 8
          %v4765 = vpop.permute.xlu0 %4764
          %4766 = vrot.lane.b32.xlu0 %v4705, 8
          %v4767 = vpop.permute.xlu0 %4766
          %4768 = vrot.lane.b32.xlu0 %v4757, 8
          %v4769 = vpop.permute.xlu0 %4768
          %4776 = vrot.lane.b32.xlu0 %v4570, 16
          %v4777 = vpop.permute.xlu0 %4776
          %4778 = vrot.lane.b32.xlu0 %v4706, 16
          %v4779 = vpop.permute.xlu0 %4778
          %4780 = vrot.lane.b32.xlu0 %v4741, 16
          %v4781 = vpop.permute.xlu0 %4780
          %4788 = vrot.lane.b32.xlu0 %v4571, 24
          %v4789 = vpop.permute.xlu0 %4788
          %4790 = vrot.lane.b32.xlu0 %v4707, 24
          %v4791 = vpop.permute.xlu0 %4790
          %4792 = vrot.lane.b32.xlu0 %v4758, 24
          %v4793 = vpop.permute.xlu0 %4792
          %4800 = vrot.lane.b32.xlu0 %v4572, 32
          %v4801 = vpop.permute.xlu0 %4800
          %4802 = vrot.lane.b32.xlu0 %v4708, 32
          %v4803 = vpop.permute.xlu0 %4802
          %4804 = vrot.lane.b32.xlu0 %v4749, 32
          %v4805 = vpop.permute.xlu0 %4804
          %4812 = vrot.lane.b32.xlu0 %v4573, 40
          %v4813 = vpop.permute.xlu0 %4812
          %4814 = vrot.lane.b32.xlu0 %v4709, 40
          %v4815 = vpop.permute.xlu0 %4814
          %4816 = vrot.lane.b32.xlu0 %v4759, 40
          %v4817 = vpop.permute.xlu0 %4816
          %4824 = vrot.lane.b32.xlu0 %v4574, 48
          %v4825 = vpop.permute.xlu0 %4824
          %4826 = vrot.lane.b32.xlu0 %v4710, 48
          %v4827 = vpop.permute.xlu0 %4826
          %4828 = vrot.lane.b32.xlu0 %v4756, 48
          %v4829 = vpop.permute.xlu0 %4828
          %4836 = vrot.lane.b32.xlu0 %v4575, 56
          %v4837 = vpop.permute.xlu0 %4836
          %4838 = vrot.lane.b32.xlu0 %v4711, 56
          %v4839 = vpop.permute.xlu0 %4838
          %4840 = vrot.lane.b32.xlu0 %v4760, 56
          %v4841 = vpop.permute.xlu0 %4840
          %v4845 = vsel %vm2897, %v4568, %v4765
          %v4846 = vsel %vm2897, %v4704, %v4767
          %v4847 = vsel %vm2897, %v4734, %v4769
          %vm4848 = vcmask 130048
          %v4849 = vsel %vm4848, %v4845, %v4777
          %v4850 = vsel %vm4848, %v4846, %v4779
          %v4851 = vsel %vm4848, %v4847, %v4781
          %vm4852 = vcmask 195584
          %v4853 = vsel %vm4852, %v4849, %v4789
          %v4854 = vsel %vm4852, %v4850, %v4791
          %v4855 = vsel %vm4852, %v4851, %v4793
          %v4856 = vsel %vm573, %v4853, %v4801
          %v4857 = vsel %vm573, %v4854, %v4803
          %v4858 = vsel %vm573, %v4855, %v4805
          %vm4859 = vcmask 326656
          %v4860 = vsel %vm4859, %v4856, %v4813
          %v4861 = vsel %vm4859, %v4857, %v4815
          %v4862 = vsel %vm4859, %v4858, %v4817
          %vm4863 = vcmask 392192
          %v4864 = vsel %vm4863, %v4860, %v4825
          %v4865 = vsel %vm4863, %v4861, %v4827
          %v4866 = vsel %vm4863, %v4862, %v4829
          %vm4867 = vcmask 457728
          %v4868 = vsel %vm4867, %v4864, %v4837
          %v4869 = vsel %vm4867, %v4865, %v4839
          %v4870 = vsel %vm4867, %v4866, %v4841
          %v4871 = vpack.c.bf16 %v4869, %v4868
          %v4872 = vpack.c.bf16 %v4870, %v4870
          %s4873 = smul.addr %s635, 4
          %s4874 = scalar_lea.vmem %s4, %s4873
          %v4875 = vld [vmem:[%s4874] sm:$0xf]
          %v4876 = vld [vmem:[%s4874 + $0x4] sm:$0xf]
          %v4877 = vld [vmem:[%s4874 + $0x8] sm:$0xf]
          %v4878 = vld [vmem:[%s4874 + $0xc] sm:$0xf]
          %v4879 = vld [vmem:[%s4874 + $0x10] sm:$0xf]
          %v4880 = vld [vmem:[%s4874 + $0x14] sm:$0xf]
          %v4881 = vld [vmem:[%s4874 + $0x18] sm:$0xf]
          %v4882 = vld [vmem:[%s4874 + $0x1c] sm:$0xf]
          %v4891 = vunpack.c.l.b16 %v4875
          %v4892 = vunpack.c.l.b16 %v4876
          %v4893 = vunpack.c.l.b16 %v4877
          %v4894 = vunpack.c.l.b16 %v4878
          %v4895 = vunpack.c.l.b16 %v4879
          %v4896 = vunpack.c.l.b16 %v4880
          %v4897 = vunpack.c.l.b16 %v4881
          %v4898 = vunpack.c.l.b16 %v4882
          %v4899 = vpack.c.b16 %v4892, %v4891
          %v4900 = vpack.c.b16 %v4894, %v4893
          %v4901 = vpack.c.b16 %v4896, %v4895
          %v4902 = vpack.c.b16 %v4898, %v4897
          %vm4907 = vcmask 523264
          %v4909 = vsel %vm4907, %v4871, 0
          %v4912 = vsel %vm4907, %v4872, 0
          %4914 = vmatprep.subr.bf16.mxu0 0
          %4915 = vmatpush1.bf16.msra.mxu0 0
          %4916 = vmatprep.subr.bf16.mxu0 0
          %4917 = vmatpush1.bf16.msra.mxu0 0
          %4918 = vmatprep.subr.bf16.mxu0 0
          %4919 = vmatpush1.bf16.msra.mxu0 0
          %4920 = vmatprep.subr.bf16.mxu0 0
          %4921 = vmatpush1.bf16.msra.mxu0 0
          %4922 = vmatprep.subr.bf16.mxu0 0
          %4923 = vmatpush1.bf16.msra.mxu0 %v4902
          %4924 = vmatprep.subr.bf16.mxu0 0
          %4925 = vmatpush1.bf16.msra.mxu0 %v4901
          %4926 = vmatprep.subr.bf16.mxu0 0
          %4927 = vmatpush1.bf16.msra.mxu0 %v4900
          %4928 = vmatprep.subr.bf16.mxu0 0
          %4929 = vmatpush1.bf16.msra.mxu0 %v4899
          %4930 = vmatprep.subr.bf16.mxu0 0
          %4931 = vmatpush2.bf16.msra.mxu0 0
          %4932 = vmatprep.subr.bf16.mxu0 0
          %4933 = vmatpush2.bf16.msra.mxu0 0
          %4934 = vmatprep.subr.bf16.mxu0 0
          %4935 = vmatpush2.bf16.msra.mxu0 0
          %4936 = vmatprep.subr.bf16.mxu0 0
          %4937 = vmatpush2.bf16.msra.mxu0 0
          %4938 = vmatprep.subr.bf16.mxu0 0
          %4939 = vmatpush2.bf16.msra.mxu0 0
          %4940 = vmatprep.subr.bf16.mxu0 0
          %4941 = vmatpush2.bf16.msra.mxu0 0
          %4942 = vmatprep.subr.bf16.mxu0 0
          %4943 = vmatpush2.bf16.msra.mxu0 0
          %4944 = vmatprep.subr.bf16.mxu0 0
          %4945 = vmatpush2.bf16.msra.mxu0 0
          %4946 = vmatprep.mubr.bf16.mxu0 0
          %4947 = vmatmul.mubr.bf16.gmra.mxu0 %v4909
          %v4948 = vpop.f32.mrf.mxu0
          %v4949 = vadd.f32 0.0, %v4948
          %v4950 = vpop.f32.mrf.mxu0
          %v4951 = vpop.f32.mrf.mxu0
          %v4952 = vadd.f32 0.0, %v4951
          %v4953 = vpop.f32.mrf.mxu0
          %4954 = vmatprep.mubr.bf16.mxu0 0
          %4955 = vmatmul.mubr.bf16.gmra.mxu0 %v4912
          %v4956 = vpop.f32.mrf.mxu0
          %v4957 = vadd.f32 0.0, %v4956
          %v4958 = vpop.f32.mrf.mxu0
          %v4959 = vpop.f32.mrf.mxu0
          %v4960 = vpop.f32.mrf.mxu0
          %4961 = vdwg.mxu0
          %v4962 = vadd.f32 %v565, %v4949
          %v4963 = vadd.f32 %v566, %v4952
          %v4964 = vadd.f32 %v567, %v4957
          %s4965 = scalar_lea.vmem %s5, %s560
          %v4966 = vld [vmem:[%s4965] sm:$0x1]
          %v4968 = vlaneseq
          %v4969 = vshrl.u32 %v4968, 7
          %v4970 = vsub.s32 0, %v4969
          %v4971 = vrot.slane %v4966, %v4970
          %v4973 = vadd.f32 %v4962, %v4971
          %v4974 = vadd.f32 %v4963, %v4971
          %v4975 = vadd.f32 %v4964, %v4971
          %v4976 = vmul.f32 %v630, %v630
          %v4977 = vmul.f32 %v631, %v631
          %v4978 = vmul.f32 %v632, %v632
          %v4979 = vsel %vm573, %v4976, 0.0
          %4980 = vadd.xlane.f32.xlu0 %v4979
          %v4981 = vpop.xlane.xlu0 %4980
          %v4982 = vsel %vm573, %v4977, 0.0
          %4983 = vadd.xlane.f32.xlu0 %v4982
          %v4984 = vpop.xlane.xlu0 %4983
          %v4985 = vsel %vm580, %v4978, 0.0
          %4986 = vadd.xlane.f32.xlu0 %v4985
          %v4987 = vpop.xlane.xlu0 %4986
          %v4988 = vadd.f32 %v4981, %v4984
          %v4989 = vsel %vm3666, %v4987, 0.0
          %v4990 = vadd.f32 %v4988, %v4989
          %v4991 = vrot.slane %v4990, 4
          %v4992 = vadd.f32 %v4990, %v4991
          %v4993 = vrot.slane %v4992, 2
          %v4994 = vadd.f32 %v4992, %v4993
          %v4995 = vrot.slane %v4994, 1
          %v4996 = vadd.f32 %v4994, %v4995
          %v4997 = vrsqrt.pop %v4996
          %v4998 = vmul.f32 %v4996, %v4997
          %vm4999 = vcmp.eq.f32.partialorder %v4996, inf
          %v5000 = vsel %vm4999, %v4996, %v4998
          %vm5001 = vcmp.eq.f32.partialorder %v4996, 0.0
          %v5002 = vand.u32 %v4996, 2147483648
          %v5003 = vsel %vm5001, %v5002, %v5000
          %v5005 = vsel %vm3378, %v3620, 0
          %v5008 = vsel %vm3378, %v3621, 0
          %v5011 = vsel %vm3378, %v3622, 0
          %5013 = vmatprep.subr.mxu0 0.0
          %5014 = vmatpush1.xpose.msra.mxu0 0.0
          %5015 = vmatprep.subr.mxu0 0.0
          %5016 = vmatpush1.xpose.msra.mxu0 0.0
          %5017 = vmatprep.subr.mxu0 0.0
          %5018 = vmatpush1.xpose.msra.mxu0 0.0
          %5019 = vmatprep.subr.mxu0 0.0
          %5020 = vmatpush1.xpose.msra.mxu0 0.0
          %5021 = vmatprep.subr.mxu0 0.0
          %5022 = vmatpush1.xpose.msra.mxu0 0.0
          %5023 = vmatprep.subr.mxu0 0.0
          %5024 = vmatpush1.xpose.msra.mxu0 0.0
          %5025 = vmatprep.subr.mxu0 0.0
          %5026 = vmatpush1.xpose.msra.mxu0 0.0
          %5027 = vmatprep.subr.mxu0 0.0
          %5028 = vmatpush1.xpose.msra.mxu0 0.0
          %5029 = vmatprep.subr.mxu0 0.0
          %5030 = vmatpush1.xpose.msra.mxu0 0.0
          %5031 = vmatprep.subr.mxu0 0.0
          %5032 = vmatpush1.xpose.msra.mxu0 0.0
          %5033 = vmatprep.subr.mxu0 0.0
          %5034 = vmatpush1.xpose.msra.mxu0 0.0
          %5035 = vmatprep.subr.mxu0 0.0
          %5036 = vmatpush1.xpose.msra.mxu0 0.0
          %5037 = vmatprep.subr.mxu0 0.0
          %5038 = vmatpush1.xpose.msra.mxu0 0.0
          %5039 = vmatprep.subr.mxu0 0.0
          %5040 = vmatpush1.xpose.msra.mxu0 %v5011
          %5041 = vmatprep.subr.mxu0 0.0
          %5042 = vmatpush1.xpose.msra.mxu0 %v5008
          %5043 = vmatprep.subr.mxu0 0.0
          %5044 = vmatpush1.xpose.msra.mxu0 %v5005
          %5045 = vmatprep.subr.mxu0 0.0
          %5046 = vmatpush2.xpose.msra.mxu0 0.0
          %5047 = vmatprep.subr.mxu0 0.0
          %5048 = vmatpush2.xpose.msra.mxu0 0.0
          %5049 = vmatprep.subr.mxu0 0.0
          %5050 = vmatpush2.xpose.msra.mxu0 0.0
          %5051 = vmatprep.subr.mxu0 0.0
          %5052 = vmatpush2.xpose.msra.mxu0 0.0
          %5053 = vmatprep.subr.mxu0 0.0
          %5054 = vmatpush2.xpose.msra.mxu0 0.0
          %5055 = vmatprep.subr.mxu0 0.0
          %5056 = vmatpush2.xpose.msra.mxu0 0.0
          %5057 = vmatprep.subr.mxu0 0.0
          %5058 = vmatpush2.xpose.msra.mxu0 0.0
          %5059 = vmatprep.subr.mxu0 0.0
          %5060 = vmatpush2.xpose.msra.mxu0 0.0
          %5061 = vmatprep.subr.mxu0 0.0
          %5062 = vmatpush2.xpose.msra.mxu0 0.0
          %5063 = vmatprep.subr.mxu0 0.0
          %5064 = vmatpush2.xpose.msra.mxu0 0.0
          %5065 = vmatprep.subr.mxu0 0.0
          %5066 = vmatpush2.xpose.msra.mxu0 0.0
          %5067 = vmatprep.subr.mxu0 0.0
          %5068 = vmatpush2.xpose.msra.mxu0 0.0
          %5069 = vmatprep.subr.mxu0 0.0
          %5070 = vmatpush2.xpose.msra.mxu0 0.0
          %5071 = vmatprep.subr.mxu0 0.0
          %5072 = vmatpush2.xpose.msra.mxu0 0.0
          %5073 = vmatprep.subr.mxu0 0.0
          %5074 = vmatpush2.xpose.msra.mxu0 0.0
          %5075 = vmatprep.subr.mxu0 0.0
          %5076 = vmatpush2.xpose.msra.mxu0 0.0
          %5077 = vmatprep.mubr.f32.mxu0 0.0
          %5078 = vmatmul.mubr.f32.gmra.mxu0 %v5005
          %v5079 = vpop.f32.mrf.mxu0
          %v5080 = vadd.f32 0.0, %v5079
          %v5081 = vpop.f32.mrf.mxu0
          %5082 = vmatprep.mubr.f32.mxu0 0.0
          %5083 = vmatmul.mubr.f32.gmra.mxu0 %v5008
          %v5084 = vpop.f32.mrf.mxu0
          %v5085 = vadd.f32 0.0, %v5084
          %v5086 = vpop.f32.mrf.mxu0
          %5087 = vmatprep.mubr.f32.mxu0 0.0
          %5088 = vmatmul.mubr.f32.gmra.mxu0 %v5011
          %v5089 = vpop.f32.mrf.mxu0
          %v5090 = vadd.f32 0.0, %v5089
          %v5091 = vpop.f32.mrf.mxu0
          %5092 = vdwg.mxu0
          %v5094 = vsel %vm3378, %v3623, 0
          %v5097 = vsel %vm3378, %v3624, 0
          %v5100 = vsel %vm3378, %v3625, 0
          %5102 = vmatprep.subr.mxu0 0.0
          %5103 = vmatpush1.xpose.msra.mxu0 0.0
          %5104 = vmatprep.subr.mxu0 0.0
          %5105 = vmatpush1.xpose.msra.mxu0 0.0
          %5106 = vmatprep.subr.mxu0 0.0
          %5107 = vmatpush1.xpose.msra.mxu0 0.0
          %5108 = vmatprep.subr.mxu0 0.0
          %5109 = vmatpush1.xpose.msra.mxu0 0.0
          %5110 = vmatprep.subr.mxu0 0.0
          %5111 = vmatpush1.xpose.msra.mxu0 0.0
          %5112 = vmatprep.subr.mxu0 0.0
          %5113 = vmatpush1.xpose.msra.mxu0 0.0
          %5114 = vmatprep.subr.mxu0 0.0
          %5115 = vmatpush1.xpose.msra.mxu0 0.0
          %5116 = vmatprep.subr.mxu0 0.0
          %5117 = vmatpush1.xpose.msra.mxu0 0.0
          %5118 = vmatprep.subr.mxu0 0.0
          %5119 = vmatpush1.xpose.msra.mxu0 0.0
          %5120 = vmatprep.subr.mxu0 0.0
          %5121 = vmatpush1.xpose.msra.mxu0 0.0
          %5122 = vmatprep.subr.mxu0 0.0
          %5123 = vmatpush1.xpose.msra.mxu0 0.0
          %5124 = vmatprep.subr.mxu0 0.0
          %5125 = vmatpush1.xpose.msra.mxu0 0.0
          %5126 = vmatprep.subr.mxu0 0.0
          %5127 = vmatpush1.xpose.msra.mxu0 0.0
          %5128 = vmatprep.subr.mxu0 0.0
          %5129 = vmatpush1.xpose.msra.mxu0 %v5100
          %5130 = vmatprep.subr.mxu0 0.0
          %5131 = vmatpush1.xpose.msra.mxu0 %v5097
          %5132 = vmatprep.subr.mxu0 0.0
          %5133 = vmatpush1.xpose.msra.mxu0 %v5094
          %5134 = vmatprep.subr.mxu0 0.0
          %5135 = vmatpush2.xpose.msra.mxu0 0.0
          %5136 = vmatprep.subr.mxu0 0.0
          %5137 = vmatpush2.xpose.msra.mxu0 0.0
          %5138 = vmatprep.subr.mxu0 0.0
          %5139 = vmatpush2.xpose.msra.mxu0 0.0
          %5140 = vmatprep.subr.mxu0 0.0
          %5141 = vmatpush2.xpose.msra.mxu0 0.0
          %5142 = vmatprep.subr.mxu0 0.0
          %5143 = vmatpush2.xpose.msra.mxu0 0.0
          %5144 = vmatprep.subr.mxu0 0.0
          %5145 = vmatpush2.xpose.msra.mxu0 0.0
          %5146 = vmatprep.subr.mxu0 0.0
          %5147 = vmatpush2.xpose.msra.mxu0 0.0
          %5148 = vmatprep.subr.mxu0 0.0
          %5149 = vmatpush2.xpose.msra.mxu0 0.0
          %5150 = vmatprep.subr.mxu0 0.0
          %5151 = vmatpush2.xpose.msra.mxu0 0.0
          %5152 = vmatprep.subr.mxu0 0.0
          %5153 = vmatpush2.xpose.msra.mxu0 0.0
          %5154 = vmatprep.subr.mxu0 0.0
          %5155 = vmatpush2.xpose.msra.mxu0 0.0
          %5156 = vmatprep.subr.mxu0 0.0
          %5157 = vmatpush2.xpose.msra.mxu0 0.0
          %5158 = vmatprep.subr.mxu0 0.0
          %5159 = vmatpush2.xpose.msra.mxu0 0.0
          %5160 = vmatprep.subr.mxu0 0.0
          %5161 = vmatpush2.xpose.msra.mxu0 0.0
          %5162 = vmatprep.subr.mxu0 0.0
          %5163 = vmatpush2.xpose.msra.mxu0 0.0
          %5164 = vmatprep.subr.mxu0 0.0
          %5165 = vmatpush2.xpose.msra.mxu0 0.0
          %5166 = vmatprep.mubr.f32.mxu0 0.0
          %5167 = vmatmul.mubr.f32.gmra.mxu0 %v5094
          %v5168 = vpop.f32.mrf.mxu0
          %v5169 = vadd.f32 0.0, %v5168
          %v5170 = vpop.f32.mrf.mxu0
          %5171 = vmatprep.mubr.f32.mxu0 0.0
          %5172 = vmatmul.mubr.f32.gmra.mxu0 %v5097
          %v5173 = vpop.f32.mrf.mxu0
          %v5174 = vadd.f32 0.0, %v5173
          %v5175 = vpop.f32.mrf.mxu0
          %5176 = vmatprep.mubr.f32.mxu0 0.0
          %5177 = vmatmul.mubr.f32.gmra.mxu0 %v5100
          %v5178 = vpop.f32.mrf.mxu0
          %v5179 = vadd.f32 0.0, %v5178
          %v5180 = vpop.f32.mrf.mxu0
          %5181 = vdwg.mxu0
          %v5183 = vsel %vm3378, %v3626, 0
          %v5186 = vsel %vm3378, %v3627, 0
          %v5189 = vsel %vm3378, %v3628, 0
          %5191 = vmatprep.subr.mxu0 0.0
          %5192 = vmatpush1.xpose.msra.mxu0 0.0
          %5193 = vmatprep.subr.mxu0 0.0
          %5194 = vmatpush1.xpose.msra.mxu0 0.0
          %5195 = vmatprep.subr.mxu0 0.0
          %5196 = vmatpush1.xpose.msra.mxu0 0.0
          %5197 = vmatprep.subr.mxu0 0.0
          %5198 = vmatpush1.xpose.msra.mxu0 0.0
          %5199 = vmatprep.subr.mxu0 0.0
          %5200 = vmatpush1.xpose.msra.mxu0 0.0
          %5201 = vmatprep.subr.mxu0 0.0
          %5202 = vmatpush1.xpose.msra.mxu0 0.0
          %5203 = vmatprep.subr.mxu0 0.0
          %5204 = vmatpush1.xpose.msra.mxu0 0.0
          %5205 = vmatprep.subr.mxu0 0.0
          %5206 = vmatpush1.xpose.msra.mxu0 0.0
          %5207 = vmatprep.subr.mxu0 0.0
          %5208 = vmatpush1.xpose.msra.mxu0 0.0
          %5209 = vmatprep.subr.mxu0 0.0
          %5210 = vmatpush1.xpose.msra.mxu0 0.0
          %5211 = vmatprep.subr.mxu0 0.0
          %5212 = vmatpush1.xpose.msra.mxu0 0.0
          %5213 = vmatprep.subr.mxu0 0.0
          %5214 = vmatpush1.xpose.msra.mxu0 0.0
          %5215 = vmatprep.subr.mxu0 0.0
          %5216 = vmatpush1.xpose.msra.mxu0 0.0
          %5217 = vmatprep.subr.mxu0 0.0
          %5218 = vmatpush1.xpose.msra.mxu0 %v5189
          %5219 = vmatprep.subr.mxu0 0.0
          %5220 = vmatpush1.xpose.msra.mxu0 %v5186
          %5221 = vmatprep.subr.mxu0 0.0
          %5222 = vmatpush1.xpose.msra.mxu0 %v5183
          %5223 = vmatprep.subr.mxu0 0.0
          %5224 = vmatpush2.xpose.msra.mxu0 0.0
          %5225 = vmatprep.subr.mxu0 0.0
          %5226 = vmatpush2.xpose.msra.mxu0 0.0
          %5227 = vmatprep.subr.mxu0 0.0
          %5228 = vmatpush2.xpose.msra.mxu0 0.0
          %5229 = vmatprep.subr.mxu0 0.0
          %5230 = vmatpush2.xpose.msra.mxu0 0.0
          %5231 = vmatprep.subr.mxu0 0.0
          %5232 = vmatpush2.xpose.msra.mxu0 0.0
          %5233 = vmatprep.subr.mxu0 0.0
          %5234 = vmatpush2.xpose.msra.mxu0 0.0
          %5235 = vmatprep.subr.mxu0 0.0
          %5236 = vmatpush2.xpose.msra.mxu0 0.0
          %5237 = vmatprep.subr.mxu0 0.0
          %5238 = vmatpush2.xpose.msra.mxu0 0.0
          %5239 = vmatprep.subr.mxu0 0.0
          %5240 = vmatpush2.xpose.msra.mxu0 0.0
          %5241 = vmatprep.subr.mxu0 0.0
          %5242 = vmatpush2.xpose.msra.mxu0 0.0
          %5243 = vmatprep.subr.mxu0 0.0
          %5244 = vmatpush2.xpose.msra.mxu0 0.0
          %5245 = vmatprep.subr.mxu0 0.0
          %5246 = vmatpush2.xpose.msra.mxu0 0.0
          %5247 = vmatprep.subr.mxu0 0.0
          %5248 = vmatpush2.xpose.msra.mxu0 0.0
          %5249 = vmatprep.subr.mxu0 0.0
          %5250 = vmatpush2.xpose.msra.mxu0 0.0
          %5251 = vmatprep.subr.mxu0 0.0
          %5252 = vmatpush2.xpose.msra.mxu0 0.0
          %5253 = vmatprep.subr.mxu0 0.0
          %5254 = vmatpush2.xpose.msra.mxu0 0.0
          %5255 = vmatprep.mubr.f32.mxu0 0.0
          %5256 = vmatmul.mubr.f32.gmra.mxu0 %v5183
          %v5257 = vpop.f32.mrf.mxu0
          %v5258 = vadd.f32 0.0, %v5257
          %v5259 = vpop.f32.mrf.mxu0
          %5260 = vmatprep.mubr.f32.mxu0 0.0
          %5261 = vmatmul.mubr.f32.gmra.mxu0 %v5186
          %v5262 = vpop.f32.mrf.mxu0
          %v5263 = vadd.f32 0.0, %v5262
          %v5264 = vpop.f32.mrf.mxu0
          %5265 = vmatprep.mubr.f32.mxu0 0.0
          %5266 = vmatmul.mubr.f32.gmra.mxu0 %v5189
          %v5267 = vpop.f32.mrf.mxu0
          %v5268 = vadd.f32 0.0, %v5267
          %v5269 = vpop.f32.mrf.mxu0
          %5270 = vdwg.mxu0
          %v5272 = vsel %vm3378, %v3629, 0
          %v5275 = vsel %vm3378, %v3630, 0
          %v5278 = vsel %vm3378, %v3631, 0
          %5280 = vmatprep.subr.mxu0 0.0
          %5281 = vmatpush1.xpose.msra.mxu0 0.0
          %5282 = vmatprep.subr.mxu0 0.0
          %5283 = vmatpush1.xpose.msra.mxu0 0.0
          %5284 = vmatprep.subr.mxu0 0.0
          %5285 = vmatpush1.xpose.msra.mxu0 0.0
          %5286 = vmatprep.subr.mxu0 0.0
          %5287 = vmatpush1.xpose.msra.mxu0 0.0
          %5288 = vmatprep.subr.mxu0 0.0
          %5289 = vmatpush1.xpose.msra.mxu0 0.0
          %5290 = vmatprep.subr.mxu0 0.0
          %5291 = vmatpush1.xpose.msra.mxu0 0.0
          %5292 = vmatprep.subr.mxu0 0.0
          %5293 = vmatpush1.xpose.msra.mxu0 0.0
          %5294 = vmatprep.subr.mxu0 0.0
          %5295 = vmatpush1.xpose.msra.mxu0 0.0
          %5296 = vmatprep.subr.mxu0 0.0
          %5297 = vmatpush1.xpose.msra.mxu0 0.0
          %5298 = vmatprep.subr.mxu0 0.0
          %5299 = vmatpush1.xpose.msra.mxu0 0.0
          %5300 = vmatprep.subr.mxu0 0.0
          %5301 = vmatpush1.xpose.msra.mxu0 0.0
          %5302 = vmatprep.subr.mxu0 0.0
          %5303 = vmatpush1.xpose.msra.mxu0 0.0
          %5304 = vmatprep.subr.mxu0 0.0
          %5305 = vmatpush1.xpose.msra.mxu0 0.0
          %5306 = vmatprep.subr.mxu0 0.0
          %5307 = vmatpush1.xpose.msra.mxu0 %v5278
          %5308 = vmatprep.subr.mxu0 0.0
          %5309 = vmatpush1.xpose.msra.mxu0 %v5275
          %5310 = vmatprep.subr.mxu0 0.0
          %5311 = vmatpush1.xpose.msra.mxu0 %v5272
          %5312 = vmatprep.subr.mxu0 0.0
          %5313 = vmatpush2.xpose.msra.mxu0 0.0
          %5314 = vmatprep.subr.mxu0 0.0
          %5315 = vmatpush2.xpose.msra.mxu0 0.0
          %5316 = vmatprep.subr.mxu0 0.0
          %5317 = vmatpush2.xpose.msra.mxu0 0.0
          %5318 = vmatprep.subr.mxu0 0.0
          %5319 = vmatpush2.xpose.msra.mxu0 0.0
          %5320 = vmatprep.subr.mxu0 0.0
          %5321 = vmatpush2.xpose.msra.mxu0 0.0
          %5322 = vmatprep.subr.mxu0 0.0
          %5323 = vmatpush2.xpose.msra.mxu0 0.0
          %5324 = vmatprep.subr.mxu0 0.0
          %5325 = vmatpush2.xpose.msra.mxu0 0.0
          %5326 = vmatprep.subr.mxu0 0.0
          %5327 = vmatpush2.xpose.msra.mxu0 0.0
          %5328 = vmatprep.subr.mxu0 0.0
          %5329 = vmatpush2.xpose.msra.mxu0 0.0
          %5330 = vmatprep.subr.mxu0 0.0
          %5331 = vmatpush2.xpose.msra.mxu0 0.0
          %5332 = vmatprep.subr.mxu0 0.0
          %5333 = vmatpush2.xpose.msra.mxu0 0.0
          %5334 = vmatprep.subr.mxu0 0.0
          %5335 = vmatpush2.xpose.msra.mxu0 0.0
          %5336 = vmatprep.subr.mxu0 0.0
          %5337 = vmatpush2.xpose.msra.mxu0 0.0
          %5338 = vmatprep.subr.mxu0 0.0
          %5339 = vmatpush2.xpose.msra.mxu0 0.0
          %5340 = vmatprep.subr.mxu0 0.0
          %5341 = vmatpush2.xpose.msra.mxu0 0.0
          %5342 = vmatprep.subr.mxu0 0.0
          %5343 = vmatpush2.xpose.msra.mxu0 0.0
          %5344 = vmatprep.mubr.f32.mxu0 0.0
          %5345 = vmatmul.mubr.f32.gmra.mxu0 %v5272
          %v5346 = vpop.f32.mrf.mxu0
          %v5347 = vadd.f32 0.0, %v5346
          %v5348 = vpop.f32.mrf.mxu0
          %5349 = vmatprep.mubr.f32.mxu0 0.0
          %5350 = vmatmul.mubr.f32.gmra.mxu0 %v5275
          %v5351 = vpop.f32.mrf.mxu0
          %v5352 = vadd.f32 0.0, %v5351
          %v5353 = vpop.f32.mrf.mxu0
          %5354 = vmatprep.mubr.f32.mxu0 0.0
          %5355 = vmatmul.mubr.f32.gmra.mxu0 %v5278
          %v5356 = vpop.f32.mrf.mxu0
          %v5357 = vadd.f32 0.0, %v5356
          %v5358 = vpop.f32.mrf.mxu0
          %5359 = vdwg.mxu0
          %v5361 = vsel %vm3378, %v3632, 0
          %v5364 = vsel %vm3378, %v3633, 0
          %v5367 = vsel %vm3378, %v3634, 0
          %5369 = vmatprep.subr.mxu0 0.0
          %5370 = vmatpush1.xpose.msra.mxu0 0.0
          %5371 = vmatprep.subr.mxu0 0.0
          %5372 = vmatpush1.xpose.msra.mxu0 0.0
          %5373 = vmatprep.subr.mxu0 0.0
          %5374 = vmatpush1.xpose.msra.mxu0 0.0
          %5375 = vmatprep.subr.mxu0 0.0
          %5376 = vmatpush1.xpose.msra.mxu0 0.0
          %5377 = vmatprep.subr.mxu0 0.0
          %5378 = vmatpush1.xpose.msra.mxu0 0.0
          %5379 = vmatprep.subr.mxu0 0.0
          %5380 = vmatpush1.xpose.msra.mxu0 0.0
          %5381 = vmatprep.subr.mxu0 0.0
          %5382 = vmatpush1.xpose.msra.mxu0 0.0
          %5383 = vmatprep.subr.mxu0 0.0
          %5384 = vmatpush1.xpose.msra.mxu0 0.0
          %5385 = vmatprep.subr.mxu0 0.0
          %5386 = vmatpush1.xpose.msra.mxu0 0.0
          %5387 = vmatprep.subr.mxu0 0.0
          %5388 = vmatpush1.xpose.msra.mxu0 0.0
          %5389 = vmatprep.subr.mxu0 0.0
          %5390 = vmatpush1.xpose.msra.mxu0 0.0
          %5391 = vmatprep.subr.mxu0 0.0
          %5392 = vmatpush1.xpose.msra.mxu0 0.0
          %5393 = vmatprep.subr.mxu0 0.0
          %5394 = vmatpush1.xpose.msra.mxu0 0.0
          %5395 = vmatprep.subr.mxu0 0.0
          %5396 = vmatpush1.xpose.msra.mxu0 %v5367
          %5397 = vmatprep.subr.mxu0 0.0
          %5398 = vmatpush1.xpose.msra.mxu0 %v5364
          %5399 = vmatprep.subr.mxu0 0.0
          %5400 = vmatpush1.xpose.msra.mxu0 %v5361
          %5401 = vmatprep.subr.mxu0 0.0
          %5402 = vmatpush2.xpose.msra.mxu0 0.0
          %5403 = vmatprep.subr.mxu0 0.0
          %5404 = vmatpush2.xpose.msra.mxu0 0.0
          %5405 = vmatprep.subr.mxu0 0.0
          %5406 = vmatpush2.xpose.msra.mxu0 0.0
          %5407 = vmatprep.subr.mxu0 0.0
          %5408 = vmatpush2.xpose.msra.mxu0 0.0
          %5409 = vmatprep.subr.mxu0 0.0
          %5410 = vmatpush2.xpose.msra.mxu0 0.0
          %5411 = vmatprep.subr.mxu0 0.0
          %5412 = vmatpush2.xpose.msra.mxu0 0.0
          %5413 = vmatprep.subr.mxu0 0.0
          %5414 = vmatpush2.xpose.msra.mxu0 0.0
          %5415 = vmatprep.subr.mxu0 0.0
          %5416 = vmatpush2.xpose.msra.mxu0 0.0
          %5417 = vmatprep.subr.mxu0 0.0
          %5418 = vmatpush2.xpose.msra.mxu0 0.0
          %5419 = vmatprep.subr.mxu0 0.0
          %5420 = vmatpush2.xpose.msra.mxu0 0.0
          %5421 = vmatprep.subr.mxu0 0.0
          %5422 = vmatpush2.xpose.msra.mxu0 0.0
          %5423 = vmatprep.subr.mxu0 0.0
          %5424 = vmatpush2.xpose.msra.mxu0 0.0
          %5425 = vmatprep.subr.mxu0 0.0
          %5426 = vmatpush2.xpose.msra.mxu0 0.0
          %5427 = vmatprep.subr.mxu0 0.0
          %5428 = vmatpush2.xpose.msra.mxu0 0.0
          %5429 = vmatprep.subr.mxu0 0.0
          %5430 = vmatpush2.xpose.msra.mxu0 0.0
          %5431 = vmatprep.subr.mxu0 0.0
          %5432 = vmatpush2.xpose.msra.mxu0 0.0
          %5433 = vmatprep.mubr.f32.mxu0 0.0
          %5434 = vmatmul.mubr.f32.gmra.mxu0 %v5361
          %v5435 = vpop.f32.mrf.mxu0
          %v5436 = vadd.f32 0.0, %v5435
          %v5437 = vpop.f32.mrf.mxu0
          %5438 = vmatprep.mubr.f32.mxu0 0.0
          %5439 = vmatmul.mubr.f32.gmra.mxu0 %v5364
          %v5440 = vpop.f32.mrf.mxu0
          %v5441 = vadd.f32 0.0, %v5440
          %v5442 = vpop.f32.mrf.mxu0
          %5443 = vmatprep.mubr.f32.mxu0 0.0
          %5444 = vmatmul.mubr.f32.gmra.mxu0 %v5367
          %v5445 = vpop.f32.mrf.mxu0
          %v5446 = vadd.f32 0.0, %v5445
          %v5447 = vpop.f32.mrf.mxu0
          %5448 = vdwg.mxu0
          %v5450 = vsel %vm3378, %v3635, 0
          %v5453 = vsel %vm3378, %v3636, 0
          %v5456 = vsel %vm3378, %v3637, 0
          %5458 = vmatprep.subr.mxu0 0.0
          %5459 = vmatpush1.xpose.msra.mxu0 0.0
          %5460 = vmatprep.subr.mxu0 0.0
          %5461 = vmatpush1.xpose.msra.mxu0 0.0
          %5462 = vmatprep.subr.mxu0 0.0
          %5463 = vmatpush1.xpose.msra.mxu0 0.0
          %5464 = vmatprep.subr.mxu0 0.0
          %5465 = vmatpush1.xpose.msra.mxu0 0.0
          %5466 = vmatprep.subr.mxu0 0.0
          %5467 = vmatpush1.xpose.msra.mxu0 0.0
          %5468 = vmatprep.subr.mxu0 0.0
          %5469 = vmatpush1.xpose.msra.mxu0 0.0
          %5470 = vmatprep.subr.mxu0 0.0
          %5471 = vmatpush1.xpose.msra.mxu0 0.0
          %5472 = vmatprep.subr.mxu0 0.0
          %5473 = vmatpush1.xpose.msra.mxu0 0.0
          %5474 = vmatprep.subr.mxu0 0.0
          %5475 = vmatpush1.xpose.msra.mxu0 0.0
          %5476 = vmatprep.subr.mxu0 0.0
          %5477 = vmatpush1.xpose.msra.mxu0 0.0
          %5478 = vmatprep.subr.mxu0 0.0
          %5479 = vmatpush1.xpose.msra.mxu0 0.0
          %5480 = vmatprep.subr.mxu0 0.0
          %5481 = vmatpush1.xpose.msra.mxu0 0.0
          %5482 = vmatprep.subr.mxu0 0.0
          %5483 = vmatpush1.xpose.msra.mxu0 0.0
          %5484 = vmatprep.subr.mxu0 0.0
          %5485 = vmatpush1.xpose.msra.mxu0 %v5456
          %5486 = vmatprep.subr.mxu0 0.0
          %5487 = vmatpush1.xpose.msra.mxu0 %v5453
          %5488 = vmatprep.subr.mxu0 0.0
          %5489 = vmatpush1.xpose.msra.mxu0 %v5450
          %5490 = vmatprep.subr.mxu0 0.0
          %5491 = vmatpush2.xpose.msra.mxu0 0.0
          %5492 = vmatprep.subr.mxu0 0.0
          %5493 = vmatpush2.xpose.msra.mxu0 0.0
          %5494 = vmatprep.subr.mxu0 0.0
          %5495 = vmatpush2.xpose.msra.mxu0 0.0
          %5496 = vmatprep.subr.mxu0 0.0
          %5497 = vmatpush2.xpose.msra.mxu0 0.0
          %5498 = vmatprep.subr.mxu0 0.0
          %5499 = vmatpush2.xpose.msra.mxu0 0.0
          %5500 = vmatprep.subr.mxu0 0.0
          %5501 = vmatpush2.xpose.msra.mxu0 0.0
          %5502 = vmatprep.subr.mxu0 0.0
          %5503 = vmatpush2.xpose.msra.mxu0 0.0
          %5504 = vmatprep.subr.mxu0 0.0
          %5505 = vmatpush2.xpose.msra.mxu0 0.0
          %5506 = vmatprep.subr.mxu0 0.0
          %5507 = vmatpush2.xpose.msra.mxu0 0.0
          %5508 = vmatprep.subr.mxu0 0.0
          %5509 = vmatpush2.xpose.msra.mxu0 0.0
          %5510 = vmatprep.subr.mxu0 0.0
          %5511 = vmatpush2.xpose.msra.mxu0 0.0
          %5512 = vmatprep.subr.mxu0 0.0
          %5513 = vmatpush2.xpose.msra.mxu0 0.0
          %5514 = vmatprep.subr.mxu0 0.0
          %5515 = vmatpush2.xpose.msra.mxu0 0.0
          %5516 = vmatprep.subr.mxu0 0.0
          %5517 = vmatpush2.xpose.msra.mxu0 0.0
          %5518 = vmatprep.subr.mxu0 0.0
          %5519 = vmatpush2.xpose.msra.mxu0 0.0
          %5520 = vmatprep.subr.mxu0 0.0
          %5521 = vmatpush2.xpose.msra.mxu0 0.0
          %5522 = vmatprep.mubr.f32.mxu0 0.0
          %5523 = vmatmul.mubr.f32.gmra.mxu0 %v5450
          %v5524 = vpop.f32.mrf.mxu0
          %v5525 = vadd.f32 0.0, %v5524
          %v5526 = vpop.f32.mrf.mxu0
          %5527 = vmatprep.mubr.f32.mxu0 0.0
          %5528 = vmatmul.mubr.f32.gmra.mxu0 %v5453
          %v5529 = vpop.f32.mrf.mxu0
          %v5530 = vadd.f32 0.0, %v5529
          %v5531 = vpop.f32.mrf.mxu0
          %5532 = vmatprep.mubr.f32.mxu0 0.0
          %5533 = vmatmul.mubr.f32.gmra.mxu0 %v5456
          %v5534 = vpop.f32.mrf.mxu0
          %v5535 = vadd.f32 0.0, %v5534
          %v5536 = vpop.f32.mrf.mxu0
          %5537 = vdwg.mxu0
          %v5539 = vsel %vm3378, %v3638, 0
          %v5542 = vsel %vm3378, %v3639, 0
          %v5545 = vsel %vm3378, %v3640, 0
          %5547 = vmatprep.subr.mxu0 0.0
          %5548 = vmatpush1.xpose.msra.mxu0 0.0
          %5549 = vmatprep.subr.mxu0 0.0
          %5550 = vmatpush1.xpose.msra.mxu0 0.0
          %5551 = vmatprep.subr.mxu0 0.0
          %5552 = vmatpush1.xpose.msra.mxu0 0.0
          %5553 = vmatprep.subr.mxu0 0.0
          %5554 = vmatpush1.xpose.msra.mxu0 0.0
          %5555 = vmatprep.subr.mxu0 0.0
          %5556 = vmatpush1.xpose.msra.mxu0 0.0
          %5557 = vmatprep.subr.mxu0 0.0
          %5558 = vmatpush1.xpose.msra.mxu0 0.0
          %5559 = vmatprep.subr.mxu0 0.0
          %5560 = vmatpush1.xpose.msra.mxu0 0.0
          %5561 = vmatprep.subr.mxu0 0.0
          %5562 = vmatpush1.xpose.msra.mxu0 0.0
          %5563 = vmatprep.subr.mxu0 0.0
          %5564 = vmatpush1.xpose.msra.mxu0 0.0
          %5565 = vmatprep.subr.mxu0 0.0
          %5566 = vmatpush1.xpose.msra.mxu0 0.0
          %5567 = vmatprep.subr.mxu0 0.0
          %5568 = vmatpush1.xpose.msra.mxu0 0.0
          %5569 = vmatprep.subr.mxu0 0.0
          %5570 = vmatpush1.xpose.msra.mxu0 0.0
          %5571 = vmatprep.subr.mxu0 0.0
          %5572 = vmatpush1.xpose.msra.mxu0 0.0
          %5573 = vmatprep.subr.mxu0 0.0
          %5574 = vmatpush1.xpose.msra.mxu0 %v5545
          %5575 = vmatprep.subr.mxu0 0.0
          %5576 = vmatpush1.xpose.msra.mxu0 %v5542
          %5577 = vmatprep.subr.mxu0 0.0
          %5578 = vmatpush1.xpose.msra.mxu0 %v5539
          %5579 = vmatprep.subr.mxu0 0.0
          %5580 = vmatpush2.xpose.msra.mxu0 0.0
          %5581 = vmatprep.subr.mxu0 0.0
          %5582 = vmatpush2.xpose.msra.mxu0 0.0
          %5583 = vmatprep.subr.mxu0 0.0
          %5584 = vmatpush2.xpose.msra.mxu0 0.0
          %5585 = vmatprep.subr.mxu0 0.0
          %5586 = vmatpush2.xpose.msra.mxu0 0.0
          %5587 = vmatprep.subr.mxu0 0.0
          %5588 = vmatpush2.xpose.msra.mxu0 0.0
          %5589 = vmatprep.subr.mxu0 0.0
          %5590 = vmatpush2.xpose.msra.mxu0 0.0
          %5591 = vmatprep.subr.mxu0 0.0
          %5592 = vmatpush2.xpose.msra.mxu0 0.0
          %5593 = vmatprep.subr.mxu0 0.0
          %5594 = vmatpush2.xpose.msra.mxu0 0.0
          %5595 = vmatprep.subr.mxu0 0.0
          %5596 = vmatpush2.xpose.msra.mxu0 0.0
          %5597 = vmatprep.subr.mxu0 0.0
          %5598 = vmatpush2.xpose.msra.mxu0 0.0
          %5599 = vmatprep.subr.mxu0 0.0
          %5600 = vmatpush2.xpose.msra.mxu0 0.0
          %5601 = vmatprep.subr.mxu0 0.0
          %5602 = vmatpush2.xpose.msra.mxu0 0.0
          %5603 = vmatprep.subr.mxu0 0.0
          %5604 = vmatpush2.xpose.msra.mxu0 0.0
          %5605 = vmatprep.subr.mxu0 0.0
          %5606 = vmatpush2.xpose.msra.mxu0 0.0
          %5607 = vmatprep.subr.mxu0 0.0
          %5608 = vmatpush2.xpose.msra.mxu0 0.0
          %5609 = vmatprep.subr.mxu0 0.0
          %5610 = vmatpush2.xpose.msra.mxu0 0.0
          %5611 = vmatprep.mubr.f32.mxu0 0.0
          %5612 = vmatmul.mubr.f32.gmra.mxu0 %v5539
          %v5613 = vpop.f32.mrf.mxu0
          %v5614 = vadd.f32 0.0, %v5613
          %v5615 = vpop.f32.mrf.mxu0
          %5616 = vmatprep.mubr.f32.mxu0 0.0
          %5617 = vmatmul.mubr.f32.gmra.mxu0 %v5542
          %v5618 = vpop.f32.mrf.mxu0
          %v5619 = vadd.f32 0.0, %v5618
          %v5620 = vpop.f32.mrf.mxu0
          %5621 = vmatprep.mubr.f32.mxu0 0.0
          %5622 = vmatmul.mubr.f32.gmra.mxu0 %v5545
          %v5623 = vpop.f32.mrf.mxu0
          %v5624 = vadd.f32 0.0, %v5623
          %v5625 = vpop.f32.mrf.mxu0
          %5626 = vdwg.mxu0
          %v5628 = vsel %vm3378, %v3641, 0
          %v5631 = vsel %vm3378, %v3642, 0
          %v5634 = vsel %vm3378, %v3643, 0
          %5636 = vmatprep.subr.mxu0 0.0
          %5637 = vmatpush1.xpose.msra.mxu0 0.0
          %5638 = vmatprep.subr.mxu0 0.0
          %5639 = vmatpush1.xpose.msra.mxu0 0.0
          %5640 = vmatprep.subr.mxu0 0.0
          %5641 = vmatpush1.xpose.msra.mxu0 0.0
          %5642 = vmatprep.subr.mxu0 0.0
          %5643 = vmatpush1.xpose.msra.mxu0 0.0
          %5644 = vmatprep.subr.mxu0 0.0
          %5645 = vmatpush1.xpose.msra.mxu0 0.0
          %5646 = vmatprep.subr.mxu0 0.0
          %5647 = vmatpush1.xpose.msra.mxu0 0.0
          %5648 = vmatprep.subr.mxu0 0.0
          %5649 = vmatpush1.xpose.msra.mxu0 0.0
          %5650 = vmatprep.subr.mxu0 0.0
          %5651 = vmatpush1.xpose.msra.mxu0 0.0
          %5652 = vmatprep.subr.mxu0 0.0
          %5653 = vmatpush1.xpose.msra.mxu0 0.0
          %5654 = vmatprep.subr.mxu0 0.0
          %5655 = vmatpush1.xpose.msra.mxu0 0.0
          %5656 = vmatprep.subr.mxu0 0.0
          %5657 = vmatpush1.xpose.msra.mxu0 0.0
          %5658 = vmatprep.subr.mxu0 0.0
          %5659 = vmatpush1.xpose.msra.mxu0 0.0
          %5660 = vmatprep.subr.mxu0 0.0
          %5661 = vmatpush1.xpose.msra.mxu0 0.0
          %5662 = vmatprep.subr.mxu0 0.0
          %5663 = vmatpush1.xpose.msra.mxu0 %v5634
          %5664 = vmatprep.subr.mxu0 0.0
          %5665 = vmatpush1.xpose.msra.mxu0 %v5631
          %5666 = vmatprep.subr.mxu0 0.0
          %5667 = vmatpush1.xpose.msra.mxu0 %v5628
          %5668 = vmatprep.subr.mxu0 0.0
          %5669 = vmatpush2.xpose.msra.mxu0 0.0
          %5670 = vmatprep.subr.mxu0 0.0
          %5671 = vmatpush2.xpose.msra.mxu0 0.0
          %5672 = vmatprep.subr.mxu0 0.0
          %5673 = vmatpush2.xpose.msra.mxu0 0.0
          %5674 = vmatprep.subr.mxu0 0.0
          %5675 = vmatpush2.xpose.msra.mxu0 0.0
          %5676 = vmatprep.subr.mxu0 0.0
          %5677 = vmatpush2.xpose.msra.mxu0 0.0
          %5678 = vmatprep.subr.mxu0 0.0
          %5679 = vmatpush2.xpose.msra.mxu0 0.0
          %5680 = vmatprep.subr.mxu0 0.0
          %5681 = vmatpush2.xpose.msra.mxu0 0.0
          %5682 = vmatprep.subr.mxu0 0.0
          %5683 = vmatpush2.xpose.msra.mxu0 0.0
          %5684 = vmatprep.subr.mxu0 0.0
          %5685 = vmatpush2.xpose.msra.mxu0 0.0
          %5686 = vmatprep.subr.mxu0 0.0
          %5687 = vmatpush2.xpose.msra.mxu0 0.0
          %5688 = vmatprep.subr.mxu0 0.0
          %5689 = vmatpush2.xpose.msra.mxu0 0.0
          %5690 = vmatprep.subr.mxu0 0.0
          %5691 = vmatpush2.xpose.msra.mxu0 0.0
          %5692 = vmatprep.subr.mxu0 0.0
          %5693 = vmatpush2.xpose.msra.mxu0 0.0
          %5694 = vmatprep.subr.mxu0 0.0
          %5695 = vmatpush2.xpose.msra.mxu0 0.0
          %5696 = vmatprep.subr.mxu0 0.0
          %5697 = vmatpush2.xpose.msra.mxu0 0.0
          %5698 = vmatprep.subr.mxu0 0.0
          %5699 = vmatpush2.xpose.msra.mxu0 0.0
          %5700 = vmatprep.mubr.f32.mxu0 0.0
          %5701 = vmatmul.mubr.f32.gmra.mxu0 %v5628
          %v5702 = vpop.f32.mrf.mxu0
          %v5703 = vadd.f32 0.0, %v5702
          %v5704 = vpop.f32.mrf.mxu0
          %5705 = vmatprep.mubr.f32.mxu0 0.0
          %5706 = vmatmul.mubr.f32.gmra.mxu0 %v5631
          %v5707 = vpop.f32.mrf.mxu0
          %v5708 = vadd.f32 0.0, %v5707
          %v5709 = vpop.f32.mrf.mxu0
          %5710 = vmatprep.mubr.f32.mxu0 0.0
          %5711 = vmatmul.mubr.f32.gmra.mxu0 %v5634
          %v5712 = vpop.f32.mrf.mxu0
          %v5713 = vadd.f32 0.0, %v5712
          %v5714 = vpop.f32.mrf.mxu0
          %5715 = vdwg.mxu0
          %v5717 = vsel %vm3378, %v5080, 0
          %v5720 = vsel %vm3378, %v5085, 0
          %v5723 = vsel %vm3378, %v5090, 0
          %v5725 = vsel %vm3666, %v5090, 0
          %5727 = vmatprep.subr.mxu0 0.0
          %5728 = vmatpush1.msra.mxu0 0.0
          %5729 = vmatprep.subr.mxu0 0.0
          %5730 = vmatpush1.msra.mxu0 0.0
          %5731 = vmatprep.subr.mxu0 0.0
          %5732 = vmatpush1.msra.mxu0 0.0
          %5733 = vmatprep.subr.mxu0 0.0
          %5734 = vmatpush1.msra.mxu0 0.0
          %5735 = vmatprep.subr.mxu0 0.0
          %5736 = vmatpush1.msra.mxu0 0.0
          %5737 = vmatprep.subr.mxu0 0.0
          %5738 = vmatpush1.msra.mxu0 0.0
          %5739 = vmatprep.subr.mxu0 0.0
          %5740 = vmatpush1.msra.mxu0 0.0
          %5741 = vmatprep.subr.mxu0 0.0
          %5742 = vmatpush1.msra.mxu0 0.0
          %5743 = vmatprep.subr.mxu0 0.0
          %5744 = vmatpush1.msra.mxu0 0.0
          %5745 = vmatprep.subr.mxu0 0.0
          %5746 = vmatpush1.msra.mxu0 0.0
          %5747 = vmatprep.subr.mxu0 0.0
          %5748 = vmatpush1.msra.mxu0 0.0
          %5749 = vmatprep.subr.mxu0 0.0
          %5750 = vmatpush1.msra.mxu0 0.0
          %5751 = vmatprep.subr.mxu0 0.0
          %5752 = vmatpush1.msra.mxu0 0.0
          %5753 = vmatprep.subr.mxu0 0.0
          %5754 = vmatpush1.msra.mxu0 %v5725
          %5755 = vmatprep.subr.mxu0 0.0
          %5756 = vmatpush1.msra.mxu0 %v5085
          %5757 = vmatprep.subr.mxu0 0.0
          %5758 = vmatpush1.msra.mxu0 %v5080
          %5759 = vmatprep.subr.mxu0 0.0
          %5760 = vmatpush2.msra.mxu0 0.0
          %5761 = vmatprep.subr.mxu0 0.0
          %5762 = vmatpush2.msra.mxu0 0.0
          %5763 = vmatprep.subr.mxu0 0.0
          %5764 = vmatpush2.msra.mxu0 0.0
          %5765 = vmatprep.subr.mxu0 0.0
          %5766 = vmatpush2.msra.mxu0 0.0
          %5767 = vmatprep.subr.mxu0 0.0
          %5768 = vmatpush2.msra.mxu0 0.0
          %5769 = vmatprep.subr.mxu0 0.0
          %5770 = vmatpush2.msra.mxu0 0.0
          %5771 = vmatprep.subr.mxu0 0.0
          %5772 = vmatpush2.msra.mxu0 0.0
          %5773 = vmatprep.subr.mxu0 0.0
          %5774 = vmatpush2.msra.mxu0 0.0
          %5775 = vmatprep.subr.mxu0 0.0
          %5776 = vmatpush2.msra.mxu0 0.0
          %5777 = vmatprep.subr.mxu0 0.0
          %5778 = vmatpush2.msra.mxu0 0.0
          %5779 = vmatprep.subr.mxu0 0.0
          %5780 = vmatpush2.msra.mxu0 0.0
          %5781 = vmatprep.subr.mxu0 0.0
          %5782 = vmatpush2.msra.mxu0 0.0
          %5783 = vmatprep.subr.mxu0 0.0
          %5784 = vmatpush2.msra.mxu0 0.0
          %5785 = vmatprep.subr.mxu0 0.0
          %5786 = vmatpush2.msra.mxu0 0.0
          %5787 = vmatprep.subr.mxu0 0.0
          %5788 = vmatpush2.msra.mxu0 0.0
          %5789 = vmatprep.subr.mxu0 0.0
          %5790 = vmatpush2.msra.mxu0 0.0
          %5791 = vmatprep.mubr.f32.mxu0 0.0
          %5792 = vmatmul.mubr.f32.gmra.mxu0 %v5717
          %v5793 = vpop.f32.mrf.mxu0
          %v5794 = vadd.f32 0.0, %v5793
          %v5795 = vpop.f32.mrf.mxu0
          %5796 = vmatprep.mubr.f32.mxu0 0.0
          %5797 = vmatmul.mubr.f32.gmra.mxu0 %v5720
          %v5798 = vpop.f32.mrf.mxu0
          %v5799 = vadd.f32 0.0, %v5798
          %v5800 = vpop.f32.mrf.mxu0
          %5801 = vmatprep.mubr.f32.mxu0 0.0
          %5802 = vmatmul.mubr.f32.gmra.mxu0 %v5723
          %v5803 = vpop.f32.mrf.mxu0
          %v5804 = vadd.f32 0.0, %v5803
          %v5805 = vpop.f32.mrf.mxu0
          %5806 = vdwg.mxu0
          %v5808 = vsel %vm3378, %v5169, 0
          %v5811 = vsel %vm3378, %v5174, 0
          %v5814 = vsel %vm3378, %v5179, 0
          %v5816 = vsel %vm3666, %v5179, 0
          %5818 = vmatprep.subr.mxu0 0.0
          %5819 = vmatpush1.msra.mxu0 0.0
          %5820 = vmatprep.subr.mxu0 0.0
          %5821 = vmatpush1.msra.mxu0 0.0
          %5822 = vmatprep.subr.mxu0 0.0
          %5823 = vmatpush1.msra.mxu0 0.0
          %5824 = vmatprep.subr.mxu0 0.0
          %5825 = vmatpush1.msra.mxu0 0.0
          %5826 = vmatprep.subr.mxu0 0.0
          %5827 = vmatpush1.msra.mxu0 0.0
          %5828 = vmatprep.subr.mxu0 0.0
          %5829 = vmatpush1.msra.mxu0 0.0
          %5830 = vmatprep.subr.mxu0 0.0
          %5831 = vmatpush1.msra.mxu0 0.0
          %5832 = vmatprep.subr.mxu0 0.0
          %5833 = vmatpush1.msra.mxu0 0.0
          %5834 = vmatprep.subr.mxu0 0.0
          %5835 = vmatpush1.msra.mxu0 0.0
          %5836 = vmatprep.subr.mxu0 0.0
          %5837 = vmatpush1.msra.mxu0 0.0
          %5838 = vmatprep.subr.mxu0 0.0
          %5839 = vmatpush1.msra.mxu0 0.0
          %5840 = vmatprep.subr.mxu0 0.0
          %5841 = vmatpush1.msra.mxu0 0.0
          %5842 = vmatprep.subr.mxu0 0.0
          %5843 = vmatpush1.msra.mxu0 0.0
          %5844 = vmatprep.subr.mxu0 0.0
          %5845 = vmatpush1.msra.mxu0 %v5816
          %5846 = vmatprep.subr.mxu0 0.0
          %5847 = vmatpush1.msra.mxu0 %v5174
          %5848 = vmatprep.subr.mxu0 0.0
          %5849 = vmatpush1.msra.mxu0 %v5169
          %5850 = vmatprep.subr.mxu0 0.0
          %5851 = vmatpush2.msra.mxu0 0.0
          %5852 = vmatprep.subr.mxu0 0.0
          %5853 = vmatpush2.msra.mxu0 0.0
          %5854 = vmatprep.subr.mxu0 0.0
          %5855 = vmatpush2.msra.mxu0 0.0
          %5856 = vmatprep.subr.mxu0 0.0
          %5857 = vmatpush2.msra.mxu0 0.0
          %5858 = vmatprep.subr.mxu0 0.0
          %5859 = vmatpush2.msra.mxu0 0.0
          %5860 = vmatprep.subr.mxu0 0.0
          %5861 = vmatpush2.msra.mxu0 0.0
          %5862 = vmatprep.subr.mxu0 0.0
          %5863 = vmatpush2.msra.mxu0 0.0
          %5864 = vmatprep.subr.mxu0 0.0
          %5865 = vmatpush2.msra.mxu0 0.0
          %5866 = vmatprep.subr.mxu0 0.0
          %5867 = vmatpush2.msra.mxu0 0.0
          %5868 = vmatprep.subr.mxu0 0.0
          %5869 = vmatpush2.msra.mxu0 0.0
          %5870 = vmatprep.subr.mxu0 0.0
          %5871 = vmatpush2.msra.mxu0 0.0
          %5872 = vmatprep.subr.mxu0 0.0
          %5873 = vmatpush2.msra.mxu0 0.0
          %5874 = vmatprep.subr.mxu0 0.0
          %5875 = vmatpush2.msra.mxu0 0.0
          %5876 = vmatprep.subr.mxu0 0.0
          %5877 = vmatpush2.msra.mxu0 0.0
          %5878 = vmatprep.subr.mxu0 0.0
          %5879 = vmatpush2.msra.mxu0 0.0
          %5880 = vmatprep.subr.mxu0 0.0
          %5881 = vmatpush2.msra.mxu0 0.0
          %5882 = vmatprep.mubr.f32.mxu0 0.0
          %5883 = vmatmul.mubr.f32.gmra.mxu0 %v5808
          %v5884 = vpop.f32.mrf.mxu0
          %v5885 = vadd.f32 0.0, %v5884
          %v5886 = vpop.f32.mrf.mxu0
          %5887 = vmatprep.mubr.f32.mxu0 0.0
          %5888 = vmatmul.mubr.f32.gmra.mxu0 %v5811
          %v5889 = vpop.f32.mrf.mxu0
          %v5890 = vadd.f32 0.0, %v5889
          %v5891 = vpop.f32.mrf.mxu0
          %5892 = vmatprep.mubr.f32.mxu0 0.0
          %5893 = vmatmul.mubr.f32.gmra.mxu0 %v5814
          %v5894 = vpop.f32.mrf.mxu0
          %v5895 = vadd.f32 0.0, %v5894
          %v5896 = vpop.f32.mrf.mxu0
          %5897 = vdwg.mxu0
          %v5899 = vsel %vm3378, %v5258, 0
          %v5902 = vsel %vm3378, %v5263, 0
          %v5905 = vsel %vm3378, %v5268, 0
          %v5907 = vsel %vm3666, %v5268, 0
          %5909 = vmatprep.subr.mxu0 0.0
          %5910 = vmatpush1.msra.mxu0 0.0
          %5911 = vmatprep.subr.mxu0 0.0
          %5912 = vmatpush1.msra.mxu0 0.0
          %5913 = vmatprep.subr.mxu0 0.0
          %5914 = vmatpush1.msra.mxu0 0.0
          %5915 = vmatprep.subr.mxu0 0.0
          %5916 = vmatpush1.msra.mxu0 0.0
          %5917 = vmatprep.subr.mxu0 0.0
          %5918 = vmatpush1.msra.mxu0 0.0
          %5919 = vmatprep.subr.mxu0 0.0
          %5920 = vmatpush1.msra.mxu0 0.0
          %5921 = vmatprep.subr.mxu0 0.0
          %5922 = vmatpush1.msra.mxu0 0.0
          %5923 = vmatprep.subr.mxu0 0.0
          %5924 = vmatpush1.msra.mxu0 0.0
          %5925 = vmatprep.subr.mxu0 0.0
          %5926 = vmatpush1.msra.mxu0 0.0
          %5927 = vmatprep.subr.mxu0 0.0
          %5928 = vmatpush1.msra.mxu0 0.0
          %5929 = vmatprep.subr.mxu0 0.0
          %5930 = vmatpush1.msra.mxu0 0.0
          %5931 = vmatprep.subr.mxu0 0.0
          %5932 = vmatpush1.msra.mxu0 0.0
          %5933 = vmatprep.subr.mxu0 0.0
          %5934 = vmatpush1.msra.mxu0 0.0
          %5935 = vmatprep.subr.mxu0 0.0
          %5936 = vmatpush1.msra.mxu0 %v5907
          %5937 = vmatprep.subr.mxu0 0.0
          %5938 = vmatpush1.msra.mxu0 %v5263
          %5939 = vmatprep.subr.mxu0 0.0
          %5940 = vmatpush1.msra.mxu0 %v5258
          %5941 = vmatprep.subr.mxu0 0.0
          %5942 = vmatpush2.msra.mxu0 0.0
          %5943 = vmatprep.subr.mxu0 0.0
          %5944 = vmatpush2.msra.mxu0 0.0
          %5945 = vmatprep.subr.mxu0 0.0
          %5946 = vmatpush2.msra.mxu0 0.0
          %5947 = vmatprep.subr.mxu0 0.0
          %5948 = vmatpush2.msra.mxu0 0.0
          %5949 = vmatprep.subr.mxu0 0.0
          %5950 = vmatpush2.msra.mxu0 0.0
          %5951 = vmatprep.subr.mxu0 0.0
          %5952 = vmatpush2.msra.mxu0 0.0
          %5953 = vmatprep.subr.mxu0 0.0
          %5954 = vmatpush2.msra.mxu0 0.0
          %5955 = vmatprep.subr.mxu0 0.0
          %5956 = vmatpush2.msra.mxu0 0.0
          %5957 = vmatprep.subr.mxu0 0.0
          %5958 = vmatpush2.msra.mxu0 0.0
          %5959 = vmatprep.subr.mxu0 0.0
          %5960 = vmatpush2.msra.mxu0 0.0
          %5961 = vmatprep.subr.mxu0 0.0
          %5962 = vmatpush2.msra.mxu0 0.0
          %5963 = vmatprep.subr.mxu0 0.0
          %5964 = vmatpush2.msra.mxu0 0.0
          %5965 = vmatprep.subr.mxu0 0.0
          %5966 = vmatpush2.msra.mxu0 0.0
          %5967 = vmatprep.subr.mxu0 0.0
          %5968 = vmatpush2.msra.mxu0 0.0
          %5969 = vmatprep.subr.mxu0 0.0
          %5970 = vmatpush2.msra.mxu0 0.0
          %5971 = vmatprep.subr.mxu0 0.0
          %5972 = vmatpush2.msra.mxu0 0.0
          %5973 = vmatprep.mubr.f32.mxu0 0.0
          %5974 = vmatmul.mubr.f32.gmra.mxu0 %v5899
          %v5975 = vpop.f32.mrf.mxu0
          %v5976 = vadd.f32 0.0, %v5975
          %v5977 = vpop.f32.mrf.mxu0
          %5978 = vmatprep.mubr.f32.mxu0 0.0
          %5979 = vmatmul.mubr.f32.gmra.mxu0 %v5902
          %v5980 = vpop.f32.mrf.mxu0
          %v5981 = vadd.f32 0.0, %v5980
          %v5982 = vpop.f32.mrf.mxu0
          %5983 = vmatprep.mubr.f32.mxu0 0.0
          %5984 = vmatmul.mubr.f32.gmra.mxu0 %v5905
          %v5985 = vpop.f32.mrf.mxu0
          %v5986 = vadd.f32 0.0, %v5985
          %v5987 = vpop.f32.mrf.mxu0
          %5988 = vdwg.mxu0
          %v5990 = vsel %vm3378, %v5347, 0
          %v5993 = vsel %vm3378, %v5352, 0
          %v5996 = vsel %vm3378, %v5357, 0
          %v5998 = vsel %vm3666, %v5357, 0
          %6000 = vmatprep.subr.mxu0 0.0
          %6001 = vmatpush1.msra.mxu0 0.0
          %6002 = vmatprep.subr.mxu0 0.0
          %6003 = vmatpush1.msra.mxu0 0.0
          %6004 = vmatprep.subr.mxu0 0.0
          %6005 = vmatpush1.msra.mxu0 0.0
          %6006 = vmatprep.subr.mxu0 0.0
          %6007 = vmatpush1.msra.mxu0 0.0
          %6008 = vmatprep.subr.mxu0 0.0
          %6009 = vmatpush1.msra.mxu0 0.0
          %6010 = vmatprep.subr.mxu0 0.0
          %6011 = vmatpush1.msra.mxu0 0.0
          %6012 = vmatprep.subr.mxu0 0.0
          %6013 = vmatpush1.msra.mxu0 0.0
          %6014 = vmatprep.subr.mxu0 0.0
          %6015 = vmatpush1.msra.mxu0 0.0
          %6016 = vmatprep.subr.mxu0 0.0
          %6017 = vmatpush1.msra.mxu0 0.0
          %6018 = vmatprep.subr.mxu0 0.0
          %6019 = vmatpush1.msra.mxu0 0.0
          %6020 = vmatprep.subr.mxu0 0.0
          %6021 = vmatpush1.msra.mxu0 0.0
          %6022 = vmatprep.subr.mxu0 0.0
          %6023 = vmatpush1.msra.mxu0 0.0
          %6024 = vmatprep.subr.mxu0 0.0
          %6025 = vmatpush1.msra.mxu0 0.0
          %6026 = vmatprep.subr.mxu0 0.0
          %6027 = vmatpush1.msra.mxu0 %v5998
          %6028 = vmatprep.subr.mxu0 0.0
          %6029 = vmatpush1.msra.mxu0 %v5352
          %6030 = vmatprep.subr.mxu0 0.0
          %6031 = vmatpush1.msra.mxu0 %v5347
          %6032 = vmatprep.subr.mxu0 0.0
          %6033 = vmatpush2.msra.mxu0 0.0
          %6034 = vmatprep.subr.mxu0 0.0
          %6035 = vmatpush2.msra.mxu0 0.0
          %6036 = vmatprep.subr.mxu0 0.0
          %6037 = vmatpush2.msra.mxu0 0.0
          %6038 = vmatprep.subr.mxu0 0.0
          %6039 = vmatpush2.msra.mxu0 0.0
          %6040 = vmatprep.subr.mxu0 0.0
          %6041 = vmatpush2.msra.mxu0 0.0
          %6042 = vmatprep.subr.mxu0 0.0
          %6043 = vmatpush2.msra.mxu0 0.0
          %6044 = vmatprep.subr.mxu0 0.0
          %6045 = vmatpush2.msra.mxu0 0.0
          %6046 = vmatprep.subr.mxu0 0.0
          %6047 = vmatpush2.msra.mxu0 0.0
          %6048 = vmatprep.subr.mxu0 0.0
          %6049 = vmatpush2.msra.mxu0 0.0
          %6050 = vmatprep.subr.mxu0 0.0
          %6051 = vmatpush2.msra.mxu0 0.0
          %6052 = vmatprep.subr.mxu0 0.0
          %6053 = vmatpush2.msra.mxu0 0.0
          %6054 = vmatprep.subr.mxu0 0.0
          %6055 = vmatpush2.msra.mxu0 0.0
          %6056 = vmatprep.subr.mxu0 0.0
          %6057 = vmatpush2.msra.mxu0 0.0
          %6058 = vmatprep.subr.mxu0 0.0
          %6059 = vmatpush2.msra.mxu0 0.0
          %6060 = vmatprep.subr.mxu0 0.0
          %6061 = vmatpush2.msra.mxu0 0.0
          %6062 = vmatprep.subr.mxu0 0.0
          %6063 = vmatpush2.msra.mxu0 0.0
          %6064 = vmatprep.mubr.f32.mxu0 0.0
          %6065 = vmatmul.mubr.f32.gmra.mxu0 %v5990
          %v6066 = vpop.f32.mrf.mxu0
          %v6067 = vadd.f32 0.0, %v6066
          %v6068 = vpop.f32.mrf.mxu0
          %6069 = vmatprep.mubr.f32.mxu0 0.0
          %6070 = vmatmul.mubr.f32.gmra.mxu0 %v5993
          %v6071 = vpop.f32.mrf.mxu0
          %v6072 = vadd.f32 0.0, %v6071
          %v6073 = vpop.f32.mrf.mxu0
          %6074 = vmatprep.mubr.f32.mxu0 0.0
          %6075 = vmatmul.mubr.f32.gmra.mxu0 %v5996
          %v6076 = vpop.f32.mrf.mxu0
          %v6077 = vadd.f32 0.0, %v6076
          %v6078 = vpop.f32.mrf.mxu0
          %6079 = vdwg.mxu0
          %v6081 = vsel %vm3378, %v5436, 0
          %v6084 = vsel %vm3378, %v5441, 0
          %v6087 = vsel %vm3378, %v5446, 0
          %v6089 = vsel %vm3666, %v5446, 0
          %6091 = vmatprep.subr.mxu0 0.0
          %6092 = vmatpush1.msra.mxu0 0.0
          %6093 = vmatprep.subr.mxu0 0.0
          %6094 = vmatpush1.msra.mxu0 0.0
          %6095 = vmatprep.subr.mxu0 0.0
          %6096 = vmatpush1.msra.mxu0 0.0
          %6097 = vmatprep.subr.mxu0 0.0
          %6098 = vmatpush1.msra.mxu0 0.0
          %6099 = vmatprep.subr.mxu0 0.0
          %6100 = vmatpush1.msra.mxu0 0.0
          %6101 = vmatprep.subr.mxu0 0.0
          %6102 = vmatpush1.msra.mxu0 0.0
          %6103 = vmatprep.subr.mxu0 0.0
          %6104 = vmatpush1.msra.mxu0 0.0
          %6105 = vmatprep.subr.mxu0 0.0
          %6106 = vmatpush1.msra.mxu0 0.0
          %6107 = vmatprep.subr.mxu0 0.0
          %6108 = vmatpush1.msra.mxu0 0.0
          %6109 = vmatprep.subr.mxu0 0.0
          %6110 = vmatpush1.msra.mxu0 0.0
          %6111 = vmatprep.subr.mxu0 0.0
          %6112 = vmatpush1.msra.mxu0 0.0
          %6113 = vmatprep.subr.mxu0 0.0
          %6114 = vmatpush1.msra.mxu0 0.0
          %6115 = vmatprep.subr.mxu0 0.0
          %6116 = vmatpush1.msra.mxu0 0.0
          %6117 = vmatprep.subr.mxu0 0.0
          %6118 = vmatpush1.msra.mxu0 %v6089
          %6119 = vmatprep.subr.mxu0 0.0
          %6120 = vmatpush1.msra.mxu0 %v5441
          %6121 = vmatprep.subr.mxu0 0.0
          %6122 = vmatpush1.msra.mxu0 %v5436
          %6123 = vmatprep.subr.mxu0 0.0
          %6124 = vmatpush2.msra.mxu0 0.0
          %6125 = vmatprep.subr.mxu0 0.0
          %6126 = vmatpush2.msra.mxu0 0.0
          %6127 = vmatprep.subr.mxu0 0.0
          %6128 = vmatpush2.msra.mxu0 0.0
          %6129 = vmatprep.subr.mxu0 0.0
          %6130 = vmatpush2.msra.mxu0 0.0
          %6131 = vmatprep.subr.mxu0 0.0
          %6132 = vmatpush2.msra.mxu0 0.0
          %6133 = vmatprep.subr.mxu0 0.0
          %6134 = vmatpush2.msra.mxu0 0.0
          %6135 = vmatprep.subr.mxu0 0.0
          %6136 = vmatpush2.msra.mxu0 0.0
          %6137 = vmatprep.subr.mxu0 0.0
          %6138 = vmatpush2.msra.mxu0 0.0
          %6139 = vmatprep.subr.mxu0 0.0
          %6140 = vmatpush2.msra.mxu0 0.0
          %6141 = vmatprep.subr.mxu0 0.0
          %6142 = vmatpush2.msra.mxu0 0.0
          %6143 = vmatprep.subr.mxu0 0.0
          %6144 = vmatpush2.msra.mxu0 0.0
          %6145 = vmatprep.subr.mxu0 0.0
          %6146 = vmatpush2.msra.mxu0 0.0
          %6147 = vmatprep.subr.mxu0 0.0
          %6148 = vmatpush2.msra.mxu0 0.0
          %6149 = vmatprep.subr.mxu0 0.0
          %6150 = vmatpush2.msra.mxu0 0.0
          %6151 = vmatprep.subr.mxu0 0.0
          %6152 = vmatpush2.msra.mxu0 0.0
          %6153 = vmatprep.subr.mxu0 0.0
          %6154 = vmatpush2.msra.mxu0 0.0
          %6155 = vmatprep.mubr.f32.mxu0 0.0
          %6156 = vmatmul.mubr.f32.gmra.mxu0 %v6081
          %v6157 = vpop.f32.mrf.mxu0
          %v6158 = vadd.f32 0.0, %v6157
          %v6159 = vpop.f32.mrf.mxu0
          %6160 = vmatprep.mubr.f32.mxu0 0.0
          %6161 = vmatmul.mubr.f32.gmra.mxu0 %v6084
          %v6162 = vpop.f32.mrf.mxu0
          %v6163 = vadd.f32 0.0, %v6162
          %v6164 = vpop.f32.mrf.mxu0
          %6165 = vmatprep.mubr.f32.mxu0 0.0
          %6166 = vmatmul.mubr.f32.gmra.mxu0 %v6087
          %v6167 = vpop.f32.mrf.mxu0
          %v6168 = vadd.f32 0.0, %v6167
          %v6169 = vpop.f32.mrf.mxu0
          %6170 = vdwg.mxu0
          %v6172 = vsel %vm3378, %v5525, 0
          %v6175 = vsel %vm3378, %v5530, 0
          %v6178 = vsel %vm3378, %v5535, 0
          %v6180 = vsel %vm3666, %v5535, 0
          %6182 = vmatprep.subr.mxu0 0.0
          %6183 = vmatpush1.msra.mxu0 0.0
          %6184 = vmatprep.subr.mxu0 0.0
          %6185 = vmatpush1.msra.mxu0 0.0
          %6186 = vmatprep.subr.mxu0 0.0
          %6187 = vmatpush1.msra.mxu0 0.0
          %6188 = vmatprep.subr.mxu0 0.0
          %6189 = vmatpush1.msra.mxu0 0.0
          %6190 = vmatprep.subr.mxu0 0.0
          %6191 = vmatpush1.msra.mxu0 0.0
          %6192 = vmatprep.subr.mxu0 0.0
          %6193 = vmatpush1.msra.mxu0 0.0
          %6194 = vmatprep.subr.mxu0 0.0
          %6195 = vmatpush1.msra.mxu0 0.0
          %6196 = vmatprep.subr.mxu0 0.0
          %6197 = vmatpush1.msra.mxu0 0.0
          %6198 = vmatprep.subr.mxu0 0.0
          %6199 = vmatpush1.msra.mxu0 0.0
          %6200 = vmatprep.subr.mxu0 0.0
          %6201 = vmatpush1.msra.mxu0 0.0
          %6202 = vmatprep.subr.mxu0 0.0
          %6203 = vmatpush1.msra.mxu0 0.0
          %6204 = vmatprep.subr.mxu0 0.0
          %6205 = vmatpush1.msra.mxu0 0.0
          %6206 = vmatprep.subr.mxu0 0.0
          %6207 = vmatpush1.msra.mxu0 0.0
          %6208 = vmatprep.subr.mxu0 0.0
          %6209 = vmatpush1.msra.mxu0 %v6180
          %6210 = vmatprep.subr.mxu0 0.0
          %6211 = vmatpush1.msra.mxu0 %v5530
          %6212 = vmatprep.subr.mxu0 0.0
          %6213 = vmatpush1.msra.mxu0 %v5525
          %6214 = vmatprep.subr.mxu0 0.0
          %6215 = vmatpush2.msra.mxu0 0.0
          %6216 = vmatprep.subr.mxu0 0.0
          %6217 = vmatpush2.msra.mxu0 0.0
          %6218 = vmatprep.subr.mxu0 0.0
          %6219 = vmatpush2.msra.mxu0 0.0
          %6220 = vmatprep.subr.mxu0 0.0
          %6221 = vmatpush2.msra.mxu0 0.0
          %6222 = vmatprep.subr.mxu0 0.0
          %6223 = vmatpush2.msra.mxu0 0.0
          %6224 = vmatprep.subr.mxu0 0.0
          %6225 = vmatpush2.msra.mxu0 0.0
          %6226 = vmatprep.subr.mxu0 0.0
          %6227 = vmatpush2.msra.mxu0 0.0
          %6228 = vmatprep.subr.mxu0 0.0
          %6229 = vmatpush2.msra.mxu0 0.0
          %6230 = vmatprep.subr.mxu0 0.0
          %6231 = vmatpush2.msra.mxu0 0.0
          %6232 = vmatprep.subr.mxu0 0.0
          %6233 = vmatpush2.msra.mxu0 0.0
          %6234 = vmatprep.subr.mxu0 0.0
          %6235 = vmatpush2.msra.mxu0 0.0
          %6236 = vmatprep.subr.mxu0 0.0
          %6237 = vmatpush2.msra.mxu0 0.0
          %6238 = vmatprep.subr.mxu0 0.0
          %6239 = vmatpush2.msra.mxu0 0.0
          %6240 = vmatprep.subr.mxu0 0.0
          %6241 = vmatpush2.msra.mxu0 0.0
          %6242 = vmatprep.subr.mxu0 0.0
          %6243 = vmatpush2.msra.mxu0 0.0
          %6244 = vmatprep.subr.mxu0 0.0
          %6245 = vmatpush2.msra.mxu0 0.0
          %6246 = vmatprep.mubr.f32.mxu0 0.0
          %6247 = vmatmul.mubr.f32.gmra.mxu0 %v6172
          %v6248 = vpop.f32.mrf.mxu0
          %v6249 = vadd.f32 0.0, %v6248
          %v6250 = vpop.f32.mrf.mxu0
          %6251 = vmatprep.mubr.f32.mxu0 0.0
          %6252 = vmatmul.mubr.f32.gmra.mxu0 %v6175
          %v6253 = vpop.f32.mrf.mxu0
          %v6254 = vadd.f32 0.0, %v6253
          %v6255 = vpop.f32.mrf.mxu0
          %6256 = vmatprep.mubr.f32.mxu0 0.0
          %6257 = vmatmul.mubr.f32.gmra.mxu0 %v6178
          %v6258 = vpop.f32.mrf.mxu0
          %v6259 = vadd.f32 0.0, %v6258
          %v6260 = vpop.f32.mrf.mxu0
          %6261 = vdwg.mxu0
          %v6263 = vsel %vm3378, %v5614, 0
          %v6266 = vsel %vm3378, %v5619, 0
          %v6269 = vsel %vm3378, %v5624, 0
          %v6271 = vsel %vm3666, %v5624, 0
          %6273 = vmatprep.subr.mxu0 0.0
          %6274 = vmatpush1.msra.mxu0 0.0
          %6275 = vmatprep.subr.mxu0 0.0
          %6276 = vmatpush1.msra.mxu0 0.0
          %6277 = vmatprep.subr.mxu0 0.0
          %6278 = vmatpush1.msra.mxu0 0.0
          %6279 = vmatprep.subr.mxu0 0.0
          %6280 = vmatpush1.msra.mxu0 0.0
          %6281 = vmatprep.subr.mxu0 0.0
          %6282 = vmatpush1.msra.mxu0 0.0
          %6283 = vmatprep.subr.mxu0 0.0
          %6284 = vmatpush1.msra.mxu0 0.0
          %6285 = vmatprep.subr.mxu0 0.0
          %6286 = vmatpush1.msra.mxu0 0.0
          %6287 = vmatprep.subr.mxu0 0.0
          %6288 = vmatpush1.msra.mxu0 0.0
          %6289 = vmatprep.subr.mxu0 0.0
          %6290 = vmatpush1.msra.mxu0 0.0
          %6291 = vmatprep.subr.mxu0 0.0
          %6292 = vmatpush1.msra.mxu0 0.0
          %6293 = vmatprep.subr.mxu0 0.0
          %6294 = vmatpush1.msra.mxu0 0.0
          %6295 = vmatprep.subr.mxu0 0.0
          %6296 = vmatpush1.msra.mxu0 0.0
          %6297 = vmatprep.subr.mxu0 0.0
          %6298 = vmatpush1.msra.mxu0 0.0
          %6299 = vmatprep.subr.mxu0 0.0
          %6300 = vmatpush1.msra.mxu0 %v6271
          %6301 = vmatprep.subr.mxu0 0.0
          %6302 = vmatpush1.msra.mxu0 %v5619
          %6303 = vmatprep.subr.mxu0 0.0
          %6304 = vmatpush1.msra.mxu0 %v5614
          %6305 = vmatprep.subr.mxu0 0.0
          %6306 = vmatpush2.msra.mxu0 0.0
          %6307 = vmatprep.subr.mxu0 0.0
          %6308 = vmatpush2.msra.mxu0 0.0
          %6309 = vmatprep.subr.mxu0 0.0
          %6310 = vmatpush2.msra.mxu0 0.0
          %6311 = vmatprep.subr.mxu0 0.0
          %6312 = vmatpush2.msra.mxu0 0.0
          %6313 = vmatprep.subr.mxu0 0.0
          %6314 = vmatpush2.msra.mxu0 0.0
          %6315 = vmatprep.subr.mxu0 0.0
          %6316 = vmatpush2.msra.mxu0 0.0
          %6317 = vmatprep.subr.mxu0 0.0
          %6318 = vmatpush2.msra.mxu0 0.0
          %6319 = vmatprep.subr.mxu0 0.0
          %6320 = vmatpush2.msra.mxu0 0.0
          %6321 = vmatprep.subr.mxu0 0.0
          %6322 = vmatpush2.msra.mxu0 0.0
          %6323 = vmatprep.subr.mxu0 0.0
          %6324 = vmatpush2.msra.mxu0 0.0
          %6325 = vmatprep.subr.mxu0 0.0
          %6326 = vmatpush2.msra.mxu0 0.0
          %6327 = vmatprep.subr.mxu0 0.0
          %6328 = vmatpush2.msra.mxu0 0.0
          %6329 = vmatprep.subr.mxu0 0.0
          %6330 = vmatpush2.msra.mxu0 0.0
          %6331 = vmatprep.subr.mxu0 0.0
          %6332 = vmatpush2.msra.mxu0 0.0
          %6333 = vmatprep.subr.mxu0 0.0
          %6334 = vmatpush2.msra.mxu0 0.0
          %6335 = vmatprep.subr.mxu0 0.0
          %6336 = vmatpush2.msra.mxu0 0.0
          %6337 = vmatprep.mubr.f32.mxu0 0.0
          %6338 = vmatmul.mubr.f32.gmra.mxu0 %v6263
          %v6339 = vpop.f32.mrf.mxu0
          %v6340 = vadd.f32 0.0, %v6339
          %v6341 = vpop.f32.mrf.mxu0
          %6342 = vmatprep.mubr.f32.mxu0 0.0
          %6343 = vmatmul.mubr.f32.gmra.mxu0 %v6266
          %v6344 = vpop.f32.mrf.mxu0
          %v6345 = vadd.f32 0.0, %v6344
          %v6346 = vpop.f32.mrf.mxu0
          %6347 = vmatprep.mubr.f32.mxu0 0.0
          %6348 = vmatmul.mubr.f32.gmra.mxu0 %v6269
          %v6349 = vpop.f32.mrf.mxu0
          %v6350 = vadd.f32 0.0, %v6349
          %v6351 = vpop.f32.mrf.mxu0
          %6352 = vdwg.mxu0
          %v6354 = vsel %vm3378, %v5703, 0
          %v6357 = vsel %vm3378, %v5708, 0
          %v6360 = vsel %vm3378, %v5713, 0
          %v6362 = vsel %vm3666, %v5713, 0
          %6364 = vmatprep.subr.mxu0 0.0
          %6365 = vmatpush1.msra.mxu0 0.0
          %6366 = vmatprep.subr.mxu0 0.0
          %6367 = vmatpush1.msra.mxu0 0.0
          %6368 = vmatprep.subr.mxu0 0.0
          %6369 = vmatpush1.msra.mxu0 0.0
          %6370 = vmatprep.subr.mxu0 0.0
          %6371 = vmatpush1.msra.mxu0 0.0
          %6372 = vmatprep.subr.mxu0 0.0
          %6373 = vmatpush1.msra.mxu0 0.0
          %6374 = vmatprep.subr.mxu0 0.0
          %6375 = vmatpush1.msra.mxu0 0.0
          %6376 = vmatprep.subr.mxu0 0.0
          %6377 = vmatpush1.msra.mxu0 0.0
          %6378 = vmatprep.subr.mxu0 0.0
          %6379 = vmatpush1.msra.mxu0 0.0
          %6380 = vmatprep.subr.mxu0 0.0
          %6381 = vmatpush1.msra.mxu0 0.0
          %6382 = vmatprep.subr.mxu0 0.0
          %6383 = vmatpush1.msra.mxu0 0.0
          %6384 = vmatprep.subr.mxu0 0.0
          %6385 = vmatpush1.msra.mxu0 0.0
          %6386 = vmatprep.subr.mxu0 0.0
          %6387 = vmatpush1.msra.mxu0 0.0
          %6388 = vmatprep.subr.mxu0 0.0
          %6389 = vmatpush1.msra.mxu0 0.0
          %6390 = vmatprep.subr.mxu0 0.0
          %6391 = vmatpush1.msra.mxu0 %v6362
          %6392 = vmatprep.subr.mxu0 0.0
          %6393 = vmatpush1.msra.mxu0 %v5708
          %6394 = vmatprep.subr.mxu0 0.0
          %6395 = vmatpush1.msra.mxu0 %v5703
          %6396 = vmatprep.subr.mxu0 0.0
          %6397 = vmatpush2.msra.mxu0 0.0
          %6398 = vmatprep.subr.mxu0 0.0
          %6399 = vmatpush2.msra.mxu0 0.0
          %6400 = vmatprep.subr.mxu0 0.0
          %6401 = vmatpush2.msra.mxu0 0.0
          %6402 = vmatprep.subr.mxu0 0.0
          %6403 = vmatpush2.msra.mxu0 0.0
          %6404 = vmatprep.subr.mxu0 0.0
          %6405 = vmatpush2.msra.mxu0 0.0
          %6406 = vmatprep.subr.mxu0 0.0
          %6407 = vmatpush2.msra.mxu0 0.0
          %6408 = vmatprep.subr.mxu0 0.0
          %6409 = vmatpush2.msra.mxu0 0.0
          %6410 = vmatprep.subr.mxu0 0.0
          %6411 = vmatpush2.msra.mxu0 0.0
          %6412 = vmatprep.subr.mxu0 0.0
          %6413 = vmatpush2.msra.mxu0 0.0
          %6414 = vmatprep.subr.mxu0 0.0
          %6415 = vmatpush2.msra.mxu0 0.0
          %6416 = vmatprep.subr.mxu0 0.0
          %6417 = vmatpush2.msra.mxu0 0.0
          %6418 = vmatprep.subr.mxu0 0.0
          %6419 = vmatpush2.msra.mxu0 0.0
          %6420 = vmatprep.subr.mxu0 0.0
          %6421 = vmatpush2.msra.mxu0 0.0
          %6422 = vmatprep.subr.mxu0 0.0
          %6423 = vmatpush2.msra.mxu0 0.0
          %6424 = vmatprep.subr.mxu0 0.0
          %6425 = vmatpush2.msra.mxu0 0.0
          %6426 = vmatprep.subr.mxu0 0.0
          %6427 = vmatpush2.msra.mxu0 0.0
          %6428 = vmatprep.mubr.f32.mxu0 0.0
          %6429 = vmatmul.mubr.f32.gmra.mxu0 %v6354
          %v6430 = vpop.f32.mrf.mxu0
          %v6431 = vadd.f32 0.0, %v6430
          %v6432 = vpop.f32.mrf.mxu0
          %6433 = vmatprep.mubr.f32.mxu0 0.0
          %6434 = vmatmul.mubr.f32.gmra.mxu0 %v6357
          %v6435 = vpop.f32.mrf.mxu0
          %v6436 = vadd.f32 0.0, %v6435
          %v6437 = vpop.f32.mrf.mxu0
          %6438 = vmatprep.mubr.f32.mxu0 0.0
          %6439 = vmatmul.mubr.f32.gmra.mxu0 %v6360
          %v6440 = vpop.f32.mrf.mxu0
          %v6441 = vadd.f32 0.0, %v6440
          %v6442 = vpop.f32.mrf.mxu0
          %6443 = vdwg.mxu0
          %v6445 = vsel %vm3378, %v5794, 0
          %v6448 = vsel %vm3378, %v5799, 0
          %v6451 = vsel %vm3378, %v5804, 0
          %v6453 = vsel %vm3666, %v5804, 0
          %6455 = vmatprep.subr.mxu0 0.0
          %6456 = vmatpush1.msra.mxu0 0.0
          %6457 = vmatprep.subr.mxu0 0.0
          %6458 = vmatpush1.msra.mxu0 0.0
          %6459 = vmatprep.subr.mxu0 0.0
          %6460 = vmatpush1.msra.mxu0 0.0
          %6461 = vmatprep.subr.mxu0 0.0
          %6462 = vmatpush1.msra.mxu0 0.0
          %6463 = vmatprep.subr.mxu0 0.0
          %6464 = vmatpush1.msra.mxu0 0.0
          %6465 = vmatprep.subr.mxu0 0.0
          %6466 = vmatpush1.msra.mxu0 0.0
          %6467 = vmatprep.subr.mxu0 0.0
          %6468 = vmatpush1.msra.mxu0 0.0
          %6469 = vmatprep.subr.mxu0 0.0
          %6470 = vmatpush1.msra.mxu0 0.0
          %6471 = vmatprep.subr.mxu0 0.0
          %6472 = vmatpush1.msra.mxu0 0.0
          %6473 = vmatprep.subr.mxu0 0.0
          %6474 = vmatpush1.msra.mxu0 0.0
          %6475 = vmatprep.subr.mxu0 0.0
          %6476 = vmatpush1.msra.mxu0 0.0
          %6477 = vmatprep.subr.mxu0 0.0
          %6478 = vmatpush1.msra.mxu0 0.0
          %6479 = vmatprep.subr.mxu0 0.0
          %6480 = vmatpush1.msra.mxu0 0.0
          %6481 = vmatprep.subr.mxu0 0.0
          %6482 = vmatpush1.msra.mxu0 %v6453
          %6483 = vmatprep.subr.mxu0 0.0
          %6484 = vmatpush1.msra.mxu0 %v5799
          %6485 = vmatprep.subr.mxu0 0.0
          %6486 = vmatpush1.msra.mxu0 %v5794
          %6487 = vmatprep.subr.mxu0 0.0
          %6488 = vmatpush2.msra.mxu0 0.0
          %6489 = vmatprep.subr.mxu0 0.0
          %6490 = vmatpush2.msra.mxu0 0.0
          %6491 = vmatprep.subr.mxu0 0.0
          %6492 = vmatpush2.msra.mxu0 0.0
          %6493 = vmatprep.subr.mxu0 0.0
          %6494 = vmatpush2.msra.mxu0 0.0
          %6495 = vmatprep.subr.mxu0 0.0
          %6496 = vmatpush2.msra.mxu0 0.0
          %6497 = vmatprep.subr.mxu0 0.0
          %6498 = vmatpush2.msra.mxu0 0.0
          %6499 = vmatprep.subr.mxu0 0.0
          %6500 = vmatpush2.msra.mxu0 0.0
          %6501 = vmatprep.subr.mxu0 0.0
          %6502 = vmatpush2.msra.mxu0 0.0
          %6503 = vmatprep.subr.mxu0 0.0
          %6504 = vmatpush2.msra.mxu0 0.0
          %6505 = vmatprep.subr.mxu0 0.0
          %6506 = vmatpush2.msra.mxu0 0.0
          %6507 = vmatprep.subr.mxu0 0.0
          %6508 = vmatpush2.msra.mxu0 0.0
          %6509 = vmatprep.subr.mxu0 0.0
          %6510 = vmatpush2.msra.mxu0 0.0
          %6511 = vmatprep.subr.mxu0 0.0
          %6512 = vmatpush2.msra.mxu0 0.0
          %6513 = vmatprep.subr.mxu0 0.0
          %6514 = vmatpush2.msra.mxu0 0.0
          %6515 = vmatprep.subr.mxu0 0.0
          %6516 = vmatpush2.msra.mxu0 0.0
          %6517 = vmatprep.subr.mxu0 0.0
          %6518 = vmatpush2.msra.mxu0 0.0
          %6519 = vmatprep.mubr.f32.mxu0 0.0
          %6520 = vmatmul.mubr.f32.gmra.mxu0 %v6445
          %v6521 = vpop.f32.mrf.mxu0
          %v6522 = vadd.f32 0.0, %v6521
          %v6523 = vpop.f32.mrf.mxu0
          %6524 = vmatprep.mubr.f32.mxu0 0.0
          %6525 = vmatmul.mubr.f32.gmra.mxu0 %v6448
          %v6526 = vpop.f32.mrf.mxu0
          %v6527 = vadd.f32 0.0, %v6526
          %v6528 = vpop.f32.mrf.mxu0
          %6529 = vmatprep.mubr.f32.mxu0 0.0
          %6530 = vmatmul.mubr.f32.gmra.mxu0 %v6451
          %v6531 = vpop.f32.mrf.mxu0
          %v6532 = vadd.f32 0.0, %v6531
          %v6533 = vpop.f32.mrf.mxu0
          %6534 = vdwg.mxu0
          %v6536 = vsel %vm3378, %v5885, 0
          %v6539 = vsel %vm3378, %v5890, 0
          %v6542 = vsel %vm3378, %v5895, 0
          %v6544 = vsel %vm3666, %v5895, 0
          %6546 = vmatprep.subr.mxu0 0.0
          %6547 = vmatpush1.msra.mxu0 0.0
          %6548 = vmatprep.subr.mxu0 0.0
          %6549 = vmatpush1.msra.mxu0 0.0
          %6550 = vmatprep.subr.mxu0 0.0
          %6551 = vmatpush1.msra.mxu0 0.0
          %6552 = vmatprep.subr.mxu0 0.0
          %6553 = vmatpush1.msra.mxu0 0.0
          %6554 = vmatprep.subr.mxu0 0.0
          %6555 = vmatpush1.msra.mxu0 0.0
          %6556 = vmatprep.subr.mxu0 0.0
          %6557 = vmatpush1.msra.mxu0 0.0
          %6558 = vmatprep.subr.mxu0 0.0
          %6559 = vmatpush1.msra.mxu0 0.0
          %6560 = vmatprep.subr.mxu0 0.0
          %6561 = vmatpush1.msra.mxu0 0.0
          %6562 = vmatprep.subr.mxu0 0.0
          %6563 = vmatpush1.msra.mxu0 0.0
          %6564 = vmatprep.subr.mxu0 0.0
          %6565 = vmatpush1.msra.mxu0 0.0
          %6566 = vmatprep.subr.mxu0 0.0
          %6567 = vmatpush1.msra.mxu0 0.0
          %6568 = vmatprep.subr.mxu0 0.0
          %6569 = vmatpush1.msra.mxu0 0.0
          %6570 = vmatprep.subr.mxu0 0.0
          %6571 = vmatpush1.msra.mxu0 0.0
          %6572 = vmatprep.subr.mxu0 0.0
          %6573 = vmatpush1.msra.mxu0 %v6544
          %6574 = vmatprep.subr.mxu0 0.0
          %6575 = vmatpush1.msra.mxu0 %v5890
          %6576 = vmatprep.subr.mxu0 0.0
          %6577 = vmatpush1.msra.mxu0 %v5885
          %6578 = vmatprep.subr.mxu0 0.0
          %6579 = vmatpush2.msra.mxu0 0.0
          %6580 = vmatprep.subr.mxu0 0.0
          %6581 = vmatpush2.msra.mxu0 0.0
          %6582 = vmatprep.subr.mxu0 0.0
          %6583 = vmatpush2.msra.mxu0 0.0
          %6584 = vmatprep.subr.mxu0 0.0
          %6585 = vmatpush2.msra.mxu0 0.0
          %6586 = vmatprep.subr.mxu0 0.0
          %6587 = vmatpush2.msra.mxu0 0.0
          %6588 = vmatprep.subr.mxu0 0.0
          %6589 = vmatpush2.msra.mxu0 0.0
          %6590 = vmatprep.subr.mxu0 0.0
          %6591 = vmatpush2.msra.mxu0 0.0
          %6592 = vmatprep.subr.mxu0 0.0
          %6593 = vmatpush2.msra.mxu0 0.0
          %6594 = vmatprep.subr.mxu0 0.0
          %6595 = vmatpush2.msra.mxu0 0.0
          %6596 = vmatprep.subr.mxu0 0.0
          %6597 = vmatpush2.msra.mxu0 0.0
          %6598 = vmatprep.subr.mxu0 0.0
          %6599 = vmatpush2.msra.mxu0 0.0
          %6600 = vmatprep.subr.mxu0 0.0
          %6601 = vmatpush2.msra.mxu0 0.0
          %6602 = vmatprep.subr.mxu0 0.0
          %6603 = vmatpush2.msra.mxu0 0.0
          %6604 = vmatprep.subr.mxu0 0.0
          %6605 = vmatpush2.msra.mxu0 0.0
          %6606 = vmatprep.subr.mxu0 0.0
          %6607 = vmatpush2.msra.mxu0 0.0
          %6608 = vmatprep.subr.mxu0 0.0
          %6609 = vmatpush2.msra.mxu0 0.0
          %6610 = vmatprep.mubr.f32.mxu0 0.0
          %6611 = vmatmul.mubr.f32.gmra.mxu0 %v6536
          %v6612 = vpop.f32.mrf.mxu0
          %v6613 = vadd.f32 0.0, %v6612
          %v6614 = vpop.f32.mrf.mxu0
          %6615 = vmatprep.mubr.f32.mxu0 0.0
          %6616 = vmatmul.mubr.f32.gmra.mxu0 %v6539
          %v6617 = vpop.f32.mrf.mxu0
          %v6618 = vadd.f32 0.0, %v6617
          %v6619 = vpop.f32.mrf.mxu0
          %6620 = vmatprep.mubr.f32.mxu0 0.0
          %6621 = vmatmul.mubr.f32.gmra.mxu0 %v6542
          %v6622 = vpop.f32.mrf.mxu0
          %v6623 = vadd.f32 0.0, %v6622
          %v6624 = vpop.f32.mrf.mxu0
          %6625 = vdwg.mxu0
          %v6627 = vsel %vm3378, %v5976, 0
          %v6630 = vsel %vm3378, %v5981, 0
          %v6633 = vsel %vm3378, %v5986, 0
          %v6635 = vsel %vm3666, %v5986, 0
          %6637 = vmatprep.subr.mxu0 0.0
          %6638 = vmatpush1.msra.mxu0 0.0
          %6639 = vmatprep.subr.mxu0 0.0
          %6640 = vmatpush1.msra.mxu0 0.0
          %6641 = vmatprep.subr.mxu0 0.0
          %6642 = vmatpush1.msra.mxu0 0.0
          %6643 = vmatprep.subr.mxu0 0.0
          %6644 = vmatpush1.msra.mxu0 0.0
          %6645 = vmatprep.subr.mxu0 0.0
          %6646 = vmatpush1.msra.mxu0 0.0
          %6647 = vmatprep.subr.mxu0 0.0
          %6648 = vmatpush1.msra.mxu0 0.0
          %6649 = vmatprep.subr.mxu0 0.0
          %6650 = vmatpush1.msra.mxu0 0.0
          %6651 = vmatprep.subr.mxu0 0.0
          %6652 = vmatpush1.msra.mxu0 0.0
          %6653 = vmatprep.subr.mxu0 0.0
          %6654 = vmatpush1.msra.mxu0 0.0
          %6655 = vmatprep.subr.mxu0 0.0
          %6656 = vmatpush1.msra.mxu0 0.0
          %6657 = vmatprep.subr.mxu0 0.0
          %6658 = vmatpush1.msra.mxu0 0.0
          %6659 = vmatprep.subr.mxu0 0.0
          %6660 = vmatpush1.msra.mxu0 0.0
          %6661 = vmatprep.subr.mxu0 0.0
          %6662 = vmatpush1.msra.mxu0 0.0
          %6663 = vmatprep.subr.mxu0 0.0
          %6664 = vmatpush1.msra.mxu0 %v6635
          %6665 = vmatprep.subr.mxu0 0.0
          %6666 = vmatpush1.msra.mxu0 %v5981
          %6667 = vmatprep.subr.mxu0 0.0
          %6668 = vmatpush1.msra.mxu0 %v5976
          %6669 = vmatprep.subr.mxu0 0.0
          %6670 = vmatpush2.msra.mxu0 0.0
          %6671 = vmatprep.subr.mxu0 0.0
          %6672 = vmatpush2.msra.mxu0 0.0
          %6673 = vmatprep.subr.mxu0 0.0
          %6674 = vmatpush2.msra.mxu0 0.0
          %6675 = vmatprep.subr.mxu0 0.0
          %6676 = vmatpush2.msra.mxu0 0.0
          %6677 = vmatprep.subr.mxu0 0.0
          %6678 = vmatpush2.msra.mxu0 0.0
          %6679 = vmatprep.subr.mxu0 0.0
          %6680 = vmatpush2.msra.mxu0 0.0
          %6681 = vmatprep.subr.mxu0 0.0
          %6682 = vmatpush2.msra.mxu0 0.0
          %6683 = vmatprep.subr.mxu0 0.0
          %6684 = vmatpush2.msra.mxu0 0.0
          %6685 = vmatprep.subr.mxu0 0.0
          %6686 = vmatpush2.msra.mxu0 0.0
          %6687 = vmatprep.subr.mxu0 0.0
          %6688 = vmatpush2.msra.mxu0 0.0
          %6689 = vmatprep.subr.mxu0 0.0
          %6690 = vmatpush2.msra.mxu0 0.0
          %6691 = vmatprep.subr.mxu0 0.0
          %6692 = vmatpush2.msra.mxu0 0.0
          %6693 = vmatprep.subr.mxu0 0.0
          %6694 = vmatpush2.msra.mxu0 0.0
          %6695 = vmatprep.subr.mxu0 0.0
          %6696 = vmatpush2.msra.mxu0 0.0
          %6697 = vmatprep.subr.mxu0 0.0
          %6698 = vmatpush2.msra.mxu0 0.0
          %6699 = vmatprep.subr.mxu0 0.0
          %6700 = vmatpush2.msra.mxu0 0.0
          %6701 = vmatprep.mubr.f32.mxu0 0.0
          %6702 = vmatmul.mubr.f32.gmra.mxu0 %v6627
          %v6703 = vpop.f32.mrf.mxu0
          %v6704 = vadd.f32 0.0, %v6703
          %v6705 = vpop.f32.mrf.mxu0
          %6706 = vmatprep.mubr.f32.mxu0 0.0
          %6707 = vmatmul.mubr.f32.gmra.mxu0 %v6630
          %v6708 = vpop.f32.mrf.mxu0
          %v6709 = vadd.f32 0.0, %v6708
          %v6710 = vpop.f32.mrf.mxu0
          %6711 = vmatprep.mubr.f32.mxu0 0.0
          %6712 = vmatmul.mubr.f32.gmra.mxu0 %v6633
          %v6713 = vpop.f32.mrf.mxu0
          %v6714 = vadd.f32 0.0, %v6713
          %v6715 = vpop.f32.mrf.mxu0
          %6716 = vdwg.mxu0
          %v6718 = vsel %vm3378, %v6067, 0
          %v6721 = vsel %vm3378, %v6072, 0
          %v6724 = vsel %vm3378, %v6077, 0
          %v6726 = vsel %vm3666, %v6077, 0
          %6728 = vmatprep.subr.mxu0 0.0
          %6729 = vmatpush1.msra.mxu0 0.0
          %6730 = vmatprep.subr.mxu0 0.0
          %6731 = vmatpush1.msra.mxu0 0.0
          %6732 = vmatprep.subr.mxu0 0.0
          %6733 = vmatpush1.msra.mxu0 0.0
          %6734 = vmatprep.subr.mxu0 0.0
          %6735 = vmatpush1.msra.mxu0 0.0
          %6736 = vmatprep.subr.mxu0 0.0
          %6737 = vmatpush1.msra.mxu0 0.0
          %6738 = vmatprep.subr.mxu0 0.0
          %6739 = vmatpush1.msra.mxu0 0.0
          %6740 = vmatprep.subr.mxu0 0.0
          %6741 = vmatpush1.msra.mxu0 0.0
          %6742 = vmatprep.subr.mxu0 0.0
          %6743 = vmatpush1.msra.mxu0 0.0
          %6744 = vmatprep.subr.mxu0 0.0
          %6745 = vmatpush1.msra.mxu0 0.0
          %6746 = vmatprep.subr.mxu0 0.0
          %6747 = vmatpush1.msra.mxu0 0.0
          %6748 = vmatprep.subr.mxu0 0.0
          %6749 = vmatpush1.msra.mxu0 0.0
          %6750 = vmatprep.subr.mxu0 0.0
          %6751 = vmatpush1.msra.mxu0 0.0
          %6752 = vmatprep.subr.mxu0 0.0
          %6753 = vmatpush1.msra.mxu0 0.0
          %6754 = vmatprep.subr.mxu0 0.0
          %6755 = vmatpush1.msra.mxu0 %v6726
          %6756 = vmatprep.subr.mxu0 0.0
          %6757 = vmatpush1.msra.mxu0 %v6072
          %6758 = vmatprep.subr.mxu0 0.0
          %6759 = vmatpush1.msra.mxu0 %v6067
          %6760 = vmatprep.subr.mxu0 0.0
          %6761 = vmatpush2.msra.mxu0 0.0
          %6762 = vmatprep.subr.mxu0 0.0
          %6763 = vmatpush2.msra.mxu0 0.0
          %6764 = vmatprep.subr.mxu0 0.0
          %6765 = vmatpush2.msra.mxu0 0.0
          %6766 = vmatprep.subr.mxu0 0.0
          %6767 = vmatpush2.msra.mxu0 0.0
          %6768 = vmatprep.subr.mxu0 0.0
          %6769 = vmatpush2.msra.mxu0 0.0
          %6770 = vmatprep.subr.mxu0 0.0
          %6771 = vmatpush2.msra.mxu0 0.0
          %6772 = vmatprep.subr.mxu0 0.0
          %6773 = vmatpush2.msra.mxu0 0.0
          %6774 = vmatprep.subr.mxu0 0.0
          %6775 = vmatpush2.msra.mxu0 0.0
          %6776 = vmatprep.subr.mxu0 0.0
          %6777 = vmatpush2.msra.mxu0 0.0
          %6778 = vmatprep.subr.mxu0 0.0
          %6779 = vmatpush2.msra.mxu0 0.0
          %6780 = vmatprep.subr.mxu0 0.0
          %6781 = vmatpush2.msra.mxu0 0.0
          %6782 = vmatprep.subr.mxu0 0.0
          %6783 = vmatpush2.msra.mxu0 0.0
          %6784 = vmatprep.subr.mxu0 0.0
          %6785 = vmatpush2.msra.mxu0 0.0
          %6786 = vmatprep.subr.mxu0 0.0
          %6787 = vmatpush2.msra.mxu0 0.0
          %6788 = vmatprep.subr.mxu0 0.0
          %6789 = vmatpush2.msra.mxu0 0.0
          %6790 = vmatprep.subr.mxu0 0.0
          %6791 = vmatpush2.msra.mxu0 0.0
          %6792 = vmatprep.mubr.f32.mxu0 0.0
          %6793 = vmatmul.mubr.f32.gmra.mxu0 %v6718
          %v6794 = vpop.f32.mrf.mxu0
          %v6795 = vadd.f32 0.0, %v6794
          %v6796 = vpop.f32.mrf.mxu0
          %6797 = vmatprep.mubr.f32.mxu0 0.0
          %6798 = vmatmul.mubr.f32.gmra.mxu0 %v6721
          %v6799 = vpop.f32.mrf.mxu0
          %v6800 = vadd.f32 0.0, %v6799
          %v6801 = vpop.f32.mrf.mxu0
          %6802 = vmatprep.mubr.f32.mxu0 0.0
          %6803 = vmatmul.mubr.f32.gmra.mxu0 %v6724
          %v6804 = vpop.f32.mrf.mxu0
          %v6805 = vadd.f32 0.0, %v6804
          %v6806 = vpop.f32.mrf.mxu0
          %6807 = vdwg.mxu0
          %v6809 = vsel %vm3378, %v6158, 0
          %v6812 = vsel %vm3378, %v6163, 0
          %v6815 = vsel %vm3378, %v6168, 0
          %v6817 = vsel %vm3666, %v6168, 0
          %6819 = vmatprep.subr.mxu0 0.0
          %6820 = vmatpush1.msra.mxu0 0.0
          %6821 = vmatprep.subr.mxu0 0.0
          %6822 = vmatpush1.msra.mxu0 0.0
          %6823 = vmatprep.subr.mxu0 0.0
          %6824 = vmatpush1.msra.mxu0 0.0
          %6825 = vmatprep.subr.mxu0 0.0
          %6826 = vmatpush1.msra.mxu0 0.0
          %6827 = vmatprep.subr.mxu0 0.0
          %6828 = vmatpush1.msra.mxu0 0.0
          %6829 = vmatprep.subr.mxu0 0.0
          %6830 = vmatpush1.msra.mxu0 0.0
          %6831 = vmatprep.subr.mxu0 0.0
          %6832 = vmatpush1.msra.mxu0 0.0
          %6833 = vmatprep.subr.mxu0 0.0
          %6834 = vmatpush1.msra.mxu0 0.0
          %6835 = vmatprep.subr.mxu0 0.0
          %6836 = vmatpush1.msra.mxu0 0.0
          %6837 = vmatprep.subr.mxu0 0.0
          %6838 = vmatpush1.msra.mxu0 0.0
          %6839 = vmatprep.subr.mxu0 0.0
          %6840 = vmatpush1.msra.mxu0 0.0
          %6841 = vmatprep.subr.mxu0 0.0
          %6842 = vmatpush1.msra.mxu0 0.0
          %6843 = vmatprep.subr.mxu0 0.0
          %6844 = vmatpush1.msra.mxu0 0.0
          %6845 = vmatprep.subr.mxu0 0.0
          %6846 = vmatpush1.msra.mxu0 %v6817
          %6847 = vmatprep.subr.mxu0 0.0
          %6848 = vmatpush1.msra.mxu0 %v6163
          %6849 = vmatprep.subr.mxu0 0.0
          %6850 = vmatpush1.msra.mxu0 %v6158
          %6851 = vmatprep.subr.mxu0 0.0
          %6852 = vmatpush2.msra.mxu0 0.0
          %6853 = vmatprep.subr.mxu0 0.0
          %6854 = vmatpush2.msra.mxu0 0.0
          %6855 = vmatprep.subr.mxu0 0.0
          %6856 = vmatpush2.msra.mxu0 0.0
          %6857 = vmatprep.subr.mxu0 0.0
          %6858 = vmatpush2.msra.mxu0 0.0
          %6859 = vmatprep.subr.mxu0 0.0
          %6860 = vmatpush2.msra.mxu0 0.0
          %6861 = vmatprep.subr.mxu0 0.0
          %6862 = vmatpush2.msra.mxu0 0.0
          %6863 = vmatprep.subr.mxu0 0.0
          %6864 = vmatpush2.msra.mxu0 0.0
          %6865 = vmatprep.subr.mxu0 0.0
          %6866 = vmatpush2.msra.mxu0 0.0
          %6867 = vmatprep.subr.mxu0 0.0
          %6868 = vmatpush2.msra.mxu0 0.0
          %6869 = vmatprep.subr.mxu0 0.0
          %6870 = vmatpush2.msra.mxu0 0.0
          %6871 = vmatprep.subr.mxu0 0.0
          %6872 = vmatpush2.msra.mxu0 0.0
          %6873 = vmatprep.subr.mxu0 0.0
          %6874 = vmatpush2.msra.mxu0 0.0
          %6875 = vmatprep.subr.mxu0 0.0
          %6876 = vmatpush2.msra.mxu0 0.0
          %6877 = vmatprep.subr.mxu0 0.0
          %6878 = vmatpush2.msra.mxu0 0.0
          %6879 = vmatprep.subr.mxu0 0.0
          %6880 = vmatpush2.msra.mxu0 0.0
          %6881 = vmatprep.subr.mxu0 0.0
          %6882 = vmatpush2.msra.mxu0 0.0
          %6883 = vmatprep.mubr.f32.mxu0 0.0
          %6884 = vmatmul.mubr.f32.gmra.mxu0 %v6809
          %v6885 = vpop.f32.mrf.mxu0
          %v6886 = vadd.f32 0.0, %v6885
          %v6887 = vpop.f32.mrf.mxu0
          %6888 = vmatprep.mubr.f32.mxu0 0.0
          %6889 = vmatmul.mubr.f32.gmra.mxu0 %v6812
          %v6890 = vpop.f32.mrf.mxu0
          %v6891 = vadd.f32 0.0, %v6890
          %v6892 = vpop.f32.mrf.mxu0
          %6893 = vmatprep.mubr.f32.mxu0 0.0
          %6894 = vmatmul.mubr.f32.gmra.mxu0 %v6815
          %v6895 = vpop.f32.mrf.mxu0
          %v6896 = vadd.f32 0.0, %v6895
          %v6897 = vpop.f32.mrf.mxu0
          %6898 = vdwg.mxu0
          %v6900 = vsel %vm3378, %v6249, 0
          %v6903 = vsel %vm3378, %v6254, 0
          %v6906 = vsel %vm3378, %v6259, 0
          %v6908 = vsel %vm3666, %v6259, 0
          %6910 = vmatprep.subr.mxu0 0.0
          %6911 = vmatpush1.msra.mxu0 0.0
          %6912 = vmatprep.subr.mxu0 0.0
          %6913 = vmatpush1.msra.mxu0 0.0
          %6914 = vmatprep.subr.mxu0 0.0
          %6915 = vmatpush1.msra.mxu0 0.0
          %6916 = vmatprep.subr.mxu0 0.0
          %6917 = vmatpush1.msra.mxu0 0.0
          %6918 = vmatprep.subr.mxu0 0.0
          %6919 = vmatpush1.msra.mxu0 0.0
          %6920 = vmatprep.subr.mxu0 0.0
          %6921 = vmatpush1.msra.mxu0 0.0
          %6922 = vmatprep.subr.mxu0 0.0
          %6923 = vmatpush1.msra.mxu0 0.0
          %6924 = vmatprep.subr.mxu0 0.0
          %6925 = vmatpush1.msra.mxu0 0.0
          %6926 = vmatprep.subr.mxu0 0.0
          %6927 = vmatpush1.msra.mxu0 0.0
          %6928 = vmatprep.subr.mxu0 0.0
          %6929 = vmatpush1.msra.mxu0 0.0
          %6930 = vmatprep.subr.mxu0 0.0
          %6931 = vmatpush1.msra.mxu0 0.0
          %6932 = vmatprep.subr.mxu0 0.0
          %6933 = vmatpush1.msra.mxu0 0.0
          %6934 = vmatprep.subr.mxu0 0.0
          %6935 = vmatpush1.msra.mxu0 0.0
          %6936 = vmatprep.subr.mxu0 0.0
          %6937 = vmatpush1.msra.mxu0 %v6908
          %6938 = vmatprep.subr.mxu0 0.0
          %6939 = vmatpush1.msra.mxu0 %v6254
          %6940 = vmatprep.subr.mxu0 0.0
          %6941 = vmatpush1.msra.mxu0 %v6249
          %6942 = vmatprep.subr.mxu0 0.0
          %6943 = vmatpush2.msra.mxu0 0.0
          %6944 = vmatprep.subr.mxu0 0.0
          %6945 = vmatpush2.msra.mxu0 0.0
          %6946 = vmatprep.subr.mxu0 0.0
          %6947 = vmatpush2.msra.mxu0 0.0
          %6948 = vmatprep.subr.mxu0 0.0
          %6949 = vmatpush2.msra.mxu0 0.0
          %6950 = vmatprep.subr.mxu0 0.0
          %6951 = vmatpush2.msra.mxu0 0.0
          %6952 = vmatprep.subr.mxu0 0.0
          %6953 = vmatpush2.msra.mxu0 0.0
          %6954 = vmatprep.subr.mxu0 0.0
          %6955 = vmatpush2.msra.mxu0 0.0
          %6956 = vmatprep.subr.mxu0 0.0
          %6957 = vmatpush2.msra.mxu0 0.0
          %6958 = vmatprep.subr.mxu0 0.0
          %6959 = vmatpush2.msra.mxu0 0.0
          %6960 = vmatprep.subr.mxu0 0.0
          %6961 = vmatpush2.msra.mxu0 0.0
          %6962 = vmatprep.subr.mxu0 0.0
          %6963 = vmatpush2.msra.mxu0 0.0
          %6964 = vmatprep.subr.mxu0 0.0
          %6965 = vmatpush2.msra.mxu0 0.0
          %6966 = vmatprep.subr.mxu0 0.0
          %6967 = vmatpush2.msra.mxu0 0.0
          %6968 = vmatprep.subr.mxu0 0.0
          %6969 = vmatpush2.msra.mxu0 0.0
          %6970 = vmatprep.subr.mxu0 0.0
          %6971 = vmatpush2.msra.mxu0 0.0
          %6972 = vmatprep.subr.mxu0 0.0
          %6973 = vmatpush2.msra.mxu0 0.0
          %6974 = vmatprep.mubr.f32.mxu0 0.0
          %6975 = vmatmul.mubr.f32.gmra.mxu0 %v6900
          %v6976 = vpop.f32.mrf.mxu0
          %v6977 = vadd.f32 0.0, %v6976
          %v6978 = vpop.f32.mrf.mxu0
          %6979 = vmatprep.mubr.f32.mxu0 0.0
          %6980 = vmatmul.mubr.f32.gmra.mxu0 %v6903
          %v6981 = vpop.f32.mrf.mxu0
          %v6982 = vadd.f32 0.0, %v6981
          %v6983 = vpop.f32.mrf.mxu0
          %6984 = vmatprep.mubr.f32.mxu0 0.0
          %6985 = vmatmul.mubr.f32.gmra.mxu0 %v6906
          %v6986 = vpop.f32.mrf.mxu0
          %v6987 = vadd.f32 0.0, %v6986
          %v6988 = vpop.f32.mrf.mxu0
          %6989 = vdwg.mxu0
          %v6991 = vsel %vm3378, %v6340, 0
          %v6994 = vsel %vm3378, %v6345, 0
          %v6997 = vsel %vm3378, %v6350, 0
          %v6999 = vsel %vm3666, %v6350, 0
          %7001 = vmatprep.subr.mxu0 0.0
          %7002 = vmatpush1.msra.mxu0 0.0
          %7003 = vmatprep.subr.mxu0 0.0
          %7004 = vmatpush1.msra.mxu0 0.0
          %7005 = vmatprep.subr.mxu0 0.0
          %7006 = vmatpush1.msra.mxu0 0.0
          %7007 = vmatprep.subr.mxu0 0.0
          %7008 = vmatpush1.msra.mxu0 0.0
          %7009 = vmatprep.subr.mxu0 0.0
          %7010 = vmatpush1.msra.mxu0 0.0
          %7011 = vmatprep.subr.mxu0 0.0
          %7012 = vmatpush1.msra.mxu0 0.0
          %7013 = vmatprep.subr.mxu0 0.0
          %7014 = vmatpush1.msra.mxu0 0.0
          %7015 = vmatprep.subr.mxu0 0.0
          %7016 = vmatpush1.msra.mxu0 0.0
          %7017 = vmatprep.subr.mxu0 0.0
          %7018 = vmatpush1.msra.mxu0 0.0
          %7019 = vmatprep.subr.mxu0 0.0
          %7020 = vmatpush1.msra.mxu0 0.0
          %7021 = vmatprep.subr.mxu0 0.0
          %7022 = vmatpush1.msra.mxu0 0.0
          %7023 = vmatprep.subr.mxu0 0.0
          %7024 = vmatpush1.msra.mxu0 0.0
          %7025 = vmatprep.subr.mxu0 0.0
          %7026 = vmatpush1.msra.mxu0 0.0
          %7027 = vmatprep.subr.mxu0 0.0
          %7028 = vmatpush1.msra.mxu0 %v6999
          %7029 = vmatprep.subr.mxu0 0.0
          %7030 = vmatpush1.msra.mxu0 %v6345
          %7031 = vmatprep.subr.mxu0 0.0
          %7032 = vmatpush1.msra.mxu0 %v6340
          %7033 = vmatprep.subr.mxu0 0.0
          %7034 = vmatpush2.msra.mxu0 0.0
          %7035 = vmatprep.subr.mxu0 0.0
          %7036 = vmatpush2.msra.mxu0 0.0
          %7037 = vmatprep.subr.mxu0 0.0
          %7038 = vmatpush2.msra.mxu0 0.0
          %7039 = vmatprep.subr.mxu0 0.0
          %7040 = vmatpush2.msra.mxu0 0.0
          %7041 = vmatprep.subr.mxu0 0.0
          %7042 = vmatpush2.msra.mxu0 0.0
          %7043 = vmatprep.subr.mxu0 0.0
          %7044 = vmatpush2.msra.mxu0 0.0
          %7045 = vmatprep.subr.mxu0 0.0
          %7046 = vmatpush2.msra.mxu0 0.0
          %7047 = vmatprep.subr.mxu0 0.0
          %7048 = vmatpush2.msra.mxu0 0.0
          %7049 = vmatprep.subr.mxu0 0.0
          %7050 = vmatpush2.msra.mxu0 0.0
          %7051 = vmatprep.subr.mxu0 0.0
          %7052 = vmatpush2.msra.mxu0 0.0
          %7053 = vmatprep.subr.mxu0 0.0
          %7054 = vmatpush2.msra.mxu0 0.0
          %7055 = vmatprep.subr.mxu0 0.0
          %7056 = vmatpush2.msra.mxu0 0.0
          %7057 = vmatprep.subr.mxu0 0.0
          %7058 = vmatpush2.msra.mxu0 0.0
          %7059 = vmatprep.subr.mxu0 0.0
          %7060 = vmatpush2.msra.mxu0 0.0
          %7061 = vmatprep.subr.mxu0 0.0
          %7062 = vmatpush2.msra.mxu0 0.0
          %7063 = vmatprep.subr.mxu0 0.0
          %7064 = vmatpush2.msra.mxu0 0.0
          %7065 = vmatprep.mubr.f32.mxu0 0.0
          %7066 = vmatmul.mubr.f32.gmra.mxu0 %v6991
          %v7067 = vpop.f32.mrf.mxu0
          %v7068 = vadd.f32 0.0, %v7067
          %v7069 = vpop.f32.mrf.mxu0
          %7070 = vmatprep.mubr.f32.mxu0 0.0
          %7071 = vmatmul.mubr.f32.gmra.mxu0 %v6994
          %v7072 = vpop.f32.mrf.mxu0
          %v7073 = vadd.f32 0.0, %v7072
          %v7074 = vpop.f32.mrf.mxu0
          %7075 = vmatprep.mubr.f32.mxu0 0.0
          %7076 = vmatmul.mubr.f32.gmra.mxu0 %v6997
          %v7077 = vpop.f32.mrf.mxu0
          %v7078 = vadd.f32 0.0, %v7077
          %v7079 = vpop.f32.mrf.mxu0
          %7080 = vdwg.mxu0
          %v7082 = vsel %vm3378, %v6431, 0
          %v7085 = vsel %vm3378, %v6436, 0
          %v7088 = vsel %vm3378, %v6441, 0
          %v7090 = vsel %vm3666, %v6441, 0
          %7092 = vmatprep.subr.mxu0 0.0
          %7093 = vmatpush1.msra.mxu0 0.0
          %7094 = vmatprep.subr.mxu0 0.0
          %7095 = vmatpush1.msra.mxu0 0.0
          %7096 = vmatprep.subr.mxu0 0.0
          %7097 = vmatpush1.msra.mxu0 0.0
          %7098 = vmatprep.subr.mxu0 0.0
          %7099 = vmatpush1.msra.mxu0 0.0
          %7100 = vmatprep.subr.mxu0 0.0
          %7101 = vmatpush1.msra.mxu0 0.0
          %7102 = vmatprep.subr.mxu0 0.0
          %7103 = vmatpush1.msra.mxu0 0.0
          %7104 = vmatprep.subr.mxu0 0.0
          %7105 = vmatpush1.msra.mxu0 0.0
          %7106 = vmatprep.subr.mxu0 0.0
          %7107 = vmatpush1.msra.mxu0 0.0
          %7108 = vmatprep.subr.mxu0 0.0
          %7109 = vmatpush1.msra.mxu0 0.0
          %7110 = vmatprep.subr.mxu0 0.0
          %7111 = vmatpush1.msra.mxu0 0.0
          %7112 = vmatprep.subr.mxu0 0.0
          %7113 = vmatpush1.msra.mxu0 0.0
          %7114 = vmatprep.subr.mxu0 0.0
          %7115 = vmatpush1.msra.mxu0 0.0
          %7116 = vmatprep.subr.mxu0 0.0
          %7117 = vmatpush1.msra.mxu0 0.0
          %7118 = vmatprep.subr.mxu0 0.0
          %7119 = vmatpush1.msra.mxu0 %v7090
          %7120 = vmatprep.subr.mxu0 0.0
          %7121 = vmatpush1.msra.mxu0 %v6436
          %7122 = vmatprep.subr.mxu0 0.0
          %7123 = vmatpush1.msra.mxu0 %v6431
          %7124 = vmatprep.subr.mxu0 0.0
          %7125 = vmatpush2.msra.mxu0 0.0
          %7126 = vmatprep.subr.mxu0 0.0
          %7127 = vmatpush2.msra.mxu0 0.0
          %7128 = vmatprep.subr.mxu0 0.0
          %7129 = vmatpush2.msra.mxu0 0.0
          %7130 = vmatprep.subr.mxu0 0.0
          %7131 = vmatpush2.msra.mxu0 0.0
          %7132 = vmatprep.subr.mxu0 0.0
          %7133 = vmatpush2.msra.mxu0 0.0
          %7134 = vmatprep.subr.mxu0 0.0
          %7135 = vmatpush2.msra.mxu0 0.0
          %7136 = vmatprep.subr.mxu0 0.0
          %7137 = vmatpush2.msra.mxu0 0.0
          %7138 = vmatprep.subr.mxu0 0.0
          %7139 = vmatpush2.msra.mxu0 0.0
          %7140 = vmatprep.subr.mxu0 0.0
          %7141 = vmatpush2.msra.mxu0 0.0
          %7142 = vmatprep.subr.mxu0 0.0
          %7143 = vmatpush2.msra.mxu0 0.0
          %7144 = vmatprep.subr.mxu0 0.0
          %7145 = vmatpush2.msra.mxu0 0.0
          %7146 = vmatprep.subr.mxu0 0.0
          %7147 = vmatpush2.msra.mxu0 0.0
          %7148 = vmatprep.subr.mxu0 0.0
          %7149 = vmatpush2.msra.mxu0 0.0
          %7150 = vmatprep.subr.mxu0 0.0
          %7151 = vmatpush2.msra.mxu0 0.0
          %7152 = vmatprep.subr.mxu0 0.0
          %7153 = vmatpush2.msra.mxu0 0.0
          %7154 = vmatprep.subr.mxu0 0.0
          %7155 = vmatpush2.msra.mxu0 0.0
          %7156 = vmatprep.mubr.f32.mxu0 0.0
          %7157 = vmatmul.mubr.f32.gmra.mxu0 %v7082
          %v7158 = vpop.f32.mrf.mxu0
          %v7159 = vadd.f32 0.0, %v7158
          %v7160 = vpop.f32.mrf.mxu0
          %7161 = vmatprep.mubr.f32.mxu0 0.0
          %7162 = vmatmul.mubr.f32.gmra.mxu0 %v7085
          %v7163 = vpop.f32.mrf.mxu0
          %v7164 = vadd.f32 0.0, %v7163
          %v7165 = vpop.f32.mrf.mxu0
          %7166 = vmatprep.mubr.f32.mxu0 0.0
          %7167 = vmatmul.mubr.f32.gmra.mxu0 %v7088
          %v7168 = vpop.f32.mrf.mxu0
          %v7169 = vadd.f32 0.0, %v7168
          %v7170 = vpop.f32.mrf.mxu0
          %7171 = vdwg.mxu0
          %v7173 = vsel %vm3378, %v6522, 0
          %v7176 = vsel %vm3378, %v6527, 0
          %v7179 = vsel %vm3378, %v6532, 0
          %v7181 = vsel %vm3666, %v6532, 0
          %7183 = vmatprep.subr.mxu0 0.0
          %7184 = vmatpush1.msra.mxu0 0.0
          %7185 = vmatprep.subr.mxu0 0.0
          %7186 = vmatpush1.msra.mxu0 0.0
          %7187 = vmatprep.subr.mxu0 0.0
          %7188 = vmatpush1.msra.mxu0 0.0
          %7189 = vmatprep.subr.mxu0 0.0
          %7190 = vmatpush1.msra.mxu0 0.0
          %7191 = vmatprep.subr.mxu0 0.0
          %7192 = vmatpush1.msra.mxu0 0.0
          %7193 = vmatprep.subr.mxu0 0.0
          %7194 = vmatpush1.msra.mxu0 0.0
          %7195 = vmatprep.subr.mxu0 0.0
          %7196 = vmatpush1.msra.mxu0 0.0
          %7197 = vmatprep.subr.mxu0 0.0
          %7198 = vmatpush1.msra.mxu0 0.0
          %7199 = vmatprep.subr.mxu0 0.0
          %7200 = vmatpush1.msra.mxu0 0.0
          %7201 = vmatprep.subr.mxu0 0.0
          %7202 = vmatpush1.msra.mxu0 0.0
          %7203 = vmatprep.subr.mxu0 0.0
          %7204 = vmatpush1.msra.mxu0 0.0
          %7205 = vmatprep.subr.mxu0 0.0
          %7206 = vmatpush1.msra.mxu0 0.0
          %7207 = vmatprep.subr.mxu0 0.0
          %7208 = vmatpush1.msra.mxu0 0.0
          %7209 = vmatprep.subr.mxu0 0.0
          %7210 = vmatpush1.msra.mxu0 %v7181
          %7211 = vmatprep.subr.mxu0 0.0
          %7212 = vmatpush1.msra.mxu0 %v6527
          %7213 = vmatprep.subr.mxu0 0.0
          %7214 = vmatpush1.msra.mxu0 %v6522
          %7215 = vmatprep.subr.mxu0 0.0
          %7216 = vmatpush2.msra.mxu0 0.0
          %7217 = vmatprep.subr.mxu0 0.0
          %7218 = vmatpush2.msra.mxu0 0.0
          %7219 = vmatprep.subr.mxu0 0.0
          %7220 = vmatpush2.msra.mxu0 0.0
          %7221 = vmatprep.subr.mxu0 0.0
          %7222 = vmatpush2.msra.mxu0 0.0
          %7223 = vmatprep.subr.mxu0 0.0
          %7224 = vmatpush2.msra.mxu0 0.0
          %7225 = vmatprep.subr.mxu0 0.0
          %7226 = vmatpush2.msra.mxu0 0.0
          %7227 = vmatprep.subr.mxu0 0.0
          %7228 = vmatpush2.msra.mxu0 0.0
          %7229 = vmatprep.subr.mxu0 0.0
          %7230 = vmatpush2.msra.mxu0 0.0
          %7231 = vmatprep.subr.mxu0 0.0
          %7232 = vmatpush2.msra.mxu0 0.0
          %7233 = vmatprep.subr.mxu0 0.0
          %7234 = vmatpush2.msra.mxu0 0.0
          %7235 = vmatprep.subr.mxu0 0.0
          %7236 = vmatpush2.msra.mxu0 0.0
          %7237 = vmatprep.subr.mxu0 0.0
          %7238 = vmatpush2.msra.mxu0 0.0
          %7239 = vmatprep.subr.mxu0 0.0
          %7240 = vmatpush2.msra.mxu0 0.0
          %7241 = vmatprep.subr.mxu0 0.0
          %7242 = vmatpush2.msra.mxu0 0.0
          %7243 = vmatprep.subr.mxu0 0.0
          %7244 = vmatpush2.msra.mxu0 0.0
          %7245 = vmatprep.subr.mxu0 0.0
          %7246 = vmatpush2.msra.mxu0 0.0
          %7247 = vmatprep.mubr.f32.mxu0 0.0
          %7248 = vmatmul.mubr.f32.gmra.mxu0 %v7173
          %v7249 = vpop.f32.mrf.mxu0
          %v7250 = vadd.f32 0.0, %v7249
          %v7251 = vpop.f32.mrf.mxu0
          %7252 = vmatprep.mubr.f32.mxu0 0.0
          %7253 = vmatmul.mubr.f32.gmra.mxu0 %v7176
          %v7254 = vpop.f32.mrf.mxu0
          %v7255 = vadd.f32 0.0, %v7254
          %v7256 = vpop.f32.mrf.mxu0
          %7257 = vmatprep.mubr.f32.mxu0 0.0
          %7258 = vmatmul.mubr.f32.gmra.mxu0 %v7179
          %v7259 = vpop.f32.mrf.mxu0
          %v7260 = vadd.f32 0.0, %v7259
          %v7261 = vpop.f32.mrf.mxu0
          %7262 = vdwg.mxu0
          %v7264 = vsel %vm3378, %v6613, 0
          %v7267 = vsel %vm3378, %v6618, 0
          %v7270 = vsel %vm3378, %v6623, 0
          %v7272 = vsel %vm3666, %v6623, 0
          %7274 = vmatprep.subr.mxu0 0.0
          %7275 = vmatpush1.msra.mxu0 0.0
          %7276 = vmatprep.subr.mxu0 0.0
          %7277 = vmatpush1.msra.mxu0 0.0
          %7278 = vmatprep.subr.mxu0 0.0
          %7279 = vmatpush1.msra.mxu0 0.0
          %7280 = vmatprep.subr.mxu0 0.0
          %7281 = vmatpush1.msra.mxu0 0.0
          %7282 = vmatprep.subr.mxu0 0.0
          %7283 = vmatpush1.msra.mxu0 0.0
          %7284 = vmatprep.subr.mxu0 0.0
          %7285 = vmatpush1.msra.mxu0 0.0
          %7286 = vmatprep.subr.mxu0 0.0
          %7287 = vmatpush1.msra.mxu0 0.0
          %7288 = vmatprep.subr.mxu0 0.0
          %7289 = vmatpush1.msra.mxu0 0.0
          %7290 = vmatprep.subr.mxu0 0.0
          %7291 = vmatpush1.msra.mxu0 0.0
          %7292 = vmatprep.subr.mxu0 0.0
          %7293 = vmatpush1.msra.mxu0 0.0
          %7294 = vmatprep.subr.mxu0 0.0
          %7295 = vmatpush1.msra.mxu0 0.0
          %7296 = vmatprep.subr.mxu0 0.0
          %7297 = vmatpush1.msra.mxu0 0.0
          %7298 = vmatprep.subr.mxu0 0.0
          %7299 = vmatpush1.msra.mxu0 0.0
          %7300 = vmatprep.subr.mxu0 0.0
          %7301 = vmatpush1.msra.mxu0 %v7272
          %7302 = vmatprep.subr.mxu0 0.0
          %7303 = vmatpush1.msra.mxu0 %v6618
          %7304 = vmatprep.subr.mxu0 0.0
          %7305 = vmatpush1.msra.mxu0 %v6613
          %7306 = vmatprep.subr.mxu0 0.0
          %7307 = vmatpush2.msra.mxu0 0.0
          %7308 = vmatprep.subr.mxu0 0.0
          %7309 = vmatpush2.msra.mxu0 0.0
          %7310 = vmatprep.subr.mxu0 0.0
          %7311 = vmatpush2.msra.mxu0 0.0
          %7312 = vmatprep.subr.mxu0 0.0
          %7313 = vmatpush2.msra.mxu0 0.0
          %7314 = vmatprep.subr.mxu0 0.0
          %7315 = vmatpush2.msra.mxu0 0.0
          %7316 = vmatprep.subr.mxu0 0.0
          %7317 = vmatpush2.msra.mxu0 0.0
          %7318 = vmatprep.subr.mxu0 0.0
          %7319 = vmatpush2.msra.mxu0 0.0
          %7320 = vmatprep.subr.mxu0 0.0
          %7321 = vmatpush2.msra.mxu0 0.0
          %7322 = vmatprep.subr.mxu0 0.0
          %7323 = vmatpush2.msra.mxu0 0.0
          %7324 = vmatprep.subr.mxu0 0.0
          %7325 = vmatpush2.msra.mxu0 0.0
          %7326 = vmatprep.subr.mxu0 0.0
          %7327 = vmatpush2.msra.mxu0 0.0
          %7328 = vmatprep.subr.mxu0 0.0
          %7329 = vmatpush2.msra.mxu0 0.0
          %7330 = vmatprep.subr.mxu0 0.0
          %7331 = vmatpush2.msra.mxu0 0.0
          %7332 = vmatprep.subr.mxu0 0.0
          %7333 = vmatpush2.msra.mxu0 0.0
          %7334 = vmatprep.subr.mxu0 0.0
          %7335 = vmatpush2.msra.mxu0 0.0
          %7336 = vmatprep.subr.mxu0 0.0
          %7337 = vmatpush2.msra.mxu0 0.0
          %7338 = vmatprep.mubr.f32.mxu0 0.0
          %7339 = vmatmul.mubr.f32.gmra.mxu0 %v7264
          %v7340 = vpop.f32.mrf.mxu0
          %v7341 = vadd.f32 0.0, %v7340
          %v7342 = vpop.f32.mrf.mxu0
          %7343 = vmatprep.mubr.f32.mxu0 0.0
          %7344 = vmatmul.mubr.f32.gmra.mxu0 %v7267
          %v7345 = vpop.f32.mrf.mxu0
          %v7346 = vadd.f32 0.0, %v7345
          %v7347 = vpop.f32.mrf.mxu0
          %7348 = vmatprep.mubr.f32.mxu0 0.0
          %7349 = vmatmul.mubr.f32.gmra.mxu0 %v7270
          %v7350 = vpop.f32.mrf.mxu0
          %v7351 = vadd.f32 0.0, %v7350
          %v7352 = vpop.f32.mrf.mxu0
          %7353 = vdwg.mxu0
          %v7355 = vsel %vm3378, %v6704, 0
          %v7358 = vsel %vm3378, %v6709, 0
          %v7361 = vsel %vm3378, %v6714, 0
          %v7363 = vsel %vm3666, %v6714, 0
          %7365 = vmatprep.subr.mxu0 0.0
          %7366 = vmatpush1.msra.mxu0 0.0
          %7367 = vmatprep.subr.mxu0 0.0
          %7368 = vmatpush1.msra.mxu0 0.0
          %7369 = vmatprep.subr.mxu0 0.0
          %7370 = vmatpush1.msra.mxu0 0.0
          %7371 = vmatprep.subr.mxu0 0.0
          %7372 = vmatpush1.msra.mxu0 0.0
          %7373 = vmatprep.subr.mxu0 0.0
          %7374 = vmatpush1.msra.mxu0 0.0
          %7375 = vmatprep.subr.mxu0 0.0
          %7376 = vmatpush1.msra.mxu0 0.0
          %7377 = vmatprep.subr.mxu0 0.0
          %7378 = vmatpush1.msra.mxu0 0.0
          %7379 = vmatprep.subr.mxu0 0.0
          %7380 = vmatpush1.msra.mxu0 0.0
          %7381 = vmatprep.subr.mxu0 0.0
          %7382 = vmatpush1.msra.mxu0 0.0
          %7383 = vmatprep.subr.mxu0 0.0
          %7384 = vmatpush1.msra.mxu0 0.0
          %7385 = vmatprep.subr.mxu0 0.0
          %7386 = vmatpush1.msra.mxu0 0.0
          %7387 = vmatprep.subr.mxu0 0.0
          %7388 = vmatpush1.msra.mxu0 0.0
          %7389 = vmatprep.subr.mxu0 0.0
          %7390 = vmatpush1.msra.mxu0 0.0
          %7391 = vmatprep.subr.mxu0 0.0
          %7392 = vmatpush1.msra.mxu0 %v7363
          %7393 = vmatprep.subr.mxu0 0.0
          %7394 = vmatpush1.msra.mxu0 %v6709
          %7395 = vmatprep.subr.mxu0 0.0
          %7396 = vmatpush1.msra.mxu0 %v6704
          %7397 = vmatprep.subr.mxu0 0.0
          %7398 = vmatpush2.msra.mxu0 0.0
          %7399 = vmatprep.subr.mxu0 0.0
          %7400 = vmatpush2.msra.mxu0 0.0
          %7401 = vmatprep.subr.mxu0 0.0
          %7402 = vmatpush2.msra.mxu0 0.0
          %7403 = vmatprep.subr.mxu0 0.0
          %7404 = vmatpush2.msra.mxu0 0.0
          %7405 = vmatprep.subr.mxu0 0.0
          %7406 = vmatpush2.msra.mxu0 0.0
          %7407 = vmatprep.subr.mxu0 0.0
          %7408 = vmatpush2.msra.mxu0 0.0
          %7409 = vmatprep.subr.mxu0 0.0
          %7410 = vmatpush2.msra.mxu0 0.0
          %7411 = vmatprep.subr.mxu0 0.0
          %7412 = vmatpush2.msra.mxu0 0.0
          %7413 = vmatprep.subr.mxu0 0.0
          %7414 = vmatpush2.msra.mxu0 0.0
          %7415 = vmatprep.subr.mxu0 0.0
          %7416 = vmatpush2.msra.mxu0 0.0
          %7417 = vmatprep.subr.mxu0 0.0
          %7418 = vmatpush2.msra.mxu0 0.0
          %7419 = vmatprep.subr.mxu0 0.0
          %7420 = vmatpush2.msra.mxu0 0.0
          %7421 = vmatprep.subr.mxu0 0.0
          %7422 = vmatpush2.msra.mxu0 0.0
          %7423 = vmatprep.subr.mxu0 0.0
          %7424 = vmatpush2.msra.mxu0 0.0
          %7425 = vmatprep.subr.mxu0 0.0
          %7426 = vmatpush2.msra.mxu0 0.0
          %7427 = vmatprep.subr.mxu0 0.0
          %7428 = vmatpush2.msra.mxu0 0.0
          %7429 = vmatprep.mubr.f32.mxu0 0.0
          %7430 = vmatmul.mubr.f32.gmra.mxu0 %v7355
          %v7431 = vpop.f32.mrf.mxu0
          %v7432 = vadd.f32 0.0, %v7431
          %v7433 = vpop.f32.mrf.mxu0
          %7434 = vmatprep.mubr.f32.mxu0 0.0
          %7435 = vmatmul.mubr.f32.gmra.mxu0 %v7358
          %v7436 = vpop.f32.mrf.mxu0
          %v7437 = vadd.f32 0.0, %v7436
          %v7438 = vpop.f32.mrf.mxu0
          %7439 = vmatprep.mubr.f32.mxu0 0.0
          %7440 = vmatmul.mubr.f32.gmra.mxu0 %v7361
          %v7441 = vpop.f32.mrf.mxu0
          %v7442 = vadd.f32 0.0, %v7441
          %v7443 = vpop.f32.mrf.mxu0
          %7444 = vdwg.mxu0
          %v7446 = vsel %vm3378, %v6795, 0
          %v7449 = vsel %vm3378, %v6800, 0
          %v7452 = vsel %vm3378, %v6805, 0
          %v7454 = vsel %vm3666, %v6805, 0
          %7456 = vmatprep.subr.mxu0 0.0
          %7457 = vmatpush1.msra.mxu0 0.0
          %7458 = vmatprep.subr.mxu0 0.0
          %7459 = vmatpush1.msra.mxu0 0.0
          %7460 = vmatprep.subr.mxu0 0.0
          %7461 = vmatpush1.msra.mxu0 0.0
          %7462 = vmatprep.subr.mxu0 0.0
          %7463 = vmatpush1.msra.mxu0 0.0
          %7464 = vmatprep.subr.mxu0 0.0
          %7465 = vmatpush1.msra.mxu0 0.0
          %7466 = vmatprep.subr.mxu0 0.0
          %7467 = vmatpush1.msra.mxu0 0.0
          %7468 = vmatprep.subr.mxu0 0.0
          %7469 = vmatpush1.msra.mxu0 0.0
          %7470 = vmatprep.subr.mxu0 0.0
          %7471 = vmatpush1.msra.mxu0 0.0
          %7472 = vmatprep.subr.mxu0 0.0
          %7473 = vmatpush1.msra.mxu0 0.0
          %7474 = vmatprep.subr.mxu0 0.0
          %7475 = vmatpush1.msra.mxu0 0.0
          %7476 = vmatprep.subr.mxu0 0.0
          %7477 = vmatpush1.msra.mxu0 0.0
          %7478 = vmatprep.subr.mxu0 0.0
          %7479 = vmatpush1.msra.mxu0 0.0
          %7480 = vmatprep.subr.mxu0 0.0
          %7481 = vmatpush1.msra.mxu0 0.0
          %7482 = vmatprep.subr.mxu0 0.0
          %7483 = vmatpush1.msra.mxu0 %v7454
          %7484 = vmatprep.subr.mxu0 0.0
          %7485 = vmatpush1.msra.mxu0 %v6800
          %7486 = vmatprep.subr.mxu0 0.0
          %7487 = vmatpush1.msra.mxu0 %v6795
          %7488 = vmatprep.subr.mxu0 0.0
          %7489 = vmatpush2.msra.mxu0 0.0
          %7490 = vmatprep.subr.mxu0 0.0
          %7491 = vmatpush2.msra.mxu0 0.0
          %7492 = vmatprep.subr.mxu0 0.0
          %7493 = vmatpush2.msra.mxu0 0.0
          %7494 = vmatprep.subr.mxu0 0.0
          %7495 = vmatpush2.msra.mxu0 0.0
          %7496 = vmatprep.subr.mxu0 0.0
          %7497 = vmatpush2.msra.mxu0 0.0
          %7498 = vmatprep.subr.mxu0 0.0
          %7499 = vmatpush2.msra.mxu0 0.0
          %7500 = vmatprep.subr.mxu0 0.0
          %7501 = vmatpush2.msra.mxu0 0.0
          %7502 = vmatprep.subr.mxu0 0.0
          %7503 = vmatpush2.msra.mxu0 0.0
          %7504 = vmatprep.subr.mxu0 0.0
          %7505 = vmatpush2.msra.mxu0 0.0
          %7506 = vmatprep.subr.mxu0 0.0
          %7507 = vmatpush2.msra.mxu0 0.0
          %7508 = vmatprep.subr.mxu0 0.0
          %7509 = vmatpush2.msra.mxu0 0.0
          %7510 = vmatprep.subr.mxu0 0.0
          %7511 = vmatpush2.msra.mxu0 0.0
          %7512 = vmatprep.subr.mxu0 0.0
          %7513 = vmatpush2.msra.mxu0 0.0
          %7514 = vmatprep.subr.mxu0 0.0
          %7515 = vmatpush2.msra.mxu0 0.0
          %7516 = vmatprep.subr.mxu0 0.0
          %7517 = vmatpush2.msra.mxu0 0.0
          %7518 = vmatprep.subr.mxu0 0.0
          %7519 = vmatpush2.msra.mxu0 0.0
          %7520 = vmatprep.mubr.f32.mxu0 0.0
          %7521 = vmatmul.mubr.f32.gmra.mxu0 %v7446
          %v7522 = vpop.f32.mrf.mxu0
          %v7523 = vadd.f32 0.0, %v7522
          %v7524 = vpop.f32.mrf.mxu0
          %7525 = vmatprep.mubr.f32.mxu0 0.0
          %7526 = vmatmul.mubr.f32.gmra.mxu0 %v7449
          %v7527 = vpop.f32.mrf.mxu0
          %v7528 = vadd.f32 0.0, %v7527
          %v7529 = vpop.f32.mrf.mxu0
          %7530 = vmatprep.mubr.f32.mxu0 0.0
          %7531 = vmatmul.mubr.f32.gmra.mxu0 %v7452
          %v7532 = vpop.f32.mrf.mxu0
          %v7533 = vadd.f32 0.0, %v7532
          %v7534 = vpop.f32.mrf.mxu0
          %7535 = vdwg.mxu0
          %v7537 = vsel %vm3378, %v6886, 0
          %v7540 = vsel %vm3378, %v6891, 0
          %v7543 = vsel %vm3378, %v6896, 0
          %v7545 = vsel %vm3666, %v6896, 0
          %7547 = vmatprep.subr.mxu0 0.0
          %7548 = vmatpush1.msra.mxu0 0.0
          %7549 = vmatprep.subr.mxu0 0.0
          %7550 = vmatpush1.msra.mxu0 0.0
          %7551 = vmatprep.subr.mxu0 0.0
          %7552 = vmatpush1.msra.mxu0 0.0
          %7553 = vmatprep.subr.mxu0 0.0
          %7554 = vmatpush1.msra.mxu0 0.0
          %7555 = vmatprep.subr.mxu0 0.0
          %7556 = vmatpush1.msra.mxu0 0.0
          %7557 = vmatprep.subr.mxu0 0.0
          %7558 = vmatpush1.msra.mxu0 0.0
          %7559 = vmatprep.subr.mxu0 0.0
          %7560 = vmatpush1.msra.mxu0 0.0
          %7561 = vmatprep.subr.mxu0 0.0
          %7562 = vmatpush1.msra.mxu0 0.0
          %7563 = vmatprep.subr.mxu0 0.0
          %7564 = vmatpush1.msra.mxu0 0.0
          %7565 = vmatprep.subr.mxu0 0.0
          %7566 = vmatpush1.msra.mxu0 0.0
          %7567 = vmatprep.subr.mxu0 0.0
          %7568 = vmatpush1.msra.mxu0 0.0
          %7569 = vmatprep.subr.mxu0 0.0
          %7570 = vmatpush1.msra.mxu0 0.0
          %7571 = vmatprep.subr.mxu0 0.0
          %7572 = vmatpush1.msra.mxu0 0.0
          %7573 = vmatprep.subr.mxu0 0.0
          %7574 = vmatpush1.msra.mxu0 %v7545
          %7575 = vmatprep.subr.mxu0 0.0
          %7576 = vmatpush1.msra.mxu0 %v6891
          %7577 = vmatprep.subr.mxu0 0.0
          %7578 = vmatpush1.msra.mxu0 %v6886
          %7579 = vmatprep.subr.mxu0 0.0
          %7580 = vmatpush2.msra.mxu0 0.0
          %7581 = vmatprep.subr.mxu0 0.0
          %7582 = vmatpush2.msra.mxu0 0.0
          %7583 = vmatprep.subr.mxu0 0.0
          %7584 = vmatpush2.msra.mxu0 0.0
          %7585 = vmatprep.subr.mxu0 0.0
          %7586 = vmatpush2.msra.mxu0 0.0
          %7587 = vmatprep.subr.mxu0 0.0
          %7588 = vmatpush2.msra.mxu0 0.0
          %7589 = vmatprep.subr.mxu0 0.0
          %7590 = vmatpush2.msra.mxu0 0.0
          %7591 = vmatprep.subr.mxu0 0.0
          %7592 = vmatpush2.msra.mxu0 0.0
          %7593 = vmatprep.subr.mxu0 0.0
          %7594 = vmatpush2.msra.mxu0 0.0
          %7595 = vmatprep.subr.mxu0 0.0
          %7596 = vmatpush2.msra.mxu0 0.0
          %7597 = vmatprep.subr.mxu0 0.0
          %7598 = vmatpush2.msra.mxu0 0.0
          %7599 = vmatprep.subr.mxu0 0.0
          %7600 = vmatpush2.msra.mxu0 0.0
          %7601 = vmatprep.subr.mxu0 0.0
          %7602 = vmatpush2.msra.mxu0 0.0
          %7603 = vmatprep.subr.mxu0 0.0
          %7604 = vmatpush2.msra.mxu0 0.0
          %7605 = vmatprep.subr.mxu0 0.0
          %7606 = vmatpush2.msra.mxu0 0.0
          %7607 = vmatprep.subr.mxu0 0.0
          %7608 = vmatpush2.msra.mxu0 0.0
          %7609 = vmatprep.subr.mxu0 0.0
          %7610 = vmatpush2.msra.mxu0 0.0
          %7611 = vmatprep.mubr.f32.mxu0 0.0
          %7612 = vmatmul.mubr.f32.gmra.mxu0 %v7537
          %v7613 = vpop.f32.mrf.mxu0
          %v7614 = vadd.f32 0.0, %v7613
          %v7615 = vpop.f32.mrf.mxu0
          %7616 = vmatprep.mubr.f32.mxu0 0.0
          %7617 = vmatmul.mubr.f32.gmra.mxu0 %v7540
          %v7618 = vpop.f32.mrf.mxu0
          %v7619 = vadd.f32 0.0, %v7618
          %v7620 = vpop.f32.mrf.mxu0
          %7621 = vmatprep.mubr.f32.mxu0 0.0
          %7622 = vmatmul.mubr.f32.gmra.mxu0 %v7543
          %v7623 = vpop.f32.mrf.mxu0
          %v7624 = vadd.f32 0.0, %v7623
          %v7625 = vpop.f32.mrf.mxu0
          %7626 = vdwg.mxu0
          %v7628 = vsel %vm3378, %v6977, 0
          %v7631 = vsel %vm3378, %v6982, 0
          %v7634 = vsel %vm3378, %v6987, 0
          %v7636 = vsel %vm3666, %v6987, 0
          %7638 = vmatprep.subr.mxu0 0.0
          %7639 = vmatpush1.msra.mxu0 0.0
          %7640 = vmatprep.subr.mxu0 0.0
          %7641 = vmatpush1.msra.mxu0 0.0
          %7642 = vmatprep.subr.mxu0 0.0
          %7643 = vmatpush1.msra.mxu0 0.0
          %7644 = vmatprep.subr.mxu0 0.0
          %7645 = vmatpush1.msra.mxu0 0.0
          %7646 = vmatprep.subr.mxu0 0.0
          %7647 = vmatpush1.msra.mxu0 0.0
          %7648 = vmatprep.subr.mxu0 0.0
          %7649 = vmatpush1.msra.mxu0 0.0
          %7650 = vmatprep.subr.mxu0 0.0
          %7651 = vmatpush1.msra.mxu0 0.0
          %7652 = vmatprep.subr.mxu0 0.0
          %7653 = vmatpush1.msra.mxu0 0.0
          %7654 = vmatprep.subr.mxu0 0.0
          %7655 = vmatpush1.msra.mxu0 0.0
          %7656 = vmatprep.subr.mxu0 0.0
          %7657 = vmatpush1.msra.mxu0 0.0
          %7658 = vmatprep.subr.mxu0 0.0
          %7659 = vmatpush1.msra.mxu0 0.0
          %7660 = vmatprep.subr.mxu0 0.0
          %7661 = vmatpush1.msra.mxu0 0.0
          %7662 = vmatprep.subr.mxu0 0.0
          %7663 = vmatpush1.msra.mxu0 0.0
          %7664 = vmatprep.subr.mxu0 0.0
          %7665 = vmatpush1.msra.mxu0 %v7636
          %7666 = vmatprep.subr.mxu0 0.0
          %7667 = vmatpush1.msra.mxu0 %v6982
          %7668 = vmatprep.subr.mxu0 0.0
          %7669 = vmatpush1.msra.mxu0 %v6977
          %7670 = vmatprep.subr.mxu0 0.0
          %7671 = vmatpush2.msra.mxu0 0.0
          %7672 = vmatprep.subr.mxu0 0.0
          %7673 = vmatpush2.msra.mxu0 0.0
          %7674 = vmatprep.subr.mxu0 0.0
          %7675 = vmatpush2.msra.mxu0 0.0
          %7676 = vmatprep.subr.mxu0 0.0
          %7677 = vmatpush2.msra.mxu0 0.0
          %7678 = vmatprep.subr.mxu0 0.0
          %7679 = vmatpush2.msra.mxu0 0.0
          %7680 = vmatprep.subr.mxu0 0.0
          %7681 = vmatpush2.msra.mxu0 0.0
          %7682 = vmatprep.subr.mxu0 0.0
          %7683 = vmatpush2.msra.mxu0 0.0
          %7684 = vmatprep.subr.mxu0 0.0
          %7685 = vmatpush2.msra.mxu0 0.0
          %7686 = vmatprep.subr.mxu0 0.0
          %7687 = vmatpush2.msra.mxu0 0.0
          %7688 = vmatprep.subr.mxu0 0.0
          %7689 = vmatpush2.msra.mxu0 0.0
          %7690 = vmatprep.subr.mxu0 0.0
          %7691 = vmatpush2.msra.mxu0 0.0
          %7692 = vmatprep.subr.mxu0 0.0
          %7693 = vmatpush2.msra.mxu0 0.0
          %7694 = vmatprep.subr.mxu0 0.0
          %7695 = vmatpush2.msra.mxu0 0.0
          %7696 = vmatprep.subr.mxu0 0.0
          %7697 = vmatpush2.msra.mxu0 0.0
          %7698 = vmatprep.subr.mxu0 0.0
          %7699 = vmatpush2.msra.mxu0 0.0
          %7700 = vmatprep.subr.mxu0 0.0
          %7701 = vmatpush2.msra.mxu0 0.0
          %7702 = vmatprep.mubr.f32.mxu0 0.0
          %7703 = vmatmul.mubr.f32.gmra.mxu0 %v7628
          %v7704 = vpop.f32.mrf.mxu0
          %v7705 = vadd.f32 0.0, %v7704
          %v7706 = vpop.f32.mrf.mxu0
          %7707 = vmatprep.mubr.f32.mxu0 0.0
          %7708 = vmatmul.mubr.f32.gmra.mxu0 %v7631
          %v7709 = vpop.f32.mrf.mxu0
          %v7710 = vadd.f32 0.0, %v7709
          %v7711 = vpop.f32.mrf.mxu0
          %7712 = vmatprep.mubr.f32.mxu0 0.0
          %7713 = vmatmul.mubr.f32.gmra.mxu0 %v7634
          %v7714 = vpop.f32.mrf.mxu0
          %v7715 = vadd.f32 0.0, %v7714
          %v7716 = vpop.f32.mrf.mxu0
          %7717 = vdwg.mxu0
          %v7719 = vsel %vm3378, %v7068, 0
          %v7722 = vsel %vm3378, %v7073, 0
          %v7725 = vsel %vm3378, %v7078, 0
          %v7727 = vsel %vm3666, %v7078, 0
          %7729 = vmatprep.subr.mxu0 0.0
          %7730 = vmatpush1.msra.mxu0 0.0
          %7731 = vmatprep.subr.mxu0 0.0
          %7732 = vmatpush1.msra.mxu0 0.0
          %7733 = vmatprep.subr.mxu0 0.0
          %7734 = vmatpush1.msra.mxu0 0.0
          %7735 = vmatprep.subr.mxu0 0.0
          %7736 = vmatpush1.msra.mxu0 0.0
          %7737 = vmatprep.subr.mxu0 0.0
          %7738 = vmatpush1.msra.mxu0 0.0
          %7739 = vmatprep.subr.mxu0 0.0
          %7740 = vmatpush1.msra.mxu0 0.0
          %7741 = vmatprep.subr.mxu0 0.0
          %7742 = vmatpush1.msra.mxu0 0.0
          %7743 = vmatprep.subr.mxu0 0.0
          %7744 = vmatpush1.msra.mxu0 0.0
          %7745 = vmatprep.subr.mxu0 0.0
          %7746 = vmatpush1.msra.mxu0 0.0
          %7747 = vmatprep.subr.mxu0 0.0
          %7748 = vmatpush1.msra.mxu0 0.0
          %7749 = vmatprep.subr.mxu0 0.0
          %7750 = vmatpush1.msra.mxu0 0.0
          %7751 = vmatprep.subr.mxu0 0.0
          %7752 = vmatpush1.msra.mxu0 0.0
          %7753 = vmatprep.subr.mxu0 0.0
          %7754 = vmatpush1.msra.mxu0 0.0
          %7755 = vmatprep.subr.mxu0 0.0
          %7756 = vmatpush1.msra.mxu0 %v7727
          %7757 = vmatprep.subr.mxu0 0.0
          %7758 = vmatpush1.msra.mxu0 %v7073
          %7759 = vmatprep.subr.mxu0 0.0
          %7760 = vmatpush1.msra.mxu0 %v7068
          %7761 = vmatprep.subr.mxu0 0.0
          %7762 = vmatpush2.msra.mxu0 0.0
          %7763 = vmatprep.subr.mxu0 0.0
          %7764 = vmatpush2.msra.mxu0 0.0
          %7765 = vmatprep.subr.mxu0 0.0
          %7766 = vmatpush2.msra.mxu0 0.0
          %7767 = vmatprep.subr.mxu0 0.0
          %7768 = vmatpush2.msra.mxu0 0.0
          %7769 = vmatprep.subr.mxu0 0.0
          %7770 = vmatpush2.msra.mxu0 0.0
          %7771 = vmatprep.subr.mxu0 0.0
          %7772 = vmatpush2.msra.mxu0 0.0
          %7773 = vmatprep.subr.mxu0 0.0
          %7774 = vmatpush2.msra.mxu0 0.0
          %7775 = vmatprep.subr.mxu0 0.0
          %7776 = vmatpush2.msra.mxu0 0.0
          %7777 = vmatprep.subr.mxu0 0.0
          %7778 = vmatpush2.msra.mxu0 0.0
          %7779 = vmatprep.subr.mxu0 0.0
          %7780 = vmatpush2.msra.mxu0 0.0
          %7781 = vmatprep.subr.mxu0 0.0
          %7782 = vmatpush2.msra.mxu0 0.0
          %7783 = vmatprep.subr.mxu0 0.0
          %7784 = vmatpush2.msra.mxu0 0.0
          %7785 = vmatprep.subr.mxu0 0.0
          %7786 = vmatpush2.msra.mxu0 0.0
          %7787 = vmatprep.subr.mxu0 0.0
          %7788 = vmatpush2.msra.mxu0 0.0
          %7789 = vmatprep.subr.mxu0 0.0
          %7790 = vmatpush2.msra.mxu0 0.0
          %7791 = vmatprep.subr.mxu0 0.0
          %7792 = vmatpush2.msra.mxu0 0.0
          %7793 = vmatprep.mubr.f32.mxu0 0.0
          %7794 = vmatmul.mubr.f32.gmra.mxu0 %v7719
          %v7795 = vpop.f32.mrf.mxu0
          %v7796 = vadd.f32 0.0, %v7795
          %v7797 = vpop.f32.mrf.mxu0
          %7798 = vmatprep.mubr.f32.mxu0 0.0
          %7799 = vmatmul.mubr.f32.gmra.mxu0 %v7722
          %v7800 = vpop.f32.mrf.mxu0
          %v7801 = vadd.f32 0.0, %v7800
          %v7802 = vpop.f32.mrf.mxu0
          %7803 = vmatprep.mubr.f32.mxu0 0.0
          %7804 = vmatmul.mubr.f32.gmra.mxu0 %v7725
          %v7805 = vpop.f32.mrf.mxu0
          %v7806 = vadd.f32 0.0, %v7805
          %v7807 = vpop.f32.mrf.mxu0
          %7808 = vdwg.mxu0
          %v7810 = vsel %vm3378, %v7159, 0
          %v7813 = vsel %vm3378, %v7164, 0
          %v7816 = vsel %vm3378, %v7169, 0
          %v7818 = vsel %vm3666, %v7169, 0
          %7820 = vmatprep.subr.mxu0 0.0
          %7821 = vmatpush1.msra.mxu0 0.0
          %7822 = vmatprep.subr.mxu0 0.0
          %7823 = vmatpush1.msra.mxu0 0.0
          %7824 = vmatprep.subr.mxu0 0.0
          %7825 = vmatpush1.msra.mxu0 0.0
          %7826 = vmatprep.subr.mxu0 0.0
          %7827 = vmatpush1.msra.mxu0 0.0
          %7828 = vmatprep.subr.mxu0 0.0
          %7829 = vmatpush1.msra.mxu0 0.0
          %7830 = vmatprep.subr.mxu0 0.0
          %7831 = vmatpush1.msra.mxu0 0.0
          %7832 = vmatprep.subr.mxu0 0.0
          %7833 = vmatpush1.msra.mxu0 0.0
          %7834 = vmatprep.subr.mxu0 0.0
          %7835 = vmatpush1.msra.mxu0 0.0
          %7836 = vmatprep.subr.mxu0 0.0
          %7837 = vmatpush1.msra.mxu0 0.0
          %7838 = vmatprep.subr.mxu0 0.0
          %7839 = vmatpush1.msra.mxu0 0.0
          %7840 = vmatprep.subr.mxu0 0.0
          %7841 = vmatpush1.msra.mxu0 0.0
          %7842 = vmatprep.subr.mxu0 0.0
          %7843 = vmatpush1.msra.mxu0 0.0
          %7844 = vmatprep.subr.mxu0 0.0
          %7845 = vmatpush1.msra.mxu0 0.0
          %7846 = vmatprep.subr.mxu0 0.0
          %7847 = vmatpush1.msra.mxu0 %v7818
          %7848 = vmatprep.subr.mxu0 0.0
          %7849 = vmatpush1.msra.mxu0 %v7164
          %7850 = vmatprep.subr.mxu0 0.0
          %7851 = vmatpush1.msra.mxu0 %v7159
          %7852 = vmatprep.subr.mxu0 0.0
          %7853 = vmatpush2.msra.mxu0 0.0
          %7854 = vmatprep.subr.mxu0 0.0
          %7855 = vmatpush2.msra.mxu0 0.0
          %7856 = vmatprep.subr.mxu0 0.0
          %7857 = vmatpush2.msra.mxu0 0.0
          %7858 = vmatprep.subr.mxu0 0.0
          %7859 = vmatpush2.msra.mxu0 0.0
          %7860 = vmatprep.subr.mxu0 0.0
          %7861 = vmatpush2.msra.mxu0 0.0
          %7862 = vmatprep.subr.mxu0 0.0
          %7863 = vmatpush2.msra.mxu0 0.0
          %7864 = vmatprep.subr.mxu0 0.0
          %7865 = vmatpush2.msra.mxu0 0.0
          %7866 = vmatprep.subr.mxu0 0.0
          %7867 = vmatpush2.msra.mxu0 0.0
          %7868 = vmatprep.subr.mxu0 0.0
          %7869 = vmatpush2.msra.mxu0 0.0
          %7870 = vmatprep.subr.mxu0 0.0
          %7871 = vmatpush2.msra.mxu0 0.0
          %7872 = vmatprep.subr.mxu0 0.0
          %7873 = vmatpush2.msra.mxu0 0.0
          %7874 = vmatprep.subr.mxu0 0.0
          %7875 = vmatpush2.msra.mxu0 0.0
          %7876 = vmatprep.subr.mxu0 0.0
          %7877 = vmatpush2.msra.mxu0 0.0
          %7878 = vmatprep.subr.mxu0 0.0
          %7879 = vmatpush2.msra.mxu0 0.0
          %7880 = vmatprep.subr.mxu0 0.0
          %7881 = vmatpush2.msra.mxu0 0.0
          %7882 = vmatprep.subr.mxu0 0.0
          %7883 = vmatpush2.msra.mxu0 0.0
          %7884 = vmatprep.mubr.f32.mxu0 0.0
          %7885 = vmatmul.mubr.f32.gmra.mxu0 %v7810
          %v7886 = vpop.f32.mrf.mxu0
          %v7887 = vadd.f32 0.0, %v7886
          %v7888 = vpop.f32.mrf.mxu0
          %7889 = vmatprep.mubr.f32.mxu0 0.0
          %7890 = vmatmul.mubr.f32.gmra.mxu0 %v7813
          %v7891 = vpop.f32.mrf.mxu0
          %v7892 = vadd.f32 0.0, %v7891
          %v7893 = vpop.f32.mrf.mxu0
          %7894 = vmatprep.mubr.f32.mxu0 0.0
          %7895 = vmatmul.mubr.f32.gmra.mxu0 %v7816
          %v7896 = vpop.f32.mrf.mxu0
          %v7897 = vadd.f32 0.0, %v7896
          %v7898 = vpop.f32.mrf.mxu0
          %7899 = vdwg.mxu0
          %v7901 = vsel %vm3378, 0.24253562, 0
          %v7904 = vsel %vm3666, %v7260, 0
          %7906 = vmatprep.subr.mxu0 0.0
          %7907 = vmatpush1.msra.mxu0 0.0
          %7908 = vmatprep.subr.mxu0 0.0
          %7909 = vmatpush1.msra.mxu0 0.0
          %7910 = vmatprep.subr.mxu0 0.0
          %7911 = vmatpush1.msra.mxu0 0.0
          %7912 = vmatprep.subr.mxu0 0.0
          %7913 = vmatpush1.msra.mxu0 0.0
          %7914 = vmatprep.subr.mxu0 0.0
          %7915 = vmatpush1.msra.mxu0 0.0
          %7916 = vmatprep.subr.mxu0 0.0
          %7917 = vmatpush1.msra.mxu0 0.0
          %7918 = vmatprep.subr.mxu0 0.0
          %7919 = vmatpush1.msra.mxu0 0.0
          %7920 = vmatprep.subr.mxu0 0.0
          %7921 = vmatpush1.msra.mxu0 0.0
          %7922 = vmatprep.subr.mxu0 0.0
          %7923 = vmatpush1.msra.mxu0 0.0
          %7924 = vmatprep.subr.mxu0 0.0
          %7925 = vmatpush1.msra.mxu0 0.0
          %7926 = vmatprep.subr.mxu0 0.0
          %7927 = vmatpush1.msra.mxu0 0.0
          %7928 = vmatprep.subr.mxu0 0.0
          %7929 = vmatpush1.msra.mxu0 0.0
          %7930 = vmatprep.subr.mxu0 0.0
          %7931 = vmatpush1.msra.mxu0 0.0
          %7932 = vmatprep.subr.mxu0 0.0
          %7933 = vmatpush1.msra.mxu0 %v7904
          %7934 = vmatprep.subr.mxu0 0.0
          %7935 = vmatpush1.msra.mxu0 %v7255
          %7936 = vmatprep.subr.mxu0 0.0
          %7937 = vmatpush1.msra.mxu0 %v7250
          %7938 = vmatprep.subr.mxu0 0.0
          %7939 = vmatpush2.msra.mxu0 0.0
          %7940 = vmatprep.subr.mxu0 0.0
          %7941 = vmatpush2.msra.mxu0 0.0
          %7942 = vmatprep.subr.mxu0 0.0
          %7943 = vmatpush2.msra.mxu0 0.0
          %7944 = vmatprep.subr.mxu0 0.0
          %7945 = vmatpush2.msra.mxu0 0.0
          %7946 = vmatprep.subr.mxu0 0.0
          %7947 = vmatpush2.msra.mxu0 0.0
          %7948 = vmatprep.subr.mxu0 0.0
          %7949 = vmatpush2.msra.mxu0 0.0
          %7950 = vmatprep.subr.mxu0 0.0
          %7951 = vmatpush2.msra.mxu0 0.0
          %7952 = vmatprep.subr.mxu0 0.0
          %7953 = vmatpush2.msra.mxu0 0.0
          %7954 = vmatprep.subr.mxu0 0.0
          %7955 = vmatpush2.msra.mxu0 0.0
          %7956 = vmatprep.subr.mxu0 0.0
          %7957 = vmatpush2.msra.mxu0 0.0
          %7958 = vmatprep.subr.mxu0 0.0
          %7959 = vmatpush2.msra.mxu0 0.0
          %7960 = vmatprep.subr.mxu0 0.0
          %7961 = vmatpush2.msra.mxu0 0.0
          %7962 = vmatprep.subr.mxu0 0.0
          %7963 = vmatpush2.msra.mxu0 0.0
          %7964 = vmatprep.subr.mxu0 0.0
          %7965 = vmatpush2.msra.mxu0 0.0
          %7966 = vmatprep.subr.mxu0 0.0
          %7967 = vmatpush2.msra.mxu0 0.0
          %7968 = vmatprep.subr.mxu0 0.0
          %7969 = vmatpush2.msra.mxu0 0.0
          %7970 = vmatprep.mubr.f32.mxu0 0.0
          %7971 = vmatmul.mubr.f32.gmra.mxu0 %v7901
          %v7972 = vpop.f32.mrf.mxu0
          %v7973 = vadd.f32 0.0, %v7972
          %v7974 = vpop.f32.mrf.mxu0
          %7975 = vdwg.mxu0
          %v7977 = vsel %vm3666, %v7351, 0
          %7979 = vmatprep.subr.mxu0 0.0
          %7980 = vmatpush1.msra.mxu0 0.0
          %7981 = vmatprep.subr.mxu0 0.0
          %7982 = vmatpush1.msra.mxu0 0.0
          %7983 = vmatprep.subr.mxu0 0.0
          %7984 = vmatpush1.msra.mxu0 0.0
          %7985 = vmatprep.subr.mxu0 0.0
          %7986 = vmatpush1.msra.mxu0 0.0
          %7987 = vmatprep.subr.mxu0 0.0
          %7988 = vmatpush1.msra.mxu0 0.0
          %7989 = vmatprep.subr.mxu0 0.0
          %7990 = vmatpush1.msra.mxu0 0.0
          %7991 = vmatprep.subr.mxu0 0.0
          %7992 = vmatpush1.msra.mxu0 0.0
          %7993 = vmatprep.subr.mxu0 0.0
          %7994 = vmatpush1.msra.mxu0 0.0
          %7995 = vmatprep.subr.mxu0 0.0
          %7996 = vmatpush1.msra.mxu0 0.0
          %7997 = vmatprep.subr.mxu0 0.0
          %7998 = vmatpush1.msra.mxu0 0.0
          %7999 = vmatprep.subr.mxu0 0.0
          %8000 = vmatpush1.msra.mxu0 0.0
          %8001 = vmatprep.subr.mxu0 0.0
          %8002 = vmatpush1.msra.mxu0 0.0
          %8003 = vmatprep.subr.mxu0 0.0
          %8004 = vmatpush1.msra.mxu0 0.0
          %8005 = vmatprep.subr.mxu0 0.0
          %8006 = vmatpush1.msra.mxu0 %v7977
          %8007 = vmatprep.subr.mxu0 0.0
          %8008 = vmatpush1.msra.mxu0 %v7346
          %8009 = vmatprep.subr.mxu0 0.0
          %8010 = vmatpush1.msra.mxu0 %v7341
          %8011 = vmatprep.subr.mxu0 0.0
          %8012 = vmatpush2.msra.mxu0 0.0
          %8013 = vmatprep.subr.mxu0 0.0
          %8014 = vmatpush2.msra.mxu0 0.0
          %8015 = vmatprep.subr.mxu0 0.0
          %8016 = vmatpush2.msra.mxu0 0.0
          %8017 = vmatprep.subr.mxu0 0.0
          %8018 = vmatpush2.msra.mxu0 0.0
          %8019 = vmatprep.subr.mxu0 0.0
          %8020 = vmatpush2.msra.mxu0 0.0
          %8021 = vmatprep.subr.mxu0 0.0
          %8022 = vmatpush2.msra.mxu0 0.0
          %8023 = vmatprep.subr.mxu0 0.0
          %8024 = vmatpush2.msra.mxu0 0.0
          %8025 = vmatprep.subr.mxu0 0.0
          %8026 = vmatpush2.msra.mxu0 0.0
          %8027 = vmatprep.subr.mxu0 0.0
          %8028 = vmatpush2.msra.mxu0 0.0
          %8029 = vmatprep.subr.mxu0 0.0
          %8030 = vmatpush2.msra.mxu0 0.0
          %8031 = vmatprep.subr.mxu0 0.0
          %8032 = vmatpush2.msra.mxu0 0.0
          %8033 = vmatprep.subr.mxu0 0.0
          %8034 = vmatpush2.msra.mxu0 0.0
          %8035 = vmatprep.subr.mxu0 0.0
          %8036 = vmatpush2.msra.mxu0 0.0
          %8037 = vmatprep.subr.mxu0 0.0
          %8038 = vmatpush2.msra.mxu0 0.0
          %8039 = vmatprep.subr.mxu0 0.0
          %8040 = vmatpush2.msra.mxu0 0.0
          %8041 = vmatprep.subr.mxu0 0.0
          %8042 = vmatpush2.msra.mxu0 0.0
          %8043 = vmatprep.mubr.f32.mxu0 0.0
          %8044 = vmatmul.mubr.f32.gmra.mxu0 %v7901
          %v8045 = vpop.f32.mrf.mxu0
          %v8046 = vadd.f32 0.0, %v8045
          %v8047 = vpop.f32.mrf.mxu0
          %8048 = vdwg.mxu0
          %v8050 = vsel %vm3666, %v7442, 0
          %8052 = vmatprep.subr.mxu0 0.0
          %8053 = vmatpush1.msra.mxu0 0.0
          %8054 = vmatprep.subr.mxu0 0.0
          %8055 = vmatpush1.msra.mxu0 0.0
          %8056 = vmatprep.subr.mxu0 0.0
          %8057 = vmatpush1.msra.mxu0 0.0
          %8058 = vmatprep.subr.mxu0 0.0
          %8059 = vmatpush1.msra.mxu0 0.0
          %8060 = vmatprep.subr.mxu0 0.0
          %8061 = vmatpush1.msra.mxu0 0.0
          %8062 = vmatprep.subr.mxu0 0.0
          %8063 = vmatpush1.msra.mxu0 0.0
          %8064 = vmatprep.subr.mxu0 0.0
          %8065 = vmatpush1.msra.mxu0 0.0
          %8066 = vmatprep.subr.mxu0 0.0
          %8067 = vmatpush1.msra.mxu0 0.0
          %8068 = vmatprep.subr.mxu0 0.0
          %8069 = vmatpush1.msra.mxu0 0.0
          %8070 = vmatprep.subr.mxu0 0.0
          %8071 = vmatpush1.msra.mxu0 0.0
          %8072 = vmatprep.subr.mxu0 0.0
          %8073 = vmatpush1.msra.mxu0 0.0
          %8074 = vmatprep.subr.mxu0 0.0
          %8075 = vmatpush1.msra.mxu0 0.0
          %8076 = vmatprep.subr.mxu0 0.0
          %8077 = vmatpush1.msra.mxu0 0.0
          %8078 = vmatprep.subr.mxu0 0.0
          %8079 = vmatpush1.msra.mxu0 %v8050
          %8080 = vmatprep.subr.mxu0 0.0
          %8081 = vmatpush1.msra.mxu0 %v7437
          %8082 = vmatprep.subr.mxu0 0.0
          %8083 = vmatpush1.msra.mxu0 %v7432
          %8084 = vmatprep.subr.mxu0 0.0
          %8085 = vmatpush2.msra.mxu0 0.0
          %8086 = vmatprep.subr.mxu0 0.0
          %8087 = vmatpush2.msra.mxu0 0.0
          %8088 = vmatprep.subr.mxu0 0.0
          %8089 = vmatpush2.msra.mxu0 0.0
          %8090 = vmatprep.subr.mxu0 0.0
          %8091 = vmatpush2.msra.mxu0 0.0
          %8092 = vmatprep.subr.mxu0 0.0
          %8093 = vmatpush2.msra.mxu0 0.0
          %8094 = vmatprep.subr.mxu0 0.0
          %8095 = vmatpush2.msra.mxu0 0.0
          %8096 = vmatprep.subr.mxu0 0.0
          %8097 = vmatpush2.msra.mxu0 0.0
          %8098 = vmatprep.subr.mxu0 0.0
          %8099 = vmatpush2.msra.mxu0 0.0
          %8100 = vmatprep.subr.mxu0 0.0
          %8101 = vmatpush2.msra.mxu0 0.0
          %8102 = vmatprep.subr.mxu0 0.0
          %8103 = vmatpush2.msra.mxu0 0.0
          %8104 = vmatprep.subr.mxu0 0.0
          %8105 = vmatpush2.msra.mxu0 0.0
          %8106 = vmatprep.subr.mxu0 0.0
          %8107 = vmatpush2.msra.mxu0 0.0
          %8108 = vmatprep.subr.mxu0 0.0
          %8109 = vmatpush2.msra.mxu0 0.0
          %8110 = vmatprep.subr.mxu0 0.0
          %8111 = vmatpush2.msra.mxu0 0.0
          %8112 = vmatprep.subr.mxu0 0.0
          %8113 = vmatpush2.msra.mxu0 0.0
          %8114 = vmatprep.subr.mxu0 0.0
          %8115 = vmatpush2.msra.mxu0 0.0
          %8116 = vmatprep.mubr.f32.mxu0 0.0
          %8117 = vmatmul.mubr.f32.gmra.mxu0 %v7901
          %v8118 = vpop.f32.mrf.mxu0
          %v8119 = vadd.f32 0.0, %v8118
          %v8120 = vpop.f32.mrf.mxu0
          %8121 = vdwg.mxu0
          %v8123 = vsel %vm3666, %v7533, 0
          %8125 = vmatprep.subr.mxu0 0.0
          %8126 = vmatpush1.msra.mxu0 0.0
          %8127 = vmatprep.subr.mxu0 0.0
          %8128 = vmatpush1.msra.mxu0 0.0
          %8129 = vmatprep.subr.mxu0 0.0
          %8130 = vmatpush1.msra.mxu0 0.0
          %8131 = vmatprep.subr.mxu0 0.0
          %8132 = vmatpush1.msra.mxu0 0.0
          %8133 = vmatprep.subr.mxu0 0.0
          %8134 = vmatpush1.msra.mxu0 0.0
          %8135 = vmatprep.subr.mxu0 0.0
          %8136 = vmatpush1.msra.mxu0 0.0
          %8137 = vmatprep.subr.mxu0 0.0
          %8138 = vmatpush1.msra.mxu0 0.0
          %8139 = vmatprep.subr.mxu0 0.0
          %8140 = vmatpush1.msra.mxu0 0.0
          %8141 = vmatprep.subr.mxu0 0.0
          %8142 = vmatpush1.msra.mxu0 0.0
          %8143 = vmatprep.subr.mxu0 0.0
          %8144 = vmatpush1.msra.mxu0 0.0
          %8145 = vmatprep.subr.mxu0 0.0
          %8146 = vmatpush1.msra.mxu0 0.0
          %8147 = vmatprep.subr.mxu0 0.0
          %8148 = vmatpush1.msra.mxu0 0.0
          %8149 = vmatprep.subr.mxu0 0.0
          %8150 = vmatpush1.msra.mxu0 0.0
          %8151 = vmatprep.subr.mxu0 0.0
          %8152 = vmatpush1.msra.mxu0 %v8123
          %8153 = vmatprep.subr.mxu0 0.0
          %8154 = vmatpush1.msra.mxu0 %v7528
          %8155 = vmatprep.subr.mxu0 0.0
          %8156 = vmatpush1.msra.mxu0 %v7523
          %8157 = vmatprep.subr.mxu0 0.0
          %8158 = vmatpush2.msra.mxu0 0.0
          %8159 = vmatprep.subr.mxu0 0.0
          %8160 = vmatpush2.msra.mxu0 0.0
          %8161 = vmatprep.subr.mxu0 0.0
          %8162 = vmatpush2.msra.mxu0 0.0
          %8163 = vmatprep.subr.mxu0 0.0
          %8164 = vmatpush2.msra.mxu0 0.0
          %8165 = vmatprep.subr.mxu0 0.0
          %8166 = vmatpush2.msra.mxu0 0.0
          %8167 = vmatprep.subr.mxu0 0.0
          %8168 = vmatpush2.msra.mxu0 0.0
          %8169 = vmatprep.subr.mxu0 0.0
          %8170 = vmatpush2.msra.mxu0 0.0
          %8171 = vmatprep.subr.mxu0 0.0
          %8172 = vmatpush2.msra.mxu0 0.0
          %8173 = vmatprep.subr.mxu0 0.0
          %8174 = vmatpush2.msra.mxu0 0.0
          %8175 = vmatprep.subr.mxu0 0.0
          %8176 = vmatpush2.msra.mxu0 0.0
          %8177 = vmatprep.subr.mxu0 0.0
          %8178 = vmatpush2.msra.mxu0 0.0
          %8179 = vmatprep.subr.mxu0 0.0
          %8180 = vmatpush2.msra.mxu0 0.0
          %8181 = vmatprep.subr.mxu0 0.0
          %8182 = vmatpush2.msra.mxu0 0.0
          %8183 = vmatprep.subr.mxu0 0.0
          %8184 = vmatpush2.msra.mxu0 0.0
          %8185 = vmatprep.subr.mxu0 0.0
          %8186 = vmatpush2.msra.mxu0 0.0
          %8187 = vmatprep.subr.mxu0 0.0
          %8188 = vmatpush2.msra.mxu0 0.0
          %8189 = vmatprep.mubr.f32.mxu0 0.0
          %8190 = vmatmul.mubr.f32.gmra.mxu0 %v7901
          %v8191 = vpop.f32.mrf.mxu0
          %v8192 = vadd.f32 0.0, %v8191
          %v8193 = vpop.f32.mrf.mxu0
          %8194 = vdwg.mxu0
          %v8196 = vsel %vm3666, %v7624, 0
          %8198 = vmatprep.subr.mxu0 0.0
          %8199 = vmatpush1.msra.mxu0 0.0
          %8200 = vmatprep.subr.mxu0 0.0
          %8201 = vmatpush1.msra.mxu0 0.0
          %8202 = vmatprep.subr.mxu0 0.0
          %8203 = vmatpush1.msra.mxu0 0.0
          %8204 = vmatprep.subr.mxu0 0.0
          %8205 = vmatpush1.msra.mxu0 0.0
          %8206 = vmatprep.subr.mxu0 0.0
          %8207 = vmatpush1.msra.mxu0 0.0
          %8208 = vmatprep.subr.mxu0 0.0
          %8209 = vmatpush1.msra.mxu0 0.0
          %8210 = vmatprep.subr.mxu0 0.0
          %8211 = vmatpush1.msra.mxu0 0.0
          %8212 = vmatprep.subr.mxu0 0.0
          %8213 = vmatpush1.msra.mxu0 0.0
          %8214 = vmatprep.subr.mxu0 0.0
          %8215 = vmatpush1.msra.mxu0 0.0
          %8216 = vmatprep.subr.mxu0 0.0
          %8217 = vmatpush1.msra.mxu0 0.0
          %8218 = vmatprep.subr.mxu0 0.0
          %8219 = vmatpush1.msra.mxu0 0.0
          %8220 = vmatprep.subr.mxu0 0.0
          %8221 = vmatpush1.msra.mxu0 0.0
          %8222 = vmatprep.subr.mxu0 0.0
          %8223 = vmatpush1.msra.mxu0 0.0
          %8224 = vmatprep.subr.mxu0 0.0
          %8225 = vmatpush1.msra.mxu0 %v8196
          %8226 = vmatprep.subr.mxu0 0.0
          %8227 = vmatpush1.msra.mxu0 %v7619
          %8228 = vmatprep.subr.mxu0 0.0
          %8229 = vmatpush1.msra.mxu0 %v7614
          %8230 = vmatprep.subr.mxu0 0.0
          %8231 = vmatpush2.msra.mxu0 0.0
          %8232 = vmatprep.subr.mxu0 0.0
          %8233 = vmatpush2.msra.mxu0 0.0
          %8234 = vmatprep.subr.mxu0 0.0
          %8235 = vmatpush2.msra.mxu0 0.0
          %8236 = vmatprep.subr.mxu0 0.0
          %8237 = vmatpush2.msra.mxu0 0.0
          %8238 = vmatprep.subr.mxu0 0.0
          %8239 = vmatpush2.msra.mxu0 0.0
          %8240 = vmatprep.subr.mxu0 0.0
          %8241 = vmatpush2.msra.mxu0 0.0
          %8242 = vmatprep.subr.mxu0 0.0
          %8243 = vmatpush2.msra.mxu0 0.0
          %8244 = vmatprep.subr.mxu0 0.0
          %8245 = vmatpush2.msra.mxu0 0.0
          %8246 = vmatprep.subr.mxu0 0.0
          %8247 = vmatpush2.msra.mxu0 0.0
          %8248 = vmatprep.subr.mxu0 0.0
          %8249 = vmatpush2.msra.mxu0 0.0
          %8250 = vmatprep.subr.mxu0 0.0
          %8251 = vmatpush2.msra.mxu0 0.0
          %8252 = vmatprep.subr.mxu0 0.0
          %8253 = vmatpush2.msra.mxu0 0.0
          %8254 = vmatprep.subr.mxu0 0.0
          %8255 = vmatpush2.msra.mxu0 0.0
          %8256 = vmatprep.subr.mxu0 0.0
          %8257 = vmatpush2.msra.mxu0 0.0
          %8258 = vmatprep.subr.mxu0 0.0
          %8259 = vmatpush2.msra.mxu0 0.0
          %8260 = vmatprep.subr.mxu0 0.0
          %8261 = vmatpush2.msra.mxu0 0.0
          %8262 = vmatprep.mubr.f32.mxu0 0.0
          %8263 = vmatmul.mubr.f32.gmra.mxu0 %v7901
          %v8264 = vpop.f32.mrf.mxu0
          %v8265 = vadd.f32 0.0, %v8264
          %v8266 = vpop.f32.mrf.mxu0
          %8267 = vdwg.mxu0
          %v8269 = vsel %vm3666, %v7715, 0
          %8271 = vmatprep.subr.mxu0 0.0
          %8272 = vmatpush1.msra.mxu0 0.0
          %8273 = vmatprep.subr.mxu0 0.0
          %8274 = vmatpush1.msra.mxu0 0.0
          %8275 = vmatprep.subr.mxu0 0.0
          %8276 = vmatpush1.msra.mxu0 0.0
          %8277 = vmatprep.subr.mxu0 0.0
          %8278 = vmatpush1.msra.mxu0 0.0
          %8279 = vmatprep.subr.mxu0 0.0
          %8280 = vmatpush1.msra.mxu0 0.0
          %8281 = vmatprep.subr.mxu0 0.0
          %8282 = vmatpush1.msra.mxu0 0.0
          %8283 = vmatprep.subr.mxu0 0.0
          %8284 = vmatpush1.msra.mxu0 0.0
          %8285 = vmatprep.subr.mxu0 0.0
          %8286 = vmatpush1.msra.mxu0 0.0
          %8287 = vmatprep.subr.mxu0 0.0
          %8288 = vmatpush1.msra.mxu0 0.0
          %8289 = vmatprep.subr.mxu0 0.0
          %8290 = vmatpush1.msra.mxu0 0.0
          %8291 = vmatprep.subr.mxu0 0.0
          %8292 = vmatpush1.msra.mxu0 0.0
          %8293 = vmatprep.subr.mxu0 0.0
          %8294 = vmatpush1.msra.mxu0 0.0
          %8295 = vmatprep.subr.mxu0 0.0
          %8296 = vmatpush1.msra.mxu0 0.0
          %8297 = vmatprep.subr.mxu0 0.0
          %8298 = vmatpush1.msra.mxu0 %v8269
          %8299 = vmatprep.subr.mxu0 0.0
          %8300 = vmatpush1.msra.mxu0 %v7710
          %8301 = vmatprep.subr.mxu0 0.0
          %8302 = vmatpush1.msra.mxu0 %v7705
          %8303 = vmatprep.subr.mxu0 0.0
          %8304 = vmatpush2.msra.mxu0 0.0
          %8305 = vmatprep.subr.mxu0 0.0
          %8306 = vmatpush2.msra.mxu0 0.0
          %8307 = vmatprep.subr.mxu0 0.0
          %8308 = vmatpush2.msra.mxu0 0.0
          %8309 = vmatprep.subr.mxu0 0.0
          %8310 = vmatpush2.msra.mxu0 0.0
          %8311 = vmatprep.subr.mxu0 0.0
          %8312 = vmatpush2.msra.mxu0 0.0
          %8313 = vmatprep.subr.mxu0 0.0
          %8314 = vmatpush2.msra.mxu0 0.0
          %8315 = vmatprep.subr.mxu0 0.0
          %8316 = vmatpush2.msra.mxu0 0.0
          %8317 = vmatprep.subr.mxu0 0.0
          %8318 = vmatpush2.msra.mxu0 0.0
          %8319 = vmatprep.subr.mxu0 0.0
          %8320 = vmatpush2.msra.mxu0 0.0
          %8321 = vmatprep.subr.mxu0 0.0
          %8322 = vmatpush2.msra.mxu0 0.0
          %8323 = vmatprep.subr.mxu0 0.0
          %8324 = vmatpush2.msra.mxu0 0.0
          %8325 = vmatprep.subr.mxu0 0.0
          %8326 = vmatpush2.msra.mxu0 0.0
          %8327 = vmatprep.subr.mxu0 0.0
          %8328 = vmatpush2.msra.mxu0 0.0
          %8329 = vmatprep.subr.mxu0 0.0
          %8330 = vmatpush2.msra.mxu0 0.0
          %8331 = vmatprep.subr.mxu0 0.0
          %8332 = vmatpush2.msra.mxu0 0.0
          %8333 = vmatprep.subr.mxu0 0.0
          %8334 = vmatpush2.msra.mxu0 0.0
          %8335 = vmatprep.mubr.f32.mxu0 0.0
          %8336 = vmatmul.mubr.f32.gmra.mxu0 %v7901
          %v8337 = vpop.f32.mrf.mxu0
          %v8338 = vadd.f32 0.0, %v8337
          %v8339 = vpop.f32.mrf.mxu0
          %8340 = vdwg.mxu0
          %v8342 = vsel %vm3666, %v7806, 0
          %8344 = vmatprep.subr.mxu0 0.0
          %8345 = vmatpush1.msra.mxu0 0.0
          %8346 = vmatprep.subr.mxu0 0.0
          %8347 = vmatpush1.msra.mxu0 0.0
          %8348 = vmatprep.subr.mxu0 0.0
          %8349 = vmatpush1.msra.mxu0 0.0
          %8350 = vmatprep.subr.mxu0 0.0
          %8351 = vmatpush1.msra.mxu0 0.0
          %8352 = vmatprep.subr.mxu0 0.0
          %8353 = vmatpush1.msra.mxu0 0.0
          %8354 = vmatprep.subr.mxu0 0.0
          %8355 = vmatpush1.msra.mxu0 0.0
          %8356 = vmatprep.subr.mxu0 0.0
          %8357 = vmatpush1.msra.mxu0 0.0
          %8358 = vmatprep.subr.mxu0 0.0
          %8359 = vmatpush1.msra.mxu0 0.0
          %8360 = vmatprep.subr.mxu0 0.0
          %8361 = vmatpush1.msra.mxu0 0.0
          %8362 = vmatprep.subr.mxu0 0.0
          %8363 = vmatpush1.msra.mxu0 0.0
          %8364 = vmatprep.subr.mxu0 0.0
          %8365 = vmatpush1.msra.mxu0 0.0
          %8366 = vmatprep.subr.mxu0 0.0
          %8367 = vmatpush1.msra.mxu0 0.0
          %8368 = vmatprep.subr.mxu0 0.0
          %8369 = vmatpush1.msra.mxu0 0.0
          %8370 = vmatprep.subr.mxu0 0.0
          %8371 = vmatpush1.msra.mxu0 %v8342
          %8372 = vmatprep.subr.mxu0 0.0
          %8373 = vmatpush1.msra.mxu0 %v7801
          %8374 = vmatprep.subr.mxu0 0.0
          %8375 = vmatpush1.msra.mxu0 %v7796
          %8376 = vmatprep.subr.mxu0 0.0
          %8377 = vmatpush2.msra.mxu0 0.0
          %8378 = vmatprep.subr.mxu0 0.0
          %8379 = vmatpush2.msra.mxu0 0.0
          %8380 = vmatprep.subr.mxu0 0.0
          %8381 = vmatpush2.msra.mxu0 0.0
          %8382 = vmatprep.subr.mxu0 0.0
          %8383 = vmatpush2.msra.mxu0 0.0
          %8384 = vmatprep.subr.mxu0 0.0
          %8385 = vmatpush2.msra.mxu0 0.0
          %8386 = vmatprep.subr.mxu0 0.0
          %8387 = vmatpush2.msra.mxu0 0.0
          %8388 = vmatprep.subr.mxu0 0.0
          %8389 = vmatpush2.msra.mxu0 0.0
          %8390 = vmatprep.subr.mxu0 0.0
          %8391 = vmatpush2.msra.mxu0 0.0
          %8392 = vmatprep.subr.mxu0 0.0
          %8393 = vmatpush2.msra.mxu0 0.0
          %8394 = vmatprep.subr.mxu0 0.0
          %8395 = vmatpush2.msra.mxu0 0.0
          %8396 = vmatprep.subr.mxu0 0.0
          %8397 = vmatpush2.msra.mxu0 0.0
          %8398 = vmatprep.subr.mxu0 0.0
          %8399 = vmatpush2.msra.mxu0 0.0
          %8400 = vmatprep.subr.mxu0 0.0
          %8401 = vmatpush2.msra.mxu0 0.0
          %8402 = vmatprep.subr.mxu0 0.0
          %8403 = vmatpush2.msra.mxu0 0.0
          %8404 = vmatprep.subr.mxu0 0.0
          %8405 = vmatpush2.msra.mxu0 0.0
          %8406 = vmatprep.subr.mxu0 0.0
          %8407 = vmatpush2.msra.mxu0 0.0
          %8408 = vmatprep.mubr.f32.mxu0 0.0
          %8409 = vmatmul.mubr.f32.gmra.mxu0 %v7901
          %v8410 = vpop.f32.mrf.mxu0
          %v8411 = vadd.f32 0.0, %v8410
          %v8412 = vpop.f32.mrf.mxu0
          %8413 = vdwg.mxu0
          %v8415 = vsel %vm3666, %v7897, 0
          %8417 = vmatprep.subr.mxu0 0.0
          %8418 = vmatpush1.msra.mxu0 0.0
          %8419 = vmatprep.subr.mxu0 0.0
          %8420 = vmatpush1.msra.mxu0 0.0
          %8421 = vmatprep.subr.mxu0 0.0
          %8422 = vmatpush1.msra.mxu0 0.0
          %8423 = vmatprep.subr.mxu0 0.0
          %8424 = vmatpush1.msra.mxu0 0.0
          %8425 = vmatprep.subr.mxu0 0.0
          %8426 = vmatpush1.msra.mxu0 0.0
          %8427 = vmatprep.subr.mxu0 0.0
          %8428 = vmatpush1.msra.mxu0 0.0
          %8429 = vmatprep.subr.mxu0 0.0
          %8430 = vmatpush1.msra.mxu0 0.0
          %8431 = vmatprep.subr.mxu0 0.0
          %8432 = vmatpush1.msra.mxu0 0.0
          %8433 = vmatprep.subr.mxu0 0.0
          %8434 = vmatpush1.msra.mxu0 0.0
          %8435 = vmatprep.subr.mxu0 0.0
          %8436 = vmatpush1.msra.mxu0 0.0
          %8437 = vmatprep.subr.mxu0 0.0
          %8438 = vmatpush1.msra.mxu0 0.0
          %8439 = vmatprep.subr.mxu0 0.0
          %8440 = vmatpush1.msra.mxu0 0.0
          %8441 = vmatprep.subr.mxu0 0.0
          %8442 = vmatpush1.msra.mxu0 0.0
          %8443 = vmatprep.subr.mxu0 0.0
          %8444 = vmatpush1.msra.mxu0 %v8415
          %8445 = vmatprep.subr.mxu0 0.0
          %8446 = vmatpush1.msra.mxu0 %v7892
          %8447 = vmatprep.subr.mxu0 0.0
          %8448 = vmatpush1.msra.mxu0 %v7887
          %8449 = vmatprep.subr.mxu0 0.0
          %8450 = vmatpush2.msra.mxu0 0.0
          %8451 = vmatprep.subr.mxu0 0.0
          %8452 = vmatpush2.msra.mxu0 0.0
          %8453 = vmatprep.subr.mxu0 0.0
          %8454 = vmatpush2.msra.mxu0 0.0
          %8455 = vmatprep.subr.mxu0 0.0
          %8456 = vmatpush2.msra.mxu0 0.0
          %8457 = vmatprep.subr.mxu0 0.0
          %8458 = vmatpush2.msra.mxu0 0.0
          %8459 = vmatprep.subr.mxu0 0.0
          %8460 = vmatpush2.msra.mxu0 0.0
          %8461 = vmatprep.subr.mxu0 0.0
          %8462 = vmatpush2.msra.mxu0 0.0
          %8463 = vmatprep.subr.mxu0 0.0
          %8464 = vmatpush2.msra.mxu0 0.0
          %8465 = vmatprep.subr.mxu0 0.0
          %8466 = vmatpush2.msra.mxu0 0.0
          %8467 = vmatprep.subr.mxu0 0.0
          %8468 = vmatpush2.msra.mxu0 0.0
          %8469 = vmatprep.subr.mxu0 0.0
          %8470 = vmatpush2.msra.mxu0 0.0
          %8471 = vmatprep.subr.mxu0 0.0
          %8472 = vmatpush2.msra.mxu0 0.0
          %8473 = vmatprep.subr.mxu0 0.0
          %8474 = vmatpush2.msra.mxu0 0.0
          %8475 = vmatprep.subr.mxu0 0.0
          %8476 = vmatpush2.msra.mxu0 0.0
          %8477 = vmatprep.subr.mxu0 0.0
          %8478 = vmatpush2.msra.mxu0 0.0
          %8479 = vmatprep.subr.mxu0 0.0
          %8480 = vmatpush2.msra.mxu0 0.0
          %8481 = vmatprep.mubr.f32.mxu0 0.0
          %8482 = vmatmul.mubr.f32.gmra.mxu0 %v7901
          %v8483 = vpop.f32.mrf.mxu0
          %v8484 = vadd.f32 0.0, %v8483
          %v8485 = vpop.f32.mrf.mxu0
          %8486 = vdwg.mxu0
          %v8487 = vmul.f32 %v7973, %v7973
          %v8488 = vmul.f32 %v8046, %v8046
          %v8489 = vmul.f32 %v8119, %v8119
          %v8490 = vmul.f32 %v8192, %v8192
          %v8491 = vmul.f32 %v8265, %v8265
          %v8492 = vmul.f32 %v8338, %v8338
          %v8493 = vmul.f32 %v8411, %v8411
          %v8494 = vmul.f32 %v8484, %v8484
          %v8495 = vsel %vm3385, %v8487, 0.0
          %8496 = vadd.xlane.f32.xlu0 %v8495
          %v8497 = vpop.xlane.xlu0 %8496
          %v8498 = vsel %vm3385, %v8488, 0.0
          %8499 = vadd.xlane.f32.xlu0 %v8498
          %v8500 = vpop.xlane.xlu0 %8499
          %v8501 = vsel %vm3385, %v8489, 0.0
          %8502 = vadd.xlane.f32.xlu0 %v8501
          %v8503 = vpop.xlane.xlu0 %8502
          %v8504 = vsel %vm3385, %v8490, 0.0
          %8505 = vadd.xlane.f32.xlu0 %v8504
          %v8506 = vpop.xlane.xlu0 %8505
          %v8507 = vsel %vm3385, %v8491, 0.0
          %8508 = vadd.xlane.f32.xlu0 %v8507
          %v8509 = vpop.xlane.xlu0 %8508
          %v8510 = vsel %vm3385, %v8492, 0.0
          %8511 = vadd.xlane.f32.xlu0 %v8510
          %v8512 = vpop.xlane.xlu0 %8511
          %v8513 = vsel %vm3385, %v8493, 0.0
          %8514 = vadd.xlane.f32.xlu0 %v8513
          %v8515 = vpop.xlane.xlu0 %8514
          %v8516 = vsel %vm3385, %v8494, 0.0
          %8517 = vadd.xlane.f32.xlu0 %v8516
          %v8518 = vpop.xlane.xlu0 %8517
          %v8519 = vadd.f32 %v8497, 1e-30
          %v8520 = vadd.f32 %v8500, 1e-30
          %v8521 = vadd.f32 %v8503, 1e-30
          %v8522 = vadd.f32 %v8506, 1e-30
          %v8523 = vadd.f32 %v8509, 1e-30
          %v8524 = vadd.f32 %v8512, 1e-30
          %v8525 = vadd.f32 %v8515, 1e-30
          %v8526 = vadd.f32 %v8518, 1e-30
          %v8527 = vrsqrt.pop %v8519
          %v8528 = vrsqrt.pop %v8520
          %v8529 = vrsqrt.pop %v8521
          %v8530 = vrsqrt.pop %v8522
          %v8531 = vrsqrt.pop %v8523
          %v8532 = vrsqrt.pop %v8524
          %v8533 = vrsqrt.pop %v8525
          %v8534 = vrsqrt.pop %v8526
          %v8535 = vmul.f32 %v7973, %v8527
          %v8536 = vmul.f32 %v8046, %v8528
          %v8537 = vmul.f32 %v8119, %v8529
          %v8538 = vmul.f32 %v8192, %v8530
          %v8539 = vmul.f32 %v8265, %v8531
          %v8540 = vmul.f32 %v8338, %v8532
          %v8541 = vmul.f32 %v8411, %v8533
          %v8542 = vmul.f32 %v8484, %v8534
          %v8544 = vsel %vm3378, %v8535, 0
          %8546 = vmatprep.subr.mxu0 0.0
          %8547 = vmatpush1.msra.mxu0 0.0
          %8548 = vmatprep.subr.mxu0 0.0
          %8549 = vmatpush1.msra.mxu0 0.0
          %8550 = vmatprep.subr.mxu0 0.0
          %8551 = vmatpush1.msra.mxu0 0.0
          %8552 = vmatprep.subr.mxu0 0.0
          %8553 = vmatpush1.msra.mxu0 0.0
          %8554 = vmatprep.subr.mxu0 0.0
          %8555 = vmatpush1.msra.mxu0 0.0
          %8556 = vmatprep.subr.mxu0 0.0
          %8557 = vmatpush1.msra.mxu0 0.0
          %8558 = vmatprep.subr.mxu0 0.0
          %8559 = vmatpush1.msra.mxu0 0.0
          %8560 = vmatprep.subr.mxu0 0.0
          %8561 = vmatpush1.msra.mxu0 0.0
          %8562 = vmatprep.subr.mxu0 0.0
          %8563 = vmatpush1.msra.mxu0 0.0
          %8564 = vmatprep.subr.mxu0 0.0
          %8565 = vmatpush1.msra.mxu0 0.0
          %8566 = vmatprep.subr.mxu0 0.0
          %8567 = vmatpush1.msra.mxu0 0.0
          %8568 = vmatprep.subr.mxu0 0.0
          %8569 = vmatpush1.msra.mxu0 0.0
          %8570 = vmatprep.subr.mxu0 0.0
          %8571 = vmatpush1.msra.mxu0 0.0
          %8572 = vmatprep.subr.mxu0 0.0
          %8573 = vmatpush1.msra.mxu0 %v7904
          %8574 = vmatprep.subr.mxu0 0.0
          %8575 = vmatpush1.msra.mxu0 %v7255
          %8576 = vmatprep.subr.mxu0 0.0
          %8577 = vmatpush1.msra.mxu0 %v7250
          %8578 = vmatprep.subr.mxu0 0.0
          %8579 = vmatpush2.msra.mxu0 0.0
          %8580 = vmatprep.subr.mxu0 0.0
          %8581 = vmatpush2.msra.mxu0 0.0
          %8582 = vmatprep.subr.mxu0 0.0
          %8583 = vmatpush2.msra.mxu0 0.0
          %8584 = vmatprep.subr.mxu0 0.0
          %8585 = vmatpush2.msra.mxu0 0.0
          %8586 = vmatprep.subr.mxu0 0.0
          %8587 = vmatpush2.msra.mxu0 0.0
          %8588 = vmatprep.subr.mxu0 0.0
          %8589 = vmatpush2.msra.mxu0 0.0
          %8590 = vmatprep.subr.mxu0 0.0
          %8591 = vmatpush2.msra.mxu0 0.0
          %8592 = vmatprep.subr.mxu0 0.0
          %8593 = vmatpush2.msra.mxu0 0.0
          %8594 = vmatprep.subr.mxu0 0.0
          %8595 = vmatpush2.msra.mxu0 0.0
          %8596 = vmatprep.subr.mxu0 0.0
          %8597 = vmatpush2.msra.mxu0 0.0
          %8598 = vmatprep.subr.mxu0 0.0
          %8599 = vmatpush2.msra.mxu0 0.0
          %8600 = vmatprep.subr.mxu0 0.0
          %8601 = vmatpush2.msra.mxu0 0.0
          %8602 = vmatprep.subr.mxu0 0.0
          %8603 = vmatpush2.msra.mxu0 0.0
          %8604 = vmatprep.subr.mxu0 0.0
          %8605 = vmatpush2.msra.mxu0 0.0
          %8606 = vmatprep.subr.mxu0 0.0
          %8607 = vmatpush2.msra.mxu0 0.0
          %8608 = vmatprep.subr.mxu0 0.0
          %8609 = vmatpush2.msra.mxu0 0.0
          %8610 = vmatprep.mubr.f32.mxu0 0.0
          %8611 = vmatmul.mubr.f32.gmra.mxu0 %v8544
          %v8612 = vpop.f32.mrf.mxu0
          %v8613 = vadd.f32 0.0, %v8612
          %v8614 = vpop.f32.mrf.mxu0
          %8615 = vdwg.mxu0
          %v8617 = vsel %vm3378, %v8536, 0
          %8619 = vmatprep.subr.mxu0 0.0
          %8620 = vmatpush1.msra.mxu0 0.0
          %8621 = vmatprep.subr.mxu0 0.0
          %8622 = vmatpush1.msra.mxu0 0.0
          %8623 = vmatprep.subr.mxu0 0.0
          %8624 = vmatpush1.msra.mxu0 0.0
          %8625 = vmatprep.subr.mxu0 0.0
          %8626 = vmatpush1.msra.mxu0 0.0
          %8627 = vmatprep.subr.mxu0 0.0
          %8628 = vmatpush1.msra.mxu0 0.0
          %8629 = vmatprep.subr.mxu0 0.0
          %8630 = vmatpush1.msra.mxu0 0.0
          %8631 = vmatprep.subr.mxu0 0.0
          %8632 = vmatpush1.msra.mxu0 0.0
          %8633 = vmatprep.subr.mxu0 0.0
          %8634 = vmatpush1.msra.mxu0 0.0
          %8635 = vmatprep.subr.mxu0 0.0
          %8636 = vmatpush1.msra.mxu0 0.0
          %8637 = vmatprep.subr.mxu0 0.0
          %8638 = vmatpush1.msra.mxu0 0.0
          %8639 = vmatprep.subr.mxu0 0.0
          %8640 = vmatpush1.msra.mxu0 0.0
          %8641 = vmatprep.subr.mxu0 0.0
          %8642 = vmatpush1.msra.mxu0 0.0
          %8643 = vmatprep.subr.mxu0 0.0
          %8644 = vmatpush1.msra.mxu0 0.0
          %8645 = vmatprep.subr.mxu0 0.0
          %8646 = vmatpush1.msra.mxu0 %v7977
          %8647 = vmatprep.subr.mxu0 0.0
          %8648 = vmatpush1.msra.mxu0 %v7346
          %8649 = vmatprep.subr.mxu0 0.0
          %8650 = vmatpush1.msra.mxu0 %v7341
          %8651 = vmatprep.subr.mxu0 0.0
          %8652 = vmatpush2.msra.mxu0 0.0
          %8653 = vmatprep.subr.mxu0 0.0
          %8654 = vmatpush2.msra.mxu0 0.0
          %8655 = vmatprep.subr.mxu0 0.0
          %8656 = vmatpush2.msra.mxu0 0.0
          %8657 = vmatprep.subr.mxu0 0.0
          %8658 = vmatpush2.msra.mxu0 0.0
          %8659 = vmatprep.subr.mxu0 0.0
          %8660 = vmatpush2.msra.mxu0 0.0
          %8661 = vmatprep.subr.mxu0 0.0
          %8662 = vmatpush2.msra.mxu0 0.0
          %8663 = vmatprep.subr.mxu0 0.0
          %8664 = vmatpush2.msra.mxu0 0.0
          %8665 = vmatprep.subr.mxu0 0.0
          %8666 = vmatpush2.msra.mxu0 0.0
          %8667 = vmatprep.subr.mxu0 0.0
          %8668 = vmatpush2.msra.mxu0 0.0
          %8669 = vmatprep.subr.mxu0 0.0
          %8670 = vmatpush2.msra.mxu0 0.0
          %8671 = vmatprep.subr.mxu0 0.0
          %8672 = vmatpush2.msra.mxu0 0.0
          %8673 = vmatprep.subr.mxu0 0.0
          %8674 = vmatpush2.msra.mxu0 0.0
          %8675 = vmatprep.subr.mxu0 0.0
          %8676 = vmatpush2.msra.mxu0 0.0
          %8677 = vmatprep.subr.mxu0 0.0
          %8678 = vmatpush2.msra.mxu0 0.0
          %8679 = vmatprep.subr.mxu0 0.0
          %8680 = vmatpush2.msra.mxu0 0.0
          %8681 = vmatprep.subr.mxu0 0.0
          %8682 = vmatpush2.msra.mxu0 0.0
          %8683 = vmatprep.mubr.f32.mxu0 0.0
          %8684 = vmatmul.mubr.f32.gmra.mxu0 %v8617
          %v8685 = vpop.f32.mrf.mxu0
          %v8686 = vadd.f32 0.0, %v8685
          %v8687 = vpop.f32.mrf.mxu0
          %8688 = vdwg.mxu0
          %v8690 = vsel %vm3378, %v8537, 0
          %8692 = vmatprep.subr.mxu0 0.0
          %8693 = vmatpush1.msra.mxu0 0.0
          %8694 = vmatprep.subr.mxu0 0.0
          %8695 = vmatpush1.msra.mxu0 0.0
          %8696 = vmatprep.subr.mxu0 0.0
          %8697 = vmatpush1.msra.mxu0 0.0
          %8698 = vmatprep.subr.mxu0 0.0
          %8699 = vmatpush1.msra.mxu0 0.0
          %8700 = vmatprep.subr.mxu0 0.0
          %8701 = vmatpush1.msra.mxu0 0.0
          %8702 = vmatprep.subr.mxu0 0.0
          %8703 = vmatpush1.msra.mxu0 0.0
          %8704 = vmatprep.subr.mxu0 0.0
          %8705 = vmatpush1.msra.mxu0 0.0
          %8706 = vmatprep.subr.mxu0 0.0
          %8707 = vmatpush1.msra.mxu0 0.0
          %8708 = vmatprep.subr.mxu0 0.0
          %8709 = vmatpush1.msra.mxu0 0.0
          %8710 = vmatprep.subr.mxu0 0.0
          %8711 = vmatpush1.msra.mxu0 0.0
          %8712 = vmatprep.subr.mxu0 0.0
          %8713 = vmatpush1.msra.mxu0 0.0
          %8714 = vmatprep.subr.mxu0 0.0
          %8715 = vmatpush1.msra.mxu0 0.0
          %8716 = vmatprep.subr.mxu0 0.0
          %8717 = vmatpush1.msra.mxu0 0.0
          %8718 = vmatprep.subr.mxu0 0.0
          %8719 = vmatpush1.msra.mxu0 %v8050
          %8720 = vmatprep.subr.mxu0 0.0
          %8721 = vmatpush1.msra.mxu0 %v7437
          %8722 = vmatprep.subr.mxu0 0.0
          %8723 = vmatpush1.msra.mxu0 %v7432
          %8724 = vmatprep.subr.mxu0 0.0
          %8725 = vmatpush2.msra.mxu0 0.0
          %8726 = vmatprep.subr.mxu0 0.0
          %8727 = vmatpush2.msra.mxu0 0.0
          %8728 = vmatprep.subr.mxu0 0.0
          %8729 = vmatpush2.msra.mxu0 0.0
          %8730 = vmatprep.subr.mxu0 0.0
          %8731 = vmatpush2.msra.mxu0 0.0
          %8732 = vmatprep.subr.mxu0 0.0
          %8733 = vmatpush2.msra.mxu0 0.0
          %8734 = vmatprep.subr.mxu0 0.0
          %8735 = vmatpush2.msra.mxu0 0.0
          %8736 = vmatprep.subr.mxu0 0.0
          %8737 = vmatpush2.msra.mxu0 0.0
          %8738 = vmatprep.subr.mxu0 0.0
          %8739 = vmatpush2.msra.mxu0 0.0
          %8740 = vmatprep.subr.mxu0 0.0
          %8741 = vmatpush2.msra.mxu0 0.0
          %8742 = vmatprep.subr.mxu0 0.0
          %8743 = vmatpush2.msra.mxu0 0.0
          %8744 = vmatprep.subr.mxu0 0.0
          %8745 = vmatpush2.msra.mxu0 0.0
          %8746 = vmatprep.subr.mxu0 0.0
          %8747 = vmatpush2.msra.mxu0 0.0
          %8748 = vmatprep.subr.mxu0 0.0
          %8749 = vmatpush2.msra.mxu0 0.0
          %8750 = vmatprep.subr.mxu0 0.0
          %8751 = vmatpush2.msra.mxu0 0.0
          %8752 = vmatprep.subr.mxu0 0.0
          %8753 = vmatpush2.msra.mxu0 0.0
          %8754 = vmatprep.subr.mxu0 0.0
          %8755 = vmatpush2.msra.mxu0 0.0
          %8756 = vmatprep.mubr.f32.mxu0 0.0
          %8757 = vmatmul.mubr.f32.gmra.mxu0 %v8690
          %v8758 = vpop.f32.mrf.mxu0
          %v8759 = vadd.f32 0.0, %v8758
          %v8760 = vpop.f32.mrf.mxu0
          %8761 = vdwg.mxu0
          %v8763 = vsel %vm3378, %v8538, 0
          %8765 = vmatprep.subr.mxu0 0.0
          %8766 = vmatpush1.msra.mxu0 0.0
          %8767 = vmatprep.subr.mxu0 0.0
          %8768 = vmatpush1.msra.mxu0 0.0
          %8769 = vmatprep.subr.mxu0 0.0
          %8770 = vmatpush1.msra.mxu0 0.0
          %8771 = vmatprep.subr.mxu0 0.0
          %8772 = vmatpush1.msra.mxu0 0.0
          %8773 = vmatprep.subr.mxu0 0.0
          %8774 = vmatpush1.msra.mxu0 0.0
          %8775 = vmatprep.subr.mxu0 0.0
          %8776 = vmatpush1.msra.mxu0 0.0
          %8777 = vmatprep.subr.mxu0 0.0
          %8778 = vmatpush1.msra.mxu0 0.0
          %8779 = vmatprep.subr.mxu0 0.0
          %8780 = vmatpush1.msra.mxu0 0.0
          %8781 = vmatprep.subr.mxu0 0.0
          %8782 = vmatpush1.msra.mxu0 0.0
          %8783 = vmatprep.subr.mxu0 0.0
          %8784 = vmatpush1.msra.mxu0 0.0
          %8785 = vmatprep.subr.mxu0 0.0
          %8786 = vmatpush1.msra.mxu0 0.0
          %8787 = vmatprep.subr.mxu0 0.0
          %8788 = vmatpush1.msra.mxu0 0.0
          %8789 = vmatprep.subr.mxu0 0.0
          %8790 = vmatpush1.msra.mxu0 0.0
          %8791 = vmatprep.subr.mxu0 0.0
          %8792 = vmatpush1.msra.mxu0 %v8123
          %8793 = vmatprep.subr.mxu0 0.0
          %8794 = vmatpush1.msra.mxu0 %v7528
          %8795 = vmatprep.subr.mxu0 0.0
          %8796 = vmatpush1.msra.mxu0 %v7523
          %8797 = vmatprep.subr.mxu0 0.0
          %8798 = vmatpush2.msra.mxu0 0.0
          %8799 = vmatprep.subr.mxu0 0.0
          %8800 = vmatpush2.msra.mxu0 0.0
          %8801 = vmatprep.subr.mxu0 0.0
          %8802 = vmatpush2.msra.mxu0 0.0
          %8803 = vmatprep.subr.mxu0 0.0
          %8804 = vmatpush2.msra.mxu0 0.0
          %8805 = vmatprep.subr.mxu0 0.0
          %8806 = vmatpush2.msra.mxu0 0.0
          %8807 = vmatprep.subr.mxu0 0.0
          %8808 = vmatpush2.msra.mxu0 0.0
          %8809 = vmatprep.subr.mxu0 0.0
          %8810 = vmatpush2.msra.mxu0 0.0
          %8811 = vmatprep.subr.mxu0 0.0
          %8812 = vmatpush2.msra.mxu0 0.0
          %8813 = vmatprep.subr.mxu0 0.0
          %8814 = vmatpush2.msra.mxu0 0.0
          %8815 = vmatprep.subr.mxu0 0.0
          %8816 = vmatpush2.msra.mxu0 0.0
          %8817 = vmatprep.subr.mxu0 0.0
          %8818 = vmatpush2.msra.mxu0 0.0
          %8819 = vmatprep.subr.mxu0 0.0
          %8820 = vmatpush2.msra.mxu0 0.0
          %8821 = vmatprep.subr.mxu0 0.0
          %8822 = vmatpush2.msra.mxu0 0.0
          %8823 = vmatprep.subr.mxu0 0.0
          %8824 = vmatpush2.msra.mxu0 0.0
          %8825 = vmatprep.subr.mxu0 0.0
          %8826 = vmatpush2.msra.mxu0 0.0
          %8827 = vmatprep.subr.mxu0 0.0
          %8828 = vmatpush2.msra.mxu0 0.0
          %8829 = vmatprep.mubr.f32.mxu0 0.0
          %8830 = vmatmul.mubr.f32.gmra.mxu0 %v8763
          %v8831 = vpop.f32.mrf.mxu0
          %v8832 = vadd.f32 0.0, %v8831
          %v8833 = vpop.f32.mrf.mxu0
          %8834 = vdwg.mxu0
          %v8836 = vsel %vm3378, %v8539, 0
          %8838 = vmatprep.subr.mxu0 0.0
          %8839 = vmatpush1.msra.mxu0 0.0
          %8840 = vmatprep.subr.mxu0 0.0
          %8841 = vmatpush1.msra.mxu0 0.0
          %8842 = vmatprep.subr.mxu0 0.0
          %8843 = vmatpush1.msra.mxu0 0.0
          %8844 = vmatprep.subr.mxu0 0.0
          %8845 = vmatpush1.msra.mxu0 0.0
          %8846 = vmatprep.subr.mxu0 0.0
          %8847 = vmatpush1.msra.mxu0 0.0
          %8848 = vmatprep.subr.mxu0 0.0
          %8849 = vmatpush1.msra.mxu0 0.0
          %8850 = vmatprep.subr.mxu0 0.0
          %8851 = vmatpush1.msra.mxu0 0.0
          %8852 = vmatprep.subr.mxu0 0.0
          %8853 = vmatpush1.msra.mxu0 0.0
          %8854 = vmatprep.subr.mxu0 0.0
          %8855 = vmatpush1.msra.mxu0 0.0
          %8856 = vmatprep.subr.mxu0 0.0
          %8857 = vmatpush1.msra.mxu0 0.0
          %8858 = vmatprep.subr.mxu0 0.0
          %8859 = vmatpush1.msra.mxu0 0.0
          %8860 = vmatprep.subr.mxu0 0.0
          %8861 = vmatpush1.msra.mxu0 0.0
          %8862 = vmatprep.subr.mxu0 0.0
          %8863 = vmatpush1.msra.mxu0 0.0
          %8864 = vmatprep.subr.mxu0 0.0
          %8865 = vmatpush1.msra.mxu0 %v8196
          %8866 = vmatprep.subr.mxu0 0.0
          %8867 = vmatpush1.msra.mxu0 %v7619
          %8868 = vmatprep.subr.mxu0 0.0
          %8869 = vmatpush1.msra.mxu0 %v7614
          %8870 = vmatprep.subr.mxu0 0.0
          %8871 = vmatpush2.msra.mxu0 0.0
          %8872 = vmatprep.subr.mxu0 0.0
          %8873 = vmatpush2.msra.mxu0 0.0
          %8874 = vmatprep.subr.mxu0 0.0
          %8875 = vmatpush2.msra.mxu0 0.0
          %8876 = vmatprep.subr.mxu0 0.0
          %8877 = vmatpush2.msra.mxu0 0.0
          %8878 = vmatprep.subr.mxu0 0.0
          %8879 = vmatpush2.msra.mxu0 0.0
          %8880 = vmatprep.subr.mxu0 0.0
          %8881 = vmatpush2.msra.mxu0 0.0
          %8882 = vmatprep.subr.mxu0 0.0
          %8883 = vmatpush2.msra.mxu0 0.0
          %8884 = vmatprep.subr.mxu0 0.0
          %8885 = vmatpush2.msra.mxu0 0.0
          %8886 = vmatprep.subr.mxu0 0.0
          %8887 = vmatpush2.msra.mxu0 0.0
          %8888 = vmatprep.subr.mxu0 0.0
          %8889 = vmatpush2.msra.mxu0 0.0
          %8890 = vmatprep.subr.mxu0 0.0
          %8891 = vmatpush2.msra.mxu0 0.0
          %8892 = vmatprep.subr.mxu0 0.0
          %8893 = vmatpush2.msra.mxu0 0.0
          %8894 = vmatprep.subr.mxu0 0.0
          %8895 = vmatpush2.msra.mxu0 0.0
          %8896 = vmatprep.subr.mxu0 0.0
          %8897 = vmatpush2.msra.mxu0 0.0
          %8898 = vmatprep.subr.mxu0 0.0
          %8899 = vmatpush2.msra.mxu0 0.0
          %8900 = vmatprep.subr.mxu0 0.0
          %8901 = vmatpush2.msra.mxu0 0.0
          %8902 = vmatprep.mubr.f32.mxu0 0.0
          %8903 = vmatmul.mubr.f32.gmra.mxu0 %v8836
          %v8904 = vpop.f32.mrf.mxu0
          %v8905 = vadd.f32 0.0, %v8904
          %v8906 = vpop.f32.mrf.mxu0
          %8907 = vdwg.mxu0
          %v8909 = vsel %vm3378, %v8540, 0
          %8911 = vmatprep.subr.mxu0 0.0
          %8912 = vmatpush1.msra.mxu0 0.0
          %8913 = vmatprep.subr.mxu0 0.0
          %8914 = vmatpush1.msra.mxu0 0.0
          %8915 = vmatprep.subr.mxu0 0.0
          %8916 = vmatpush1.msra.mxu0 0.0
          %8917 = vmatprep.subr.mxu0 0.0
          %8918 = vmatpush1.msra.mxu0 0.0
          %8919 = vmatprep.subr.mxu0 0.0
          %8920 = vmatpush1.msra.mxu0 0.0
          %8921 = vmatprep.subr.mxu0 0.0
          %8922 = vmatpush1.msra.mxu0 0.0
          %8923 = vmatprep.subr.mxu0 0.0
          %8924 = vmatpush1.msra.mxu0 0.0
          %8925 = vmatprep.subr.mxu0 0.0
          %8926 = vmatpush1.msra.mxu0 0.0
          %8927 = vmatprep.subr.mxu0 0.0
          %8928 = vmatpush1.msra.mxu0 0.0
          %8929 = vmatprep.subr.mxu0 0.0
          %8930 = vmatpush1.msra.mxu0 0.0
          %8931 = vmatprep.subr.mxu0 0.0
          %8932 = vmatpush1.msra.mxu0 0.0
          %8933 = vmatprep.subr.mxu0 0.0
          %8934 = vmatpush1.msra.mxu0 0.0
          %8935 = vmatprep.subr.mxu0 0.0
          %8936 = vmatpush1.msra.mxu0 0.0
          %8937 = vmatprep.subr.mxu0 0.0
          %8938 = vmatpush1.msra.mxu0 %v8269
          %8939 = vmatprep.subr.mxu0 0.0
          %8940 = vmatpush1.msra.mxu0 %v7710
          %8941 = vmatprep.subr.mxu0 0.0
          %8942 = vmatpush1.msra.mxu0 %v7705
          %8943 = vmatprep.subr.mxu0 0.0
          %8944 = vmatpush2.msra.mxu0 0.0
          %8945 = vmatprep.subr.mxu0 0.0
          %8946 = vmatpush2.msra.mxu0 0.0
          %8947 = vmatprep.subr.mxu0 0.0
          %8948 = vmatpush2.msra.mxu0 0.0
          %8949 = vmatprep.subr.mxu0 0.0
          %8950 = vmatpush2.msra.mxu0 0.0
          %8951 = vmatprep.subr.mxu0 0.0
          %8952 = vmatpush2.msra.mxu0 0.0
          %8953 = vmatprep.subr.mxu0 0.0
          %8954 = vmatpush2.msra.mxu0 0.0
          %8955 = vmatprep.subr.mxu0 0.0
          %8956 = vmatpush2.msra.mxu0 0.0
          %8957 = vmatprep.subr.mxu0 0.0
          %8958 = vmatpush2.msra.mxu0 0.0
          %8959 = vmatprep.subr.mxu0 0.0
          %8960 = vmatpush2.msra.mxu0 0.0
          %8961 = vmatprep.subr.mxu0 0.0
          %8962 = vmatpush2.msra.mxu0 0.0
          %8963 = vmatprep.subr.mxu0 0.0
          %8964 = vmatpush2.msra.mxu0 0.0
          %8965 = vmatprep.subr.mxu0 0.0
          %8966 = vmatpush2.msra.mxu0 0.0
          %8967 = vmatprep.subr.mxu0 0.0
          %8968 = vmatpush2.msra.mxu0 0.0
          %8969 = vmatprep.subr.mxu0 0.0
          %8970 = vmatpush2.msra.mxu0 0.0
          %8971 = vmatprep.subr.mxu0 0.0
          %8972 = vmatpush2.msra.mxu0 0.0
          %8973 = vmatprep.subr.mxu0 0.0
          %8974 = vmatpush2.msra.mxu0 0.0
          %8975 = vmatprep.mubr.f32.mxu0 0.0
          %8976 = vmatmul.mubr.f32.gmra.mxu0 %v8909
          %v8977 = vpop.f32.mrf.mxu0
          %v8978 = vadd.f32 0.0, %v8977
          %v8979 = vpop.f32.mrf.mxu0
          %8980 = vdwg.mxu0
          %v8982 = vsel %vm3378, %v8541, 0
          %8984 = vmatprep.subr.mxu0 0.0
          %8985 = vmatpush1.msra.mxu0 0.0
          %8986 = vmatprep.subr.mxu0 0.0
          %8987 = vmatpush1.msra.mxu0 0.0
          %8988 = vmatprep.subr.mxu0 0.0
          %8989 = vmatpush1.msra.mxu0 0.0
          %8990 = vmatprep.subr.mxu0 0.0
          %8991 = vmatpush1.msra.mxu0 0.0
          %8992 = vmatprep.subr.mxu0 0.0
          %8993 = vmatpush1.msra.mxu0 0.0
          %8994 = vmatprep.subr.mxu0 0.0
          %8995 = vmatpush1.msra.mxu0 0.0
          %8996 = vmatprep.subr.mxu0 0.0
          %8997 = vmatpush1.msra.mxu0 0.0
          %8998 = vmatprep.subr.mxu0 0.0
          %8999 = vmatpush1.msra.mxu0 0.0
          %9000 = vmatprep.subr.mxu0 0.0
          %9001 = vmatpush1.msra.mxu0 0.0
          %9002 = vmatprep.subr.mxu0 0.0
          %9003 = vmatpush1.msra.mxu0 0.0
          %9004 = vmatprep.subr.mxu0 0.0
          %9005 = vmatpush1.msra.mxu0 0.0
          %9006 = vmatprep.subr.mxu0 0.0
          %9007 = vmatpush1.msra.mxu0 0.0
          %9008 = vmatprep.subr.mxu0 0.0
          %9009 = vmatpush1.msra.mxu0 0.0
          %9010 = vmatprep.subr.mxu0 0.0
          %9011 = vmatpush1.msra.mxu0 %v8342
          %9012 = vmatprep.subr.mxu0 0.0
          %9013 = vmatpush1.msra.mxu0 %v7801
          %9014 = vmatprep.subr.mxu0 0.0
          %9015 = vmatpush1.msra.mxu0 %v7796
          %9016 = vmatprep.subr.mxu0 0.0
          %9017 = vmatpush2.msra.mxu0 0.0
          %9018 = vmatprep.subr.mxu0 0.0
          %9019 = vmatpush2.msra.mxu0 0.0
          %9020 = vmatprep.subr.mxu0 0.0
          %9021 = vmatpush2.msra.mxu0 0.0
          %9022 = vmatprep.subr.mxu0 0.0
          %9023 = vmatpush2.msra.mxu0 0.0
          %9024 = vmatprep.subr.mxu0 0.0
          %9025 = vmatpush2.msra.mxu0 0.0
          %9026 = vmatprep.subr.mxu0 0.0
          %9027 = vmatpush2.msra.mxu0 0.0
          %9028 = vmatprep.subr.mxu0 0.0
          %9029 = vmatpush2.msra.mxu0 0.0
          %9030 = vmatprep.subr.mxu0 0.0
          %9031 = vmatpush2.msra.mxu0 0.0
          %9032 = vmatprep.subr.mxu0 0.0
          %9033 = vmatpush2.msra.mxu0 0.0
          %9034 = vmatprep.subr.mxu0 0.0
          %9035 = vmatpush2.msra.mxu0 0.0
          %9036 = vmatprep.subr.mxu0 0.0
          %9037 = vmatpush2.msra.mxu0 0.0
          %9038 = vmatprep.subr.mxu0 0.0
          %9039 = vmatpush2.msra.mxu0 0.0
          %9040 = vmatprep.subr.mxu0 0.0
          %9041 = vmatpush2.msra.mxu0 0.0
          %9042 = vmatprep.subr.mxu0 0.0
          %9043 = vmatpush2.msra.mxu0 0.0
          %9044 = vmatprep.subr.mxu0 0.0
          %9045 = vmatpush2.msra.mxu0 0.0
          %9046 = vmatprep.subr.mxu0 0.0
          %9047 = vmatpush2.msra.mxu0 0.0
          %9048 = vmatprep.mubr.f32.mxu0 0.0
          %9049 = vmatmul.mubr.f32.gmra.mxu0 %v8982
          %v9050 = vpop.f32.mrf.mxu0
          %v9051 = vadd.f32 0.0, %v9050
          %v9052 = vpop.f32.mrf.mxu0
          %9053 = vdwg.mxu0
          %v9055 = vsel %vm3378, %v8542, 0
          %9057 = vmatprep.subr.mxu0 0.0
          %9058 = vmatpush1.msra.mxu0 0.0
          %9059 = vmatprep.subr.mxu0 0.0
          %9060 = vmatpush1.msra.mxu0 0.0
          %9061 = vmatprep.subr.mxu0 0.0
          %9062 = vmatpush1.msra.mxu0 0.0
          %9063 = vmatprep.subr.mxu0 0.0
          %9064 = vmatpush1.msra.mxu0 0.0
          %9065 = vmatprep.subr.mxu0 0.0
          %9066 = vmatpush1.msra.mxu0 0.0
          %9067 = vmatprep.subr.mxu0 0.0
          %9068 = vmatpush1.msra.mxu0 0.0
          %9069 = vmatprep.subr.mxu0 0.0
          %9070 = vmatpush1.msra.mxu0 0.0
          %9071 = vmatprep.subr.mxu0 0.0
          %9072 = vmatpush1.msra.mxu0 0.0
          %9073 = vmatprep.subr.mxu0 0.0
          %9074 = vmatpush1.msra.mxu0 0.0
          %9075 = vmatprep.subr.mxu0 0.0
          %9076 = vmatpush1.msra.mxu0 0.0
          %9077 = vmatprep.subr.mxu0 0.0
          %9078 = vmatpush1.msra.mxu0 0.0
          %9079 = vmatprep.subr.mxu0 0.0
          %9080 = vmatpush1.msra.mxu0 0.0
          %9081 = vmatprep.subr.mxu0 0.0
          %9082 = vmatpush1.msra.mxu0 0.0
          %9083 = vmatprep.subr.mxu0 0.0
          %9084 = vmatpush1.msra.mxu0 %v8415
          %9085 = vmatprep.subr.mxu0 0.0
          %9086 = vmatpush1.msra.mxu0 %v7892
          %9087 = vmatprep.subr.mxu0 0.0
          %9088 = vmatpush1.msra.mxu0 %v7887
          %9089 = vmatprep.subr.mxu0 0.0
          %9090 = vmatpush2.msra.mxu0 0.0
          %9091 = vmatprep.subr.mxu0 0.0
          %9092 = vmatpush2.msra.mxu0 0.0
          %9093 = vmatprep.subr.mxu0 0.0
          %9094 = vmatpush2.msra.mxu0 0.0
          %9095 = vmatprep.subr.mxu0 0.0
          %9096 = vmatpush2.msra.mxu0 0.0
          %9097 = vmatprep.subr.mxu0 0.0
          %9098 = vmatpush2.msra.mxu0 0.0
          %9099 = vmatprep.subr.mxu0 0.0
          %9100 = vmatpush2.msra.mxu0 0.0
          %9101 = vmatprep.subr.mxu0 0.0
          %9102 = vmatpush2.msra.mxu0 0.0
          %9103 = vmatprep.subr.mxu0 0.0
          %9104 = vmatpush2.msra.mxu0 0.0
          %9105 = vmatprep.subr.mxu0 0.0
          %9106 = vmatpush2.msra.mxu0 0.0
          %9107 = vmatprep.subr.mxu0 0.0
          %9108 = vmatpush2.msra.mxu0 0.0
          %9109 = vmatprep.subr.mxu0 0.0
          %9110 = vmatpush2.msra.mxu0 0.0
          %9111 = vmatprep.subr.mxu0 0.0
          %9112 = vmatpush2.msra.mxu0 0.0
          %9113 = vmatprep.subr.mxu0 0.0
          %9114 = vmatpush2.msra.mxu0 0.0
          %9115 = vmatprep.subr.mxu0 0.0
          %9116 = vmatpush2.msra.mxu0 0.0
          %9117 = vmatprep.subr.mxu0 0.0
          %9118 = vmatpush2.msra.mxu0 0.0
          %9119 = vmatprep.subr.mxu0 0.0
          %9120 = vmatpush2.msra.mxu0 0.0
          %9121 = vmatprep.mubr.f32.mxu0 0.0
          %9122 = vmatmul.mubr.f32.gmra.mxu0 %v9055
          %v9123 = vpop.f32.mrf.mxu0
          %v9124 = vadd.f32 0.0, %v9123
          %v9125 = vpop.f32.mrf.mxu0
          %9126 = vdwg.mxu0
          %v9127 = vmul.f32 %v8613, %v8613
          %v9128 = vmul.f32 %v8686, %v8686
          %v9129 = vmul.f32 %v8759, %v8759
          %v9130 = vmul.f32 %v8832, %v8832
          %v9131 = vmul.f32 %v8905, %v8905
          %v9132 = vmul.f32 %v8978, %v8978
          %v9133 = vmul.f32 %v9051, %v9051
          %v9134 = vmul.f32 %v9124, %v9124
          %v9135 = vsel %vm3385, %v9127, 0.0
          %9136 = vadd.xlane.f32.xlu0 %v9135
          %v9137 = vpop.xlane.xlu0 %9136
          %v9138 = vsel %vm3385, %v9128, 0.0
          %9139 = vadd.xlane.f32.xlu0 %v9138
          %v9140 = vpop.xlane.xlu0 %9139
          %v9141 = vsel %vm3385, %v9129, 0.0
          %9142 = vadd.xlane.f32.xlu0 %v9141
          %v9143 = vpop.xlane.xlu0 %9142
          %v9144 = vsel %vm3385, %v9130, 0.0
          %9145 = vadd.xlane.f32.xlu0 %v9144
          %v9146 = vpop.xlane.xlu0 %9145
          %v9147 = vsel %vm3385, %v9131, 0.0
          %9148 = vadd.xlane.f32.xlu0 %v9147
          %v9149 = vpop.xlane.xlu0 %9148
          %v9150 = vsel %vm3385, %v9132, 0.0
          %9151 = vadd.xlane.f32.xlu0 %v9150
          %v9152 = vpop.xlane.xlu0 %9151
          %v9153 = vsel %vm3385, %v9133, 0.0
          %9154 = vadd.xlane.f32.xlu0 %v9153
          %v9155 = vpop.xlane.xlu0 %9154
          %v9156 = vsel %vm3385, %v9134, 0.0
          %9157 = vadd.xlane.f32.xlu0 %v9156
          %v9158 = vpop.xlane.xlu0 %9157
          %v9159 = vadd.f32 %v9137, 1e-30
          %v9160 = vadd.f32 %v9140, 1e-30
          %v9161 = vadd.f32 %v9143, 1e-30
          %v9162 = vadd.f32 %v9146, 1e-30
          %v9163 = vadd.f32 %v9149, 1e-30
          %v9164 = vadd.f32 %v9152, 1e-30
          %v9165 = vadd.f32 %v9155, 1e-30
          %v9166 = vadd.f32 %v9158, 1e-30
          %v9167 = vrsqrt.pop %v9159
          %v9168 = vrsqrt.pop %v9160
          %v9169 = vrsqrt.pop %v9161
          %v9170 = vrsqrt.pop %v9162
          %v9171 = vrsqrt.pop %v9163
          %v9172 = vrsqrt.pop %v9164
          %v9173 = vrsqrt.pop %v9165
          %v9174 = vrsqrt.pop %v9166
          %v9175 = vmul.f32 %v8613, %v9167
          %v9176 = vmul.f32 %v8686, %v9168
          %v9177 = vmul.f32 %v8759, %v9169
          %v9178 = vmul.f32 %v8832, %v9170
          %v9179 = vmul.f32 %v8905, %v9171
          %v9180 = vmul.f32 %v8978, %v9172
          %v9181 = vmul.f32 %v9051, %v9173
          %v9182 = vmul.f32 %v9124, %v9174
          %v9184 = vsel %vm3378, %v9175, 0
          %9186 = vmatprep.subr.mxu0 0.0
          %9187 = vmatpush1.msra.mxu0 0.0
          %9188 = vmatprep.subr.mxu0 0.0
          %9189 = vmatpush1.msra.mxu0 0.0
          %9190 = vmatprep.subr.mxu0 0.0
          %9191 = vmatpush1.msra.mxu0 0.0
          %9192 = vmatprep.subr.mxu0 0.0
          %9193 = vmatpush1.msra.mxu0 0.0
          %9194 = vmatprep.subr.mxu0 0.0
          %9195 = vmatpush1.msra.mxu0 0.0
          %9196 = vmatprep.subr.mxu0 0.0
          %9197 = vmatpush1.msra.mxu0 0.0
          %9198 = vmatprep.subr.mxu0 0.0
          %9199 = vmatpush1.msra.mxu0 0.0
          %9200 = vmatprep.subr.mxu0 0.0
          %9201 = vmatpush1.msra.mxu0 0.0
          %9202 = vmatprep.subr.mxu0 0.0
          %9203 = vmatpush1.msra.mxu0 0.0
          %9204 = vmatprep.subr.mxu0 0.0
          %9205 = vmatpush1.msra.mxu0 0.0
          %9206 = vmatprep.subr.mxu0 0.0
          %9207 = vmatpush1.msra.mxu0 0.0
          %9208 = vmatprep.subr.mxu0 0.0
          %9209 = vmatpush1.msra.mxu0 0.0
          %9210 = vmatprep.subr.mxu0 0.0
          %9211 = vmatpush1.msra.mxu0 0.0
          %9212 = vmatprep.subr.mxu0 0.0
          %9213 = vmatpush1.msra.mxu0 %v7904
          %9214 = vmatprep.subr.mxu0 0.0
          %9215 = vmatpush1.msra.mxu0 %v7255
          %9216 = vmatprep.subr.mxu0 0.0
          %9217 = vmatpush1.msra.mxu0 %v7250
          %9218 = vmatprep.subr.mxu0 0.0
          %9219 = vmatpush2.msra.mxu0 0.0
          %9220 = vmatprep.subr.mxu0 0.0
          %9221 = vmatpush2.msra.mxu0 0.0
          %9222 = vmatprep.subr.mxu0 0.0
          %9223 = vmatpush2.msra.mxu0 0.0
          %9224 = vmatprep.subr.mxu0 0.0
          %9225 = vmatpush2.msra.mxu0 0.0
          %9226 = vmatprep.subr.mxu0 0.0
          %9227 = vmatpush2.msra.mxu0 0.0
          %9228 = vmatprep.subr.mxu0 0.0
          %9229 = vmatpush2.msra.mxu0 0.0
          %9230 = vmatprep.subr.mxu0 0.0
          %9231 = vmatpush2.msra.mxu0 0.0
          %9232 = vmatprep.subr.mxu0 0.0
          %9233 = vmatpush2.msra.mxu0 0.0
          %9234 = vmatprep.subr.mxu0 0.0
          %9235 = vmatpush2.msra.mxu0 0.0
          %9236 = vmatprep.subr.mxu0 0.0
          %9237 = vmatpush2.msra.mxu0 0.0
          %9238 = vmatprep.subr.mxu0 0.0
          %9239 = vmatpush2.msra.mxu0 0.0
          %9240 = vmatprep.subr.mxu0 0.0
          %9241 = vmatpush2.msra.mxu0 0.0
          %9242 = vmatprep.subr.mxu0 0.0
          %9243 = vmatpush2.msra.mxu0 0.0
          %9244 = vmatprep.subr.mxu0 0.0
          %9245 = vmatpush2.msra.mxu0 0.0
          %9246 = vmatprep.subr.mxu0 0.0
          %9247 = vmatpush2.msra.mxu0 0.0
          %9248 = vmatprep.subr.mxu0 0.0
          %9249 = vmatpush2.msra.mxu0 0.0
          %9250 = vmatprep.mubr.f32.mxu0 0.0
          %9251 = vmatmul.mubr.f32.gmra.mxu0 %v9184
          %v9252 = vpop.f32.mrf.mxu0
          %v9253 = vadd.f32 0.0, %v9252
          %v9254 = vpop.f32.mrf.mxu0
          %9255 = vdwg.mxu0
          %v9257 = vsel %vm3378, %v9176, 0
          %9259 = vmatprep.subr.mxu0 0.0
          %9260 = vmatpush1.msra.mxu0 0.0
          %9261 = vmatprep.subr.mxu0 0.0
          %9262 = vmatpush1.msra.mxu0 0.0
          %9263 = vmatprep.subr.mxu0 0.0
          %9264 = vmatpush1.msra.mxu0 0.0
          %9265 = vmatprep.subr.mxu0 0.0
          %9266 = vmatpush1.msra.mxu0 0.0
          %9267 = vmatprep.subr.mxu0 0.0
          %9268 = vmatpush1.msra.mxu0 0.0
          %9269 = vmatprep.subr.mxu0 0.0
          %9270 = vmatpush1.msra.mxu0 0.0
          %9271 = vmatprep.subr.mxu0 0.0
          %9272 = vmatpush1.msra.mxu0 0.0
          %9273 = vmatprep.subr.mxu0 0.0
          %9274 = vmatpush1.msra.mxu0 0.0
          %9275 = vmatprep.subr.mxu0 0.0
          %9276 = vmatpush1.msra.mxu0 0.0
          %9277 = vmatprep.subr.mxu0 0.0
          %9278 = vmatpush1.msra.mxu0 0.0
          %9279 = vmatprep.subr.mxu0 0.0
          %9280 = vmatpush1.msra.mxu0 0.0
          %9281 = vmatprep.subr.mxu0 0.0
          %9282 = vmatpush1.msra.mxu0 0.0
          %9283 = vmatprep.subr.mxu0 0.0
          %9284 = vmatpush1.msra.mxu0 0.0
          %9285 = vmatprep.subr.mxu0 0.0
          %9286 = vmatpush1.msra.mxu0 %v7977
          %9287 = vmatprep.subr.mxu0 0.0
          %9288 = vmatpush1.msra.mxu0 %v7346
          %9289 = vmatprep.subr.mxu0 0.0
          %9290 = vmatpush1.msra.mxu0 %v7341
          %9291 = vmatprep.subr.mxu0 0.0
          %9292 = vmatpush2.msra.mxu0 0.0
          %9293 = vmatprep.subr.mxu0 0.0
          %9294 = vmatpush2.msra.mxu0 0.0
          %9295 = vmatprep.subr.mxu0 0.0
          %9296 = vmatpush2.msra.mxu0 0.0
          %9297 = vmatprep.subr.mxu0 0.0
          %9298 = vmatpush2.msra.mxu0 0.0
          %9299 = vmatprep.subr.mxu0 0.0
          %9300 = vmatpush2.msra.mxu0 0.0
          %9301 = vmatprep.subr.mxu0 0.0
          %9302 = vmatpush2.msra.mxu0 0.0
          %9303 = vmatprep.subr.mxu0 0.0
          %9304 = vmatpush2.msra.mxu0 0.0
          %9305 = vmatprep.subr.mxu0 0.0
          %9306 = vmatpush2.msra.mxu0 0.0
          %9307 = vmatprep.subr.mxu0 0.0
          %9308 = vmatpush2.msra.mxu0 0.0
          %9309 = vmatprep.subr.mxu0 0.0
          %9310 = vmatpush2.msra.mxu0 0.0
          %9311 = vmatprep.subr.mxu0 0.0
          %9312 = vmatpush2.msra.mxu0 0.0
          %9313 = vmatprep.subr.mxu0 0.0
          %9314 = vmatpush2.msra.mxu0 0.0
          %9315 = vmatprep.subr.mxu0 0.0
          %9316 = vmatpush2.msra.mxu0 0.0
          %9317 = vmatprep.subr.mxu0 0.0
          %9318 = vmatpush2.msra.mxu0 0.0
          %9319 = vmatprep.subr.mxu0 0.0
          %9320 = vmatpush2.msra.mxu0 0.0
          %9321 = vmatprep.subr.mxu0 0.0
          %9322 = vmatpush2.msra.mxu0 0.0
          %9323 = vmatprep.mubr.f32.mxu0 0.0
          %9324 = vmatmul.mubr.f32.gmra.mxu0 %v9257
          %v9325 = vpop.f32.mrf.mxu0
          %v9326 = vadd.f32 0.0, %v9325
          %v9327 = vpop.f32.mrf.mxu0
          %9328 = vdwg.mxu0
          %v9330 = vsel %vm3378, %v9177, 0
          %9332 = vmatprep.subr.mxu0 0.0
          %9333 = vmatpush1.msra.mxu0 0.0
          %9334 = vmatprep.subr.mxu0 0.0
          %9335 = vmatpush1.msra.mxu0 0.0
          %9336 = vmatprep.subr.mxu0 0.0
          %9337 = vmatpush1.msra.mxu0 0.0
          %9338 = vmatprep.subr.mxu0 0.0
          %9339 = vmatpush1.msra.mxu0 0.0
          %9340 = vmatprep.subr.mxu0 0.0
          %9341 = vmatpush1.msra.mxu0 0.0
          %9342 = vmatprep.subr.mxu0 0.0
          %9343 = vmatpush1.msra.mxu0 0.0
          %9344 = vmatprep.subr.mxu0 0.0
          %9345 = vmatpush1.msra.mxu0 0.0
          %9346 = vmatprep.subr.mxu0 0.0
          %9347 = vmatpush1.msra.mxu0 0.0
          %9348 = vmatprep.subr.mxu0 0.0
          %9349 = vmatpush1.msra.mxu0 0.0
          %9350 = vmatprep.subr.mxu0 0.0
          %9351 = vmatpush1.msra.mxu0 0.0
          %9352 = vmatprep.subr.mxu0 0.0
          %9353 = vmatpush1.msra.mxu0 0.0
          %9354 = vmatprep.subr.mxu0 0.0
          %9355 = vmatpush1.msra.mxu0 0.0
          %9356 = vmatprep.subr.mxu0 0.0
          %9357 = vmatpush1.msra.mxu0 0.0
          %9358 = vmatprep.subr.mxu0 0.0
          %9359 = vmatpush1.msra.mxu0 %v8050
          %9360 = vmatprep.subr.mxu0 0.0
          %9361 = vmatpush1.msra.mxu0 %v7437
          %9362 = vmatprep.subr.mxu0 0.0
          %9363 = vmatpush1.msra.mxu0 %v7432
          %9364 = vmatprep.subr.mxu0 0.0
          %9365 = vmatpush2.msra.mxu0 0.0
          %9366 = vmatprep.subr.mxu0 0.0
          %9367 = vmatpush2.msra.mxu0 0.0
          %9368 = vmatprep.subr.mxu0 0.0
          %9369 = vmatpush2.msra.mxu0 0.0
          %9370 = vmatprep.subr.mxu0 0.0
          %9371 = vmatpush2.msra.mxu0 0.0
          %9372 = vmatprep.subr.mxu0 0.0
          %9373 = vmatpush2.msra.mxu0 0.0
          %9374 = vmatprep.subr.mxu0 0.0
          %9375 = vmatpush2.msra.mxu0 0.0
          %9376 = vmatprep.subr.mxu0 0.0
          %9377 = vmatpush2.msra.mxu0 0.0
          %9378 = vmatprep.subr.mxu0 0.0
          %9379 = vmatpush2.msra.mxu0 0.0
          %9380 = vmatprep.subr.mxu0 0.0
          %9381 = vmatpush2.msra.mxu0 0.0
          %9382 = vmatprep.subr.mxu0 0.0
          %9383 = vmatpush2.msra.mxu0 0.0
          %9384 = vmatprep.subr.mxu0 0.0
          %9385 = vmatpush2.msra.mxu0 0.0
          %9386 = vmatprep.subr.mxu0 0.0
          %9387 = vmatpush2.msra.mxu0 0.0
          %9388 = vmatprep.subr.mxu0 0.0
          %9389 = vmatpush2.msra.mxu0 0.0
          %9390 = vmatprep.subr.mxu0 0.0
          %9391 = vmatpush2.msra.mxu0 0.0
          %9392 = vmatprep.subr.mxu0 0.0
          %9393 = vmatpush2.msra.mxu0 0.0
          %9394 = vmatprep.subr.mxu0 0.0
          %9395 = vmatpush2.msra.mxu0 0.0
          %9396 = vmatprep.mubr.f32.mxu0 0.0
          %9397 = vmatmul.mubr.f32.gmra.mxu0 %v9330
          %v9398 = vpop.f32.mrf.mxu0
          %v9399 = vadd.f32 0.0, %v9398
          %v9400 = vpop.f32.mrf.mxu0
          %9401 = vdwg.mxu0
          %v9403 = vsel %vm3378, %v9178, 0
          %9405 = vmatprep.subr.mxu0 0.0
          %9406 = vmatpush1.msra.mxu0 0.0
          %9407 = vmatprep.subr.mxu0 0.0
          %9408 = vmatpush1.msra.mxu0 0.0
          %9409 = vmatprep.subr.mxu0 0.0
          %9410 = vmatpush1.msra.mxu0 0.0
          %9411 = vmatprep.subr.mxu0 0.0
          %9412 = vmatpush1.msra.mxu0 0.0
          %9413 = vmatprep.subr.mxu0 0.0
          %9414 = vmatpush1.msra.mxu0 0.0
          %9415 = vmatprep.subr.mxu0 0.0
          %9416 = vmatpush1.msra.mxu0 0.0
          %9417 = vmatprep.subr.mxu0 0.0
          %9418 = vmatpush1.msra.mxu0 0.0
          %9419 = vmatprep.subr.mxu0 0.0
          %9420 = vmatpush1.msra.mxu0 0.0
          %9421 = vmatprep.subr.mxu0 0.0
          %9422 = vmatpush1.msra.mxu0 0.0
          %9423 = vmatprep.subr.mxu0 0.0
          %9424 = vmatpush1.msra.mxu0 0.0
          %9425 = vmatprep.subr.mxu0 0.0
          %9426 = vmatpush1.msra.mxu0 0.0
          %9427 = vmatprep.subr.mxu0 0.0
          %9428 = vmatpush1.msra.mxu0 0.0
          %9429 = vmatprep.subr.mxu0 0.0
          %9430 = vmatpush1.msra.mxu0 0.0
          %9431 = vmatprep.subr.mxu0 0.0
          %9432 = vmatpush1.msra.mxu0 %v8123
          %9433 = vmatprep.subr.mxu0 0.0
          %9434 = vmatpush1.msra.mxu0 %v7528
          %9435 = vmatprep.subr.mxu0 0.0
          %9436 = vmatpush1.msra.mxu0 %v7523
          %9437 = vmatprep.subr.mxu0 0.0
          %9438 = vmatpush2.msra.mxu0 0.0
          %9439 = vmatprep.subr.mxu0 0.0
          %9440 = vmatpush2.msra.mxu0 0.0
          %9441 = vmatprep.subr.mxu0 0.0
          %9442 = vmatpush2.msra.mxu0 0.0
          %9443 = vmatprep.subr.mxu0 0.0
          %9444 = vmatpush2.msra.mxu0 0.0
          %9445 = vmatprep.subr.mxu0 0.0
          %9446 = vmatpush2.msra.mxu0 0.0
          %9447 = vmatprep.subr.mxu0 0.0
          %9448 = vmatpush2.msra.mxu0 0.0
          %9449 = vmatprep.subr.mxu0 0.0
          %9450 = vmatpush2.msra.mxu0 0.0
          %9451 = vmatprep.subr.mxu0 0.0
          %9452 = vmatpush2.msra.mxu0 0.0
          %9453 = vmatprep.subr.mxu0 0.0
          %9454 = vmatpush2.msra.mxu0 0.0
          %9455 = vmatprep.subr.mxu0 0.0
          %9456 = vmatpush2.msra.mxu0 0.0
          %9457 = vmatprep.subr.mxu0 0.0
          %9458 = vmatpush2.msra.mxu0 0.0
          %9459 = vmatprep.subr.mxu0 0.0
          %9460 = vmatpush2.msra.mxu0 0.0
          %9461 = vmatprep.subr.mxu0 0.0
          %9462 = vmatpush2.msra.mxu0 0.0
          %9463 = vmatprep.subr.mxu0 0.0
          %9464 = vmatpush2.msra.mxu0 0.0
          %9465 = vmatprep.subr.mxu0 0.0
          %9466 = vmatpush2.msra.mxu0 0.0
          %9467 = vmatprep.subr.mxu0 0.0
          %9468 = vmatpush2.msra.mxu0 0.0
          %9469 = vmatprep.mubr.f32.mxu0 0.0
          %9470 = vmatmul.mubr.f32.gmra.mxu0 %v9403
          %v9471 = vpop.f32.mrf.mxu0
          %v9472 = vadd.f32 0.0, %v9471
          %v9473 = vpop.f32.mrf.mxu0
          %9474 = vdwg.mxu0
          %v9476 = vsel %vm3378, %v9179, 0
          %9478 = vmatprep.subr.mxu0 0.0
          %9479 = vmatpush1.msra.mxu0 0.0
          %9480 = vmatprep.subr.mxu0 0.0
          %9481 = vmatpush1.msra.mxu0 0.0
          %9482 = vmatprep.subr.mxu0 0.0
          %9483 = vmatpush1.msra.mxu0 0.0
          %9484 = vmatprep.subr.mxu0 0.0
          %9485 = vmatpush1.msra.mxu0 0.0
          %9486 = vmatprep.subr.mxu0 0.0
          %9487 = vmatpush1.msra.mxu0 0.0
          %9488 = vmatprep.subr.mxu0 0.0
          %9489 = vmatpush1.msra.mxu0 0.0
          %9490 = vmatprep.subr.mxu0 0.0
          %9491 = vmatpush1.msra.mxu0 0.0
          %9492 = vmatprep.subr.mxu0 0.0
          %9493 = vmatpush1.msra.mxu0 0.0
          %9494 = vmatprep.subr.mxu0 0.0
          %9495 = vmatpush1.msra.mxu0 0.0
          %9496 = vmatprep.subr.mxu0 0.0
          %9497 = vmatpush1.msra.mxu0 0.0
          %9498 = vmatprep.subr.mxu0 0.0
          %9499 = vmatpush1.msra.mxu0 0.0
          %9500 = vmatprep.subr.mxu0 0.0
          %9501 = vmatpush1.msra.mxu0 0.0
          %9502 = vmatprep.subr.mxu0 0.0
          %9503 = vmatpush1.msra.mxu0 0.0
          %9504 = vmatprep.subr.mxu0 0.0
          %9505 = vmatpush1.msra.mxu0 %v8196
          %9506 = vmatprep.subr.mxu0 0.0
          %9507 = vmatpush1.msra.mxu0 %v7619
          %9508 = vmatprep.subr.mxu0 0.0
          %9509 = vmatpush1.msra.mxu0 %v7614
          %9510 = vmatprep.subr.mxu0 0.0
          %9511 = vmatpush2.msra.mxu0 0.0
          %9512 = vmatprep.subr.mxu0 0.0
          %9513 = vmatpush2.msra.mxu0 0.0
          %9514 = vmatprep.subr.mxu0 0.0
          %9515 = vmatpush2.msra.mxu0 0.0
          %9516 = vmatprep.subr.mxu0 0.0
          %9517 = vmatpush2.msra.mxu0 0.0
          %9518 = vmatprep.subr.mxu0 0.0
          %9519 = vmatpush2.msra.mxu0 0.0
          %9520 = vmatprep.subr.mxu0 0.0
          %9521 = vmatpush2.msra.mxu0 0.0
          %9522 = vmatprep.subr.mxu0 0.0
          %9523 = vmatpush2.msra.mxu0 0.0
          %9524 = vmatprep.subr.mxu0 0.0
          %9525 = vmatpush2.msra.mxu0 0.0
          %9526 = vmatprep.subr.mxu0 0.0
          %9527 = vmatpush2.msra.mxu0 0.0
          %9528 = vmatprep.subr.mxu0 0.0
          %9529 = vmatpush2.msra.mxu0 0.0
          %9530 = vmatprep.subr.mxu0 0.0
          %9531 = vmatpush2.msra.mxu0 0.0
          %9532 = vmatprep.subr.mxu0 0.0
          %9533 = vmatpush2.msra.mxu0 0.0
          %9534 = vmatprep.subr.mxu0 0.0
          %9535 = vmatpush2.msra.mxu0 0.0
          %9536 = vmatprep.subr.mxu0 0.0
          %9537 = vmatpush2.msra.mxu0 0.0
          %9538 = vmatprep.subr.mxu0 0.0
          %9539 = vmatpush2.msra.mxu0 0.0
          %9540 = vmatprep.subr.mxu0 0.0
          %9541 = vmatpush2.msra.mxu0 0.0
          %9542 = vmatprep.mubr.f32.mxu0 0.0
          %9543 = vmatmul.mubr.f32.gmra.mxu0 %v9476
          %v9544 = vpop.f32.mrf.mxu0
          %v9545 = vadd.f32 0.0, %v9544
          %v9546 = vpop.f32.mrf.mxu0
          %9547 = vdwg.mxu0
          %v9549 = vsel %vm3378, %v9180, 0
          %9551 = vmatprep.subr.mxu0 0.0
          %9552 = vmatpush1.msra.mxu0 0.0
          %9553 = vmatprep.subr.mxu0 0.0
          %9554 = vmatpush1.msra.mxu0 0.0
          %9555 = vmatprep.subr.mxu0 0.0
          %9556 = vmatpush1.msra.mxu0 0.0
          %9557 = vmatprep.subr.mxu0 0.0
          %9558 = vmatpush1.msra.mxu0 0.0
          %9559 = vmatprep.subr.mxu0 0.0
          %9560 = vmatpush1.msra.mxu0 0.0
          %9561 = vmatprep.subr.mxu0 0.0
          %9562 = vmatpush1.msra.mxu0 0.0
          %9563 = vmatprep.subr.mxu0 0.0
          %9564 = vmatpush1.msra.mxu0 0.0
          %9565 = vmatprep.subr.mxu0 0.0
          %9566 = vmatpush1.msra.mxu0 0.0
          %9567 = vmatprep.subr.mxu0 0.0
          %9568 = vmatpush1.msra.mxu0 0.0
          %9569 = vmatprep.subr.mxu0 0.0
          %9570 = vmatpush1.msra.mxu0 0.0
          %9571 = vmatprep.subr.mxu0 0.0
          %9572 = vmatpush1.msra.mxu0 0.0
          %9573 = vmatprep.subr.mxu0 0.0
          %9574 = vmatpush1.msra.mxu0 0.0
          %9575 = vmatprep.subr.mxu0 0.0
          %9576 = vmatpush1.msra.mxu0 0.0
          %9577 = vmatprep.subr.mxu0 0.0
          %9578 = vmatpush1.msra.mxu0 %v8269
          %9579 = vmatprep.subr.mxu0 0.0
          %9580 = vmatpush1.msra.mxu0 %v7710
          %9581 = vmatprep.subr.mxu0 0.0
          %9582 = vmatpush1.msra.mxu0 %v7705
          %9583 = vmatprep.subr.mxu0 0.0
          %9584 = vmatpush2.msra.mxu0 0.0
          %9585 = vmatprep.subr.mxu0 0.0
          %9586 = vmatpush2.msra.mxu0 0.0
          %9587 = vmatprep.subr.mxu0 0.0
          %9588 = vmatpush2.msra.mxu0 0.0
          %9589 = vmatprep.subr.mxu0 0.0
          %9590 = vmatpush2.msra.mxu0 0.0
          %9591 = vmatprep.subr.mxu0 0.0
          %9592 = vmatpush2.msra.mxu0 0.0
          %9593 = vmatprep.subr.mxu0 0.0
          %9594 = vmatpush2.msra.mxu0 0.0
          %9595 = vmatprep.subr.mxu0 0.0
          %9596 = vmatpush2.msra.mxu0 0.0
          %9597 = vmatprep.subr.mxu0 0.0
          %9598 = vmatpush2.msra.mxu0 0.0
          %9599 = vmatprep.subr.mxu0 0.0
          %9600 = vmatpush2.msra.mxu0 0.0
          %9601 = vmatprep.subr.mxu0 0.0
          %9602 = vmatpush2.msra.mxu0 0.0
          %9603 = vmatprep.subr.mxu0 0.0
          %9604 = vmatpush2.msra.mxu0 0.0
          %9605 = vmatprep.subr.mxu0 0.0
          %9606 = vmatpush2.msra.mxu0 0.0
          %9607 = vmatprep.subr.mxu0 0.0
          %9608 = vmatpush2.msra.mxu0 0.0
          %9609 = vmatprep.subr.mxu0 0.0
          %9610 = vmatpush2.msra.mxu0 0.0
          %9611 = vmatprep.subr.mxu0 0.0
          %9612 = vmatpush2.msra.mxu0 0.0
          %9613 = vmatprep.subr.mxu0 0.0
          %9614 = vmatpush2.msra.mxu0 0.0
          %9615 = vmatprep.mubr.f32.mxu0 0.0
          %9616 = vmatmul.mubr.f32.gmra.mxu0 %v9549
          %v9617 = vpop.f32.mrf.mxu0
          %v9618 = vadd.f32 0.0, %v9617
          %v9619 = vpop.f32.mrf.mxu0
          %9620 = vdwg.mxu0
          %v9622 = vsel %vm3378, %v9181, 0
          %9624 = vmatprep.subr.mxu0 0.0
          %9625 = vmatpush1.msra.mxu0 0.0
          %9626 = vmatprep.subr.mxu0 0.0
          %9627 = vmatpush1.msra.mxu0 0.0
          %9628 = vmatprep.subr.mxu0 0.0
          %9629 = vmatpush1.msra.mxu0 0.0
          %9630 = vmatprep.subr.mxu0 0.0
          %9631 = vmatpush1.msra.mxu0 0.0
          %9632 = vmatprep.subr.mxu0 0.0
          %9633 = vmatpush1.msra.mxu0 0.0
          %9634 = vmatprep.subr.mxu0 0.0
          %9635 = vmatpush1.msra.mxu0 0.0
          %9636 = vmatprep.subr.mxu0 0.0
          %9637 = vmatpush1.msra.mxu0 0.0
          %9638 = vmatprep.subr.mxu0 0.0
          %9639 = vmatpush1.msra.mxu0 0.0
          %9640 = vmatprep.subr.mxu0 0.0
          %9641 = vmatpush1.msra.mxu0 0.0
          %9642 = vmatprep.subr.mxu0 0.0
          %9643 = vmatpush1.msra.mxu0 0.0
          %9644 = vmatprep.subr.mxu0 0.0
          %9645 = vmatpush1.msra.mxu0 0.0
          %9646 = vmatprep.subr.mxu0 0.0
          %9647 = vmatpush1.msra.mxu0 0.0
          %9648 = vmatprep.subr.mxu0 0.0
          %9649 = vmatpush1.msra.mxu0 0.0
          %9650 = vmatprep.subr.mxu0 0.0
          %9651 = vmatpush1.msra.mxu0 %v8342
          %9652 = vmatprep.subr.mxu0 0.0
          %9653 = vmatpush1.msra.mxu0 %v7801
          %9654 = vmatprep.subr.mxu0 0.0
          %9655 = vmatpush1.msra.mxu0 %v7796
          %9656 = vmatprep.subr.mxu0 0.0
          %9657 = vmatpush2.msra.mxu0 0.0
          %9658 = vmatprep.subr.mxu0 0.0
          %9659 = vmatpush2.msra.mxu0 0.0
          %9660 = vmatprep.subr.mxu0 0.0
          %9661 = vmatpush2.msra.mxu0 0.0
          %9662 = vmatprep.subr.mxu0 0.0
          %9663 = vmatpush2.msra.mxu0 0.0
          %9664 = vmatprep.subr.mxu0 0.0
          %9665 = vmatpush2.msra.mxu0 0.0
          %9666 = vmatprep.subr.mxu0 0.0
          %9667 = vmatpush2.msra.mxu0 0.0
          %9668 = vmatprep.subr.mxu0 0.0
          %9669 = vmatpush2.msra.mxu0 0.0
          %9670 = vmatprep.subr.mxu0 0.0
          %9671 = vmatpush2.msra.mxu0 0.0
          %9672 = vmatprep.subr.mxu0 0.0
          %9673 = vmatpush2.msra.mxu0 0.0
          %9674 = vmatprep.subr.mxu0 0.0
          %9675 = vmatpush2.msra.mxu0 0.0
          %9676 = vmatprep.subr.mxu0 0.0
          %9677 = vmatpush2.msra.mxu0 0.0
          %9678 = vmatprep.subr.mxu0 0.0
          %9679 = vmatpush2.msra.mxu0 0.0
          %9680 = vmatprep.subr.mxu0 0.0
          %9681 = vmatpush2.msra.mxu0 0.0
          %9682 = vmatprep.subr.mxu0 0.0
          %9683 = vmatpush2.msra.mxu0 0.0
          %9684 = vmatprep.subr.mxu0 0.0
          %9685 = vmatpush2.msra.mxu0 0.0
          %9686 = vmatprep.subr.mxu0 0.0
          %9687 = vmatpush2.msra.mxu0 0.0
          %9688 = vmatprep.mubr.f32.mxu0 0.0
          %9689 = vmatmul.mubr.f32.gmra.mxu0 %v9622
          %v9690 = vpop.f32.mrf.mxu0
          %v9691 = vadd.f32 0.0, %v9690
          %v9692 = vpop.f32.mrf.mxu0
          %9693 = vdwg.mxu0
          %v9695 = vsel %vm3378, %v9182, 0
          %9697 = vmatprep.subr.mxu0 0.0
          %9698 = vmatpush1.msra.mxu0 0.0
          %9699 = vmatprep.subr.mxu0 0.0
          %9700 = vmatpush1.msra.mxu0 0.0
          %9701 = vmatprep.subr.mxu0 0.0
          %9702 = vmatpush1.msra.mxu0 0.0
          %9703 = vmatprep.subr.mxu0 0.0
          %9704 = vmatpush1.msra.mxu0 0.0
          %9705 = vmatprep.subr.mxu0 0.0
          %9706 = vmatpush1.msra.mxu0 0.0
          %9707 = vmatprep.subr.mxu0 0.0
          %9708 = vmatpush1.msra.mxu0 0.0
          %9709 = vmatprep.subr.mxu0 0.0
          %9710 = vmatpush1.msra.mxu0 0.0
          %9711 = vmatprep.subr.mxu0 0.0
          %9712 = vmatpush1.msra.mxu0 0.0
          %9713 = vmatprep.subr.mxu0 0.0
          %9714 = vmatpush1.msra.mxu0 0.0
          %9715 = vmatprep.subr.mxu0 0.0
          %9716 = vmatpush1.msra.mxu0 0.0
          %9717 = vmatprep.subr.mxu0 0.0
          %9718 = vmatpush1.msra.mxu0 0.0
          %9719 = vmatprep.subr.mxu0 0.0
          %9720 = vmatpush1.msra.mxu0 0.0
          %9721 = vmatprep.subr.mxu0 0.0
          %9722 = vmatpush1.msra.mxu0 0.0
          %9723 = vmatprep.subr.mxu0 0.0
          %9724 = vmatpush1.msra.mxu0 %v8415
          %9725 = vmatprep.subr.mxu0 0.0
          %9726 = vmatpush1.msra.mxu0 %v7892
          %9727 = vmatprep.subr.mxu0 0.0
          %9728 = vmatpush1.msra.mxu0 %v7887
          %9729 = vmatprep.subr.mxu0 0.0
          %9730 = vmatpush2.msra.mxu0 0.0
          %9731 = vmatprep.subr.mxu0 0.0
          %9732 = vmatpush2.msra.mxu0 0.0
          %9733 = vmatprep.subr.mxu0 0.0
          %9734 = vmatpush2.msra.mxu0 0.0
          %9735 = vmatprep.subr.mxu0 0.0
          %9736 = vmatpush2.msra.mxu0 0.0
          %9737 = vmatprep.subr.mxu0 0.0
          %9738 = vmatpush2.msra.mxu0 0.0
          %9739 = vmatprep.subr.mxu0 0.0
          %9740 = vmatpush2.msra.mxu0 0.0
          %9741 = vmatprep.subr.mxu0 0.0
          %9742 = vmatpush2.msra.mxu0 0.0
          %9743 = vmatprep.subr.mxu0 0.0
          %9744 = vmatpush2.msra.mxu0 0.0
          %9745 = vmatprep.subr.mxu0 0.0
          %9746 = vmatpush2.msra.mxu0 0.0
          %9747 = vmatprep.subr.mxu0 0.0
          %9748 = vmatpush2.msra.mxu0 0.0
          %9749 = vmatprep.subr.mxu0 0.0
          %9750 = vmatpush2.msra.mxu0 0.0
          %9751 = vmatprep.subr.mxu0 0.0
          %9752 = vmatpush2.msra.mxu0 0.0
          %9753 = vmatprep.subr.mxu0 0.0
          %9754 = vmatpush2.msra.mxu0 0.0
          %9755 = vmatprep.subr.mxu0 0.0
          %9756 = vmatpush2.msra.mxu0 0.0
          %9757 = vmatprep.subr.mxu0 0.0
          %9758 = vmatpush2.msra.mxu0 0.0
          %9759 = vmatprep.subr.mxu0 0.0
          %9760 = vmatpush2.msra.mxu0 0.0
          %9761 = vmatprep.mubr.f32.mxu0 0.0
          %9762 = vmatmul.mubr.f32.gmra.mxu0 %v9695
          %v9763 = vpop.f32.mrf.mxu0
          %v9764 = vadd.f32 0.0, %v9763
          %v9765 = vpop.f32.mrf.mxu0
          %9766 = vdwg.mxu0
          %v9767 = vmul.f32 %v9253, %v9253
          %v9768 = vmul.f32 %v9326, %v9326
          %v9769 = vmul.f32 %v9399, %v9399
          %v9770 = vmul.f32 %v9472, %v9472
          %v9771 = vmul.f32 %v9545, %v9545
          %v9772 = vmul.f32 %v9618, %v9618
          %v9773 = vmul.f32 %v9691, %v9691
          %v9774 = vmul.f32 %v9764, %v9764
          %v9775 = vsel %vm3385, %v9767, 0.0
          %9776 = vadd.xlane.f32.xlu0 %v9775
          %v9777 = vpop.xlane.xlu0 %9776
          %v9778 = vsel %vm3385, %v9768, 0.0
          %9779 = vadd.xlane.f32.xlu0 %v9778
          %v9780 = vpop.xlane.xlu0 %9779
          %v9781 = vsel %vm3385, %v9769, 0.0
          %9782 = vadd.xlane.f32.xlu0 %v9781
          %v9783 = vpop.xlane.xlu0 %9782
          %v9784 = vsel %vm3385, %v9770, 0.0
          %9785 = vadd.xlane.f32.xlu0 %v9784
          %v9786 = vpop.xlane.xlu0 %9785
          %v9787 = vsel %vm3385, %v9771, 0.0
          %9788 = vadd.xlane.f32.xlu0 %v9787
          %v9789 = vpop.xlane.xlu0 %9788
          %v9790 = vsel %vm3385, %v9772, 0.0
          %9791 = vadd.xlane.f32.xlu0 %v9790
          %v9792 = vpop.xlane.xlu0 %9791
          %v9793 = vsel %vm3385, %v9773, 0.0
          %9794 = vadd.xlane.f32.xlu0 %v9793
          %v9795 = vpop.xlane.xlu0 %9794
          %v9796 = vsel %vm3385, %v9774, 0.0
          %9797 = vadd.xlane.f32.xlu0 %v9796
          %v9798 = vpop.xlane.xlu0 %9797
          %v9799 = vrsqrt.pop %v9777
          %v9800 = vmul.f32 %v9777, %v9799
          %vm9801 = vcmp.eq.f32.partialorder %v9777, inf
          %v9802 = vsel %vm9801, %v9777, %v9800
          %vm9803 = vcmp.eq.f32.partialorder %v9777, 0.0
          %v9804 = vand.u32 %v9777, 2147483648
          %v9805 = vsel %vm9803, %v9804, %v9802
          %v9806 = vrsqrt.pop %v9780
          %v9807 = vmul.f32 %v9780, %v9806
          %vm9808 = vcmp.eq.f32.partialorder %v9780, inf
          %v9809 = vsel %vm9808, %v9780, %v9807
          %vm9810 = vcmp.eq.f32.partialorder %v9780, 0.0
          %v9811 = vand.u32 %v9780, 2147483648
          %v9812 = vsel %vm9810, %v9811, %v9809
          %v9813 = vrsqrt.pop %v9783
          %v9814 = vmul.f32 %v9783, %v9813
          %vm9815 = vcmp.eq.f32.partialorder %v9783, inf
          %v9816 = vsel %vm9815, %v9783, %v9814
          %vm9817 = vcmp.eq.f32.partialorder %v9783, 0.0
          %v9818 = vand.u32 %v9783, 2147483648
          %v9819 = vsel %vm9817, %v9818, %v9816
          %v9820 = vrsqrt.pop %v9786
          %v9821 = vmul.f32 %v9786, %v9820
          %vm9822 = vcmp.eq.f32.partialorder %v9786, inf
          %v9823 = vsel %vm9822, %v9786, %v9821
          %vm9824 = vcmp.eq.f32.partialorder %v9786, 0.0
          %v9825 = vand.u32 %v9786, 2147483648
          %v9826 = vsel %vm9824, %v9825, %v9823
          %v9827 = vrsqrt.pop %v9789
          %v9828 = vmul.f32 %v9789, %v9827
          %vm9829 = vcmp.eq.f32.partialorder %v9789, inf
          %v9830 = vsel %vm9829, %v9789, %v9828
          %vm9831 = vcmp.eq.f32.partialorder %v9789, 0.0
          %v9832 = vand.u32 %v9789, 2147483648
          %v9833 = vsel %vm9831, %v9832, %v9830
          %v9834 = vrsqrt.pop %v9792
          %v9835 = vmul.f32 %v9792, %v9834
          %vm9836 = vcmp.eq.f32.partialorder %v9792, inf
          %v9837 = vsel %vm9836, %v9792, %v9835
          %vm9838 = vcmp.eq.f32.partialorder %v9792, 0.0
          %v9839 = vand.u32 %v9792, 2147483648
          %v9840 = vsel %vm9838, %v9839, %v9837
          %v9841 = vrsqrt.pop %v9795
          %v9842 = vmul.f32 %v9795, %v9841
          %vm9843 = vcmp.eq.f32.partialorder %v9795, inf
          %v9844 = vsel %vm9843, %v9795, %v9842
          %vm9845 = vcmp.eq.f32.partialorder %v9795, 0.0
          %v9846 = vand.u32 %v9795, 2147483648
          %v9847 = vsel %vm9845, %v9846, %v9844
          %v9848 = vrsqrt.pop %v9798
          %v9849 = vmul.f32 %v9798, %v9848
          %vm9850 = vcmp.eq.f32.partialorder %v9798, inf
          %v9851 = vsel %vm9850, %v9798, %v9849
          %vm9852 = vcmp.eq.f32.partialorder %v9798, 0.0
          %v9853 = vand.u32 %v9798, 2147483648
          %v9854 = vsel %vm9852, %v9853, %v9851
          %v9855 = vrsqrt.pop %v9805
          %v9856 = vmul.f32 %v9805, %v9855
          %vm9857 = vcmp.eq.f32.partialorder %v9805, inf
          %v9858 = vsel %vm9857, %v9805, %v9856
          %vm9859 = vcmp.eq.f32.partialorder %v9805, 0.0
          %v9860 = vand.u32 %v9805, 2147483648
          %v9861 = vsel %vm9859, %v9860, %v9858
          %v9862 = vrsqrt.pop %v9812
          %v9863 = vmul.f32 %v9812, %v9862
          %vm9864 = vcmp.eq.f32.partialorder %v9812, inf
          %v9865 = vsel %vm9864, %v9812, %v9863
          %vm9866 = vcmp.eq.f32.partialorder %v9812, 0.0
          %v9867 = vand.u32 %v9812, 2147483648
          %v9868 = vsel %vm9866, %v9867, %v9865
          %v9869 = vrsqrt.pop %v9819
          %v9870 = vmul.f32 %v9819, %v9869
          %vm9871 = vcmp.eq.f32.partialorder %v9819, inf
          %v9872 = vsel %vm9871, %v9819, %v9870
          %vm9873 = vcmp.eq.f32.partialorder %v9819, 0.0
          %v9874 = vand.u32 %v9819, 2147483648
          %v9875 = vsel %vm9873, %v9874, %v9872
          %v9876 = vrsqrt.pop %v9826
          %v9877 = vmul.f32 %v9826, %v9876
          %vm9878 = vcmp.eq.f32.partialorder %v9826, inf
          %v9879 = vsel %vm9878, %v9826, %v9877
          %vm9880 = vcmp.eq.f32.partialorder %v9826, 0.0
          %v9881 = vand.u32 %v9826, 2147483648
          %v9882 = vsel %vm9880, %v9881, %v9879
          %v9883 = vrsqrt.pop %v9833
          %v9884 = vmul.f32 %v9833, %v9883
          %vm9885 = vcmp.eq.f32.partialorder %v9833, inf
          %v9886 = vsel %vm9885, %v9833, %v9884
          %vm9887 = vcmp.eq.f32.partialorder %v9833, 0.0
          %v9888 = vand.u32 %v9833, 2147483648
          %v9889 = vsel %vm9887, %v9888, %v9886
          %v9890 = vrsqrt.pop %v9840
          %v9891 = vmul.f32 %v9840, %v9890
          %vm9892 = vcmp.eq.f32.partialorder %v9840, inf
          %v9893 = vsel %vm9892, %v9840, %v9891
          %vm9894 = vcmp.eq.f32.partialorder %v9840, 0.0
          %v9895 = vand.u32 %v9840, 2147483648
          %v9896 = vsel %vm9894, %v9895, %v9893
          %v9897 = vrsqrt.pop %v9847
          %v9898 = vmul.f32 %v9847, %v9897
          %vm9899 = vcmp.eq.f32.partialorder %v9847, inf
          %v9900 = vsel %vm9899, %v9847, %v9898
          %vm9901 = vcmp.eq.f32.partialorder %v9847, 0.0
          %v9902 = vand.u32 %v9847, 2147483648
          %v9903 = vsel %vm9901, %v9902, %v9900
          %v9904 = vrsqrt.pop %v9854
          %v9905 = vmul.f32 %v9854, %v9904
          %vm9906 = vcmp.eq.f32.partialorder %v9854, inf
          %v9907 = vsel %vm9906, %v9854, %v9905
          %vm9908 = vcmp.eq.f32.partialorder %v9854, 0.0
          %v9909 = vand.u32 %v9854, 2147483648
          %v9910 = vsel %vm9908, %v9909, %v9907
          %v9911 = vrsqrt.pop %v9861
          %v9912 = vmul.f32 %v9861, %v9911
          %vm9913 = vcmp.eq.f32.partialorder %v9861, inf
          %v9914 = vsel %vm9913, %v9861, %v9912
          %vm9915 = vcmp.eq.f32.partialorder %v9861, 0.0
          %v9916 = vand.u32 %v9861, 2147483648
          %v9917 = vsel %vm9915, %v9916, %v9914
          %v9918 = vrsqrt.pop %v9868
          %v9919 = vmul.f32 %v9868, %v9918
          %vm9920 = vcmp.eq.f32.partialorder %v9868, inf
          %v9921 = vsel %vm9920, %v9868, %v9919
          %vm9922 = vcmp.eq.f32.partialorder %v9868, 0.0
          %v9923 = vand.u32 %v9868, 2147483648
          %v9924 = vsel %vm9922, %v9923, %v9921
          %v9925 = vrsqrt.pop %v9875
          %v9926 = vmul.f32 %v9875, %v9925
          %vm9927 = vcmp.eq.f32.partialorder %v9875, inf
          %v9928 = vsel %vm9927, %v9875, %v9926
          %vm9929 = vcmp.eq.f32.partialorder %v9875, 0.0
          %v9930 = vand.u32 %v9875, 2147483648
          %v9931 = vsel %vm9929, %v9930, %v9928
          %v9932 = vrsqrt.pop %v9882
          %v9933 = vmul.f32 %v9882, %v9932
          %vm9934 = vcmp.eq.f32.partialorder %v9882, inf
          %v9935 = vsel %vm9934, %v9882, %v9933
          %vm9936 = vcmp.eq.f32.partialorder %v9882, 0.0
          %v9937 = vand.u32 %v9882, 2147483648
          %v9938 = vsel %vm9936, %v9937, %v9935
          %v9939 = vrsqrt.pop %v9889
          %v9940 = vmul.f32 %v9889, %v9939
          %vm9941 = vcmp.eq.f32.partialorder %v9889, inf
          %v9942 = vsel %vm9941, %v9889, %v9940
          %vm9943 = vcmp.eq.f32.partialorder %v9889, 0.0
          %v9944 = vand.u32 %v9889, 2147483648
          %v9945 = vsel %vm9943, %v9944, %v9942
          %v9946 = vrsqrt.pop %v9896
          %v9947 = vmul.f32 %v9896, %v9946
          %vm9948 = vcmp.eq.f32.partialorder %v9896, inf
          %v9949 = vsel %vm9948, %v9896, %v9947
          %vm9950 = vcmp.eq.f32.partialorder %v9896, 0.0
          %v9951 = vand.u32 %v9896, 2147483648
          %v9952 = vsel %vm9950, %v9951, %v9949
          %v9953 = vrsqrt.pop %v9903
          %v9954 = vmul.f32 %v9903, %v9953
          %vm9955 = vcmp.eq.f32.partialorder %v9903, inf
          %v9956 = vsel %vm9955, %v9903, %v9954
          %vm9957 = vcmp.eq.f32.partialorder %v9903, 0.0
          %v9958 = vand.u32 %v9903, 2147483648
          %v9959 = vsel %vm9957, %v9958, %v9956
          %v9960 = vrsqrt.pop %v9910
          %v9961 = vmul.f32 %v9910, %v9960
          %vm9962 = vcmp.eq.f32.partialorder %v9910, inf
          %v9963 = vsel %vm9962, %v9910, %v9961
          %vm9964 = vcmp.eq.f32.partialorder %v9910, 0.0
          %v9965 = vand.u32 %v9910, 2147483648
          %v9966 = vsel %vm9964, %v9965, %v9963
          %v9967 = vrsqrt.pop %v9917
          %v9968 = vmul.f32 %v9917, %v9967
          %vm9969 = vcmp.eq.f32.partialorder %v9917, inf
          %v9970 = vsel %vm9969, %v9917, %v9968
          %vm9971 = vcmp.eq.f32.partialorder %v9917, 0.0
          %v9972 = vand.u32 %v9917, 2147483648
          %v9973 = vsel %vm9971, %v9972, %v9970
          %v9974 = vrsqrt.pop %v9924
          %v9975 = vmul.f32 %v9924, %v9974
          %vm9976 = vcmp.eq.f32.partialorder %v9924, inf
          %v9977 = vsel %vm9976, %v9924, %v9975
          %vm9978 = vcmp.eq.f32.partialorder %v9924, 0.0
          %v9979 = vand.u32 %v9924, 2147483648
          %v9980 = vsel %vm9978, %v9979, %v9977
          %v9981 = vrsqrt.pop %v9931
          %v9982 = vmul.f32 %v9931, %v9981
          %vm9983 = vcmp.eq.f32.partialorder %v9931, inf
          %v9984 = vsel %vm9983, %v9931, %v9982
          %vm9985 = vcmp.eq.f32.partialorder %v9931, 0.0
          %v9986 = vand.u32 %v9931, 2147483648
          %v9987 = vsel %vm9985, %v9986, %v9984
          %v9988 = vrsqrt.pop %v9938
          %v9989 = vmul.f32 %v9938, %v9988
          %vm9990 = vcmp.eq.f32.partialorder %v9938, inf
          %v9991 = vsel %vm9990, %v9938, %v9989
          %vm9992 = vcmp.eq.f32.partialorder %v9938, 0.0
          %v9993 = vand.u32 %v9938, 2147483648
          %v9994 = vsel %vm9992, %v9993, %v9991
          %v9995 = vrsqrt.pop %v9945
          %v9996 = vmul.f32 %v9945, %v9995
          %vm9997 = vcmp.eq.f32.partialorder %v9945, inf
          %v9998 = vsel %vm9997, %v9945, %v9996
          %vm9999 = vcmp.eq.f32.partialorder %v9945, 0.0
          %v10000 = vand.u32 %v9945, 2147483648
          %v10001 = vsel %vm9999, %v10000, %v9998
          %v10002 = vrsqrt.pop %v9952
          %v10003 = vmul.f32 %v9952, %v10002
          %vm10004 = vcmp.eq.f32.partialorder %v9952, inf
          %v10005 = vsel %vm10004, %v9952, %v10003
          %vm10006 = vcmp.eq.f32.partialorder %v9952, 0.0
          %v10007 = vand.u32 %v9952, 2147483648
          %v10008 = vsel %vm10006, %v10007, %v10005
          %v10009 = vrsqrt.pop %v9959
          %v10010 = vmul.f32 %v9959, %v10009
          %vm10011 = vcmp.eq.f32.partialorder %v9959, inf
          %v10012 = vsel %vm10011, %v9959, %v10010
          %vm10013 = vcmp.eq.f32.partialorder %v9959, 0.0
          %v10014 = vand.u32 %v9959, 2147483648
          %v10015 = vsel %vm10013, %v10014, %v10012
          %v10016 = vrsqrt.pop %v9966
          %v10017 = vmul.f32 %v9966, %v10016
          %vm10018 = vcmp.eq.f32.partialorder %v9966, inf
          %v10019 = vsel %vm10018, %v9966, %v10017
          %vm10020 = vcmp.eq.f32.partialorder %v9966, 0.0
          %v10021 = vand.u32 %v9966, 2147483648
          %v10022 = vsel %vm10020, %v10021, %v10019
          %v10023 = vrsqrt.pop %v9973
          %v10024 = vmul.f32 %v9973, %v10023
          %vm10025 = vcmp.eq.f32.partialorder %v9973, inf
          %v10026 = vsel %vm10025, %v9973, %v10024
          %vm10027 = vcmp.eq.f32.partialorder %v9973, 0.0
          %v10028 = vand.u32 %v9973, 2147483648
          %v10029 = vsel %vm10027, %v10028, %v10026
          %v10030 = vrsqrt.pop %v9980
          %v10031 = vmul.f32 %v9980, %v10030
          %vm10032 = vcmp.eq.f32.partialorder %v9980, inf
          %v10033 = vsel %vm10032, %v9980, %v10031
          %vm10034 = vcmp.eq.f32.partialorder %v9980, 0.0
          %v10035 = vand.u32 %v9980, 2147483648
          %v10036 = vsel %vm10034, %v10035, %v10033
          %v10037 = vrsqrt.pop %v9987
          %v10038 = vmul.f32 %v9987, %v10037
          %vm10039 = vcmp.eq.f32.partialorder %v9987, inf
          %v10040 = vsel %vm10039, %v9987, %v10038
          %vm10041 = vcmp.eq.f32.partialorder %v9987, 0.0
          %v10042 = vand.u32 %v9987, 2147483648
          %v10043 = vsel %vm10041, %v10042, %v10040
          %v10044 = vrsqrt.pop %v9994
          %v10045 = vmul.f32 %v9994, %v10044
          %vm10046 = vcmp.eq.f32.partialorder %v9994, inf
          %v10047 = vsel %vm10046, %v9994, %v10045
          %vm10048 = vcmp.eq.f32.partialorder %v9994, 0.0
          %v10049 = vand.u32 %v9994, 2147483648
          %v10050 = vsel %vm10048, %v10049, %v10047
          %v10051 = vrsqrt.pop %v10001
          %v10052 = vmul.f32 %v10001, %v10051
          %vm10053 = vcmp.eq.f32.partialorder %v10001, inf
          %v10054 = vsel %vm10053, %v10001, %v10052
          %vm10055 = vcmp.eq.f32.partialorder %v10001, 0.0
          %v10056 = vand.u32 %v10001, 2147483648
          %v10057 = vsel %vm10055, %v10056, %v10054
          %v10058 = vrsqrt.pop %v10008
          %v10059 = vmul.f32 %v10008, %v10058
          %vm10060 = vcmp.eq.f32.partialorder %v10008, inf
          %v10061 = vsel %vm10060, %v10008, %v10059
          %vm10062 = vcmp.eq.f32.partialorder %v10008, 0.0
          %v10063 = vand.u32 %v10008, 2147483648
          %v10064 = vsel %vm10062, %v10063, %v10061
          %v10065 = vrsqrt.pop %v10015
          %v10066 = vmul.f32 %v10015, %v10065
          %vm10067 = vcmp.eq.f32.partialorder %v10015, inf
          %v10068 = vsel %vm10067, %v10015, %v10066
          %vm10069 = vcmp.eq.f32.partialorder %v10015, 0.0
          %v10070 = vand.u32 %v10015, 2147483648
          %v10071 = vsel %vm10069, %v10070, %v10068
          %v10072 = vrsqrt.pop %v10022
          %v10073 = vmul.f32 %v10022, %v10072
          %vm10074 = vcmp.eq.f32.partialorder %v10022, inf
          %v10075 = vsel %vm10074, %v10022, %v10073
          %vm10076 = vcmp.eq.f32.partialorder %v10022, 0.0
          %v10077 = vand.u32 %v10022, 2147483648
          %v10078 = vsel %vm10076, %v10077, %v10075
          %v10079 = vsel %vm3666, %v10029, 0.0
          %v10080 = vsel %vm3666, %v10036, 0.0
          %v10081 = vadd.f32 %v10079, %v10080
          %v10082 = vsel %vm3666, %v10043, 0.0
          %v10083 = vadd.f32 %v10081, %v10082
          %v10084 = vsel %vm3666, %v10050, 0.0
          %v10085 = vadd.f32 %v10083, %v10084
          %v10086 = vsel %vm3666, %v10057, 0.0
          %v10087 = vadd.f32 %v10085, %v10086
          %v10088 = vsel %vm3666, %v10064, 0.0
          %v10089 = vadd.f32 %v10087, %v10088
          %v10090 = vsel %vm3666, %v10071, 0.0
          %v10091 = vadd.f32 %v10089, %v10090
          %v10092 = vsel %vm3666, %v10078, 0.0
          %v10093 = vadd.f32 %v10091, %v10092
          %v10094 = vmul.f32 %v5003, 4.0
          %v10095 = vmul.f32 %v10094, %v5003
          %v10096 = vmul.f32 %v568, %v568
          %v10097 = vadd.f32 %v10095, %v10096
          %v10098 = vmul.f32 %v10097, 0.0625
          %v10099 = vrsqrt.pop %v10098
          %v10100 = vmul.f32 %v10098, %v10099
          %vm10101 = vcmp.eq.f32.partialorder %v10098, inf
          %v10102 = vsel %vm10101, %v10098, %v10100
          %vm10103 = vcmp.eq.f32.partialorder %v10098, 0.0
          %v10104 = vand.u32 %v10098, 2147483648
          %v10105 = vsel %vm10103, %v10104, %v10102
          %v10106 = vmul.f32 %v568, %v10105
          %v10107 = vadd.f32 %v5003, %v568
          %v10108 = vmul.f32 %v10106, %v10107
          %v10109 = vmul.f32 %v568, %v10093
          %v10110 = vadd.f32 %v568, %v10109
          %v10111 = vmul.f32 %v10108, 8.0
          %v10112 = vadd.f32 %v10110, %v10111
          %s10113 = scalar_lea.vmem %s6, %s560
          %v10114 = vld [vmem:[%s10113] sm:$0x1]
          %s10115 = scalar_lea.vmem %s7, %s560
          %v10116 = vld [vmem:[%s10115] sm:$0x1]
          %v10117 = vsel %vm573, %v4973, 0.0
          %10118 = vadd.xlane.f32.xlu0 %v10117
          %v10119 = vpop.xlane.xlu0 %10118
          %v10120 = vsel %vm573, %v4974, 0.0
          %10121 = vadd.xlane.f32.xlu0 %v10120
          %v10122 = vpop.xlane.xlu0 %10121
          %v10123 = vsel %vm580, %v4975, 0.0
          %10124 = vadd.xlane.f32.xlu0 %v10123
          %v10125 = vpop.xlane.xlu0 %10124
          %v10126 = vmul.f32 %v10119, %v584
          %v10127 = vmul.f32 %v10122, %v584
          %v10128 = vmul.f32 %v10125, %v584
          %v10129 = vsub.f32 %v4973, %v10126
          %v10130 = vsub.f32 %v4974, %v10127
          %v10131 = vsub.f32 %v4975, %v10128
          %v10132 = vmul.f32 %v10129, %v10129
          %v10133 = vmul.f32 %v10130, %v10130
          %v10134 = vmul.f32 %v10131, %v10131
          %v10135 = vsel %vm573, %v10132, 0.0
          %10136 = vadd.xlane.f32.xlu0 %v10135
          %v10137 = vpop.xlane.xlu0 %10136
          %v10138 = vsel %vm573, %v10133, 0.0
          %10139 = vadd.xlane.f32.xlu0 %v10138
          %v10140 = vpop.xlane.xlu0 %10139
          %v10141 = vsel %vm580, %v10134, 0.0
          %10142 = vadd.xlane.f32.xlu0 %v10141
          %v10143 = vpop.xlane.xlu0 %10142
          %v10144 = vmul.f32 %v10137, %v584
          %v10145 = vmul.f32 %v10140, %v584
          %v10146 = vmul.f32 %v10143, %v584
          %v10147 = vadd.f32 %v10144, 1e-05
          %v10148 = vadd.f32 %v10145, 1e-05
          %v10149 = vadd.f32 %v10146, 1e-05
          %v10150 = vrsqrt.pop %v10147
          %v10151 = vrsqrt.pop %v10148
          %v10152 = vrsqrt.pop %v10149
          %v10153 = vmul.f32 %v10129, %v10150
          %v10154 = vmul.f32 %v10130, %v10151
          %v10155 = vmul.f32 %v10131, %v10152
          %v10157 = vlaneseq
          %v10158 = vshrl.u32 %v10157, 7
          %v10159 = vsub.s32 0, %v10158
          %v10160 = vrot.slane %v10114, %v10159
          %v10162 = vmul.f32 %v10153, %v10160
          %v10163 = vmul.f32 %v10154, %v10160
          %v10164 = vmul.f32 %v10155, %v10160
          %v10166 = vlaneseq
          %v10167 = vshrl.u32 %v10166, 7
          %v10168 = vsub.s32 0, %v10167
          %v10169 = vrot.slane %v10116, %v10168
          %v10171 = vadd.f32 %v10162, %v10169
          %v10172 = vadd.f32 %v10163, %v10169
          %v10173 = vadd.f32 %v10164, %v10169
          %v10174 = vpack.c.bf16 %v10172, %v10171
          %v10175 = vpack.c.bf16 %v10173, %v10173
          %s10176 = smul.u32 %s560, 4
          %s10177 = smul.addr %s10176, 4
          %s10178 = scalar_lea.vmem %s8, %s10177
          %v10179 = vld [vmem:[%s10178] sm:$0xf]
          %v10180 = vld [vmem:[%s10178 + $0x4] sm:$0xf]
          %v10181 = vld [vmem:[%s10178 + $0x8] sm:$0xf]
          %v10182 = vld [vmem:[%s10178 + $0xc] sm:$0xf]
          %s10183 = scalar_lea.vmem %s9, %s560
          %v10184 = vld [vmem:[%s10183] sm:$0x1]
          %v10186 = vlaneseq
          %v10187 = vshrl.u32 %v10186, 7
          %v10188 = vsub.s32 0, %v10187
          %v10189 = vrot.slane %v10184, %v10188
          %v10195 = vunpack.c.l.b16 %v10179
          %v10196 = vunpack.c.l.b16 %v10180
          %v10197 = vunpack.c.l.b16 %v10181
          %v10198 = vunpack.c.l.b16 %v10182
          %v10199 = vpack.c.b16 %v10196, %v10195
          %v10200 = vpack.c.b16 %v10198, %v10197
          %v10204 = vsel %vm573, %v10174, 0
          %v10207 = vsel %vm573, %v10175, 0
          %10209 = vmatprep.subr.bf16.mxu0 0
          %10210 = vmatpush1.bf16.msra.mxu0 0
          %10211 = vmatprep.subr.bf16.mxu0 0
          %10212 = vmatpush1.bf16.msra.mxu0 0
          %10213 = vmatprep.subr.bf16.mxu0 0
          %10214 = vmatpush1.bf16.msra.mxu0 0
          %10215 = vmatprep.subr.bf16.mxu0 0
          %10216 = vmatpush1.bf16.msra.mxu0 0
          %10217 = vmatprep.subr.bf16.mxu0 0
          %10218 = vmatpush1.bf16.msra.mxu0 0
          %10219 = vmatprep.subr.bf16.mxu0 0
          %10220 = vmatpush1.bf16.msra.mxu0 0
          %10221 = vmatprep.subr.bf16.mxu0 0
          %10222 = vmatpush1.bf16.msra.mxu0 %v10200
          %10223 = vmatprep.subr.bf16.mxu0 0
          %10224 = vmatpush1.bf16.msra.mxu0 %v10199
          %10225 = vmatprep.subr.bf16.mxu0 0
          %10226 = vmatpush2.bf16.msra.mxu0 0
          %10227 = vmatprep.subr.bf16.mxu0 0
          %10228 = vmatpush2.bf16.msra.mxu0 0
          %10229 = vmatprep.subr.bf16.mxu0 0
          %10230 = vmatpush2.bf16.msra.mxu0 0
          %10231 = vmatprep.subr.bf16.mxu0 0
          %10232 = vmatpush2.bf16.msra.mxu0 0
          %10233 = vmatprep.subr.bf16.mxu0 0
          %10234 = vmatpush2.bf16.msra.mxu0 0
          %10235 = vmatprep.subr.bf16.mxu0 0
          %10236 = vmatpush2.bf16.msra.mxu0 0
          %10237 = vmatprep.subr.bf16.mxu0 0
          %10238 = vmatpush2.bf16.msra.mxu0 0
          %10239 = vmatprep.subr.bf16.mxu0 0
          %10240 = vmatpush2.bf16.msra.mxu0 0
          %10241 = vmatprep.mubr.bf16.mxu0 0
          %10242 = vmatmul.mubr.bf16.gmra.mxu0 %v10204
          %v10243 = vpop.f32.mrf.mxu0
          %v10244 = vadd.f32 %v10189, %v10243
          %v10245 = vpop.f32.mrf.mxu0
          %v10246 = vpop.f32.mrf.mxu0
          %v10247 = vadd.f32 %v10189, %v10246
          %v10248 = vpop.f32.mrf.mxu0
          %10249 = vmatprep.mubr.bf16.mxu0 0
          %10250 = vmatmul.mubr.bf16.gmra.mxu0 %v10207
          %v10251 = vpop.f32.mrf.mxu0
          %v10252 = vadd.f32 %v10189, %v10251
          %v10253 = vpop.f32.mrf.mxu0
          %v10254 = vpop.f32.mrf.mxu0
          %v10255 = vpop.f32.mrf.mxu0
          %10256 = vdwg.mxu0
          %v10257 = vmul.f32 %v10244, %v10244
          %v10258 = vmul.f32 %v10247, %v10247
          %v10259 = vmul.f32 %v10252, %v10252
          %v10260 = vmul.f32 %v10244, %v10257
          %v10261 = vmul.f32 %v10247, %v10258
          %v10262 = vmul.f32 %v10252, %v10259
          %v10263 = vmul.f32 %v10260, 0.044715
          %v10264 = vmul.f32 %v10261, 0.044715
          %v10265 = vmul.f32 %v10262, 0.044715
          %v10266 = vadd.f32 %v10244, %v10263
          %v10267 = vadd.f32 %v10247, %v10264
          %v10268 = vadd.f32 %v10252, %v10265
          %v10269 = vmul.f32 %v10266, 0.7978846
          %v10270 = vmul.f32 %v10267, 0.7978846
          %v10271 = vmul.f32 %v10268, 0.7978846
          %v10272 = vtanh.pop %v10269
          %v10273 = vtanh.pop %v10270
          %v10274 = vtanh.pop %v10271
          %v10275 = vadd.f32 %v10272, 1.0
          %v10276 = vadd.f32 %v10273, 1.0
          %v10277 = vadd.f32 %v10274, 1.0
          %v10278 = vmul.f32 %v10275, 0.5
          %v10279 = vmul.f32 %v10276, 0.5
          %v10280 = vmul.f32 %v10277, 0.5
          %v10281 = vmul.f32 %v10244, %v10278
          %v10282 = vmul.f32 %v10247, %v10279
          %v10283 = vmul.f32 %v10252, %v10280
          %v10284 = vpack.c.bf16 %v10282, %v10281
          %v10285 = vpack.c.bf16 %v10283, %v10283
          %s10286 = smul.addr %s635, 4
          %s10287 = scalar_lea.vmem %s10, %s10286
          %v10288 = vld [vmem:[%s10287] sm:$0xf]
          %v10289 = vld [vmem:[%s10287 + $0x4] sm:$0xf]
          %v10290 = vld [vmem:[%s10287 + $0x8] sm:$0xf]
          %v10291 = vld [vmem:[%s10287 + $0xc] sm:$0xf]
          %v10292 = vld [vmem:[%s10287 + $0x10] sm:$0xf]
          %v10293 = vld [vmem:[%s10287 + $0x14] sm:$0xf]
          %v10294 = vld [vmem:[%s10287 + $0x18] sm:$0xf]
          %v10295 = vld [vmem:[%s10287 + $0x1c] sm:$0xf]
          %v10304 = vunpack.c.l.b16 %v10288
          %v10305 = vunpack.c.l.b16 %v10289
          %v10306 = vunpack.c.l.b16 %v10290
          %v10307 = vunpack.c.l.b16 %v10291
          %v10308 = vunpack.c.l.b16 %v10292
          %v10309 = vunpack.c.l.b16 %v10293
          %v10310 = vunpack.c.l.b16 %v10294
          %v10311 = vunpack.c.l.b16 %v10295
          %v10312 = vpack.c.b16 %v10305, %v10304
          %v10313 = vpack.c.b16 %v10307, %v10306
          %v10314 = vpack.c.b16 %v10309, %v10308
          %v10315 = vpack.c.b16 %v10311, %v10310
          %v10321 = vsel %vm4907, %v10284, 0
          %v10324 = vsel %vm4907, %v10285, 0
          %10326 = vmatprep.subr.bf16.mxu0 0
          %10327 = vmatpush1.bf16.msra.mxu0 0
          %10328 = vmatprep.subr.bf16.mxu0 0
          %10329 = vmatpush1.bf16.msra.mxu0 0
          %10330 = vmatprep.subr.bf16.mxu0 0
          %10331 = vmatpush1.bf16.msra.mxu0 0
          %10332 = vmatprep.subr.bf16.mxu0 0
          %10333 = vmatpush1.bf16.msra.mxu0 0
          %10334 = vmatprep.subr.bf16.mxu0 0
          %10335 = vmatpush1.bf16.msra.mxu0 %v10315
          %10336 = vmatprep.subr.bf16.mxu0 0
          %10337 = vmatpush1.bf16.msra.mxu0 %v10314
          %10338 = vmatprep.subr.bf16.mxu0 0
          %10339 = vmatpush1.bf16.msra.mxu0 %v10313
          %10340 = vmatprep.subr.bf16.mxu0 0
          %10341 = vmatpush1.bf16.msra.mxu0 %v10312
          %10342 = vmatprep.subr.bf16.mxu0 0
          %10343 = vmatpush2.bf16.msra.mxu0 0
          %10344 = vmatprep.subr.bf16.mxu0 0
          %10345 = vmatpush2.bf16.msra.mxu0 0
          %10346 = vmatprep.subr.bf16.mxu0 0
          %10347 = vmatpush2.bf16.msra.mxu0 0
          %10348 = vmatprep.subr.bf16.mxu0 0
          %10349 = vmatpush2.bf16.msra.mxu0 0
          %10350 = vmatprep.subr.bf16.mxu0 0
          %10351 = vmatpush2.bf16.msra.mxu0 0
          %10352 = vmatprep.subr.bf16.mxu0 0
          %10353 = vmatpush2.bf16.msra.mxu0 0
          %10354 = vmatprep.subr.bf16.mxu0 0
          %10355 = vmatpush2.bf16.msra.mxu0 0
          %10356 = vmatprep.subr.bf16.mxu0 0
          %10357 = vmatpush2.bf16.msra.mxu0 0
          %10358 = vmatprep.mubr.bf16.mxu0 0
          %10359 = vmatmul.mubr.bf16.gmra.mxu0 %v10321
          %v10360 = vpop.f32.mrf.mxu0
          %v10361 = vadd.f32 0.0, %v10360
          %v10362 = vpop.f32.mrf.mxu0
          %v10363 = vpop.f32.mrf.mxu0
          %v10364 = vadd.f32 0.0, %v10363
          %v10365 = vpop.f32.mrf.mxu0
          %10366 = vmatprep.mubr.bf16.mxu0 0
          %10367 = vmatmul.mubr.bf16.gmra.mxu0 %v10324
          %v10368 = vpop.f32.mrf.mxu0
          %v10369 = vadd.f32 0.0, %v10368
          %v10370 = vpop.f32.mrf.mxu0
          %v10371 = vpop.f32.mrf.mxu0
          %v10372 = vpop.f32.mrf.mxu0
          %10373 = vdwg.mxu0
          %v10374 = vadd.f32 %v4973, %v10361
          %v10375 = vadd.f32 %v4974, %v10364
          %v10376 = vadd.f32 %v4975, %v10369
          %s10377 = scalar_lea.vmem %s11, %s560
          %v10378 = vld [vmem:[%s10377] sm:$0x1]
          %v10380 = vlaneseq
          %v10381 = vshrl.u32 %v10380, 7
          %v10382 = vsub.s32 0, %v10381
          %v10383 = vrot.slane %v10378, %v10382
          %v10385 = vadd.f32 %v10374, %v10383
          %v10386 = vadd.f32 %v10375, %v10383
          %v10387 = vadd.f32 %v10376, %v10383
        $region89: #{vit_analyzer_forward.1} parent=83 // loop_footer
          %s564 = sadd.s32 1, %s560
        $region90: #{vit_analyzer_forward.1} parent=83 // loop_footer_branch
          %559 = sbr.rel target = $region86
        $region91: #{vit_analyzer_forward.1} parent=83 // loop_exit
          _
        %v10388 = vld [vmem:[%s12] sm:$0x1]
        %v10389 = vld [vmem:[%s13] sm:$0x1]
        %vm10390 = vcmask 253952
        %v10391 = vsel %vm10390, %v565, 0.0
        %10392 = vadd.xlane.f32.xlu0 %v10391
        %v10393 = vpop.xlane.xlu0 %10392
        %v10394 = vrcp.pop 32.0
        %v10395 = vmul.f32 %v10393, %v10394
        %v10396 = vsub.f32 %v565, %v10395
        %v10397 = vmul.f32 %v10396, %v10396
        %v10398 = vsel %vm10390, %v10397, 0.0
        %10399 = vadd.xlane.f32.xlu0 %v10398
        %v10400 = vpop.xlane.xlu0 %10399
        %v10401 = vmul.f32 %v10400, %v10394
        %v10402 = vadd.f32 %v10401, 1e-05
        %v10403 = vrsqrt.pop %v10402
        %v10404 = vmul.f32 %v10396, %v10403
        %v10405 = vmul.f32 %v10404, %v10388
        %v10406 = vadd.f32 %v10405, %v10389
        %v10407 = vpack.c.bf16 %v10406, %v10406
        %v10408 = vld [vmem:[%s14] sm:$0xf]
        %v10409 = vld [vmem:[%s14 + $0x4] sm:$0xf]
        %v10410 = vld [vmem:[%s14 + $0x8] sm:$0xf]
        %v10411 = vld [vmem:[%s14 + $0xc] sm:$0xf]
        %v10412 = vld [vmem:[%s15] sm:$0x1]
        %v10417 = vunpack.c.l.b16 %v10408
        %v10418 = vunpack.c.l.b16 %v10409
        %v10419 = vunpack.c.l.b16 %v10410
        %v10420 = vunpack.c.l.b16 %v10411
        %v10421 = vpack.c.b16 %v10418, %v10417
        %v10422 = vpack.c.b16 %v10420, %v10419
        %vm10425 = vcmask 261120
        %v10427 = vsel %vm10425, %v10407, 0
        %10429 = vmatprep.subr.bf16.mxu0 0
        %10430 = vmatpush1.bf16.msra.mxu0 0
        %10431 = vmatprep.subr.bf16.mxu0 0
        %10432 = vmatpush1.bf16.msra.mxu0 0
        %10433 = vmatprep.subr.bf16.mxu0 0
        %10434 = vmatpush1.bf16.msra.mxu0 0
        %10435 = vmatprep.subr.bf16.mxu0 0
        %10436 = vmatpush1.bf16.msra.mxu0 0
        %10437 = vmatprep.subr.bf16.mxu0 0
        %10438 = vmatpush1.bf16.msra.mxu0 0
        %10439 = vmatprep.subr.bf16.mxu0 0
        %10440 = vmatpush1.bf16.msra.mxu0 0
        %10441 = vmatprep.subr.bf16.mxu0 0
        %10442 = vmatpush1.bf16.msra.mxu0 %v10422
        %10443 = vmatprep.subr.bf16.mxu0 0
        %10444 = vmatpush1.bf16.msra.mxu0 %v10421
        %10445 = vmatprep.subr.bf16.mxu0 0
        %10446 = vmatpush2.bf16.msra.mxu0 0
        %10447 = vmatprep.subr.bf16.mxu0 0
        %10448 = vmatpush2.bf16.msra.mxu0 0
        %10449 = vmatprep.subr.bf16.mxu0 0
        %10450 = vmatpush2.bf16.msra.mxu0 0
        %10451 = vmatprep.subr.bf16.mxu0 0
        %10452 = vmatpush2.bf16.msra.mxu0 0
        %10453 = vmatprep.subr.bf16.mxu0 0
        %10454 = vmatpush2.bf16.msra.mxu0 0
        %10455 = vmatprep.subr.bf16.mxu0 0
        %10456 = vmatpush2.bf16.msra.mxu0 0
        %10457 = vmatprep.subr.bf16.mxu0 0
        %10458 = vmatpush2.bf16.msra.mxu0 0
        %10459 = vmatprep.subr.bf16.mxu0 0
        %10460 = vmatpush2.bf16.msra.mxu0 0
        %10461 = vmatprep.mubr.bf16.mxu0 0
        %10462 = vmatmul.mubr.bf16.gmra.mxu0 %v10427
        %v10463 = vpop.f32.mrf.mxu0
        %v10464 = vadd.f32 %v10412, %v10463
        %v10465 = vpop.f32.mrf.mxu0
        %v10466 = vpop.f32.mrf.mxu0
        %v10467 = vpop.f32.mrf.mxu0
        %10468 = vdwg.mxu0
        %vm10469 = vcmask 73728
        %10470 = vst.msk [vmem:[%s541] sm:$0x1] %vm10469, %v10464
        %vm10471 = vcmask 0
        %10472 = vst.msk [vmem:[%s554] sm:$0x1] %vm10471, %v568
        %s10473 = sand.u32 %s381, 1
        %s10474 = scalar_lea.sflag [#allocation3], %s10473
        %s10475 = sand.u32 %s381, 1
        %s10476 = scalar_lea.vmem [#allocation2], %s10475
        %p10477 = scmp.lt.s32.totalorder %s32, 1
        %s10478 = scalar_select %p10477, %s32, 1
        %s10479 = scalar_lea.vmem %s17, %s10478
        // Predicated region
        $region92: #{vit_analyzer_forward.1} parent=83 // pred_check
          %p10480 = pneg %p391
        $region93: #{vit_analyzer_forward.1} parent=83 // pred_check_branch
          %10482 = sbr.rel (%p10480) target = $region95
        $region94: #{vit_analyzer_forward.1} parent=83 // pred_region
          %s10484 = ssub.s32 16, 16
          %10485 = vsyncadd %s10474, %s10484
          %s10486 = smul.addr %s32, 16
          %s10487 = scalar_lea.hbm %s16, %s10486
          %s10489 = sshll.u32 %s10476, 4
          %s10490 = int_to_ptr.vmem [resolvable:$true] %s10489
          %10492 = dma.vmem_to_hbm [thread:$0]  %s10490, 16, %s10487, %s10474
        $region95: #{vit_analyzer_forward.1} parent=83 // pred_fallthru
          _
        // Predicated region
        $region96: #{vit_analyzer_forward.1} parent=83 // pred_check
          %p10493 = pneg %p417
        $region97: #{vit_analyzer_forward.1} parent=83 // pred_check_branch
          %10495 = sbr.rel (%p10493) target = $region99
        $region98: #{vit_analyzer_forward.1} parent=83 // pred_region
          _
        $region99: #{vit_analyzer_forward.1} parent=83 // pred_fallthru
          _
      $region84: #{vit_analyzer_forward.1} parent=5 // pred_fallthru
        _
      %p10496 = scmp.le.s32.totalorder 2, %s27
      // Predicated region
      $region100: #{vit_analyzer_forward.1} parent=5 // pred_check
        %p10497 = pneg %p10496
      $region101: #{vit_analyzer_forward.1} parent=5 // pred_check_branch
        %10499 = sbr.rel (%p10497) target = $region103
      $region102: #{vit_analyzer_forward.1} parent=5 // pred_region
        %s10500 = ssub.s32 %s27, 2
        // Predicated region
        $region104: #{vit_analyzer_forward.1} parent=102 // pred_check
          %p10501 = pneg %p397
        $region105: #{vit_analyzer_forward.1} parent=102 // pred_check_branch
          %10503 = sbr.rel (%p10501) target = $region107
        $region106: #{vit_analyzer_forward.1} parent=102 // pred_region
          %s10504 = sand.u32 %s382, 1
          %s10505 = scalar_lea.sflag [#allocation3], %s10504
          %s10506 = sand.u32 %s382, 1
          %s10507 = scalar_lea.vmem [#allocation2], %s10506
          %10508 = dma.done %s10505, 16
        $region107: #{vit_analyzer_forward.1} parent=102 // pred_fallthru
          _
        // Predicated region
        $region108: #{vit_analyzer_forward.1} parent=102 // pred_check
          %p10509 = pneg %p423
        $region109: #{vit_analyzer_forward.1} parent=102 // pred_check_branch
          %10511 = sbr.rel (%p10509) target = $region111
        $region110: #{vit_analyzer_forward.1} parent=102 // pred_region
          %p10512 = scmp.lt.s32.totalorder %s33, 1
          %s10513 = scalar_select %p10512, %s33, 1
          %s10514 = scalar_lea.vmem %s17, %s10513
        $region111: #{vit_analyzer_forward.1} parent=102 // pred_fallthru
          _
      $region103: #{vit_analyzer_forward.1} parent=5 // pred_fallthru
        _
    $region6: #{vit_analyzer_forward.1} parent=1 // loop_footer
      %s31 = sadd.s32 1, %s27
    $region7: #{vit_analyzer_forward.1} parent=1 // loop_footer_branch
      %26 = sbr.rel target = $region3
    $region8: #{vit_analyzer_forward.1} parent=1 // loop_exit
      _
    %10515 = vsyncpa [#allocation3], 1
    %s10516 = scalar_lea.sflag [#allocation3], 1
    %10517 = vsyncpa %s10516, 1

</llo_original>
